<compile_context>
chip_gen: v7x
topology: tpu7x:2x2x1
jax: 0.10.0
libtpu: 0.0.40
codegen_flags: <defaults>
</compile_context>

<pallas_src>
import math

import jax
import jax.numpy as jnp
from jax.experimental import pallas as pl
from jax.experimental.pallas import tpu as pltpu

# ----------------- small config consistent with the module -----------------
B = 2          # batch
N = 16         # number of tokens
C_A = 64       # single repr dim (c_a), divisible by n_heads
C_S = 32       # single embedding dim (c_s)
C_Z = 16       # pair embedding dim (c_z)
N_HEADS = 4
N_BLOCKS = 2
D_HEAD = C_A // N_HEADS
EPS = 1e-5
BIASINIT = -2.0

PARAM_ORDER = ("w_sln", "w_sraw", "w_qkvg", "w_o", "w_z", "biases", "w_t", "w_b")


# ----------------------------- shared helper --------------------------------
def _layernorm(x, gamma=None, beta=None):
    mu = jnp.mean(x, axis=-1, keepdims=True)
    xc = x - mu
    var = jnp.mean(xc * xc, axis=-1, keepdims=True)
    y = xc * jax.lax.rsqrt(var + EPS)
    if gamma is not None:
        y = y * gamma
    if beta is not None:
        y = y + beta
    return y


# ------------------------------- the kernel ---------------------------------
def dt_kernel(a_ref, s_ref, z_ref,
              w_sln_ref, w_sraw_ref, w_qkvg_ref, w_o_ref, w_z_ref, b_ref,
              w_t_ref, w_b_ref,
              out_ref, acc_ref):
    """One DiffusionTransformerBlock per grid step; residual carried in out_ref."""
    blk = pl.program_id(0)

    @pl.when(blk == 0)
    def _():
        out_ref[...] = a_ref[...]          # seed the carried residual stream

    a = out_ref[...]                       # [B*N, C_A] current residual (f32)
    s = s_ref[...]                         # [B*N, C_S]
    biases = b_ref[...]                    # [8, C_A] packed bias rows

    # ---- s-conditioning (one LayerNorm(s); adaln gamma_s folded into weights)
    s_norm = _layernorm(s)
    sp = jnp.dot(s_norm, w_sln_ref[...], preferred_element_type=jnp.float32)   # [B*N, 4*C_A]
    gate1 = jax.nn.sigmoid(sp[:, 0:C_A] + biases[0:1, :])
    skip1 = sp[:, C_A:2 * C_A]
    gate2 = jax.nn.sigmoid(sp[:, 2 * C_A:3 * C_A] + biases[1:2, :])
    skip2 = sp[:, 3 * C_A:4 * C_A]
    sr = jnp.dot(s, w_sraw_ref[...], preferred_element_type=jnp.float32)       # [B*N, 2*C_A]
    attn_gate = jax.nn.sigmoid(sr[:, 0:C_A] + biases[2:3, :])       # sigmoid(linear_a_last(s))
    ff_gate = jax.nn.sigmoid(sr[:, C_A:2 * C_A] + biases[3:4, :])   # sigmoid(linear_s(s))

    # ---------------- AttentionPairBias (standard path) --------------------
    a_ln = gate1 * _layernorm(a) + skip1                            # AdaptiveLayerNorm

    # fused q|k|v|g projection: one 256-lane matmul instead of four 64-lane ones
    qkvg = jnp.dot(a_ln, w_qkvg_ref[...], preferred_element_type=jnp.float32)  # [B*N, 4*C_A]
    scale = 1.0 / math.sqrt(D_HEAD)
    q = (qkvg[:, 0:C_A] + biases[5:6, :]) * scale
    k = qkvg[:, C_A:2 * C_A]
    v = qkvg[:, 2 * C_A:3 * C_A]
    g = jax.nn.sigmoid(qkvg[:, 3 * C_A:4 * C_A] + biases[6:7, :])

    q3 = q.reshape(B, N, C_A)
    k3 = k.reshape(B, N, C_A)
    v3 = v.reshape(B, N, C_A)

    # layernorm_z: gamma is folded into w_z in the wrapper; beta only shifts all
    # logits of a softmax row uniformly, so it drops out exactly.
    z_norm = _layernorm(z_ref[...])                                 # [B, N, N, C_Z]
    w_z = w_z_ref[...]                                              # [N_HEADS, C_Z]

    # NOTE: per-head pair bias stays as broadcast-mul + last-axis reduce; the
    # single-matmul form needs a (0,3,1,2) transpose afterwards, which Mosaic's
    # transpose lowering (last-two-dims only) does not support.
    for h in range(N_HEADS):                                        # static unrolled
        lo = h * D_HEAD
        qh = q3[:, :, lo:lo + D_HEAD]                               # [B, N, D]
        kh = k3[:, :, lo:lo + D_HEAD]
        vh = v3[:, :, lo:lo + D_HEAD]
        bias_h = jnp.sum(z_norm * w_z[h, :][None, None, None, :], axis=-1)   # [B, N, N]
        logits = jnp.einsum("bqd,bkd->bqk", qh, kh,
                            preferred_element_type=jnp.float32) + bias_h
        logits = logits - jnp.max(logits, axis=-1, keepdims=True)
        p = jnp.exp(logits)
        p = p * pl.reciprocal(jnp.sum(p, axis=-1, keepdims=True), approx=True)
        oh = jnp.einsum("bqk,bkd->bqd", p, vh, preferred_element_type=jnp.float32)
        acc_ref[:, lo:lo + D_HEAD] = oh.reshape(B * N, D_HEAD)      # head accumulator

    o = acc_ref[...] * g                                            # gated heads [B*N, C_A]
    attn = jnp.dot(o, w_o_ref[...], preferred_element_type=jnp.float32) + biases[4:5, :]
    attn = attn_gate * attn
    a_mid = attn + a                                                # residual 1

    # ---------------- ConditionedTransitionBlock (Alg. 25) ------------------
    a2 = gate2 * _layernorm(a_mid) + skip2
    t = jnp.dot(a2, w_t_ref[...], preferred_element_type=jnp.float32)          # [B*N, 4*C_A]
    b_hid = jax.nn.silu(t[:, 0:2 * C_A]) * t[:, 2 * C_A:4 * C_A]
    ff = ff_gate * jnp.dot(b_hid, w_b_ref[...], preferred_element_type=jnp.float32)

    out_ref[...] = (ff + a_mid).astype(out_ref.dtype)               # residual 2 (carried)


# ------------------------------ wrapper --------------------------------------
def _map_full2(blk):
    return (0, 0)


def _map_full4(blk):
    return (0, 0, 0, 0)


def _map_per_block(blk):
    return (blk, 0, 0)


def pack_block_params(p):
    """Fold LayerNorm affines into downstream weights, fuse matmuls, pack biases.
    PyTorch Linear weights are [out, in]; kernel weights are [in, out]."""
    g1 = p["adaln1_gamma_s"].reshape(C_S, 1)
    g2 = p["adaln2_gamma_s"].reshape(C_S, 1)
    w_sln = jnp.concatenate(
        [p["adaln1_w_gate"].T * g1, p["adaln1_w_skip"].T * g1,
         p["adaln2_w_gate"].T * g2, p["adaln2_w_skip"].T * g2], axis=1)      # [C_S, 4*C_A]
    w_sraw = jnp.concatenate([p["w_alast"].T, p["w_s"].T], axis=1)           # [C_S, 2*C_A]
    w_qkvg = jnp.concatenate(
        [p["w_q"].T, p["w_k"].T, p["w_v"].T, p["w_g"].T], axis=1)            # [C_A, 4*C_A]
    w_t = jnp.concatenate([p["w_a1"].T, p["w_a2"].T], axis=1)                # [C_A, 4*C_A]
    biases = jnp.concatenate(
        [p["adaln1_b_gate"], p["adaln2_b_gate"], p["b_alast"], p["b_s"],
         p["b_o"], p["b_q"], p["b_g"], jnp.zeros((1, C_A), jnp.float32)],
        axis=0)                                                              # [8, C_A]
    return {
        "w_sln": w_sln,
        "w_sraw": w_sraw,
        "w_qkvg": w_qkvg,
        "w_o": p["w_o"].T,
        "w_z": p["w_z"] * p["lnz_gamma"],   # fold layernorm_z gamma; beta drops out
        "biases": biases,
        "w_t": w_t,
        "w_b": p["w_b"].T,
    }


def diffusion_transformer(a, s, z, all_block_params):
    """Full n_blocks DiffusionTransformer stack in a single pallas_call."""
    packed = [pack_block_params(p) for p in all_block_params]
    stacked = {k: jnp.stack([pb[k] for pb in packed], axis=0) for k in PARAM_ORDER}

    a2 = a.reshape(B * N, C_A)
    s2 = s.reshape(B * N, C_S)

    in_specs = [
        pl.BlockSpec((B * N, C_A), _map_full2),        # a (only read at block 0)
        pl.BlockSpec((B * N, C_S), _map_full2),        # s (VMEM-resident across blocks)
        pl.BlockSpec((B, N, N, C_Z), _map_full4),      # z (VMEM-resident across blocks)
    ]
    in_specs += [
        pl.BlockSpec((None,) + stacked[name].shape[1:], _map_per_block)
        for name in PARAM_ORDER                        # per-block weight slabs
    ]

    out = pl.pallas_call(
        dt_kernel,
        out_shape=jax.ShapeDtypeStruct((B * N, C_A), a.dtype),
        grid=(N_BLOCKS,),
        in_specs=in_specs,
        # constant index -> output block stays resident across the whole grid and
        # acts as the carried residual stream; written back to HBM once at the end.
        out_specs=pl.BlockSpec((B * N, C_A), _map_full2),
        scratch_shapes=[pltpu.VMEM((B * N, C_A), jnp.float32)],
        compiler_params=pltpu.CompilerParams(dimension_semantics=("arbitrary",)),
    )(a2, s2, z, *[stacked[name] for name in PARAM_ORDER])
    return out.reshape(B, N, C_A)


# -------------------------- parameter construction --------------------------
def init_block_params(key):
    """Parameters for one DiffusionTransformerBlock, in PyTorch layout
    (Linear weight = [out_features, in_features])."""
    keys = iter(jax.random.split(key, 24))

    def w(shape, scale=0.02):
        return jax.random.normal(next(keys), shape, jnp.float32) * scale

    p = {}
    # AttentionPairBias.AdaptiveLayerNorm
    p["adaln1_gamma_s"] = jnp.ones((1, C_S), jnp.float32)
    p["adaln1_w_gate"] = w((C_A, C_S))
    p["adaln1_b_gate"] = jnp.zeros((1, C_A), jnp.float32)
    p["adaln1_w_skip"] = w((C_A, C_S))
    # LayerNorm(z) + LinearNoBias(c_z -> n_heads)
    p["lnz_gamma"] = jnp.ones((1, C_Z), jnp.float32)
    p["lnz_beta"] = jnp.zeros((1, C_Z), jnp.float32)
    p["w_z"] = w((N_HEADS, C_Z))
    # Attention (q has bias per q_linear_bias=True; k, v no bias; gating linear)
    p["w_q"] = w((C_A, C_A)); p["b_q"] = jnp.zeros((1, C_A), jnp.float32)
    p["w_k"] = w((C_A, C_A))
    p["w_v"] = w((C_A, C_A))
    p["w_g"] = w((C_A, C_A)); p["b_g"] = jnp.ones((1, C_A), jnp.float32)
    p["w_o"] = w((C_A, C_A)); p["b_o"] = jnp.zeros((1, C_A), jnp.float32)
    # linear_a_last (BiasInitLinear, biasinit=-2.0)
    p["w_alast"] = w((C_A, C_S)); p["b_alast"] = jnp.full((1, C_A), BIASINIT, jnp.float32)
    # ConditionedTransitionBlock.AdaptiveLayerNorm
    p["adaln2_gamma_s"] = jnp.ones((1, C_S), jnp.float32)
    p["adaln2_w_gate"] = w((C_A, C_S))
    p["adaln2_b_gate"] = jnp.zeros((1, C_A), jnp.float32)
    p["adaln2_w_skip"] = w((C_A, C_S))
    # ConditionedTransitionBlock linears (n=2)
    p["w_a1"] = w((2 * C_A, C_A))
    p["w_a2"] = w((2 * C_A, C_A))
    p["w_b"] = w((C_A, 2 * C_A))
    p["w_s"] = w((C_A, C_S)); p["b_s"] = jnp.full((1, C_A), BIASINIT, jnp.float32)
    return p


# --------------------------- pure-JAX reference ------------------------------
def _ref_adaln(a, s, gamma_s, w_gate, b_gate, w_skip):
    a_ln = _layernorm(a)
    s_ln = _layernorm(s, gamma=gamma_s)
    return jax.nn.sigmoid(s_ln @ w_gate.T + b_gate) * a_ln + s_ln @ w_skip.T


def ref_block(a, s, z, p):
    a_ln = _ref_adaln(a, s, p["adaln1_gamma_s"], p["adaln1_w_gate"],
                      p["adaln1_b_gate"], p["adaln1_w_skip"])
    z_ln = _layernorm(z, gamma=p["lnz_gamma"], beta=p["lnz_beta"])
    bias = jnp.einsum("bqkc,hc->bhqk", z_ln, p["w_z"])            # [B,H,N,N]

    q = (a_ln @ p["w_q"].T + p["b_q"]).reshape(B, N, N_HEADS, D_HEAD)
    k = (a_ln @ p["w_k"].T).reshape(B, N, N_HEADS, D_HEAD)
    v = (a_ln @ p["w_v"].T).reshape(B, N, N_HEADS, D_HEAD)
    logits = jnp.einsum("bqhd,bkhd->bhqk", q, k) / math.sqrt(D_HEAD) + bias
    p_attn = jax.nn.softmax(logits, axis=-1)
    o = jnp.einsum("bhqk,bkhd->bqhd", p_attn, v).reshape(B, N, C_A)
    o = o * jax.nn.sigmoid(a_ln @ p["w_g"].T + p["b_g"])
    attn = o @ p["w_o"].T + p["b_o"]
    attn = jax.nn.sigmoid(s @ p["w_alast"].T + p["b_alast"]) * attn
    attn_out = attn + a

    a2 = _ref_adaln(attn_out, s, p["adaln2_gamma_s"], p["adaln2_w_gate"],
                    p["adaln2_b_gate"], p["adaln2_w_skip"])
    b_hid = jax.nn.silu(a2 @ p["w_a1"].T) * (a2 @ p["w_a2"].T)
    ff = jax.nn.sigmoid(s @ p["w_s"].T + p["b_s"]) * (b_hid @ p["w_b"].T)
    return ff + attn_out


def ref_diffusion_transformer(a, s, z, all_block_params):
    for bp in all_block_params:
        a = ref_block(a, s, z, bp)
    return a


# --------------------------------- main --------------------------------------
if __name__ == "__main__":
    root = jax.random.PRNGKey(0)
    ka, ks, kz, kp = jax.random.split(root, 4)

    a = jax.random.normal(ka, (B, N, C_A), jnp.float32)
    s = jax.random.normal(ks, (B, N, C_S), jnp.float32)
    z = jax.random.normal(kz, (B, N, N, C_Z), jnp.float32)

    block_keys = jax.random.split(kp, N_BLOCKS)
    all_block_params = [init_block_params(bk) for bk in block_keys]

    out = jax.block_until_ready(diffusion_transformer(a, s, z, all_block_params))
    assert out.shape == (B, N, C_A) and out.dtype == jnp.float32

    # cross-check against a pure-JAX reference of the same math
    ref = jax.block_until_ready(ref_diffusion_transformer(a, s, z, all_block_params))
    assert jnp.all(jnp.isfinite(out))
    max_err = float(jnp.max(jnp.abs(out - ref)))
    assert max_err < 1e-2, f"mismatch vs reference: max_err={max_err}"

    print("KERNEL_OK")
</pallas_src>

<mosaic_0001>
module attributes {stable_mosaic.version = 11 : i64} {
  func.func @dt_kernel(%arg0: i32, %arg1: memref<32x64xf32, #tpu.memory_space<vmem>>, %arg2: memref<32x32xf32, #tpu.memory_space<vmem>>, %arg3: memref<2x16x16x16xf32, #tpu.memory_space<vmem>>, %arg4: memref<1x32x256xf32, #tpu.memory_space<vmem>>, %arg5: memref<1x32x128xf32, #tpu.memory_space<vmem>>, %arg6: memref<1x64x256xf32, #tpu.memory_space<vmem>>, %arg7: memref<1x64x64xf32, #tpu.memory_space<vmem>>, %arg8: memref<1x4x16xf32, #tpu.memory_space<vmem>>, %arg9: memref<1x8x64xf32, #tpu.memory_space<vmem>>, %arg10: memref<1x64x256xf32, #tpu.memory_space<vmem>>, %arg11: memref<1x128x64xf32, #tpu.memory_space<vmem>>, %arg12: memref<32x64xf32, #tpu.memory_space<vmem>>, %arg13: memref<32x64xf32, #tpu.memory_space<vmem>>) attributes {dimension_semantics = [#tpu.dimension_semantics<arbitrary>], iteration_bounds = array<i64: 2>, scalar_prefetch = 0 : i64, scratch_operands = 1 : i64, tpu.core_type = #tpu.core_type<tc>, window_params = [{pipeline_mode = #tpu.pipeline_mode<synchronous>, transform_indices = @transform_0, window_bounds = array<i64: 32, 64>}, {pipeline_mode = #tpu.pipeline_mode<synchronous>, transform_indices = @transform_1, window_bounds = array<i64: 32, 32>}, {pipeline_mode = #tpu.pipeline_mode<synchronous>, transform_indices = @transform_2, window_bounds = array<i64: 2, 16, 16, 16>}, {transform_indices = @transform_3, window_bounds = array<i64: 1, 32, 256>}, {transform_indices = @transform_4, window_bounds = array<i64: 1, 32, 128>}, {transform_indices = @transform_5, window_bounds = array<i64: 1, 64, 256>}, {transform_indices = @transform_6, window_bounds = array<i64: 1, 64, 64>}, {transform_indices = @transform_7, window_bounds = array<i64: 1, 4, 16>}, {transform_indices = @transform_8, window_bounds = array<i64: 1, 8, 64>}, {transform_indices = @transform_9, window_bounds = array<i64: 1, 64, 256>}, {transform_indices = @transform_10, window_bounds = array<i64: 1, 128, 64>}, {pipeline_mode = #tpu.pipeline_mode<synchronous>, transform_indices = @transform_11, window_bounds = array<i64: 32, 64>}]} {
    %c0_i32 = arith.constant 0 : i32
    %0 = arith.cmpi eq, %arg0, %c0_i32 : i32
    %1 = arith.extui %0 : i1 to i32
    %c0_i32_0 = arith.constant 0 : i32
    %2 = arith.cmpi ne, %1, %c0_i32_0 : i32
    scf.if %2 {
      %c0_93 = arith.constant 0 : index
      %c0_94 = arith.constant 0 : index
      %269 = vector.load %arg1[%c0_93, %c0_94] : memref<32x64xf32, #tpu.memory_space<vmem>>, vector<32x64xf32>
      %c0_95 = arith.constant 0 : index
      %c0_96 = arith.constant 0 : index
      %270 = vector.load %arg12[%c0_95, %c0_96] : memref<32x64xf32, #tpu.memory_space<vmem>>, vector<32x64xf32>
      tpu.vector_store %arg12[%c0_95, %c0_96], %269 {strides = array<i32>} : memref<32x64xf32, #tpu.memory_space<vmem>>, vector<32x64xf32>,
    } else {
    }
    %c0 = arith.constant 0 : index
    %c0_1 = arith.constant 0 : index
    %3 = vector.load %arg12[%c0, %c0_1] : memref<32x64xf32, #tpu.memory_space<vmem>>, vector<32x64xf32>
    %c0_2 = arith.constant 0 : index
    %c0_3 = arith.constant 0 : index
    %4 = vector.load %arg2[%c0_2, %c0_3] : memref<32x32xf32, #tpu.memory_space<vmem>>, vector<32x32xf32>
    %c0_4 = arith.constant 0 : index
    %c0_5 = arith.constant 0 : index
    %c0_6 = arith.constant 0 : index
    %5 = vector.load %arg9[%c0_4, %c0_5, %c0_6] : memref<1x8x64xf32, #tpu.memory_space<vmem>>, vector<1x8x64xf32>
    %6 = vector.shape_cast %5 : vector<1x8x64xf32> to vector<8x64xf32>
    %cst = arith.constant dense<0.000000e+00> : vector<32xf32>
    %7 = vector.multi_reduction <add>, %4, %cst [1] : vector<32x32xf32> to vector<32xf32>
    %8 = vector.shape_cast %7 : vector<32xf32> to vector<32x1xf32>
    %cst_7 = arith.constant 3.200000e+01 : f32
    %9 = vector.broadcast %cst_7 : f32 to vector<32x1xf32>
    %10 = arith.divf %8, %9 : vector<32x1xf32>
    %11 = vector.broadcast %10 : vector<32x1xf32> to vector<32x32xf32>
    %12 = arith.subf %4, %11 : vector<32x32xf32>
    %13 = arith.mulf %12, %12 : vector<32x32xf32>
    %cst_8 = arith.constant dense<0.000000e+00> : vector<32xf32>
    %14 = vector.multi_reduction <add>, %13, %cst_8 [1] : vector<32x32xf32> to vector<32xf32>
    %15 = vector.shape_cast %14 : vector<32xf32> to vector<32x1xf32>
    %cst_9 = arith.constant 3.200000e+01 : f32
    %16 = vector.broadcast %cst_9 : f32 to vector<32x1xf32>
    %17 = arith.divf %15, %16 : vector<32x1xf32>
    %cst_10 = arith.constant 9.99999974E-6 : f32
    %18 = vector.broadcast %cst_10 : f32 to vector<32x1xf32>
    %19 = arith.addf %17, %18 : vector<32x1xf32>
    %20 = math.rsqrt %19 : vector<32x1xf32>
    %21 = vector.broadcast %20 : vector<32x1xf32> to vector<32x32xf32>
    %22 = arith.mulf %12, %21 : vector<32x32xf32>
    %c0_11 = arith.constant 0 : index
    %c0_12 = arith.constant 0 : index
    %c0_13 = arith.constant 0 : index
    %23 = vector.load %arg4[%c0_11, %c0_12, %c0_13] : memref<1x32x256xf32, #tpu.memory_space<vmem>>, vector<1x32x256xf32>
    %24 = vector.shape_cast %23 : vector<1x32x256xf32> to vector<32x256xf32>
    %cst_14 = arith.constant dense<0.000000e+00> : vector<32x256xf32>
    %25 = tpu.matmul %22, %24, %cst_14 {dimension_numbers = #tpu.dot_dimension_numbers<[1], [0], [0], [1], [0, 0, 1, 1], [], []>} : vector<32x32xf32>, vector<32x256xf32>, vector<32x256xf32> -> vector<32x256xf32>
    %26 = vector.extract_strided_slice %25 {offsets = [0, 0], sizes = [32, 64], strides = [1, 1]} : vector<32x256xf32> to vector<32x64xf32>
    %27 = vector.extract_strided_slice %6 {offsets = [0, 0], sizes = [1, 64], strides = [1, 1]} : vector<8x64xf32> to vector<1x64xf32>
    %28 = vector.broadcast %27 : vector<1x64xf32> to vector<32x64xf32>
    %29 = arith.addf %26, %28 : vector<32x64xf32>
    %30 = arith.negf %29 : vector<32x64xf32>
    %31 = math.exp %30 : vector<32x64xf32>
    %cst_15 = arith.constant 1.000000e+00 : f32
    %32 = vector.broadcast %cst_15 : f32 to vector<32x64xf32>
    %33 = arith.addf %32, %31 : vector<32x64xf32>
    %34 = arith.divf %32, %33 : vector<32x64xf32>
    %35 = vector.extract_strided_slice %25 {offsets = [0, 64], sizes = [32, 64], strides = [1, 1]} : vector<32x256xf32> to vector<32x64xf32>
    %36 = vector.extract_strided_slice %25 {offsets = [0, 128], sizes = [32, 64], strides = [1, 1]} : vector<32x256xf32> to vector<32x64xf32>
    %37 = vector.extract_strided_slice %6 {offsets = [1, 0], sizes = [1, 64], strides = [1, 1]} : vector<8x64xf32> to vector<1x64xf32>
    %38 = vector.broadcast %37 : vector<1x64xf32> to vector<32x64xf32>
    %39 = arith.addf %36, %38 : vector<32x64xf32>
    %40 = arith.negf %39 : vector<32x64xf32>
    %41 = math.exp %40 : vector<32x64xf32>
    %cst_16 = arith.constant 1.000000e+00 : f32
    %42 = vector.broadcast %cst_16 : f32 to vector<32x64xf32>
    %43 = arith.addf %42, %41 : vector<32x64xf32>
    %44 = arith.divf %42, %43 : vector<32x64xf32>
    %45 = vector.extract_strided_slice %25 {offsets = [0, 192], sizes = [32, 64], strides = [1, 1]} : vector<32x256xf32> to vector<32x64xf32>
    %c0_17 = arith.constant 0 : index
    %c0_18 = arith.constant 0 : index
    %c0_19 = arith.constant 0 : index
    %46 = vector.load %arg5[%c0_17, %c0_18, %c0_19] : memref<1x32x128xf32, #tpu.memory_space<vmem>>, vector<1x32x128xf32>
    %47 = vector.shape_cast %46 : vector<1x32x128xf32> to vector<32x128xf32>
    %cst_20 = arith.constant dense<0.000000e+00> : vector<32x128xf32>
    %48 = tpu.matmul %4, %47, %cst_20 {dimension_numbers = #tpu.dot_dimension_numbers<[1], [0], [0], [1], [0, 0, 1, 1], [], []>} : vector<32x32xf32>, vector<32x128xf32>, vector<32x128xf32> -> vector<32x128xf32>
    %49 = vector.extract_strided_slice %48 {offsets = [0, 0], sizes = [32, 64], strides = [1, 1]} : vector<32x128xf32> to vector<32x64xf32>
    %50 = vector.extract_strided_slice %6 {offsets = [2, 0], sizes = [1, 64], strides = [1, 1]} : vector<8x64xf32> to vector<1x64xf32>
    %51 = vector.broadcast %50 : vector<1x64xf32> to vector<32x64xf32>
    %52 = arith.addf %49, %51 : vector<32x64xf32>
    %53 = arith.negf %52 : vector<32x64xf32>
    %54 = math.exp %53 : vector<32x64xf32>
    %cst_21 = arith.constant 1.000000e+00 : f32
    %55 = vector.broadcast %cst_21 : f32 to vector<32x64xf32>
    %56 = arith.addf %55, %54 : vector<32x64xf32>
    %57 = arith.divf %55, %56 : vector<32x64xf32>
    %58 = vector.extract_strided_slice %48 {offsets = [0, 64], sizes = [32, 64], strides = [1, 1]} : vector<32x128xf32> to vector<32x64xf32>
    %59 = vector.extract_strided_slice %6 {offsets = [3, 0], sizes = [1, 64], strides = [1, 1]} : vector<8x64xf32> to vector<1x64xf32>
    %60 = vector.broadcast %59 : vector<1x64xf32> to vector<32x64xf32>
    %61 = arith.addf %58, %60 : vector<32x64xf32>
    %62 = arith.negf %61 : vector<32x64xf32>
    %63 = math.exp %62 : vector<32x64xf32>
    %cst_22 = arith.constant 1.000000e+00 : f32
    %64 = vector.broadcast %cst_22 : f32 to vector<32x64xf32>
    %65 = arith.addf %64, %63 : vector<32x64xf32>
    %66 = arith.divf %64, %65 : vector<32x64xf32>
    %cst_23 = arith.constant dense<0.000000e+00> : vector<32xf32>
    %67 = vector.multi_reduction <add>, %3, %cst_23 [1] : vector<32x64xf32> to vector<32xf32>
    %68 = vector.shape_cast %67 : vector<32xf32> to vector<32x1xf32>
    %cst_24 = arith.constant 6.400000e+01 : f32
    %69 = vector.broadcast %cst_24 : f32 to vector<32x1xf32>
    %70 = arith.divf %68, %69 : vector<32x1xf32>
    %71 = vector.broadcast %70 : vector<32x1xf32> to vector<32x64xf32>
    %72 = arith.subf %3, %71 : vector<32x64xf32>
    %73 = arith.mulf %72, %72 : vector<32x64xf32>
    %cst_25 = arith.constant dense<0.000000e+00> : vector<32xf32>
    %74 = vector.multi_reduction <add>, %73, %cst_25 [1] : vector<32x64xf32> to vector<32xf32>
    %75 = vector.shape_cast %74 : vector<32xf32> to vector<32x1xf32>
    %cst_26 = arith.constant 6.400000e+01 : f32
    %76 = vector.broadcast %cst_26 : f32 to vector<32x1xf32>
    %77 = arith.divf %75, %76 : vector<32x1xf32>
    %cst_27 = arith.constant 9.99999974E-6 : f32
    %78 = vector.broadcast %cst_27 : f32 to vector<32x1xf32>
    %79 = arith.addf %77, %78 : vector<32x1xf32>
    %80 = math.rsqrt %79 : vector<32x1xf32>
    %81 = vector.broadcast %80 : vector<32x1xf32> to vector<32x64xf32>
    %82 = arith.mulf %72, %81 : vector<32x64xf32>
    %83 = arith.mulf %34, %82 : vector<32x64xf32>
    %84 = arith.addf %83, %35 : vector<32x64xf32>
    %c0_28 = arith.constant 0 : index
    %c0_29 = arith.constant 0 : index
    %c0_30 = arith.constant 0 : index
    %85 = vector.load %arg6[%c0_28, %c0_29, %c0_30] : memref<1x64x256xf32, #tpu.memory_space<vmem>>, vector<1x64x256xf32>
    %86 = vector.shape_cast %85 : vector<1x64x256xf32> to vector<64x256xf32>
    %cst_31 = arith.constant dense<0.000000e+00> : vector<32x256xf32>
    %87 = tpu.matmul %84, %86, %cst_31 {dimension_numbers = #tpu.dot_dimension_numbers<[1], [0], [0], [1], [0, 0, 1, 1], [], []>} : vector<32x64xf32>, vector<64x256xf32>, vector<32x256xf32> -> vector<32x256xf32>
    %88 = vector.extract_strided_slice %87 {offsets = [0, 0], sizes = [32, 64], strides = [1, 1]} : vector<32x256xf32> to vector<32x64xf32>
    %89 = vector.extract_strided_slice %6 {offsets = [5, 0], sizes = [1, 64], strides = [1, 1]} : vector<8x64xf32> to vector<1x64xf32>
    %90 = vector.broadcast %89 : vector<1x64xf32> to vector<32x64xf32>
    %91 = arith.addf %88, %90 : vector<32x64xf32>
    %cst_32 = arith.constant 2.500000e-01 : f32
    %92 = vector.broadcast %cst_32 : f32 to vector<32x64xf32>
    %93 = arith.mulf %91, %92 : vector<32x64xf32>
    %94 = vector.extract_strided_slice %87 {offsets = [0, 64], sizes = [32, 64], strides = [1, 1]} : vector<32x256xf32> to vector<32x64xf32>
    %95 = vector.extract_strided_slice %87 {offsets = [0, 128], sizes = [32, 64], strides = [1, 1]} : vector<32x256xf32> to vector<32x64xf32>
    %96 = vector.extract_strided_slice %87 {offsets = [0, 192], sizes = [32, 64], strides = [1, 1]} : vector<32x256xf32> to vector<32x64xf32>
    %97 = vector.extract_strided_slice %6 {offsets = [6, 0], sizes = [1, 64], strides = [1, 1]} : vector<8x64xf32> to vector<1x64xf32>
    %98 = vector.broadcast %97 : vector<1x64xf32> to vector<32x64xf32>
    %99 = arith.addf %96, %98 : vector<32x64xf32>
    %100 = arith.negf %99 : vector<32x64xf32>
    %101 = math.exp %100 : vector<32x64xf32>
    %cst_33 = arith.constant 1.000000e+00 : f32
    %102 = vector.broadcast %cst_33 : f32 to vector<32x64xf32>
    %103 = arith.addf %102, %101 : vector<32x64xf32>
    %104 = arith.divf %102, %103 : vector<32x64xf32>
    %105 = vector.shape_cast %93 : vector<32x64xf32> to vector<2x16x64xf32>
    %106 = vector.shape_cast %94 : vector<32x64xf32> to vector<2x16x64xf32>
    %107 = vector.shape_cast %95 : vector<32x64xf32> to vector<2x16x64xf32>
    %c0_34 = arith.constant 0 : index
    %c0_35 = arith.constant 0 : index
    %c0_36 = arith.constant 0 : index
    %c0_37 = arith.constant 0 : index
    %108 = vector.load %arg3[%c0_34, %c0_35, %c0_36, %c0_37] : memref<2x16x16x16xf32, #tpu.memory_space<vmem>>, vector<2x16x16x16xf32>
    %cst_38 = arith.constant dense<0.000000e+00> : vector<2x16x16xf32>
    %109 = vector.multi_reduction <add>, %108, %cst_38 [3] : vector<2x16x16x16xf32> to vector<2x16x16xf32>
    %110 = vector.shape_cast %109 : vector<2x16x16xf32> to vector<2x16x16x1xf32>
    %cst_39 = arith.constant 1.600000e+01 : f32
    %111 = vector.broadcast %cst_39 : f32 to vector<2x16x16x1xf32>
    %112 = arith.divf %110, %111 : vector<2x16x16x1xf32>
    %113 = vector.broadcast %112 : vector<2x16x16x1xf32> to vector<2x16x16x16xf32>
    %114 = arith.subf %108, %113 : vector<2x16x16x16xf32>
    %115 = arith.mulf %114, %114 : vector<2x16x16x16xf32>
    %cst_40 = arith.constant dense<0.000000e+00> : vector<2x16x16xf32>
    %116 = vector.multi_reduction <add>, %115, %cst_40 [3] : vector<2x16x16x16xf32> to vector<2x16x16xf32>
    %117 = vector.shape_cast %116 : vector<2x16x16xf32> to vector<2x16x16x1xf32>
    %cst_41 = arith.constant 1.600000e+01 : f32
    %118 = vector.broadcast %cst_41 : f32 to vector<2x16x16x1xf32>
    %119 = arith.divf %117, %118 : vector<2x16x16x1xf32>
    %cst_42 = arith.constant 9.99999974E-6 : f32
    %120 = vector.broadcast %cst_42 : f32 to vector<2x16x16x1xf32>
    %121 = arith.addf %119, %120 : vector<2x16x16x1xf32>
    %122 = math.rsqrt %121 : vector<2x16x16x1xf32>
    %123 = vector.broadcast %122 : vector<2x16x16x1xf32> to vector<2x16x16x16xf32>
    %124 = arith.mulf %114, %123 : vector<2x16x16x16xf32>
    %c0_43 = arith.constant 0 : index
    %c0_44 = arith.constant 0 : index
    %c0_45 = arith.constant 0 : index
    %125 = vector.load %arg8[%c0_43, %c0_44, %c0_45] : memref<1x4x16xf32, #tpu.memory_space<vmem>>, vector<1x4x16xf32>
    %126 = vector.shape_cast %125 : vector<1x4x16xf32> to vector<4x16xf32>
    %127 = vector.extract_strided_slice %105 {offsets = [0, 0, 0], sizes = [2, 16, 16], strides = [1, 1, 1]} : vector<2x16x64xf32> to vector<2x16x16xf32>
    %128 = vector.extract_strided_slice %106 {offsets = [0, 0, 0], sizes = [2, 16, 16], strides = [1, 1, 1]} : vector<2x16x64xf32> to vector<2x16x16xf32>
    %129 = vector.extract_strided_slice %107 {offsets = [0, 0, 0], sizes = [2, 16, 16], strides = [1, 1, 1]} : vector<2x16x64xf32> to vector<2x16x16xf32>
    %130 = vector.extract_strided_slice %126 {offsets = [0, 0], sizes = [1, 16], strides = [1, 1]} : vector<4x16xf32> to vector<1x16xf32>
    %131 = vector.shape_cast %130 : vector<1x16xf32> to vector<16xf32>
    %132 = vector.shape_cast %131 : vector<16xf32> to vector<1x1x1x16xf32>
    %133 = vector.broadcast %132 : vector<1x1x1x16xf32> to vector<2x16x16x16xf32>
    %134 = arith.mulf %124, %133 : vector<2x16x16x16xf32>
    %cst_46 = arith.constant dense<0.000000e+00> : vector<2x16x16xf32>
    %135 = vector.multi_reduction <add>, %134, %cst_46 [3] : vector<2x16x16x16xf32> to vector<2x16x16xf32>
    "tpu.trace_start"() <{level = 10 : i32, message = "bqd,bkd->bqk"}> : () -> ()
    %cst_47 = arith.constant dense<0.000000e+00> : vector<2x16x16xf32>
    %136 = tpu.matmul %127, %128, %cst_47 {dimension_numbers = #tpu.dot_dimension_numbers<[2], [2], [1], [1], [0, 0, 0, 1, 1, 1], [0], [0]>} : vector<2x16x16xf32>, vector<2x16x16xf32>, vector<2x16x16xf32> -> vector<2x16x16xf32>
    "tpu.trace_stop"() : () -> ()
    %137 = arith.addf %136, %135 : vector<2x16x16xf32>
    %cst_48 = arith.constant dense<0xFF800000> : vector<2x16xf32>
    %138 = vector.multi_reduction <maximumf>, %137, %cst_48 [2] : vector<2x16x16xf32> to vector<2x16xf32>
    %139 = vector.shape_cast %138 : vector<2x16xf32> to vector<2x16x1xf32>
    %140 = vector.broadcast %139 : vector<2x16x1xf32> to vector<2x16x16xf32>
    %141 = arith.subf %137, %140 : vector<2x16x16xf32>
    %142 = math.exp %141 : vector<2x16x16xf32>
    %cst_49 = arith.constant dense<0.000000e+00> : vector<2x16xf32>
    %143 = vector.multi_reduction <add>, %142, %cst_49 [2] : vector<2x16x16xf32> to vector<2x16xf32>
    %144 = vector.shape_cast %143 : vector<2x16xf32> to vector<2x16x1xf32>
    %145 = tpu.reciprocal %144 {approx = true} : vector<2x16x1xf32> -> vector<2x16x1xf32>
    %146 = vector.broadcast %145 : vector<2x16x1xf32> to vector<2x16x16xf32>
    %147 = arith.mulf %142, %146 : vector<2x16x16xf32>
    "tpu.trace_start"() <{level = 10 : i32, message = "bqk,bkd->bqd"}> : () -> ()
    %cst_50 = arith.constant dense<0.000000e+00> : vector<2x16x16xf32>
    %148 = tpu.matmul %147, %129, %cst_50 {dimension_numbers = #tpu.dot_dimension_numbers<[2], [1], [1], [2], [0, 0, 0, 1, 1, 2], [0], [0]>} : vector<2x16x16xf32>, vector<2x16x16xf32>, vector<2x16x16xf32> -> vector<2x16x16xf32>
    "tpu.trace_stop"() : () -> ()
    %149 = vector.shape_cast %148 : vector<2x16x16xf32> to vector<32x16xf32>
    %c0_51 = arith.constant 0 : index
    %c0_52 = arith.constant 0 : index
    %150 = vector.load %arg13[%c0_51, %c0_52] : memref<32x64xf32, #tpu.memory_space<vmem>>, vector<32x16xf32>
    tpu.vector_store %arg13[%c0_51, %c0_52], %149 {strides = array<i32>} : memref<32x64xf32, #tpu.memory_space<vmem>>, vector<32x16xf32>,
    %151 = vector.extract_strided_slice %105 {offsets = [0, 0, 16], sizes = [2, 16, 16], strides = [1, 1, 1]} : vector<2x16x64xf32> to vector<2x16x16xf32>
    %152 = vector.extract_strided_slice %106 {offsets = [0, 0, 16], sizes = [2, 16, 16], strides = [1, 1, 1]} : vector<2x16x64xf32> to vector<2x16x16xf32>
    %153 = vector.extract_strided_slice %107 {offsets = [0, 0, 16], sizes = [2, 16, 16], strides = [1, 1, 1]} : vector<2x16x64xf32> to vector<2x16x16xf32>
    %154 = vector.extract_strided_slice %126 {offsets = [1, 0], sizes = [1, 16], strides = [1, 1]} : vector<4x16xf32> to vector<1x16xf32>
    %155 = vector.shape_cast %154 : vector<1x16xf32> to vector<16xf32>
    %156 = vector.shape_cast %155 : vector<16xf32> to vector<1x1x1x16xf32>
    %157 = vector.broadcast %156 : vector<1x1x1x16xf32> to vector<2x16x16x16xf32>
    %158 = arith.mulf %124, %157 : vector<2x16x16x16xf32>
    %cst_53 = arith.constant dense<0.000000e+00> : vector<2x16x16xf32>
    %159 = vector.multi_reduction <add>, %158, %cst_53 [3] : vector<2x16x16x16xf32> to vector<2x16x16xf32>
    "tpu.trace_start"() <{level = 10 : i32, message = "bqd,bkd->bqk"}> : () -> ()
    %cst_54 = arith.constant dense<0.000000e+00> : vector<2x16x16xf32>
    %160 = tpu.matmul %151, %152, %cst_54 {dimension_numbers = #tpu.dot_dimension_numbers<[2], [2], [1], [1], [0, 0, 0, 1, 1, 1], [0], [0]>} : vector<2x16x16xf32>, vector<2x16x16xf32>, vector<2x16x16xf32> -> vector<2x16x16xf32>
    "tpu.trace_stop"() : () -> ()
    %161 = arith.addf %160, %159 : vector<2x16x16xf32>
    %cst_55 = arith.constant dense<0xFF800000> : vector<2x16xf32>
    %162 = vector.multi_reduction <maximumf>, %161, %cst_55 [2] : vector<2x16x16xf32> to vector<2x16xf32>
    %163 = vector.shape_cast %162 : vector<2x16xf32> to vector<2x16x1xf32>
    %164 = vector.broadcast %163 : vector<2x16x1xf32> to vector<2x16x16xf32>
    %165 = arith.subf %161, %164 : vector<2x16x16xf32>
    %166 = math.exp %165 : vector<2x16x16xf32>
    %cst_56 = arith.constant dense<0.000000e+00> : vector<2x16xf32>
    %167 = vector.multi_reduction <add>, %166, %cst_56 [2] : vector<2x16x16xf32> to vector<2x16xf32>
    %168 = vector.shape_cast %167 : vector<2x16xf32> to vector<2x16x1xf32>
    %169 = tpu.reciprocal %168 {approx = true} : vector<2x16x1xf32> -> vector<2x16x1xf32>
    %170 = vector.broadcast %169 : vector<2x16x1xf32> to vector<2x16x16xf32>
    %171 = arith.mulf %166, %170 : vector<2x16x16xf32>
    "tpu.trace_start"() <{level = 10 : i32, message = "bqk,bkd->bqd"}> : () -> ()
    %cst_57 = arith.constant dense<0.000000e+00> : vector<2x16x16xf32>
    %172 = tpu.matmul %171, %153, %cst_57 {dimension_numbers = #tpu.dot_dimension_numbers<[2], [1], [1], [2], [0, 0, 0, 1, 1, 2], [0], [0]>} : vector<2x16x16xf32>, vector<2x16x16xf32>, vector<2x16x16xf32> -> vector<2x16x16xf32>
    "tpu.trace_stop"() : () -> ()
    %173 = vector.shape_cast %172 : vector<2x16x16xf32> to vector<32x16xf32>
    %c0_58 = arith.constant 0 : index
    %c16 = arith.constant 16 : index
    %174 = vector.load %arg13[%c0_58, %c16] : memref<32x64xf32, #tpu.memory_space<vmem>>, vector<32x16xf32>
    tpu.vector_store %arg13[%c0_58, %c16], %173 {strides = array<i32>} : memref<32x64xf32, #tpu.memory_space<vmem>>, vector<32x16xf32>,
    %175 = vector.extract_strided_slice %105 {offsets = [0, 0, 32], sizes = [2, 16, 16], strides = [1, 1, 1]} : vector<2x16x64xf32> to vector<2x16x16xf32>
    %176 = vector.extract_strided_slice %106 {offsets = [0, 0, 32], sizes = [2, 16, 16], strides = [1, 1, 1]} : vector<2x16x64xf32> to vector<2x16x16xf32>
    %177 = vector.extract_strided_slice %107 {offsets = [0, 0, 32], sizes = [2, 16, 16], strides = [1, 1, 1]} : vector<2x16x64xf32> to vector<2x16x16xf32>
    %178 = vector.extract_strided_slice %126 {offsets = [2, 0], sizes = [1, 16], strides = [1, 1]} : vector<4x16xf32> to vector<1x16xf32>
    %179 = vector.shape_cast %178 : vector<1x16xf32> to vector<16xf32>
    %180 = vector.shape_cast %179 : vector<16xf32> to vector<1x1x1x16xf32>
    %181 = vector.broadcast %180 : vector<1x1x1x16xf32> to vector<2x16x16x16xf32>
    %182 = arith.mulf %124, %181 : vector<2x16x16x16xf32>
    %cst_59 = arith.constant dense<0.000000e+00> : vector<2x16x16xf32>
    %183 = vector.multi_reduction <add>, %182, %cst_59 [3] : vector<2x16x16x16xf32> to vector<2x16x16xf32>
    "tpu.trace_start"() <{level = 10 : i32, message = "bqd,bkd->bqk"}> : () -> ()
    %cst_60 = arith.constant dense<0.000000e+00> : vector<2x16x16xf32>
    %184 = tpu.matmul %175, %176, %cst_60 {dimension_numbers = #tpu.dot_dimension_numbers<[2], [2], [1], [1], [0, 0, 0, 1, 1, 1], [0], [0]>} : vector<2x16x16xf32>, vector<2x16x16xf32>, vector<2x16x16xf32> -> vector<2x16x16xf32>
    "tpu.trace_stop"() : () -> ()
    %185 = arith.addf %184, %183 : vector<2x16x16xf32>
    %cst_61 = arith.constant dense<0xFF800000> : vector<2x16xf32>
    %186 = vector.multi_reduction <maximumf>, %185, %cst_61 [2] : vector<2x16x16xf32> to vector<2x16xf32>
    %187 = vector.shape_cast %186 : vector<2x16xf32> to vector<2x16x1xf32>
    %188 = vector.broadcast %187 : vector<2x16x1xf32> to vector<2x16x16xf32>
    %189 = arith.subf %185, %188 : vector<2x16x16xf32>
    %190 = math.exp %189 : vector<2x16x16xf32>
    %cst_62 = arith.constant dense<0.000000e+00> : vector<2x16xf32>
    %191 = vector.multi_reduction <add>, %190, %cst_62 [2] : vector<2x16x16xf32> to vector<2x16xf32>
    %192 = vector.shape_cast %191 : vector<2x16xf32> to vector<2x16x1xf32>
    %193 = tpu.reciprocal %192 {approx = true} : vector<2x16x1xf32> -> vector<2x16x1xf32>
    %194 = vector.broadcast %193 : vector<2x16x1xf32> to vector<2x16x16xf32>
    %195 = arith.mulf %190, %194 : vector<2x16x16xf32>
    "tpu.trace_start"() <{level = 10 : i32, message = "bqk,bkd->bqd"}> : () -> ()
    %cst_63 = arith.constant dense<0.000000e+00> : vector<2x16x16xf32>
    %196 = tpu.matmul %195, %177, %cst_63 {dimension_numbers = #tpu.dot_dimension_numbers<[2], [1], [1], [2], [0, 0, 0, 1, 1, 2], [0], [0]>} : vector<2x16x16xf32>, vector<2x16x16xf32>, vector<2x16x16xf32> -> vector<2x16x16xf32>
    "tpu.trace_stop"() : () -> ()
    %197 = vector.shape_cast %196 : vector<2x16x16xf32> to vector<32x16xf32>
    %c0_64 = arith.constant 0 : index
    %c32 = arith.constant 32 : index
    %198 = vector.load %arg13[%c0_64, %c32] : memref<32x64xf32, #tpu.memory_space<vmem>>, vector<32x16xf32>
    tpu.vector_store %arg13[%c0_64, %c32], %197 {strides = array<i32>} : memref<32x64xf32, #tpu.memory_space<vmem>>, vector<32x16xf32>,
    %199 = vector.extract_strided_slice %105 {offsets = [0, 0, 48], sizes = [2, 16, 16], strides = [1, 1, 1]} : vector<2x16x64xf32> to vector<2x16x16xf32>
    %200 = vector.extract_strided_slice %106 {offsets = [0, 0, 48], sizes = [2, 16, 16], strides = [1, 1, 1]} : vector<2x16x64xf32> to vector<2x16x16xf32>
    %201 = vector.extract_strided_slice %107 {offsets = [0, 0, 48], sizes = [2, 16, 16], strides = [1, 1, 1]} : vector<2x16x64xf32> to vector<2x16x16xf32>
    %202 = vector.extract_strided_slice %126 {offsets = [3, 0], sizes = [1, 16], strides = [1, 1]} : vector<4x16xf32> to vector<1x16xf32>
    %203 = vector.shape_cast %202 : vector<1x16xf32> to vector<16xf32>
    %204 = vector.shape_cast %203 : vector<16xf32> to vector<1x1x1x16xf32>
    %205 = vector.broadcast %204 : vector<1x1x1x16xf32> to vector<2x16x16x16xf32>
    %206 = arith.mulf %124, %205 : vector<2x16x16x16xf32>
    %cst_65 = arith.constant dense<0.000000e+00> : vector<2x16x16xf32>
    %207 = vector.multi_reduction <add>, %206, %cst_65 [3] : vector<2x16x16x16xf32> to vector<2x16x16xf32>
    "tpu.trace_start"() <{level = 10 : i32, message = "bqd,bkd->bqk"}> : () -> ()
    %cst_66 = arith.constant dense<0.000000e+00> : vector<2x16x16xf32>
    %208 = tpu.matmul %199, %200, %cst_66 {dimension_numbers = #tpu.dot_dimension_numbers<[2], [2], [1], [1], [0, 0, 0, 1, 1, 1], [0], [0]>} : vector<2x16x16xf32>, vector<2x16x16xf32>, vector<2x16x16xf32> -> vector<2x16x16xf32>
    "tpu.trace_stop"() : () -> ()
    %209 = arith.addf %208, %207 : vector<2x16x16xf32>
    %cst_67 = arith.constant dense<0xFF800000> : vector<2x16xf32>
    %210 = vector.multi_reduction <maximumf>, %209, %cst_67 [2] : vector<2x16x16xf32> to vector<2x16xf32>
    %211 = vector.shape_cast %210 : vector<2x16xf32> to vector<2x16x1xf32>
    %212 = vector.broadcast %211 : vector<2x16x1xf32> to vector<2x16x16xf32>
    %213 = arith.subf %209, %212 : vector<2x16x16xf32>
    %214 = math.exp %213 : vector<2x16x16xf32>
    %cst_68 = arith.constant dense<0.000000e+00> : vector<2x16xf32>
    %215 = vector.multi_reduction <add>, %214, %cst_68 [2] : vector<2x16x16xf32> to vector<2x16xf32>
    %216 = vector.shape_cast %215 : vector<2x16xf32> to vector<2x16x1xf32>
    %217 = tpu.reciprocal %216 {approx = true} : vector<2x16x1xf32> -> vector<2x16x1xf32>
    %218 = vector.broadcast %217 : vector<2x16x1xf32> to vector<2x16x16xf32>
    %219 = arith.mulf %214, %218 : vector<2x16x16xf32>
    "tpu.trace_start"() <{level = 10 : i32, message = "bqk,bkd->bqd"}> : () -> ()
    %cst_69 = arith.constant dense<0.000000e+00> : vector<2x16x16xf32>
    %220 = tpu.matmul %219, %201, %cst_69 {dimension_numbers = #tpu.dot_dimension_numbers<[2], [1], [1], [2], [0, 0, 0, 1, 1, 2], [0], [0]>} : vector<2x16x16xf32>, vector<2x16x16xf32>, vector<2x16x16xf32> -> vector<2x16x16xf32>
    "tpu.trace_stop"() : () -> ()
    %221 = vector.shape_cast %220 : vector<2x16x16xf32> to vector<32x16xf32>
    %c0_70 = arith.constant 0 : index
    %c48 = arith.constant 48 : index
    %222 = vector.load %arg13[%c0_70, %c48] : memref<32x64xf32, #tpu.memory_space<vmem>>, vector<32x16xf32>
    tpu.vector_store %arg13[%c0_70, %c48], %221 {strides = array<i32>} : memref<32x64xf32, #tpu.memory_space<vmem>>, vector<32x16xf32>,
    %c0_71 = arith.constant 0 : index
    %c0_72 = arith.constant 0 : index
    %223 = vector.load %arg13[%c0_71, %c0_72] : memref<32x64xf32, #tpu.memory_space<vmem>>, vector<32x64xf32>
    %224 = arith.mulf %223, %104 : vector<32x64xf32>
    %c0_73 = arith.constant 0 : index
    %c0_74 = arith.constant 0 : index
    %c0_75 = arith.constant 0 : index
    %225 = vector.load %arg7[%c0_73, %c0_74, %c0_75] : memref<1x64x64xf32, #tpu.memory_space<vmem>>, vector<1x64x64xf32>
    %226 = vector.shape_cast %225 : vector<1x64x64xf32> to vector<64x64xf32>
    %cst_76 = arith.constant dense<0.000000e+00> : vector<32x64xf32>
    %227 = tpu.matmul %224, %226, %cst_76 {dimension_numbers = #tpu.dot_dimension_numbers<[1], [0], [0], [1], [0, 0, 1, 1], [], []>} : vector<32x64xf32>, vector<64x64xf32>, vector<32x64xf32> -> vector<32x64xf32>
    %228 = vector.extract_strided_slice %6 {offsets = [4, 0], sizes = [1, 64], strides = [1, 1]} : vector<8x64xf32> to vector<1x64xf32>
    %229 = vector.broadcast %228 : vector<1x64xf32> to vector<32x64xf32>
    %230 = arith.addf %227, %229 : vector<32x64xf32>
    %231 = arith.mulf %57, %230 : vector<32x64xf32>
    %232 = arith.addf %231, %3 : vector<32x64xf32>
    %cst_77 = arith.constant dense<0.000000e+00> : vector<32xf32>
    %233 = vector.multi_reduction <add>, %232, %cst_77 [1] : vector<32x64xf32> to vector<32xf32>
    %234 = vector.shape_cast %233 : vector<32xf32> to vector<32x1xf32>
    %cst_78 = arith.constant 6.400000e+01 : f32
    %235 = vector.broadcast %cst_78 : f32 to vector<32x1xf32>
    %236 = arith.divf %234, %235 : vector<32x1xf32>
    %237 = vector.broadcast %236 : vector<32x1xf32> to vector<32x64xf32>
    %238 = arith.subf %232, %237 : vector<32x64xf32>
    %239 = arith.mulf %238, %238 : vector<32x64xf32>
    %cst_79 = arith.constant dense<0.000000e+00> : vector<32xf32>
    %240 = vector.multi_reduction <add>, %239, %cst_79 [1] : vector<32x64xf32> to vector<32xf32>
    %241 = vector.shape_cast %240 : vector<32xf32> to vector<32x1xf32>
    %cst_80 = arith.constant 6.400000e+01 : f32
    %242 = vector.broadcast %cst_80 : f32 to vector<32x1xf32>
    %243 = arith.divf %241, %242 : vector<32x1xf32>
    %cst_81 = arith.constant 9.99999974E-6 : f32
    %244 = vector.broadcast %cst_81 : f32 to vector<32x1xf32>
    %245 = arith.addf %243, %244 : vector<32x1xf32>
    %246 = math.rsqrt %245 : vector<32x1xf32>
    %247 = vector.broadcast %246 : vector<32x1xf32> to vector<32x64xf32>
    %248 = arith.mulf %238, %247 : vector<32x64xf32>
    %249 = arith.mulf %44, %248 : vector<32x64xf32>
    %250 = arith.addf %249, %45 : vector<32x64xf32>
    %c0_82 = arith.constant 0 : index
    %c0_83 = arith.constant 0 : index
    %c0_84 = arith.constant 0 : index
    %251 = vector.load %arg10[%c0_82, %c0_83, %c0_84] : memref<1x64x256xf32, #tpu.memory_space<vmem>>, vector<1x64x256xf32>
    %252 = vector.shape_cast %251 : vector<1x64x256xf32> to vector<64x256xf32>
    %cst_85 = arith.constant dense<0.000000e+00> : vector<32x256xf32>
    %253 = tpu.matmul %250, %252, %cst_85 {dimension_numbers = #tpu.dot_dimension_numbers<[1], [0], [0], [1], [0, 0, 1, 1], [], []>} : vector<32x64xf32>, vector<64x256xf32>, vector<32x256xf32> -> vector<32x256xf32>
    %254 = vector.extract_strided_slice %253 {offsets = [0, 0], sizes = [32, 128], strides = [1, 1]} : vector<32x256xf32> to vector<32x128xf32>
    %255 = arith.negf %254 : vector<32x128xf32>
    %256 = math.exp %255 : vector<32x128xf32>
    %cst_86 = arith.constant 1.000000e+00 : f32
    %257 = vector.broadcast %cst_86 : f32 to vector<32x128xf32>
    %258 = arith.addf %257, %256 : vector<32x128xf32>
    %259 = arith.divf %257, %258 : vector<32x128xf32>
    %260 = arith.mulf %254, %259 : vector<32x128xf32>
    %261 = vector.extract_strided_slice %253 {offsets = [0, 128], sizes = [32, 128], strides = [1, 1]} : vector<32x256xf32> to vector<32x128xf32>
    %262 = arith.mulf %260, %261 : vector<32x128xf32>
    %c0_87 = arith.constant 0 : index
    %c0_88 = arith.constant 0 : index
    %c0_89 = arith.constant 0 : index
    %263 = vector.load %arg11[%c0_87, %c0_88, %c0_89] : memref<1x128x64xf32, #tpu.memory_space<vmem>>, vector<1x128x64xf32>
    %264 = vector.shape_cast %263 : vector<1x128x64xf32> to vector<128x64xf32>
    %cst_90 = arith.constant dense<0.000000e+00> : vector<32x64xf32>
    %265 = tpu.matmul %262, %264, %cst_90 {dimension_numbers = #tpu.dot_dimension_numbers<[1], [0], [0], [1], [0, 0, 1, 1], [], []>} : vector<32x128xf32>, vector<128x64xf32>, vector<32x64xf32> -> vector<32x64xf32>
    %266 = arith.mulf %66, %265 : vector<32x64xf32>
    %267 = arith.addf %266, %232 : vector<32x64xf32>
    %c0_91 = arith.constant 0 : index
    %c0_92 = arith.constant 0 : index
    %268 = vector.load %arg12[%c0_91, %c0_92] : memref<32x64xf32, #tpu.memory_space<vmem>>, vector<32x64xf32>
    tpu.vector_store %arg12[%c0_91, %c0_92], %267 {strides = array<i32>} : memref<32x64xf32, #tpu.memory_space<vmem>>, vector<32x64xf32>,
    return
  }
  func.func @transform_0(%arg0: i32) -> (i32, i32) {
    %c0_i32 = arith.constant 0 : i32
    %c0_i32_0 = arith.constant 0 : i32
    %c0_i32_1 = arith.constant 0 : i32
    return %c0_i32, %c0_i32_0 : i32, i32
  }
  func.func @transform_1(%arg0: i32) -> (i32, i32) {
    %c0_i32 = arith.constant 0 : i32
    %c0_i32_0 = arith.constant 0 : i32
    %c0_i32_1 = arith.constant 0 : i32
    return %c0_i32, %c0_i32_0 : i32, i32
  }
  func.func @transform_2(%arg0: i32) -> (i32, i32, i32, i32) {
    %c0_i32 = arith.constant 0 : i32
    %c0_i32_0 = arith.constant 0 : i32
    %c0_i32_1 = arith.constant 0 : i32
    %c0_i32_2 = arith.constant 0 : i32
    %c0_i32_3 = arith.constant 0 : i32
    return %c0_i32, %c0_i32_0, %c0_i32_1, %c0_i32_2 : i32, i32, i32, i32
  }
  func.func @transform_3(%arg0: i32) -> (i32, i32, i32) {
    %c0_i32 = arith.constant 0 : i32
    %c0_i32_0 = arith.constant 0 : i32
    %c0_i32_1 = arith.constant 0 : i32
    return %arg0, %c0_i32, %c0_i32_0 : i32, i32, i32
  }
  func.func @transform_4(%arg0: i32) -> (i32, i32, i32) {
    %c0_i32 = arith.constant 0 : i32
    %c0_i32_0 = arith.constant 0 : i32
    %c0_i32_1 = arith.constant 0 : i32
    return %arg0, %c0_i32, %c0_i32_0 : i32, i32, i32
  }
  func.func @transform_5(%arg0: i32) -> (i32, i32, i32) {
    %c0_i32 = arith.constant 0 : i32
    %c0_i32_0 = arith.constant 0 : i32
    %c0_i32_1 = arith.constant 0 : i32
    return %arg0, %c0_i32, %c0_i32_0 : i32, i32, i32
  }
  func.func @transform_6(%arg0: i32) -> (i32, i32, i32) {
    %c0_i32 = arith.constant 0 : i32
    %c0_i32_0 = arith.constant 0 : i32
    %c0_i32_1 = arith.constant 0 : i32
    return %arg0, %c0_i32, %c0_i32_0 : i32, i32, i32
  }
  func.func @transform_7(%arg0: i32) -> (i32, i32, i32) {
    %c0_i32 = arith.constant 0 : i32
    %c0_i32_0 = arith.constant 0 : i32
    %c0_i32_1 = arith.constant 0 : i32
    return %arg0, %c0_i32, %c0_i32_0 : i32, i32, i32
  }
  func.func @transform_8(%arg0: i32) -> (i32, i32, i32) {
    %c0_i32 = arith.constant 0 : i32
    %c0_i32_0 = arith.constant 0 : i32
    %c0_i32_1 = arith.constant 0 : i32
    return %arg0, %c0_i32, %c0_i32_0 : i32, i32, i32
  }
  func.func @transform_9(%arg0: i32) -> (i32, i32, i32) {
    %c0_i32 = arith.constant 0 : i32
    %c0_i32_0 = arith.constant 0 : i32
    %c0_i32_1 = arith.constant 0 : i32
    return %arg0, %c0_i32, %c0_i32_0 : i32, i32, i32
  }
  func.func @transform_10(%arg0: i32) -> (i32, i32, i32) {
    %c0_i32 = arith.constant 0 : i32
    %c0_i32_0 = arith.constant 0 : i32
    %c0_i32_1 = arith.constant 0 : i32
    return %arg0, %c0_i32, %c0_i32_0 : i32, i32, i32
  }
  func.func @transform_11(%arg0: i32) -> (i32, i32) {
    %c0_i32 = arith.constant 0 : i32
    %c0_i32_0 = arith.constant 0 : i32
    %c0_i32_1 = arith.constant 0 : i32
    return %c0_i32, %c0_i32_0 : i32, i32
  }
}

</mosaic_0001>

<llo_original>
// kernel: tpu_custom_call.1
$region0: #{tpu_custom_call.1}
  #allocation0 [shape = 'u32[]', space=smem, size = 0x4, offset = 0x4, fixed_abs, tag = 'smem constant byte address 0x4 - core index']
  #allocation1 [shape = 'u32[144,128]{1,0:T(1,128)}', space=vmem, size = 0x12000, scoped, tag = 'internal scratch']
  #allocation2 [shape = 'f32[32,64]{1,0:T(8,128)}', space=vmem, size = 0x4000, scoped, tag = 'scratch operand']
  %s0 = inlined_call_operand.hbm [shape: f32[32,64], index: 0, kind: input, shape index: {}]
  %s1 = inlined_call_operand.hbm [shape: f32[32,32], index: 1, kind: input, shape index: {}]
  %s2 = inlined_call_operand.hbm [shape: f32[2,16,16,16], index: 2, kind: input, shape index: {}]
  %s3 = inlined_call_operand.vmem [shape: f32[2,32,256], index: 3, kind: input, shape index: {}]
  %s4 = inlined_call_operand.hbm [shape: f32[2,32,128], index: 4, kind: input, shape index: {}]
  %s5 = inlined_call_operand.vmem [shape: f32[2,64,256], index: 5, kind: input, shape index: {}]
  %s6 = inlined_call_operand.hbm [shape: f32[2,64,64], index: 6, kind: input, shape index: {}]
  %s7 = inlined_call_operand.hbm [shape: f32[2,4,16], index: 7, kind: input, shape index: {}]
  %s8 = inlined_call_operand.vmem [shape: f32[2,8,64], index: 8, kind: input, shape index: {}]
  %s9 = inlined_call_operand.hbm [shape: f32[2,64,256], index: 9, kind: input, shape index: {}]
  %s10 = inlined_call_operand.vmem [shape: f32[2,128,64], index: 10, kind: input, shape index: {}]
  %s11 = inlined_call_operand.hbm [shape: f32[32,64], index: 11, kind: output, shape index: {}]
  %s12 = sld [smem:[#allocation0]]
  $region109: #{tpu_custom_call.1} parent=0
    _
  %s14 = ssub.s32 1, %s12
  %s15 = scalar_select 0, %s14, %s12
  $region1: #{tpu_custom_call.1} parent=0
    #allocation3 [shape = 'u8[16384]{0}', space=vmem, size = 0x4000, scoped, tag = 'input window, operand 0, single buffered']
    #allocation4 [shape = 's32[2]{0}', space=sflag, size = 0x8, scoped, tag = 'scoped memory for tpu_custom_call.1']
    #allocation5 [shape = 's32[2]{0}', space=sflag, size = 0x8, scoped, tag = 'scoped memory for tpu_custom_call.1']
    #allocation6 [shape = 'u8[16384]{0}', space=vmem, size = 0x4000, scoped, tag = 'input window, operand 1, single buffered']
    #allocation7 [shape = 's32[1]{0}', space=sflag, size = 0x4, scoped, tag = 'scoped memory for tpu_custom_call.1']
    #allocation8 [shape = 'u8[262144]{0}', space=vmem, size = 0x40000, scoped, tag = 'input window, operand 2, single buffered']
    #allocation9 [shape = 'u8[32768]{0}', space=vmem, size = 0x8000, scoped, tag = 'input window, operand 4']
    #allocation10 [shape = 's32[2]{0}', space=sflag, size = 0x8, scoped, tag = 'scoped memory for tpu_custom_call.1']
    #allocation11 [shape = 'u8[65536]{0}', space=vmem, size = 0x10000, scoped, tag = 'input window, operand 6']
    #allocation12 [shape = 'u8[4096]{0}', space=vmem, size = 0x1000, scoped, tag = 'input window, operand 7']
    #allocation13 [shape = 's32[2]{0}', space=sflag, size = 0x8, scoped, tag = 'scoped memory for tpu_custom_call.1']
    #allocation14 [shape = 'u8[131072]{0}', space=vmem, size = 0x20000, scoped, tag = 'input window, operand 9']
    #allocation15 [shape = 'u8[16384]{0}', space=vmem, size = 0x4000, scoped, tag = 'output window, operand 0, single buffered']
    %16 = vsyncpa [#allocation4], 0
    %17 = vsyncpa [#allocation7], 0
    %18 = vsyncpa [#allocation10], 0
    %s19 = scalar_lea.sflag [#allocation10], 1
    %20 = vsyncpa %s19, 0
    %21 = vsyncpa [#allocation13], 0
    %s22 = scalar_lea.sflag [#allocation13], 1
    %23 = vsyncpa %s22, 0
    %24 = vsyncpa [#allocation5], 0
    loop: start=0, step=1, limit=4
    $region2: #{tpu_custom_call.1} parent=1 // loop_pre_header
      _
    $region3: #{tpu_custom_call.1} parent=1 // loop_header
      %s26 = sphi 0, %s30
      %p27 = scmp.ge.s32.totalorder %s26, 4
      %s34 = sphi 0, %s34
      %s36 = sphi 0, %s34
      %s37 = sphi 0, %s36
      %s51 = sphi 0, %s37
      %s55 = sphi 0, %s55
      %s57 = sphi 0, %s55
      %s58 = sphi 0, %s57
      %s72 = sphi 0, %s58
      %s76 = sphi 0, %s76
      %s78 = sphi 0, %s76
      %s79 = sphi 0, %s78
      %s93 = sphi 0, %s79
      %s99 = sphi 0, %s101
      %s102 = sphi 0, %s99
      %s103 = sphi 0, %s102
      %s119 = sphi 0, %s103
      %s125 = sphi 0, %s127
      %s128 = sphi 0, %s125
      %s129 = sphi 0, %s128
      %s145 = sphi 0, %s129
      %s151 = sphi 0, %s153
      %s154 = sphi 0, %s151
      %s155 = sphi 0, %s154
      %s171 = sphi 0, %s155
      %s177 = sphi 0, %s179
      %s180 = sphi 0, %s177
      %s181 = sphi 0, %s180
      %s197 = sphi 0, %s181
      %s203 = sphi 0, %s205
      %s206 = sphi 0, %s203
      %s207 = sphi 0, %s206
      %s223 = sphi 0, %s207
      %s229 = sphi 0, %s231
      %s232 = sphi 0, %s229
      %s233 = sphi 0, %s232
      %s249 = sphi 0, %s233
      %s255 = sphi 0, %s257
      %s258 = sphi 0, %s255
      %s259 = sphi 0, %s258
      %s275 = sphi 0, %s259
      %s281 = sphi 0, %s283
      %s284 = sphi 0, %s281
      %s285 = sphi 0, %s284
      %s301 = sphi 0, %s285
      %s305 = sphi 0, %s305
      %s307 = sphi 0, %s305
      %s308 = sphi 0, %s307
      %s322 = sphi 0, %s308
    $region4: #{tpu_custom_call.1} parent=1 // loop_header_branch
      %29 = sbr.rel (%p27) target = $region8
    $region5: #{tpu_custom_call.1} parent=1 // loop_body
      %s31 = ssub.s32 %s26, 1
      %s32 = ssub.s32 %s26, 2
      %s33 = sadd.s32 %s26, 1
      %s35 = sadd.s32 %s34, 1
      %p38 = scmp.eq.s32.totalorder %s26, 1
      %p39 = scmp.ne.s32.totalorder %s34, %s36
      %p40 = scmp.eq.s32.totalorder %s26, 0
      %p41 = por %p39, %p40
      %p42 = scmp.ne.s32.totalorder %s34, %s36
      %p43 = scmp.eq.s32.totalorder %s31, 1
      %p44 = por %p42, %p43
      %p45 = scmp.ne.s32.totalorder %s36, %s37
      %p46 = scmp.eq.s32.totalorder %s31, 0
      %p47 = por %p45, %p46
      %p48 = scmp.ne.s32.totalorder %s36, %s37
      %p49 = scmp.eq.s32.totalorder %s32, 1
      %p50 = por %p48, %p49
      %p52 = scmp.ne.s32.totalorder %s37, %s51
      %p53 = scmp.eq.s32.totalorder %s32, 0
      %p54 = por %p52, %p53
      %s56 = sadd.s32 %s55, 1
      %p59 = scmp.eq.s32.totalorder %s26, 1
      %p60 = scmp.ne.s32.totalorder %s55, %s57
      %p61 = scmp.eq.s32.totalorder %s26, 0
      %p62 = por %p60, %p61
      %p63 = scmp.ne.s32.totalorder %s55, %s57
      %p64 = scmp.eq.s32.totalorder %s31, 1
      %p65 = por %p63, %p64
      %p66 = scmp.ne.s32.totalorder %s57, %s58
      %p67 = scmp.eq.s32.totalorder %s31, 0
      %p68 = por %p66, %p67
      %p69 = scmp.ne.s32.totalorder %s57, %s58
      %p70 = scmp.eq.s32.totalorder %s32, 1
      %p71 = por %p69, %p70
      %p73 = scmp.ne.s32.totalorder %s58, %s72
      %p74 = scmp.eq.s32.totalorder %s32, 0
      %p75 = por %p73, %p74
      %s77 = sadd.s32 %s76, 1
      %p80 = scmp.eq.s32.totalorder %s26, 1
      %p81 = scmp.ne.s32.totalorder %s76, %s78
      %p82 = scmp.eq.s32.totalorder %s26, 0
      %p83 = por %p81, %p82
      %p84 = scmp.ne.s32.totalorder %s76, %s78
      %p85 = scmp.eq.s32.totalorder %s31, 1
      %p86 = por %p84, %p85
      %p87 = scmp.ne.s32.totalorder %s78, %s79
      %p88 = scmp.eq.s32.totalorder %s31, 0
      %p89 = por %p87, %p88
      %p90 = scmp.ne.s32.totalorder %s78, %s79
      %p91 = scmp.eq.s32.totalorder %s32, 1
      %p92 = por %p90, %p91
      %p94 = scmp.ne.s32.totalorder %s79, %s93
      %p95 = scmp.eq.s32.totalorder %s32, 0
      %p96 = por %p94, %p95
      %s97 = ssub.s32 %s26, %s33
      %p98 = scmp.eq.s32.totalorder %s97, 0
      %s100 = sadd.s32 %s99, 1
      %s101 = scalar_select %p98, %s99, %s100
      %p104 = pneg %p98
      %p105 = scmp.eq.s32.totalorder %s26, 1
      %p106 = por %p104, %p105
      %p107 = scmp.ne.s32.totalorder %s99, %s102
      %p108 = scmp.eq.s32.totalorder %s26, 0
      %p109 = por %p107, %p108
      %p110 = scmp.ne.s32.totalorder %s99, %s102
      %p111 = scmp.eq.s32.totalorder %s31, 1
      %p112 = por %p110, %p111
      %p113 = scmp.ne.s32.totalorder %s102, %s103
      %p114 = scmp.eq.s32.totalorder %s31, 0
      %p115 = por %p113, %p114
      %p116 = scmp.ne.s32.totalorder %s102, %s103
      %p117 = scmp.eq.s32.totalorder %s32, 1
      %p118 = por %p116, %p117
      %p120 = scmp.ne.s32.totalorder %s103, %s119
      %p121 = scmp.eq.s32.totalorder %s32, 0
      %p122 = por %p120, %p121
      %s123 = ssub.s32 %s26, %s33
      %p124 = scmp.eq.s32.totalorder %s123, 0
      %s126 = sadd.s32 %s125, 1
      %s127 = scalar_select %p124, %s125, %s126
      %p130 = pneg %p124
      %p131 = scmp.eq.s32.totalorder %s26, 1
      %p132 = por %p130, %p131
      %p133 = scmp.ne.s32.totalorder %s125, %s128
      %p134 = scmp.eq.s32.totalorder %s26, 0
      %p135 = por %p133, %p134
      %p136 = scmp.ne.s32.totalorder %s125, %s128
      %p137 = scmp.eq.s32.totalorder %s31, 1
      %p138 = por %p136, %p137
      %p139 = scmp.ne.s32.totalorder %s128, %s129
      %p140 = scmp.eq.s32.totalorder %s31, 0
      %p141 = por %p139, %p140
      %p142 = scmp.ne.s32.totalorder %s128, %s129
      %p143 = scmp.eq.s32.totalorder %s32, 1
      %p144 = por %p142, %p143
      %p146 = scmp.ne.s32.totalorder %s129, %s145
      %p147 = scmp.eq.s32.totalorder %s32, 0
      %p148 = por %p146, %p147
      %s149 = ssub.s32 %s26, %s33
      %p150 = scmp.eq.s32.totalorder %s149, 0
      %s152 = sadd.s32 %s151, 1
      %s153 = scalar_select %p150, %s151, %s152
      %p156 = pneg %p150
      %p157 = scmp.eq.s32.totalorder %s26, 1
      %p158 = por %p156, %p157
      %p159 = scmp.ne.s32.totalorder %s151, %s154
      %p160 = scmp.eq.s32.totalorder %s26, 0
      %p161 = por %p159, %p160
      %p162 = scmp.ne.s32.totalorder %s151, %s154
      %p163 = scmp.eq.s32.totalorder %s31, 1
      %p164 = por %p162, %p163
      %p165 = scmp.ne.s32.totalorder %s154, %s155
      %p166 = scmp.eq.s32.totalorder %s31, 0
      %p167 = por %p165, %p166
      %p168 = scmp.ne.s32.totalorder %s154, %s155
      %p169 = scmp.eq.s32.totalorder %s32, 1
      %p170 = por %p168, %p169
      %p172 = scmp.ne.s32.totalorder %s155, %s171
      %p173 = scmp.eq.s32.totalorder %s32, 0
      %p174 = por %p172, %p173
      %s175 = ssub.s32 %s26, %s33
      %p176 = scmp.eq.s32.totalorder %s175, 0
      %s178 = sadd.s32 %s177, 1
      %s179 = scalar_select %p176, %s177, %s178
      %p182 = pneg %p176
      %p183 = scmp.eq.s32.totalorder %s26, 1
      %p184 = por %p182, %p183
      %p185 = scmp.ne.s32.totalorder %s177, %s180
      %p186 = scmp.eq.s32.totalorder %s26, 0
      %p187 = por %p185, %p186
      %p188 = scmp.ne.s32.totalorder %s177, %s180
      %p189 = scmp.eq.s32.totalorder %s31, 1
      %p190 = por %p188, %p189
      %p191 = scmp.ne.s32.totalorder %s180, %s181
      %p192 = scmp.eq.s32.totalorder %s31, 0
      %p193 = por %p191, %p192
      %p194 = scmp.ne.s32.totalorder %s180, %s181
      %p195 = scmp.eq.s32.totalorder %s32, 1
      %p196 = por %p194, %p195
      %p198 = scmp.ne.s32.totalorder %s181, %s197
      %p199 = scmp.eq.s32.totalorder %s32, 0
      %p200 = por %p198, %p199
      %s201 = ssub.s32 %s26, %s33
      %p202 = scmp.eq.s32.totalorder %s201, 0
      %s204 = sadd.s32 %s203, 1
      %s205 = scalar_select %p202, %s203, %s204
      %p208 = pneg %p202
      %p209 = scmp.eq.s32.totalorder %s26, 1
      %p210 = por %p208, %p209
      %p211 = scmp.ne.s32.totalorder %s203, %s206
      %p212 = scmp.eq.s32.totalorder %s26, 0
      %p213 = por %p211, %p212
      %p214 = scmp.ne.s32.totalorder %s203, %s206
      %p215 = scmp.eq.s32.totalorder %s31, 1
      %p216 = por %p214, %p215
      %p217 = scmp.ne.s32.totalorder %s206, %s207
      %p218 = scmp.eq.s32.totalorder %s31, 0
      %p219 = por %p217, %p218
      %p220 = scmp.ne.s32.totalorder %s206, %s207
      %p221 = scmp.eq.s32.totalorder %s32, 1
      %p222 = por %p220, %p221
      %p224 = scmp.ne.s32.totalorder %s207, %s223
      %p225 = scmp.eq.s32.totalorder %s32, 0
      %p226 = por %p224, %p225
      %s227 = ssub.s32 %s26, %s33
      %p228 = scmp.eq.s32.totalorder %s227, 0
      %s230 = sadd.s32 %s229, 1
      %s231 = scalar_select %p228, %s229, %s230
      %p234 = pneg %p228
      %p235 = scmp.eq.s32.totalorder %s26, 1
      %p236 = por %p234, %p235
      %p237 = scmp.ne.s32.totalorder %s229, %s232
      %p238 = scmp.eq.s32.totalorder %s26, 0
      %p239 = por %p237, %p238
      %p240 = scmp.ne.s32.totalorder %s229, %s232
      %p241 = scmp.eq.s32.totalorder %s31, 1
      %p242 = por %p240, %p241
      %p243 = scmp.ne.s32.totalorder %s232, %s233
      %p244 = scmp.eq.s32.totalorder %s31, 0
      %p245 = por %p243, %p244
      %p246 = scmp.ne.s32.totalorder %s232, %s233
      %p247 = scmp.eq.s32.totalorder %s32, 1
      %p248 = por %p246, %p247
      %p250 = scmp.ne.s32.totalorder %s233, %s249
      %p251 = scmp.eq.s32.totalorder %s32, 0
      %p252 = por %p250, %p251
      %s253 = ssub.s32 %s26, %s33
      %p254 = scmp.eq.s32.totalorder %s253, 0
      %s256 = sadd.s32 %s255, 1
      %s257 = scalar_select %p254, %s255, %s256
      %p260 = pneg %p254
      %p261 = scmp.eq.s32.totalorder %s26, 1
      %p262 = por %p260, %p261
      %p263 = scmp.ne.s32.totalorder %s255, %s258
      %p264 = scmp.eq.s32.totalorder %s26, 0
      %p265 = por %p263, %p264
      %p266 = scmp.ne.s32.totalorder %s255, %s258
      %p267 = scmp.eq.s32.totalorder %s31, 1
      %p268 = por %p266, %p267
      %p269 = scmp.ne.s32.totalorder %s258, %s259
      %p270 = scmp.eq.s32.totalorder %s31, 0
      %p271 = por %p269, %p270
      %p272 = scmp.ne.s32.totalorder %s258, %s259
      %p273 = scmp.eq.s32.totalorder %s32, 1
      %p274 = por %p272, %p273
      %p276 = scmp.ne.s32.totalorder %s259, %s275
      %p277 = scmp.eq.s32.totalorder %s32, 0
      %p278 = por %p276, %p277
      %s279 = ssub.s32 %s26, %s33
      %p280 = scmp.eq.s32.totalorder %s279, 0
      %s282 = sadd.s32 %s281, 1
      %s283 = scalar_select %p280, %s281, %s282
      %p286 = pneg %p280
      %p287 = scmp.eq.s32.totalorder %s26, 1
      %p288 = por %p286, %p287
      %p289 = scmp.ne.s32.totalorder %s281, %s284
      %p290 = scmp.eq.s32.totalorder %s26, 0
      %p291 = por %p289, %p290
      %p292 = scmp.ne.s32.totalorder %s281, %s284
      %p293 = scmp.eq.s32.totalorder %s31, 1
      %p294 = por %p292, %p293
      %p295 = scmp.ne.s32.totalorder %s284, %s285
      %p296 = scmp.eq.s32.totalorder %s31, 0
      %p297 = por %p295, %p296
      %p298 = scmp.ne.s32.totalorder %s284, %s285
      %p299 = scmp.eq.s32.totalorder %s32, 1
      %p300 = por %p298, %p299
      %p302 = scmp.ne.s32.totalorder %s285, %s301
      %p303 = scmp.eq.s32.totalorder %s32, 0
      %p304 = por %p302, %p303
      %s306 = sadd.s32 %s305, 1
      %p309 = scmp.eq.s32.totalorder %s26, 1
      %p310 = scmp.ne.s32.totalorder %s305, %s307
      %p311 = scmp.eq.s32.totalorder %s26, 0
      %p312 = por %p310, %p311
      %p313 = scmp.ne.s32.totalorder %s305, %s307
      %p314 = scmp.eq.s32.totalorder %s31, 1
      %p315 = por %p313, %p314
      %p316 = scmp.ne.s32.totalorder %s307, %s308
      %p317 = scmp.eq.s32.totalorder %s31, 0
      %p318 = por %p316, %p317
      %p319 = scmp.ne.s32.totalorder %s307, %s308
      %p320 = scmp.eq.s32.totalorder %s32, 1
      %p321 = por %p319, %p320
      %p323 = scmp.ne.s32.totalorder %s308, %s322
      %p324 = scmp.eq.s32.totalorder %s32, 0
      %p325 = por %p323, %p324
      %p326 = scmp.le.s32.totalorder 1, %s26
      %p327 = scmp.lt.s32.totalorder %s26, 3
      %p328 = pnand %p326, %p327
      %p329 = pneg %p328
      // Predicated region
      $region9: #{tpu_custom_call.1} parent=5 // pred_check
        _
      $region10: #{tpu_custom_call.1} parent=5 // pred_check_branch
        %331 = sbr.rel (%p328) target = $region12
      $region11: #{tpu_custom_call.1} parent=5 // pred_region
        %s332 = ssub.s32 %s26, 1
        // Predicated region
        $region13: #{tpu_custom_call.1} parent=11 // pred_check
          %p333 = pneg %p47
        $region14: #{tpu_custom_call.1} parent=11 // pred_check_branch
          %335 = sbr.rel (%p333) target = $region16
        $region15: #{tpu_custom_call.1} parent=11 // pred_region
          %s337 = ssub.s32 512, 512
          %338 = vsyncadd [#allocation4], %s337
          %s339 = sshll.u32 [#allocation3], 4
          %s340 = int_to_ptr.vmem [resolvable:$true] %s339
          %345 = dma.hbm_to_vmem [thread:$0]  %s0, 512, %s340, [#allocation4], 128, 128, 8
        $region16: #{tpu_custom_call.1} parent=11 // pred_fallthru
          _
        // Predicated region
        $region17: #{tpu_custom_call.1} parent=11 // pred_check
          %p346 = pneg %p68
        $region18: #{tpu_custom_call.1} parent=11 // pred_check_branch
          %348 = sbr.rel (%p346) target = $region20
        $region19: #{tpu_custom_call.1} parent=11 // pred_region
          %s350 = ssub.s32 512, 512
          %351 = vsyncadd [#allocation7], %s350
          %s352 = sshll.u32 [#allocation6], 4
          %s353 = int_to_ptr.vmem [resolvable:$true] %s352
          %358 = dma.hbm_to_vmem [thread:$0]  %s1, 512, %s353, [#allocation7], 128, 128, 8
        $region20: #{tpu_custom_call.1} parent=11 // pred_fallthru
          _
        // Predicated region
        $region21: #{tpu_custom_call.1} parent=11 // pred_check
          %p359 = pneg %p89
        $region22: #{tpu_custom_call.1} parent=11 // pred_check_branch
          %361 = sbr.rel (%p359) target = $region24
        $region23: #{tpu_custom_call.1} parent=11 // pred_region
          %s363 = ssub.s32 8192, 8192
          %364 = vsyncadd [#allocation7], %s363
          %s365 = sshll.u32 [#allocation8], 4
          %s366 = int_to_ptr.vmem [resolvable:$true] %s365
          %371 = dma.hbm_to_vmem [thread:$0]  %s2, 8192, %s366, [#allocation7], 128, 128, 8
        $region24: #{tpu_custom_call.1} parent=11 // pred_fallthru
          _
      $region12: #{tpu_custom_call.1} parent=5 // pred_fallthru
        _
      %p372 = scmp.lt.s32.totalorder %s26, 2
      // Predicated region
      $region25: #{tpu_custom_call.1} parent=5 // pred_check
        %p373 = pneg %p372
      $region26: #{tpu_custom_call.1} parent=5 // pred_check_branch
        %375 = sbr.rel (%p373) target = $region28
      $region27: #{tpu_custom_call.1} parent=5 // pred_region
        // Predicated region
        $region29: #{tpu_custom_call.1} parent=27 // pred_check
          %p376 = pneg %p109
        $region30: #{tpu_custom_call.1} parent=27 // pred_check_branch
          %378 = sbr.rel (%p376) target = $region32
        $region31: #{tpu_custom_call.1} parent=27 // pred_region
          %p379 = scmp.lt.s32.totalorder %s26, 1
          %s380 = scalar_select %p379, %s26, 1
          %s381 = smul.addr %s380, 8
          %s382 = smul.addr %s381, 8
          %s383 = scalar_lea.vmem %s3, %s382
        $region32: #{tpu_custom_call.1} parent=27 // pred_fallthru
          _
        // Predicated region
        $region33: #{tpu_custom_call.1} parent=27 // pred_check
          %p384 = pneg %p135
        $region34: #{tpu_custom_call.1} parent=27 // pred_check_branch
          %386 = sbr.rel (%p384) target = $region36
        $region35: #{tpu_custom_call.1} parent=27 // pred_region
          %s387 = sand.u32 %s26, 1
          %s388 = scalar_lea.sflag [#allocation10], %s387
          %s389 = sand.u32 %s125, 1
          %s390 = smul.addr %s389, 32
          %s391 = scalar_lea.vmem [#allocation9], %s390
          %s393 = ssub.s32 512, 512
          %394 = vsyncadd %s388, %s393
          %s395 = smul.addr %s26, 4
          %s396 = smul.addr %s395, 128
          %s397 = scalar_lea.hbm %s4, %s396
          %s398 = sshll.u32 %s391, 4
          %s399 = int_to_ptr.vmem [resolvable:$true] %s398
          %404 = dma.hbm_to_vmem [thread:$0]  %s397, 512, %s399, %s388, 128, 128, 8
        $region36: #{tpu_custom_call.1} parent=27 // pred_fallthru
          _
        // Predicated region
        $region37: #{tpu_custom_call.1} parent=27 // pred_check
          %p405 = pneg %p161
        $region38: #{tpu_custom_call.1} parent=27 // pred_check_branch
          %407 = sbr.rel (%p405) target = $region40
        $region39: #{tpu_custom_call.1} parent=27 // pred_region
          %p408 = scmp.lt.s32.totalorder %s26, 1
          %s409 = scalar_select %p408, %s26, 1
          %s410 = smul.addr %s409, 16
          %s411 = smul.addr %s410, 8
          %s412 = scalar_lea.vmem %s5, %s411
        $region40: #{tpu_custom_call.1} parent=27 // pred_fallthru
          _
        // Predicated region
        $region41: #{tpu_custom_call.1} parent=27 // pred_check
          %p413 = pneg %p187
        $region42: #{tpu_custom_call.1} parent=27 // pred_check_branch
          %415 = sbr.rel (%p413) target = $region44
        $region43: #{tpu_custom_call.1} parent=27 // pred_region
          %s416 = sand.u32 %s26, 1
          %s417 = scalar_lea.sflag [#allocation10], %s416
          %s418 = sand.u32 %s177, 1
          %s419 = smul.addr %s418, 64
          %s420 = scalar_lea.vmem [#allocation11], %s419
          %s422 = ssub.s32 1024, 1024
          %423 = vsyncadd %s417, %s422
          %s424 = smul.addr %s26, 8
          %s425 = smul.addr %s424, 128
          %s426 = scalar_lea.hbm %s6, %s425
          %s427 = sshll.u32 %s420, 4
          %s428 = int_to_ptr.vmem [resolvable:$true] %s427
          %433 = dma.hbm_to_vmem [thread:$0]  %s426, 1024, %s428, %s417, 128, 128, 8
        $region44: #{tpu_custom_call.1} parent=27 // pred_fallthru
          _
        // Predicated region
        $region45: #{tpu_custom_call.1} parent=27 // pred_check
          %p434 = pneg %p213
        $region46: #{tpu_custom_call.1} parent=27 // pred_check_branch
          %436 = sbr.rel (%p434) target = $region48
        $region47: #{tpu_custom_call.1} parent=27 // pred_region
          %s437 = sand.u32 %s26, 1
          %s438 = scalar_lea.sflag [#allocation13], %s437
          %s439 = sand.u32 %s203, 1
          %s440 = smul.addr %s439, 4
          %s441 = scalar_lea.vmem [#allocation12], %s440
          %s443 = ssub.s32 64, 64
          %444 = vsyncadd %s438, %s443
          %s445 = smul.addr %s26, 64
          %s446 = scalar_lea.hbm %s7, %s445
          %s448 = sshll.u32 %s441, 4
          %s449 = int_to_ptr.vmem [resolvable:$true] %s448
          %451 = dma.hbm_to_vmem [thread:$0]  %s446, 64, %s449, %s438
        $region48: #{tpu_custom_call.1} parent=27 // pred_fallthru
          _
        // Predicated region
        $region49: #{tpu_custom_call.1} parent=27 // pred_check
          %p452 = pneg %p239
        $region50: #{tpu_custom_call.1} parent=27 // pred_check_branch
          %454 = sbr.rel (%p452) target = $region52
        $region51: #{tpu_custom_call.1} parent=27 // pred_region
          %p455 = scmp.lt.s32.totalorder %s26, 1
          %s456 = scalar_select %p455, %s26, 1
          %s457 = smul.addr %s456, 8
          %s458 = scalar_lea.vmem %s8, %s457
        $region52: #{tpu_custom_call.1} parent=27 // pred_fallthru
          _
        // Predicated region
        $region53: #{tpu_custom_call.1} parent=27 // pred_check
          %p459 = pneg %p265
        $region54: #{tpu_custom_call.1} parent=27 // pred_check_branch
          %461 = sbr.rel (%p459) target = $region56
        $region55: #{tpu_custom_call.1} parent=27 // pred_region
          %s462 = sand.u32 %s26, 1
          %s463 = scalar_lea.sflag [#allocation13], %s462
          %s464 = sand.u32 %s255, 1
          %s465 = smul.addr %s464, 128
          %s466 = scalar_lea.vmem [#allocation14], %s465
          %s468 = ssub.s32 2048, 2048
          %469 = vsyncadd %s463, %s468
          %s470 = smul.addr %s26, 16
          %s471 = smul.addr %s470, 128
          %s472 = scalar_lea.hbm %s9, %s471
          %s473 = sshll.u32 %s466, 4
          %s474 = int_to_ptr.vmem [resolvable:$true] %s473
          %479 = dma.hbm_to_vmem [thread:$0]  %s472, 2048, %s474, %s463, 256, 256, 16
        $region56: #{tpu_custom_call.1} parent=27 // pred_fallthru
          _
        // Predicated region
        $region57: #{tpu_custom_call.1} parent=27 // pred_check
          %p480 = pneg %p291
        $region58: #{tpu_custom_call.1} parent=27 // pred_check_branch
          %482 = sbr.rel (%p480) target = $region60
        $region59: #{tpu_custom_call.1} parent=27 // pred_region
          %p483 = scmp.lt.s32.totalorder %s26, 1
          %s484 = scalar_select %p483, %s26, 1
          %s485 = smul.addr %s484, 16
          %s486 = smul.addr %s485, 8
          %s487 = scalar_lea.vmem %s10, %s486
        $region60: #{tpu_custom_call.1} parent=27 // pred_fallthru
          _
      $region28: #{tpu_custom_call.1} parent=5 // pred_fallthru
        _
      %p488 = scmp.le.s32.totalorder 1, %s26
      %p489 = scmp.lt.s32.totalorder %s26, 3
      %p490 = pnand %p488, %p489
      %p491 = pneg %p490
      // Predicated region
      $region61: #{tpu_custom_call.1} parent=5 // pred_check
        _
      $region62: #{tpu_custom_call.1} parent=5 // pred_check_branch
        %493 = sbr.rel (%p490) target = $region64
      $region63: #{tpu_custom_call.1} parent=5 // pred_region
        %s494 = ssub.s32 %s26, 1
        // Predicated region
        $region65: #{tpu_custom_call.1} parent=63 // pred_check
          %p495 = pneg %p47
        $region66: #{tpu_custom_call.1} parent=63 // pred_check_branch
          %497 = sbr.rel (%p495) target = $region68
        $region67: #{tpu_custom_call.1} parent=63 // pred_region
          %498 = dma.done [#allocation4], 512
        $region68: #{tpu_custom_call.1} parent=63 // pred_fallthru
          _
        // Predicated region
        $region69: #{tpu_custom_call.1} parent=63 // pred_check
          %p499 = pneg %p68
        $region70: #{tpu_custom_call.1} parent=63 // pred_check_branch
          %501 = sbr.rel (%p499) target = $region72
        $region71: #{tpu_custom_call.1} parent=63 // pred_region
          %502 = dma.done [#allocation7], 512
        $region72: #{tpu_custom_call.1} parent=63 // pred_fallthru
          _
        // Predicated region
        $region73: #{tpu_custom_call.1} parent=63 // pred_check
          %p503 = pneg %p89
        $region74: #{tpu_custom_call.1} parent=63 // pred_check_branch
          %505 = sbr.rel (%p503) target = $region76
        $region75: #{tpu_custom_call.1} parent=63 // pred_region
          %506 = dma.done [#allocation7], 8192
        $region76: #{tpu_custom_call.1} parent=63 // pred_fallthru
          _
        %s507 = sand.u32 %s31, 1
        %s508 = scalar_lea.sflag [#allocation10], %s507
        %s509 = sand.u32 %s128, 1
        %s510 = smul.addr %s509, 32
        %s511 = scalar_lea.vmem [#allocation9], %s510
        // Predicated region
        $region77: #{tpu_custom_call.1} parent=63 // pred_check
          %p512 = pneg %p141
        $region78: #{tpu_custom_call.1} parent=63 // pred_check_branch
          %514 = sbr.rel (%p512) target = $region80
        $region79: #{tpu_custom_call.1} parent=63 // pred_region
          %515 = dma.done %s508, 512
        $region80: #{tpu_custom_call.1} parent=63 // pred_fallthru
          _
        %s516 = sand.u32 %s31, 1
        %s517 = scalar_lea.sflag [#allocation10], %s516
        %s518 = sand.u32 %s180, 1
        %s519 = smul.addr %s518, 64
        %s520 = scalar_lea.vmem [#allocation11], %s519
        // Predicated region
        $region81: #{tpu_custom_call.1} parent=63 // pred_check
          %p521 = pneg %p193
        $region82: #{tpu_custom_call.1} parent=63 // pred_check_branch
          %523 = sbr.rel (%p521) target = $region84
        $region83: #{tpu_custom_call.1} parent=63 // pred_region
          %524 = dma.done %s517, 1024
        $region84: #{tpu_custom_call.1} parent=63 // pred_fallthru
          _
        %s525 = sand.u32 %s31, 1
        %s526 = scalar_lea.sflag [#allocation13], %s525
        %s527 = sand.u32 %s206, 1
        %s528 = smul.addr %s527, 4
        %s529 = scalar_lea.vmem [#allocation12], %s528
        // Predicated region
        $region85: #{tpu_custom_call.1} parent=63 // pred_check
          %p530 = pneg %p219
        $region86: #{tpu_custom_call.1} parent=63 // pred_check_branch
          %532 = sbr.rel (%p530) target = $region88
        $region87: #{tpu_custom_call.1} parent=63 // pred_region
          %533 = dma.done %s526, 64
        $region88: #{tpu_custom_call.1} parent=63 // pred_fallthru
          _
        %s534 = sand.u32 %s31, 1
        %s535 = scalar_lea.sflag [#allocation13], %s534
        %s536 = sand.u32 %s258, 1
        %s537 = smul.addr %s536, 128
        %s538 = scalar_lea.vmem [#allocation14], %s537
        // Predicated region
        $region89: #{tpu_custom_call.1} parent=63 // pred_check
          %p539 = pneg %p271
        $region90: #{tpu_custom_call.1} parent=63 // pred_check_branch
          %541 = sbr.rel (%p539) target = $region92
        $region91: #{tpu_custom_call.1} parent=63 // pred_region
          %542 = dma.done %s535, 2048
        $region92: #{tpu_custom_call.1} parent=63 // pred_fallthru
          _
        %p543 = pneg %p47
        %p544 = pneg %p44
        %p545 = pneg %p68
        %p546 = pneg %p65
        %p547 = pneg %p89
        %p548 = pneg %p86
        %p549 = scmp.lt.s32.totalorder %s31, 1
        %s550 = scalar_select %p549, %s31, 1
        %s551 = smul.addr %s550, 8
        %s552 = smul.addr %s551, 8
        %s553 = scalar_lea.vmem %s3, %s552
        %p554 = pneg %p115
        %p555 = pneg %p112
        %s556 = sand.u32 %s31, 1
        %s557 = scalar_lea.sflag [#allocation10], %s556
        %s558 = sand.u32 %s128, 1
        %s559 = smul.addr %s558, 32
        %s560 = scalar_lea.vmem [#allocation9], %s559
        %p561 = pneg %p141
        %p562 = pneg %p138
        %p563 = scmp.lt.s32.totalorder %s31, 1
        %s564 = scalar_select %p563, %s31, 1
        %s565 = smul.addr %s564, 16
        %s566 = smul.addr %s565, 8
        %s567 = scalar_lea.vmem %s5, %s566
        %p568 = pneg %p167
        %p569 = pneg %p164
        %s570 = sand.u32 %s31, 1
        %s571 = scalar_lea.sflag [#allocation10], %s570
        %s572 = sand.u32 %s180, 1
        %s573 = smul.addr %s572, 64
        %s574 = scalar_lea.vmem [#allocation11], %s573
        %p575 = pneg %p193
        %p576 = pneg %p190
        %s577 = sand.u32 %s31, 1
        %s578 = scalar_lea.sflag [#allocation13], %s577
        %s579 = sand.u32 %s206, 1
        %s580 = smul.addr %s579, 4
        %s581 = scalar_lea.vmem [#allocation12], %s580
        %p582 = pneg %p219
        %p583 = pneg %p216
        %p584 = scmp.lt.s32.totalorder %s31, 1
        %s585 = scalar_select %p584, %s31, 1
        %s586 = smul.addr %s585, 8
        %s587 = scalar_lea.vmem %s8, %s586
        %p588 = pneg %p245
        %p589 = pneg %p242
        %s590 = sand.u32 %s31, 1
        %s591 = scalar_lea.sflag [#allocation13], %s590
        %s592 = sand.u32 %s258, 1
        %s593 = smul.addr %s592, 128
        %s594 = scalar_lea.vmem [#allocation14], %s593
        %p595 = pneg %p271
        %p596 = pneg %p268
        %p597 = scmp.lt.s32.totalorder %s31, 1
        %s598 = scalar_select %p597, %s31, 1
        %s599 = smul.addr %s598, 16
        %s600 = smul.addr %s599, 8
        %s601 = scalar_lea.vmem %s10, %s600
        %p602 = pneg %p297
        %p603 = pneg %p294
        %p604 = pneg %p318
        %p605 = pneg %p315
        %p606 = scmp.lt.s32.totalorder %s31, 1
        %s607 = scalar_select %p606, %s31, 1
        %s608 = smul.addr %s607, 8
        %s609 = smul.addr %s608, 8
        %s610 = scalar_lea.vmem %s3, %s609
        %p611 = scmp.lt.s32.totalorder %s31, 1
        %s612 = scalar_select %p611, %s31, 1
        %s613 = smul.addr %s612, 16
        %s614 = smul.addr %s613, 8
        %s615 = scalar_lea.vmem %s5, %s614
        %p616 = scmp.lt.s32.totalorder %s31, 1
        %s617 = scalar_select %p616, %s31, 1
        %s618 = smul.addr %s617, 8
        %s619 = scalar_lea.vmem %s8, %s618
        %p620 = scmp.lt.s32.totalorder %s31, 1
        %s621 = scalar_select %p620, %s31, 1
        %s622 = smul.addr %s621, 16
        %s623 = smul.addr %s622, 8
        %s624 = scalar_lea.vmem %s10, %s623
        %p625 = scmp.eq.s32.totalorder %s31, 0
        // Predicated region
        $region93: #{tpu_custom_call.1} parent=63 // pred_check
          %p626 = pneg %p625
        $region94: #{tpu_custom_call.1} parent=63 // pred_check_branch
          %628 = sbr.rel (%p626) target = $region96
        $region95: #{tpu_custom_call.1} parent=63 // pred_region
          %v629 = vld [vmem:[#allocation3] sm:$0xff]
          %v630 = vld [vmem:[#allocation3 + $0x8] sm:$0xff]
          %v631 = vld [vmem:[#allocation3 + $0x10] sm:$0xff]
          %v632 = vld [vmem:[#allocation3 + $0x18] sm:$0xff]
          %vm633 = vcmask 523264
          %634 = vst.msk [vmem:[#allocation15] sm:$0xff] %vm633, %v629
          %635 = vst.msk [vmem:[#allocation15 + $0x8] sm:$0xff] %vm633, %v630
          %636 = vst.msk [vmem:[#allocation15 + $0x10] sm:$0xff] %vm633, %v631
          %637 = vst.msk [vmem:[#allocation15 + $0x18] sm:$0xff] %vm633, %v632
        $region96: #{tpu_custom_call.1} parent=63 // pred_fallthru
          _
        %v638 = vld [vmem:[#allocation15] sm:$0xff]
        %v639 = vld [vmem:[#allocation15 + $0x8] sm:$0xff]
        %v640 = vld [vmem:[#allocation15 + $0x10] sm:$0xff]
        %v641 = vld [vmem:[#allocation15 + $0x18] sm:$0xff]
        %v642 = vld [vmem:[#allocation6] sm:$0xff]
        %v643 = vld [vmem:[#allocation6 + $0x8] sm:$0xff]
        %v644 = vld [vmem:[#allocation6 + $0x10] sm:$0xff]
        %v645 = vld [vmem:[#allocation6 + $0x18] sm:$0xff]
        %v646 = vld [vmem:[%s619] sm:$0xff]
        %vm647 = vcmask 261120
        %v648 = vsel %vm647, %v642, 0.0
        %649 = vadd.xlane.f32.xlu0 %v648
        %v650 = vpop.xlane.xlu0 %649
        %v651 = vsel %vm647, %v643, 0.0
        %652 = vadd.xlane.f32.xlu0 %v651
        %v653 = vpop.xlane.xlu0 %652
        %v654 = vsel %vm647, %v644, 0.0
        %655 = vadd.xlane.f32.xlu0 %v654
        %v656 = vpop.xlane.xlu0 %655
        %v657 = vsel %vm647, %v645, 0.0
        %658 = vadd.xlane.f32.xlu0 %v657
        %v659 = vpop.xlane.xlu0 %658
        %v660 = vrcp.pop 32.0
        %v661 = vmul.f32 %v650, %v660
        %v662 = vmul.f32 %v653, %v660
        %v663 = vmul.f32 %v656, %v660
        %v664 = vmul.f32 %v659, %v660
        %v665 = vsub.f32 %v642, %v661
        %v666 = vsub.f32 %v643, %v662
        %v667 = vsub.f32 %v644, %v663
        %v668 = vsub.f32 %v645, %v664
        %v669 = vmul.f32 %v665, %v665
        %v670 = vmul.f32 %v666, %v666
        %v671 = vmul.f32 %v667, %v667
        %v672 = vmul.f32 %v668, %v668
        %v673 = vsel %vm647, %v669, 0.0
        %674 = vadd.xlane.f32.xlu0 %v673
        %v675 = vpop.xlane.xlu0 %674
        %v676 = vsel %vm647, %v670, 0.0
        %677 = vadd.xlane.f32.xlu0 %v676
        %v678 = vpop.xlane.xlu0 %677
        %v679 = vsel %vm647, %v671, 0.0
        %680 = vadd.xlane.f32.xlu0 %v679
        %v681 = vpop.xlane.xlu0 %680
        %v682 = vsel %vm647, %v672, 0.0
        %683 = vadd.xlane.f32.xlu0 %v682
        %v684 = vpop.xlane.xlu0 %683
        %v685 = vmul.f32 %v675, %v660
        %v686 = vmul.f32 %v678, %v660
        %v687 = vmul.f32 %v681, %v660
        %v688 = vmul.f32 %v684, %v660
        %v689 = vadd.f32 %v685, 1e-05
        %v690 = vadd.f32 %v686, 1e-05
        %v691 = vadd.f32 %v687, 1e-05
        %v692 = vadd.f32 %v688, 1e-05
        %v693 = vrsqrt.pop %v689
        %v694 = vrsqrt.pop %v690
        %v695 = vrsqrt.pop %v691
        %v696 = vrsqrt.pop %v692
        %v697 = vmul.f32 %v665, %v693
        %v698 = vmul.f32 %v666, %v694
        %v699 = vmul.f32 %v667, %v695
        %v700 = vmul.f32 %v668, %v696
        %v701 = vld [vmem:[%s610] sm:$0xff]
        %v702 = vld [vmem:[%s610 + $0x8] sm:$0xff]
        %v703 = vld [vmem:[%s610 + $0x10] sm:$0xff]
        %v704 = vld [vmem:[%s610 + $0x18] sm:$0xff]
        %v705 = vld [vmem:[%s610 + $0x20] sm:$0xff]
        %v706 = vld [vmem:[%s610 + $0x28] sm:$0xff]
        %v707 = vld [vmem:[%s610 + $0x30] sm:$0xff]
        %v708 = vld [vmem:[%s610 + $0x38] sm:$0xff]
        %v710 = vsel %vm647, %v697, 0
        %v713 = vsel %vm647, %v698, 0
        %v716 = vsel %vm647, %v699, 0
        %v719 = vsel %vm647, %v700, 0
        %721 = vmatprep.subr.mxu0 %v702
        %722 = vmatpush1.msra.mxu0 %v701
        %723 = vmatprep.subr.mxu0 %v704
        %724 = vmatpush1.msra.mxu0 %v703
        %725 = vmatprep.subr.mxu0 %v706
        %726 = vmatpush1.msra.mxu0 %v705
        %727 = vmatprep.subr.mxu0 %v708
        %728 = vmatpush1.msra.mxu0 %v707
        %729 = vmatprep.subr.mxu0 0.0
        %730 = vmatpush1.msra.mxu0 0.0
        %731 = vmatprep.subr.mxu0 0.0
        %732 = vmatpush1.msra.mxu0 0.0
        %733 = vmatprep.subr.mxu0 0.0
        %734 = vmatpush1.msra.mxu0 0.0
        %735 = vmatprep.subr.mxu0 0.0
        %736 = vmatpush1.msra.mxu0 0.0
        %737 = vmatprep.subr.mxu0 0.0
        %738 = vmatpush1.msra.mxu0 0.0
        %739 = vmatprep.subr.mxu0 0.0
        %740 = vmatpush1.msra.mxu0 0.0
        %741 = vmatprep.subr.mxu0 0.0
        %742 = vmatpush1.msra.mxu0 0.0
        %743 = vmatprep.subr.mxu0 0.0
        %744 = vmatpush1.msra.mxu0 0.0
        %745 = vmatprep.subr.mxu0 0.0
        %746 = vmatpush1.msra.mxu0 0.0
        %747 = vmatprep.subr.mxu0 0.0
        %748 = vmatpush1.msra.mxu0 0.0
        %749 = vmatprep.subr.mxu0 0.0
        %750 = vmatpush1.msra.mxu0 0.0
        %751 = vmatprep.subr.mxu0 0.0
        %752 = vmatpush1.msra.mxu0 0.0
        %753 = vmatprep.subr.mxu0 0.0
        %754 = vmatpush1.msra.mxu0 0.0
        %755 = vmatprep.subr.mxu0 0.0
        %756 = vmatpush1.msra.mxu0 0.0
        %757 = vmatprep.subr.mxu0 0.0
        %758 = vmatpush1.msra.mxu0 0.0
        %759 = vmatprep.subr.mxu0 0.0
        %760 = vmatpush1.msra.mxu0 0.0
        %761 = vmatprep.subr.mxu0 0.0
        %762 = vmatpush1.msra.mxu0 0.0
        %763 = vmatprep.subr.mxu0 0.0
        %764 = vmatpush1.msra.mxu0 0.0
        %765 = vmatprep.subr.mxu0 0.0
        %766 = vmatpush1.msra.mxu0 0.0
        %767 = vmatprep.subr.mxu0 0.0
        %768 = vmatpush1.msra.mxu0 0.0
        %769 = vmatprep.subr.mxu0 0.0
        %770 = vmatpush1.msra.mxu0 0.0
        %771 = vmatprep.subr.mxu0 0.0
        %772 = vmatpush1.msra.mxu0 0.0
        %773 = vmatprep.subr.mxu0 0.0
        %774 = vmatpush1.msra.mxu0 0.0
        %775 = vmatprep.subr.mxu0 0.0
        %776 = vmatpush1.msra.mxu0 0.0
        %777 = vmatprep.subr.mxu0 0.0
        %778 = vmatpush1.msra.mxu0 0.0
        %779 = vmatprep.subr.mxu0 0.0
        %780 = vmatpush1.msra.mxu0 0.0
        %781 = vmatprep.subr.mxu0 0.0
        %782 = vmatpush1.msra.mxu0 0.0
        %783 = vmatprep.subr.mxu0 0.0
        %784 = vmatpush1.msra.mxu0 0.0
        %785 = vmatprep.mubr.f32.mxu0 0.0
        %786 = vmatmul.mubr.f32.gmra.mrb[0].mxu0 %v710
        %v787 = vpop.f32.mrb[0].mxu0
        %v788 = vadd.f32 0.0, %v787
        %v789 = vpop.f32.mrb[0].mxu0
        %v790 = vadd.f32 0.0, %v789
        %791 = vmatprep.mubr.f32.mxu0 0.0
        %792 = vmatmul.mubr.f32.gmra.mrb[0].mxu0 %v713
        %v793 = vpop.f32.mrb[0].mxu0
        %v794 = vadd.f32 0.0, %v793
        %v795 = vpop.f32.mrb[0].mxu0
        %v796 = vadd.f32 0.0, %v795
        %797 = vmatprep.mubr.f32.mxu0 0.0
        %798 = vmatmul.mubr.f32.gmra.mrb[0].mxu0 %v716
        %v799 = vpop.f32.mrb[0].mxu0
        %v800 = vadd.f32 0.0, %v799
        %v801 = vpop.f32.mrb[0].mxu0
        %v802 = vadd.f32 0.0, %v801
        %803 = vmatprep.mubr.f32.mxu0 0.0
        %804 = vmatmul.mubr.f32.gmra.mrb[0].mxu0 %v719
        %v805 = vpop.f32.mrb[0].mxu0
        %v806 = vadd.f32 0.0, %v805
        %v807 = vpop.f32.mrb[0].mxu0
        %v808 = vadd.f32 0.0, %v807
        %809 = vdwg.mxu0
        %v810 = vlaneseq
        %v811 = vshrl.u32 %v810, 7
        %v812 = vsub.s32 0, %v811
        %v813 = vrot.slane %v646, %v812
        %v814 = vadd.f32 %v788, %v813
        %v815 = vadd.f32 %v794, %v813
        %v816 = vadd.f32 %v800, %v813
        %v817 = vadd.f32 %v806, %v813
        %v818 = vxor.u32 %v814, 2147483648
        %v819 = vxor.u32 %v815, 2147483648
        %v820 = vxor.u32 %v816, 2147483648
        %v821 = vxor.u32 %v817, 2147483648
        %v822 = vmul.f32 %v818, 1.442695
        %v823 = vpow.pop %v822
        %v824 = vmul.f32 %v819, 1.442695
        %v825 = vpow.pop %v824
        %v826 = vmul.f32 %v820, 1.442695
        %v827 = vpow.pop %v826
        %v828 = vmul.f32 %v821, 1.442695
        %v829 = vpow.pop %v828
        %v830 = vadd.f32 %v823, 1.0
        %v831 = vadd.f32 %v825, 1.0
        %v832 = vadd.f32 %v827, 1.0
        %v833 = vadd.f32 %v829, 1.0
        %v834 = vrcp.pop %v830
        %v835 = vmul.f32 1.0, %v834
        %v836 = vrcp.pop %v831
        %v837 = vmul.f32 1.0, %v836
        %v838 = vrcp.pop %v832
        %v839 = vmul.f32 1.0, %v838
        %v840 = vrcp.pop %v833
        %v841 = vmul.f32 1.0, %v840
        %v842 = vlaneseq
        %v843 = vshrl.u32 %v842, 7
        %v844 = vsub.s32 1, %v843
        %v845 = vrot.slane %v646, %v844
        %v846 = vadd.f32 %v790, %v845
        %v847 = vadd.f32 %v796, %v845
        %v848 = vadd.f32 %v802, %v845
        %v849 = vadd.f32 %v808, %v845
        %v850 = vxor.u32 %v846, 2147483648
        %v851 = vxor.u32 %v847, 2147483648
        %v852 = vxor.u32 %v848, 2147483648
        %v853 = vxor.u32 %v849, 2147483648
        %v854 = vmul.f32 %v850, 1.442695
        %v855 = vpow.pop %v854
        %v856 = vmul.f32 %v851, 1.442695
        %v857 = vpow.pop %v856
        %v858 = vmul.f32 %v852, 1.442695
        %v859 = vpow.pop %v858
        %v860 = vmul.f32 %v853, 1.442695
        %v861 = vpow.pop %v860
        %v862 = vadd.f32 %v855, 1.0
        %v863 = vadd.f32 %v857, 1.0
        %v864 = vadd.f32 %v859, 1.0
        %v865 = vadd.f32 %v861, 1.0
        %v866 = vrcp.pop %v862
        %v867 = vmul.f32 1.0, %v866
        %v868 = vrcp.pop %v863
        %v869 = vmul.f32 1.0, %v868
        %v870 = vrcp.pop %v864
        %v871 = vmul.f32 1.0, %v870
        %v872 = vrcp.pop %v865
        %v873 = vmul.f32 1.0, %v872
        %v874 = vld [vmem:[%s511] sm:$0xff]
        %v875 = vld [vmem:[%s511 + $0x8] sm:$0xff]
        %v876 = vld [vmem:[%s511 + $0x10] sm:$0xff]
        %v877 = vld [vmem:[%s511 + $0x18] sm:$0xff]
        %v879 = vsel %vm647, %v642, 0
        %v882 = vsel %vm647, %v643, 0
        %v885 = vsel %vm647, %v644, 0
        %v888 = vsel %vm647, %v645, 0
        %890 = vmatprep.subr.mxu0 0.0
        %891 = vmatpush1.msra.mxu0 %v874
        %892 = vmatprep.subr.mxu0 0.0
        %893 = vmatpush1.msra.mxu0 %v875
        %894 = vmatprep.subr.mxu0 0.0
        %895 = vmatpush1.msra.mxu0 %v876
        %896 = vmatprep.subr.mxu0 0.0
        %897 = vmatpush1.msra.mxu0 %v877
        %898 = vmatprep.subr.mxu0 0.0
        %899 = vmatpush1.msra.mxu0 0.0
        %900 = vmatprep.subr.mxu0 0.0
        %901 = vmatpush1.msra.mxu0 0.0
        %902 = vmatprep.subr.mxu0 0.0
        %903 = vmatpush1.msra.mxu0 0.0
        %904 = vmatprep.subr.mxu0 0.0
        %905 = vmatpush1.msra.mxu0 0.0
        %906 = vmatprep.subr.mxu0 0.0
        %907 = vmatpush1.msra.mxu0 0.0
        %908 = vmatprep.subr.mxu0 0.0
        %909 = vmatpush1.msra.mxu0 0.0
        %910 = vmatprep.subr.mxu0 0.0
        %911 = vmatpush1.msra.mxu0 0.0
        %912 = vmatprep.subr.mxu0 0.0
        %913 = vmatpush1.msra.mxu0 0.0
        %914 = vmatprep.subr.mxu0 0.0
        %915 = vmatpush1.msra.mxu0 0.0
        %916 = vmatprep.subr.mxu0 0.0
        %917 = vmatpush1.msra.mxu0 0.0
        %918 = vmatprep.subr.mxu0 0.0
        %919 = vmatpush1.msra.mxu0 0.0
        %920 = vmatprep.subr.mxu0 0.0
        %921 = vmatpush1.msra.mxu0 0.0
        %922 = vmatprep.subr.mxu0 0.0
        %923 = vmatpush1.msra.mxu0 0.0
        %924 = vmatprep.subr.mxu0 0.0
        %925 = vmatpush1.msra.mxu0 0.0
        %926 = vmatprep.subr.mxu0 0.0
        %927 = vmatpush1.msra.mxu0 0.0
        %928 = vmatprep.subr.mxu0 0.0
        %929 = vmatpush1.msra.mxu0 0.0
        %930 = vmatprep.subr.mxu0 0.0
        %931 = vmatpush1.msra.mxu0 0.0
        %932 = vmatprep.subr.mxu0 0.0
        %933 = vmatpush1.msra.mxu0 0.0
        %934 = vmatprep.subr.mxu0 0.0
        %935 = vmatpush1.msra.mxu0 0.0
        %936 = vmatprep.subr.mxu0 0.0
        %937 = vmatpush1.msra.mxu0 0.0
        %938 = vmatprep.subr.mxu0 0.0
        %939 = vmatpush1.msra.mxu0 0.0
        %940 = vmatprep.subr.mxu0 0.0
        %941 = vmatpush1.msra.mxu0 0.0
        %942 = vmatprep.subr.mxu0 0.0
        %943 = vmatpush1.msra.mxu0 0.0
        %944 = vmatprep.subr.mxu0 0.0
        %945 = vmatpush1.msra.mxu0 0.0
        %946 = vmatprep.subr.mxu0 0.0
        %947 = vmatpush1.msra.mxu0 0.0
        %948 = vmatprep.subr.mxu0 0.0
        %949 = vmatpush1.msra.mxu0 0.0
        %950 = vmatprep.subr.mxu0 0.0
        %951 = vmatpush1.msra.mxu0 0.0
        %952 = vmatprep.subr.mxu0 0.0
        %953 = vmatpush1.msra.mxu0 0.0
        %954 = vmatprep.mubr.f32.mxu0 0.0
        %955 = vmatmul.mubr.f32.gmra.mrb[0].mxu0 %v879
        %v956 = vpop.f32.mrb[0].mxu0
        %v957 = vadd.f32 0.0, %v956
        %v958 = vpop.f32.mrb[0].mxu0
        %959 = vmatprep.mubr.f32.mxu0 0.0
        %960 = vmatmul.mubr.f32.gmra.mrb[0].mxu0 %v882
        %v961 = vpop.f32.mrb[0].mxu0
        %v962 = vadd.f32 0.0, %v961
        %v963 = vpop.f32.mrb[0].mxu0
        %964 = vmatprep.mubr.f32.mxu0 0.0
        %965 = vmatmul.mubr.f32.gmra.mrb[0].mxu0 %v885
        %v966 = vpop.f32.mrb[0].mxu0
        %v967 = vadd.f32 0.0, %v966
        %v968 = vpop.f32.mrb[0].mxu0
        %969 = vmatprep.mubr.f32.mxu0 0.0
        %970 = vmatmul.mubr.f32.gmra.mrb[0].mxu0 %v888
        %v971 = vpop.f32.mrb[0].mxu0
        %v972 = vadd.f32 0.0, %v971
        %v973 = vpop.f32.mrb[0].mxu0
        %974 = vdwg.mxu0
        %v975 = vlaneseq
        %v976 = vshrl.u32 %v975, 7
        %v977 = vsub.s32 2, %v976
        %v978 = vrot.slane %v646, %v977
        %v979 = vadd.f32 %v957, %v978
        %v980 = vadd.f32 %v962, %v978
        %v981 = vadd.f32 %v967, %v978
        %v982 = vadd.f32 %v972, %v978
        %v983 = vxor.u32 %v979, 2147483648
        %v984 = vxor.u32 %v980, 2147483648
        %v985 = vxor.u32 %v981, 2147483648
        %v986 = vxor.u32 %v982, 2147483648
        %v987 = vmul.f32 %v983, 1.442695
        %v988 = vpow.pop %v987
        %v989 = vmul.f32 %v984, 1.442695
        %v990 = vpow.pop %v989
        %v991 = vmul.f32 %v985, 1.442695
        %v992 = vpow.pop %v991
        %v993 = vmul.f32 %v986, 1.442695
        %v994 = vpow.pop %v993
        %v995 = vadd.f32 %v988, 1.0
        %v996 = vadd.f32 %v990, 1.0
        %v997 = vadd.f32 %v992, 1.0
        %v998 = vadd.f32 %v994, 1.0
        %v999 = vrcp.pop %v995
        %v1000 = vmul.f32 1.0, %v999
        %v1001 = vrcp.pop %v996
        %v1002 = vmul.f32 1.0, %v1001
        %v1003 = vrcp.pop %v997
        %v1004 = vmul.f32 1.0, %v1003
        %v1005 = vrcp.pop %v998
        %v1006 = vmul.f32 1.0, %v1005
        %v1007 = vlaneseq
        %v1008 = vshrl.u32 %v1007, 7
        %v1009 = vsub.s32 3, %v1008
        %v1010 = vrot.slane %v646, %v1009
        %1012 = vrot.lane.b32.xlu0 %v1010, 64
        %v1013 = vpop.permute.xlu0 %1012
        %v1015 = vadd.f32 %v957, %v1013
        %v1016 = vadd.f32 %v962, %v1013
        %v1017 = vadd.f32 %v967, %v1013
        %v1018 = vadd.f32 %v972, %v1013
        %v1019 = vxor.u32 %v1015, 2147483648
        %v1020 = vxor.u32 %v1016, 2147483648
        %v1021 = vxor.u32 %v1017, 2147483648
        %v1022 = vxor.u32 %v1018, 2147483648
        %v1023 = vmul.f32 %v1019, 1.442695
        %v1024 = vpow.pop %v1023
        %v1025 = vmul.f32 %v1020, 1.442695
        %v1026 = vpow.pop %v1025
        %v1027 = vmul.f32 %v1021, 1.442695
        %v1028 = vpow.pop %v1027
        %v1029 = vmul.f32 %v1022, 1.442695
        %v1030 = vpow.pop %v1029
        %v1031 = vadd.f32 %v1024, 1.0
        %v1032 = vadd.f32 %v1026, 1.0
        %v1033 = vadd.f32 %v1028, 1.0
        %v1034 = vadd.f32 %v1030, 1.0
        %v1035 = vrcp.pop %v1031
        %v1036 = vmul.f32 1.0, %v1035
        %v1037 = vrcp.pop %v1032
        %v1038 = vmul.f32 1.0, %v1037
        %v1039 = vrcp.pop %v1033
        %v1040 = vmul.f32 1.0, %v1039
        %v1041 = vrcp.pop %v1034
        %v1042 = vmul.f32 1.0, %v1041
        %vm1043 = vcmask 523264
        %v1044 = vsel %vm1043, %v638, 0.0
        %1045 = vadd.xlane.f32.xlu0 %v1044
        %v1046 = vpop.xlane.xlu0 %1045
        %v1047 = vsel %vm1043, %v639, 0.0
        %1048 = vadd.xlane.f32.xlu0 %v1047
        %v1049 = vpop.xlane.xlu0 %1048
        %v1050 = vsel %vm1043, %v640, 0.0
        %1051 = vadd.xlane.f32.xlu0 %v1050
        %v1052 = vpop.xlane.xlu0 %1051
        %v1053 = vsel %vm1043, %v641, 0.0
        %1054 = vadd.xlane.f32.xlu0 %v1053
        %v1055 = vpop.xlane.xlu0 %1054
        %v1056 = vrcp.pop 64.0
        %v1057 = vmul.f32 %v1046, %v1056
        %v1058 = vmul.f32 %v1049, %v1056
        %v1059 = vmul.f32 %v1052, %v1056
        %v1060 = vmul.f32 %v1055, %v1056
        %v1061 = vsub.f32 %v638, %v1057
        %v1062 = vsub.f32 %v639, %v1058
        %v1063 = vsub.f32 %v640, %v1059
        %v1064 = vsub.f32 %v641, %v1060
        %v1065 = vmul.f32 %v1061, %v1061
        %v1066 = vmul.f32 %v1062, %v1062
        %v1067 = vmul.f32 %v1063, %v1063
        %v1068 = vmul.f32 %v1064, %v1064
        %v1069 = vsel %vm1043, %v1065, 0.0
        %1070 = vadd.xlane.f32.xlu0 %v1069
        %v1071 = vpop.xlane.xlu0 %1070
        %v1072 = vsel %vm1043, %v1066, 0.0
        %1073 = vadd.xlane.f32.xlu0 %v1072
        %v1074 = vpop.xlane.xlu0 %1073
        %v1075 = vsel %vm1043, %v1067, 0.0
        %1076 = vadd.xlane.f32.xlu0 %v1075
        %v1077 = vpop.xlane.xlu0 %1076
        %v1078 = vsel %vm1043, %v1068, 0.0
        %1079 = vadd.xlane.f32.xlu0 %v1078
        %v1080 = vpop.xlane.xlu0 %1079
        %v1081 = vmul.f32 %v1071, %v1056
        %v1082 = vmul.f32 %v1074, %v1056
        %v1083 = vmul.f32 %v1077, %v1056
        %v1084 = vmul.f32 %v1080, %v1056
        %v1085 = vadd.f32 %v1081, 1e-05
        %v1086 = vadd.f32 %v1082, 1e-05
        %v1087 = vadd.f32 %v1083, 1e-05
        %v1088 = vadd.f32 %v1084, 1e-05
        %v1089 = vrsqrt.pop %v1085
        %v1090 = vrsqrt.pop %v1086
        %v1091 = vrsqrt.pop %v1087
        %v1092 = vrsqrt.pop %v1088
        %v1093 = vmul.f32 %v1061, %v1089
        %v1094 = vmul.f32 %v1062, %v1090
        %v1095 = vmul.f32 %v1063, %v1091
        %v1096 = vmul.f32 %v1064, %v1092
        %v1097 = vmul.f32 %v835, %v1093
        %v1098 = vmul.f32 %v837, %v1094
        %v1099 = vmul.f32 %v839, %v1095
        %v1100 = vmul.f32 %v841, %v1096
        %1105 = vrot.lane.b32.xlu0 %v788, 64
        %v1106 = vpop.permute.xlu0 %1105
        %1107 = vrot.lane.b32.xlu0 %v794, 64
        %v1108 = vpop.permute.xlu0 %1107
        %1109 = vrot.lane.b32.xlu0 %v800, 64
        %v1110 = vpop.permute.xlu0 %1109
        %1111 = vrot.lane.b32.xlu0 %v806, 64
        %v1112 = vpop.permute.xlu0 %1111
        %v1117 = vadd.f32 %v1097, %v1106
        %v1118 = vadd.f32 %v1098, %v1108
        %v1119 = vadd.f32 %v1099, %v1110
        %v1120 = vadd.f32 %v1100, %v1112
        %v1121 = vld [vmem:[%s615] sm:$0xff]
        %v1122 = vld [vmem:[%s615 + $0x8] sm:$0xff]
        %v1123 = vld [vmem:[%s615 + $0x10] sm:$0xff]
        %v1124 = vld [vmem:[%s615 + $0x18] sm:$0xff]
        %v1125 = vld [vmem:[%s615 + $0x20] sm:$0xff]
        %v1126 = vld [vmem:[%s615 + $0x28] sm:$0xff]
        %v1127 = vld [vmem:[%s615 + $0x30] sm:$0xff]
        %v1128 = vld [vmem:[%s615 + $0x38] sm:$0xff]
        %v1129 = vld [vmem:[%s615 + $0x40] sm:$0xff]
        %v1130 = vld [vmem:[%s615 + $0x48] sm:$0xff]
        %v1131 = vld [vmem:[%s615 + $0x50] sm:$0xff]
        %v1132 = vld [vmem:[%s615 + $0x58] sm:$0xff]
        %v1133 = vld [vmem:[%s615 + $0x60] sm:$0xff]
        %v1134 = vld [vmem:[%s615 + $0x68] sm:$0xff]
        %v1135 = vld [vmem:[%s615 + $0x70] sm:$0xff]
        %v1136 = vld [vmem:[%s615 + $0x78] sm:$0xff]
        %v1138 = vsel %vm1043, %v1117, 0
        %v1141 = vsel %vm1043, %v1118, 0
        %v1144 = vsel %vm1043, %v1119, 0
        %v1147 = vsel %vm1043, %v1120, 0
        %1149 = vmatprep.subr.mxu0 %v1122
        %1150 = vmatpush1.msra.mxu0 %v1121
        %1151 = vmatprep.subr.mxu0 %v1124
        %1152 = vmatpush1.msra.mxu0 %v1123
        %1153 = vmatprep.subr.mxu0 %v1126
        %1154 = vmatpush1.msra.mxu0 %v1125
        %1155 = vmatprep.subr.mxu0 %v1128
        %1156 = vmatpush1.msra.mxu0 %v1127
        %1157 = vmatprep.subr.mxu0 %v1130
        %1158 = vmatpush1.msra.mxu0 %v1129
        %1159 = vmatprep.subr.mxu0 %v1132
        %1160 = vmatpush1.msra.mxu0 %v1131
        %1161 = vmatprep.subr.mxu0 %v1134
        %1162 = vmatpush1.msra.mxu0 %v1133
        %1163 = vmatprep.subr.mxu0 %v1136
        %1164 = vmatpush1.msra.mxu0 %v1135
        %1165 = vmatprep.subr.mxu0 0.0
        %1166 = vmatpush1.msra.mxu0 0.0
        %1167 = vmatprep.subr.mxu0 0.0
        %1168 = vmatpush1.msra.mxu0 0.0
        %1169 = vmatprep.subr.mxu0 0.0
        %1170 = vmatpush1.msra.mxu0 0.0
        %1171 = vmatprep.subr.mxu0 0.0
        %1172 = vmatpush1.msra.mxu0 0.0
        %1173 = vmatprep.subr.mxu0 0.0
        %1174 = vmatpush1.msra.mxu0 0.0
        %1175 = vmatprep.subr.mxu0 0.0
        %1176 = vmatpush1.msra.mxu0 0.0
        %1177 = vmatprep.subr.mxu0 0.0
        %1178 = vmatpush1.msra.mxu0 0.0
        %1179 = vmatprep.subr.mxu0 0.0
        %1180 = vmatpush1.msra.mxu0 0.0
        %1181 = vmatprep.subr.mxu0 0.0
        %1182 = vmatpush1.msra.mxu0 0.0
        %1183 = vmatprep.subr.mxu0 0.0
        %1184 = vmatpush1.msra.mxu0 0.0
        %1185 = vmatprep.subr.mxu0 0.0
        %1186 = vmatpush1.msra.mxu0 0.0
        %1187 = vmatprep.subr.mxu0 0.0
        %1188 = vmatpush1.msra.mxu0 0.0
        %1189 = vmatprep.subr.mxu0 0.0
        %1190 = vmatpush1.msra.mxu0 0.0
        %1191 = vmatprep.subr.mxu0 0.0
        %1192 = vmatpush1.msra.mxu0 0.0
        %1193 = vmatprep.subr.mxu0 0.0
        %1194 = vmatpush1.msra.mxu0 0.0
        %1195 = vmatprep.subr.mxu0 0.0
        %1196 = vmatpush1.msra.mxu0 0.0
        %1197 = vmatprep.subr.mxu0 0.0
        %1198 = vmatpush1.msra.mxu0 0.0
        %1199 = vmatprep.subr.mxu0 0.0
        %1200 = vmatpush1.msra.mxu0 0.0
        %1201 = vmatprep.subr.mxu0 0.0
        %1202 = vmatpush1.msra.mxu0 0.0
        %1203 = vmatprep.subr.mxu0 0.0
        %1204 = vmatpush1.msra.mxu0 0.0
        %1205 = vmatprep.subr.mxu0 0.0
        %1206 = vmatpush1.msra.mxu0 0.0
        %1207 = vmatprep.subr.mxu0 0.0
        %1208 = vmatpush1.msra.mxu0 0.0
        %1209 = vmatprep.subr.mxu0 0.0
        %1210 = vmatpush1.msra.mxu0 0.0
        %1211 = vmatprep.subr.mxu0 0.0
        %1212 = vmatpush1.msra.mxu0 0.0
        %1213 = vmatprep.mubr.f32.mxu0 0.0
        %1214 = vmatmul.mubr.f32.gmra.mrb[0].mxu0 %v1138
        %v1215 = vpop.f32.mrb[0].mxu0
        %v1216 = vadd.f32 0.0, %v1215
        %v1217 = vpop.f32.mrb[0].mxu0
        %v1218 = vadd.f32 0.0, %v1217
        %1219 = vmatprep.mubr.f32.mxu0 0.0
        %1220 = vmatmul.mubr.f32.gmra.mrb[0].mxu0 %v1141
        %v1221 = vpop.f32.mrb[0].mxu0
        %v1222 = vadd.f32 0.0, %v1221
        %v1223 = vpop.f32.mrb[0].mxu0
        %v1224 = vadd.f32 0.0, %v1223
        %1225 = vmatprep.mubr.f32.mxu0 0.0
        %1226 = vmatmul.mubr.f32.gmra.mrb[0].mxu0 %v1144
        %v1227 = vpop.f32.mrb[0].mxu0
        %v1228 = vadd.f32 0.0, %v1227
        %v1229 = vpop.f32.mrb[0].mxu0
        %v1230 = vadd.f32 0.0, %v1229
        %1231 = vmatprep.mubr.f32.mxu0 0.0
        %1232 = vmatmul.mubr.f32.gmra.mrb[0].mxu0 %v1147
        %v1233 = vpop.f32.mrb[0].mxu0
        %v1234 = vadd.f32 0.0, %v1233
        %v1235 = vpop.f32.mrb[0].mxu0
        %v1236 = vadd.f32 0.0, %v1235
        %1237 = vdwg.mxu0
        %v1238 = vlaneseq
        %v1239 = vshrl.u32 %v1238, 7
        %v1240 = vsub.s32 5, %v1239
        %v1241 = vrot.slane %v646, %v1240
        %v1242 = vadd.f32 %v1216, %v1241
        %v1243 = vadd.f32 %v1222, %v1241
        %v1244 = vadd.f32 %v1228, %v1241
        %v1245 = vadd.f32 %v1234, %v1241
        %v1246 = vmul.f32 %v1242, 0.25
        %v1247 = vmul.f32 %v1243, 0.25
        %v1248 = vmul.f32 %v1244, 0.25
        %v1249 = vmul.f32 %v1245, 0.25
        %v1250 = vlaneseq
        %v1251 = vshrl.u32 %v1250, 7
        %v1252 = vsub.s32 6, %v1251
        %v1253 = vrot.slane %v646, %v1252
        %1255 = vrot.lane.b32.xlu0 %v1253, 64
        %v1256 = vpop.permute.xlu0 %1255
        %v1258 = vadd.f32 %v1218, %v1256
        %v1259 = vadd.f32 %v1224, %v1256
        %v1260 = vadd.f32 %v1230, %v1256
        %v1261 = vadd.f32 %v1236, %v1256
        %v1262 = vxor.u32 %v1258, 2147483648
        %v1263 = vxor.u32 %v1259, 2147483648
        %v1264 = vxor.u32 %v1260, 2147483648
        %v1265 = vxor.u32 %v1261, 2147483648
        %v1266 = vmul.f32 %v1262, 1.442695
        %v1267 = vpow.pop %v1266
        %v1268 = vmul.f32 %v1263, 1.442695
        %v1269 = vpow.pop %v1268
        %v1270 = vmul.f32 %v1264, 1.442695
        %v1271 = vpow.pop %v1270
        %v1272 = vmul.f32 %v1265, 1.442695
        %v1273 = vpow.pop %v1272
        %v1274 = vadd.f32 %v1267, 1.0
        %v1275 = vadd.f32 %v1269, 1.0
        %v1276 = vadd.f32 %v1271, 1.0
        %v1277 = vadd.f32 %v1273, 1.0
        %v1278 = vrcp.pop %v1274
        %v1279 = vmul.f32 1.0, %v1278
        %v1280 = vrcp.pop %v1275
        %v1281 = vmul.f32 1.0, %v1280
        %v1282 = vrcp.pop %v1276
        %v1283 = vmul.f32 1.0, %v1282
        %v1284 = vrcp.pop %v1277
        %v1285 = vmul.f32 1.0, %v1284
        %v1286 = vld [vmem:[#allocation8] sm:$0xff]
        %v1287 = vld [vmem:[#allocation8 + $0x8] sm:$0xff]
        %v1288 = vld [vmem:[#allocation8 + $0x10] sm:$0xff]
        %v1289 = vld [vmem:[#allocation8 + $0x18] sm:$0xff]
        %v1290 = vld [vmem:[#allocation8 + $0x20] sm:$0xff]
        %v1291 = vld [vmem:[#allocation8 + $0x28] sm:$0xff]
        %v1292 = vld [vmem:[#allocation8 + $0x30] sm:$0xff]
        %v1293 = vld [vmem:[#allocation8 + $0x38] sm:$0xff]
        %v1294 = vld [vmem:[#allocation8 + $0x40] sm:$0xff]
        %v1295 = vld [vmem:[#allocation8 + $0x48] sm:$0xff]
        %v1296 = vld [vmem:[#allocation8 + $0x50] sm:$0xff]
        %v1297 = vld [vmem:[#allocation8 + $0x58] sm:$0xff]
        %v1298 = vld [vmem:[#allocation8 + $0x60] sm:$0xff]
        %v1299 = vld [vmem:[#allocation8 + $0x68] sm:$0xff]
        %v1300 = vld [vmem:[#allocation8 + $0x70] sm:$0xff]
        %v1301 = vld [vmem:[#allocation8 + $0x78] sm:$0xff]
        %v1302 = vld [vmem:[#allocation8 + $0x80] sm:$0xff]
        %v1303 = vld [vmem:[#allocation8 + $0x88] sm:$0xff]
        %v1304 = vld [vmem:[#allocation8 + $0x90] sm:$0xff]
        %v1305 = vld [vmem:[#allocation8 + $0x98] sm:$0xff]
        %v1306 = vld [vmem:[#allocation8 + $0xa0] sm:$0xff]
        %v1307 = vld [vmem:[#allocation8 + $0xa8] sm:$0xff]
        %v1308 = vld [vmem:[#allocation8 + $0xb0] sm:$0xff]
        %v1309 = vld [vmem:[#allocation8 + $0xb8] sm:$0xff]
        %v1310 = vld [vmem:[#allocation8 + $0xc0] sm:$0xff]
        %v1311 = vld [vmem:[#allocation8 + $0xc8] sm:$0xff]
        %v1312 = vld [vmem:[#allocation8 + $0xd0] sm:$0xff]
        %v1313 = vld [vmem:[#allocation8 + $0xd8] sm:$0xff]
        %v1314 = vld [vmem:[#allocation8 + $0xe0] sm:$0xff]
        %v1315 = vld [vmem:[#allocation8 + $0xe8] sm:$0xff]
        %v1316 = vld [vmem:[#allocation8 + $0xf0] sm:$0xff]
        %v1317 = vld [vmem:[#allocation8 + $0xf8] sm:$0xff]
        %v1318 = vld [vmem:[#allocation8 + $0x100] sm:$0xff]
        %v1319 = vld [vmem:[#allocation8 + $0x108] sm:$0xff]
        %v1320 = vld [vmem:[#allocation8 + $0x110] sm:$0xff]
        %v1321 = vld [vmem:[#allocation8 + $0x118] sm:$0xff]
        %v1322 = vld [vmem:[#allocation8 + $0x120] sm:$0xff]
        %v1323 = vld [vmem:[#allocation8 + $0x128] sm:$0xff]
        %v1324 = vld [vmem:[#allocation8 + $0x130] sm:$0xff]
        %v1325 = vld [vmem:[#allocation8 + $0x138] sm:$0xff]
        %v1326 = vld [vmem:[#allocation8 + $0x140] sm:$0xff]
        %v1327 = vld [vmem:[#allocation8 + $0x148] sm:$0xff]
        %v1328 = vld [vmem:[#allocation8 + $0x150] sm:$0xff]
        %v1329 = vld [vmem:[#allocation8 + $0x158] sm:$0xff]
        %v1330 = vld [vmem:[#allocation8 + $0x160] sm:$0xff]
        %v1331 = vld [vmem:[#allocation8 + $0x168] sm:$0xff]
        %v1332 = vld [vmem:[#allocation8 + $0x170] sm:$0xff]
        %v1333 = vld [vmem:[#allocation8 + $0x178] sm:$0xff]
        %v1334 = vld [vmem:[#allocation8 + $0x180] sm:$0xff]
        %v1335 = vld [vmem:[#allocation8 + $0x188] sm:$0xff]
        %v1336 = vld [vmem:[#allocation8 + $0x190] sm:$0xff]
        %v1337 = vld [vmem:[#allocation8 + $0x198] sm:$0xff]
        %v1338 = vld [vmem:[#allocation8 + $0x1a0] sm:$0xff]
        %v1339 = vld [vmem:[#allocation8 + $0x1a8] sm:$0xff]
        %v1340 = vld [vmem:[#allocation8 + $0x1b0] sm:$0xff]
        %v1341 = vld [vmem:[#allocation8 + $0x1b8] sm:$0xff]
        %v1342 = vld [vmem:[#allocation8 + $0x1c0] sm:$0xff]
        %v1343 = vld [vmem:[#allocation8 + $0x1c8] sm:$0xff]
        %v1344 = vld [vmem:[#allocation8 + $0x1d0] sm:$0xff]
        %v1345 = vld [vmem:[#allocation8 + $0x1d8] sm:$0xff]
        %v1346 = vld [vmem:[#allocation8 + $0x1e0] sm:$0xff]
        %v1347 = vld [vmem:[#allocation8 + $0x1e8] sm:$0xff]
        %v1348 = vld [vmem:[#allocation8 + $0x1f0] sm:$0xff]
        %v1349 = vld [vmem:[#allocation8 + $0x1f8] sm:$0xff]
        %vm1350 = vcmask 130048
        %v1351 = vsel %vm1350, %v1286, 0.0
        %1352 = vadd.xlane.f32.xlu0 %v1351
        %v1353 = vpop.xlane.xlu0 %1352
        %v1354 = vsel %vm1350, %v1287, 0.0
        %1355 = vadd.xlane.f32.xlu0 %v1354
        %v1356 = vpop.xlane.xlu0 %1355
        %v1357 = vsel %vm1350, %v1288, 0.0
        %1358 = vadd.xlane.f32.xlu0 %v1357
        %v1359 = vpop.xlane.xlu0 %1358
        %v1360 = vsel %vm1350, %v1289, 0.0
        %1361 = vadd.xlane.f32.xlu0 %v1360
        %v1362 = vpop.xlane.xlu0 %1361
        %v1363 = vsel %vm1350, %v1290, 0.0
        %1364 = vadd.xlane.f32.xlu0 %v1363
        %v1365 = vpop.xlane.xlu0 %1364
        %v1366 = vsel %vm1350, %v1291, 0.0
        %1367 = vadd.xlane.f32.xlu0 %v1366
        %v1368 = vpop.xlane.xlu0 %1367
        %v1369 = vsel %vm1350, %v1292, 0.0
        %1370 = vadd.xlane.f32.xlu0 %v1369
        %v1371 = vpop.xlane.xlu0 %1370
        %v1372 = vsel %vm1350, %v1293, 0.0
        %1373 = vadd.xlane.f32.xlu0 %v1372
        %v1374 = vpop.xlane.xlu0 %1373
        %v1375 = vsel %vm1350, %v1294, 0.0
        %1376 = vadd.xlane.f32.xlu0 %v1375
        %v1377 = vpop.xlane.xlu0 %1376
        %v1378 = vsel %vm1350, %v1295, 0.0
        %1379 = vadd.xlane.f32.xlu0 %v1378
        %v1380 = vpop.xlane.xlu0 %1379
        %v1381 = vsel %vm1350, %v1296, 0.0
        %1382 = vadd.xlane.f32.xlu0 %v1381
        %v1383 = vpop.xlane.xlu0 %1382
        %v1384 = vsel %vm1350, %v1297, 0.0
        %1385 = vadd.xlane.f32.xlu0 %v1384
        %v1386 = vpop.xlane.xlu0 %1385
        %v1387 = vsel %vm1350, %v1298, 0.0
        %1388 = vadd.xlane.f32.xlu0 %v1387
        %v1389 = vpop.xlane.xlu0 %1388
        %v1390 = vsel %vm1350, %v1299, 0.0
        %1391 = vadd.xlane.f32.xlu0 %v1390
        %v1392 = vpop.xlane.xlu0 %1391
        %v1393 = vsel %vm1350, %v1300, 0.0
        %1394 = vadd.xlane.f32.xlu0 %v1393
        %v1395 = vpop.xlane.xlu0 %1394
        %v1396 = vsel %vm1350, %v1301, 0.0
        %1397 = vadd.xlane.f32.xlu0 %v1396
        %v1398 = vpop.xlane.xlu0 %1397
        %v1399 = vsel %vm1350, %v1302, 0.0
        %1400 = vadd.xlane.f32.xlu0 %v1399
        %v1401 = vpop.xlane.xlu0 %1400
        %v1402 = vsel %vm1350, %v1303, 0.0
        %1403 = vadd.xlane.f32.xlu0 %v1402
        %v1404 = vpop.xlane.xlu0 %1403
        %v1405 = vsel %vm1350, %v1304, 0.0
        %1406 = vadd.xlane.f32.xlu0 %v1405
        %v1407 = vpop.xlane.xlu0 %1406
        %v1408 = vsel %vm1350, %v1305, 0.0
        %1409 = vadd.xlane.f32.xlu0 %v1408
        %v1410 = vpop.xlane.xlu0 %1409
        %v1411 = vsel %vm1350, %v1306, 0.0
        %1412 = vadd.xlane.f32.xlu0 %v1411
        %v1413 = vpop.xlane.xlu0 %1412
        %v1414 = vsel %vm1350, %v1307, 0.0
        %1415 = vadd.xlane.f32.xlu0 %v1414
        %v1416 = vpop.xlane.xlu0 %1415
        %v1417 = vsel %vm1350, %v1308, 0.0
        %1418 = vadd.xlane.f32.xlu0 %v1417
        %v1419 = vpop.xlane.xlu0 %1418
        %v1420 = vsel %vm1350, %v1309, 0.0
        %1421 = vadd.xlane.f32.xlu0 %v1420
        %v1422 = vpop.xlane.xlu0 %1421
        %v1423 = vsel %vm1350, %v1310, 0.0
        %1424 = vadd.xlane.f32.xlu0 %v1423
        %v1425 = vpop.xlane.xlu0 %1424
        %v1426 = vsel %vm1350, %v1311, 0.0
        %1427 = vadd.xlane.f32.xlu0 %v1426
        %v1428 = vpop.xlane.xlu0 %1427
        %v1429 = vsel %vm1350, %v1312, 0.0
        %1430 = vadd.xlane.f32.xlu0 %v1429
        %v1431 = vpop.xlane.xlu0 %1430
        %v1432 = vsel %vm1350, %v1313, 0.0
        %1433 = vadd.xlane.f32.xlu0 %v1432
        %v1434 = vpop.xlane.xlu0 %1433
        %v1435 = vsel %vm1350, %v1314, 0.0
        %1436 = vadd.xlane.f32.xlu0 %v1435
        %v1437 = vpop.xlane.xlu0 %1436
        %v1438 = vsel %vm1350, %v1315, 0.0
        %1439 = vadd.xlane.f32.xlu0 %v1438
        %v1440 = vpop.xlane.xlu0 %1439
        %v1441 = vsel %vm1350, %v1316, 0.0
        %1442 = vadd.xlane.f32.xlu0 %v1441
        %v1443 = vpop.xlane.xlu0 %1442
        %v1444 = vsel %vm1350, %v1317, 0.0
        %1445 = vadd.xlane.f32.xlu0 %v1444
        %v1446 = vpop.xlane.xlu0 %1445
        %v1447 = vsel %vm1350, %v1318, 0.0
        %1448 = vadd.xlane.f32.xlu0 %v1447
        %v1449 = vpop.xlane.xlu0 %1448
        %v1450 = vsel %vm1350, %v1319, 0.0
        %1451 = vadd.xlane.f32.xlu0 %v1450
        %v1452 = vpop.xlane.xlu0 %1451
        %v1453 = vsel %vm1350, %v1320, 0.0
        %1454 = vadd.xlane.f32.xlu0 %v1453
        %v1455 = vpop.xlane.xlu0 %1454
        %v1456 = vsel %vm1350, %v1321, 0.0
        %1457 = vadd.xlane.f32.xlu0 %v1456
        %v1458 = vpop.xlane.xlu0 %1457
        %v1459 = vsel %vm1350, %v1322, 0.0
        %1460 = vadd.xlane.f32.xlu0 %v1459
        %v1461 = vpop.xlane.xlu0 %1460
        %v1462 = vsel %vm1350, %v1323, 0.0
        %1463 = vadd.xlane.f32.xlu0 %v1462
        %v1464 = vpop.xlane.xlu0 %1463
        %v1465 = vsel %vm1350, %v1324, 0.0
        %1466 = vadd.xlane.f32.xlu0 %v1465
        %v1467 = vpop.xlane.xlu0 %1466
        %v1468 = vsel %vm1350, %v1325, 0.0
        %1469 = vadd.xlane.f32.xlu0 %v1468
        %v1470 = vpop.xlane.xlu0 %1469
        %v1471 = vsel %vm1350, %v1326, 0.0
        %1472 = vadd.xlane.f32.xlu0 %v1471
        %v1473 = vpop.xlane.xlu0 %1472
        %v1474 = vsel %vm1350, %v1327, 0.0
        %1475 = vadd.xlane.f32.xlu0 %v1474
        %v1476 = vpop.xlane.xlu0 %1475
        %v1477 = vsel %vm1350, %v1328, 0.0
        %1478 = vadd.xlane.f32.xlu0 %v1477
        %v1479 = vpop.xlane.xlu0 %1478
        %v1480 = vsel %vm1350, %v1329, 0.0
        %1481 = vadd.xlane.f32.xlu0 %v1480
        %v1482 = vpop.xlane.xlu0 %1481
        %v1483 = vsel %vm1350, %v1330, 0.0
        %1484 = vadd.xlane.f32.xlu0 %v1483
        %v1485 = vpop.xlane.xlu0 %1484
        %v1486 = vsel %vm1350, %v1331, 0.0
        %1487 = vadd.xlane.f32.xlu0 %v1486
        %v1488 = vpop.xlane.xlu0 %1487
        %v1489 = vsel %vm1350, %v1332, 0.0
        %1490 = vadd.xlane.f32.xlu0 %v1489
        %v1491 = vpop.xlane.xlu0 %1490
        %v1492 = vsel %vm1350, %v1333, 0.0
        %1493 = vadd.xlane.f32.xlu0 %v1492
        %v1494 = vpop.xlane.xlu0 %1493
        %v1495 = vsel %vm1350, %v1334, 0.0
        %1496 = vadd.xlane.f32.xlu0 %v1495
        %v1497 = vpop.xlane.xlu0 %1496
        %v1498 = vsel %vm1350, %v1335, 0.0
        %1499 = vadd.xlane.f32.xlu0 %v1498
        %v1500 = vpop.xlane.xlu0 %1499
        %v1501 = vsel %vm1350, %v1336, 0.0
        %1502 = vadd.xlane.f32.xlu0 %v1501
        %v1503 = vpop.xlane.xlu0 %1502
        %v1504 = vsel %vm1350, %v1337, 0.0
        %1505 = vadd.xlane.f32.xlu0 %v1504
        %v1506 = vpop.xlane.xlu0 %1505
        %v1507 = vsel %vm1350, %v1338, 0.0
        %1508 = vadd.xlane.f32.xlu0 %v1507
        %v1509 = vpop.xlane.xlu0 %1508
        %v1510 = vsel %vm1350, %v1339, 0.0
        %1511 = vadd.xlane.f32.xlu0 %v1510
        %v1512 = vpop.xlane.xlu0 %1511
        %v1513 = vsel %vm1350, %v1340, 0.0
        %1514 = vadd.xlane.f32.xlu0 %v1513
        %v1515 = vpop.xlane.xlu0 %1514
        %v1516 = vsel %vm1350, %v1341, 0.0
        %1517 = vadd.xlane.f32.xlu0 %v1516
        %v1518 = vpop.xlane.xlu0 %1517
        %v1519 = vsel %vm1350, %v1342, 0.0
        %1520 = vadd.xlane.f32.xlu0 %v1519
        %v1521 = vpop.xlane.xlu0 %1520
        %v1522 = vsel %vm1350, %v1343, 0.0
        %1523 = vadd.xlane.f32.xlu0 %v1522
        %v1524 = vpop.xlane.xlu0 %1523
        %v1525 = vsel %vm1350, %v1344, 0.0
        %1526 = vadd.xlane.f32.xlu0 %v1525
        %v1527 = vpop.xlane.xlu0 %1526
        %v1528 = vsel %vm1350, %v1345, 0.0
        %1529 = vadd.xlane.f32.xlu0 %v1528
        %v1530 = vpop.xlane.xlu0 %1529
        %v1531 = vsel %vm1350, %v1346, 0.0
        %1532 = vadd.xlane.f32.xlu0 %v1531
        %v1533 = vpop.xlane.xlu0 %1532
        %v1534 = vsel %vm1350, %v1347, 0.0
        %1535 = vadd.xlane.f32.xlu0 %v1534
        %v1536 = vpop.xlane.xlu0 %1535
        %v1537 = vsel %vm1350, %v1348, 0.0
        %1538 = vadd.xlane.f32.xlu0 %v1537
        %v1539 = vpop.xlane.xlu0 %1538
        %v1540 = vsel %vm1350, %v1349, 0.0
        %1541 = vadd.xlane.f32.xlu0 %v1540
        %v1542 = vpop.xlane.xlu0 %1541
        %v1543 = vrcp.pop 16.0
        %v1544 = vmul.f32 %v1353, %v1543
        %v1545 = vmul.f32 %v1356, %v1543
        %v1546 = vmul.f32 %v1359, %v1543
        %v1547 = vmul.f32 %v1362, %v1543
        %v1548 = vmul.f32 %v1365, %v1543
        %v1549 = vmul.f32 %v1368, %v1543
        %v1550 = vmul.f32 %v1371, %v1543
        %v1551 = vmul.f32 %v1374, %v1543
        %v1552 = vmul.f32 %v1377, %v1543
        %v1553 = vmul.f32 %v1380, %v1543
        %v1554 = vmul.f32 %v1383, %v1543
        %v1555 = vmul.f32 %v1386, %v1543
        %v1556 = vmul.f32 %v1389, %v1543
        %v1557 = vmul.f32 %v1392, %v1543
        %v1558 = vmul.f32 %v1395, %v1543
        %v1559 = vmul.f32 %v1398, %v1543
        %v1560 = vmul.f32 %v1401, %v1543
        %v1561 = vmul.f32 %v1404, %v1543
        %v1562 = vmul.f32 %v1407, %v1543
        %v1563 = vmul.f32 %v1410, %v1543
        %v1564 = vmul.f32 %v1413, %v1543
        %v1565 = vmul.f32 %v1416, %v1543
        %v1566 = vmul.f32 %v1419, %v1543
        %v1567 = vmul.f32 %v1422, %v1543
        %v1568 = vmul.f32 %v1425, %v1543
        %v1569 = vmul.f32 %v1428, %v1543
        %v1570 = vmul.f32 %v1431, %v1543
        %v1571 = vmul.f32 %v1434, %v1543
        %v1572 = vmul.f32 %v1437, %v1543
        %v1573 = vmul.f32 %v1440, %v1543
        %v1574 = vmul.f32 %v1443, %v1543
        %v1575 = vmul.f32 %v1446, %v1543
        %v1576 = vmul.f32 %v1449, %v1543
        %v1577 = vmul.f32 %v1452, %v1543
        %v1578 = vmul.f32 %v1455, %v1543
        %v1579 = vmul.f32 %v1458, %v1543
        %v1580 = vmul.f32 %v1461, %v1543
        %v1581 = vmul.f32 %v1464, %v1543
        %v1582 = vmul.f32 %v1467, %v1543
        %v1583 = vmul.f32 %v1470, %v1543
        %v1584 = vmul.f32 %v1473, %v1543
        %v1585 = vmul.f32 %v1476, %v1543
        %v1586 = vmul.f32 %v1479, %v1543
        %v1587 = vmul.f32 %v1482, %v1543
        %v1588 = vmul.f32 %v1485, %v1543
        %v1589 = vmul.f32 %v1488, %v1543
        %v1590 = vmul.f32 %v1491, %v1543
        %v1591 = vmul.f32 %v1494, %v1543
        %v1592 = vmul.f32 %v1497, %v1543
        %v1593 = vmul.f32 %v1500, %v1543
        %v1594 = vmul.f32 %v1503, %v1543
        %v1595 = vmul.f32 %v1506, %v1543
        %v1596 = vmul.f32 %v1509, %v1543
        %v1597 = vmul.f32 %v1512, %v1543
        %v1598 = vmul.f32 %v1515, %v1543
        %v1599 = vmul.f32 %v1518, %v1543
        %v1600 = vmul.f32 %v1521, %v1543
        %v1601 = vmul.f32 %v1524, %v1543
        %v1602 = vmul.f32 %v1527, %v1543
        %v1603 = vmul.f32 %v1530, %v1543
        %v1604 = vmul.f32 %v1533, %v1543
        %v1605 = vmul.f32 %v1536, %v1543
        %v1606 = vmul.f32 %v1539, %v1543
        %v1607 = vmul.f32 %v1542, %v1543
        %v1608 = vsub.f32 %v1286, %v1544
        %v1609 = vsub.f32 %v1287, %v1545
        %v1610 = vsub.f32 %v1288, %v1546
        %v1611 = vsub.f32 %v1289, %v1547
        %v1612 = vsub.f32 %v1290, %v1548
        %v1613 = vsub.f32 %v1291, %v1549
        %v1614 = vsub.f32 %v1292, %v1550
        %v1615 = vsub.f32 %v1293, %v1551
        %v1616 = vsub.f32 %v1294, %v1552
        %v1617 = vsub.f32 %v1295, %v1553
        %v1618 = vsub.f32 %v1296, %v1554
        %v1619 = vsub.f32 %v1297, %v1555
        %v1620 = vsub.f32 %v1298, %v1556
        %v1621 = vsub.f32 %v1299, %v1557
        %v1622 = vsub.f32 %v1300, %v1558
        %v1623 = vsub.f32 %v1301, %v1559
        %v1624 = vsub.f32 %v1302, %v1560
        %v1625 = vsub.f32 %v1303, %v1561
        %v1626 = vsub.f32 %v1304, %v1562
        %v1627 = vsub.f32 %v1305, %v1563
        %v1628 = vsub.f32 %v1306, %v1564
        %v1629 = vsub.f32 %v1307, %v1565
        %v1630 = vsub.f32 %v1308, %v1566
        %v1631 = vsub.f32 %v1309, %v1567
        %v1632 = vsub.f32 %v1310, %v1568
        %v1633 = vsub.f32 %v1311, %v1569
        %v1634 = vsub.f32 %v1312, %v1570
        %v1635 = vsub.f32 %v1313, %v1571
        %v1636 = vsub.f32 %v1314, %v1572
        %v1637 = vsub.f32 %v1315, %v1573
        %v1638 = vsub.f32 %v1316, %v1574
        %v1639 = vsub.f32 %v1317, %v1575
        %v1640 = vsub.f32 %v1318, %v1576
        %v1641 = vsub.f32 %v1319, %v1577
        %v1642 = vsub.f32 %v1320, %v1578
        %v1643 = vsub.f32 %v1321, %v1579
        %v1644 = vsub.f32 %v1322, %v1580
        %v1645 = vsub.f32 %v1323, %v1581
        %v1646 = vsub.f32 %v1324, %v1582
        %v1647 = vsub.f32 %v1325, %v1583
        %v1648 = vsub.f32 %v1326, %v1584
        %v1649 = vsub.f32 %v1327, %v1585
        %v1650 = vsub.f32 %v1328, %v1586
        %v1651 = vsub.f32 %v1329, %v1587
        %v1652 = vsub.f32 %v1330, %v1588
        %v1653 = vsub.f32 %v1331, %v1589
        %v1654 = vsub.f32 %v1332, %v1590
        %v1655 = vsub.f32 %v1333, %v1591
        %v1656 = vsub.f32 %v1334, %v1592
        %v1657 = vsub.f32 %v1335, %v1593
        %v1658 = vsub.f32 %v1336, %v1594
        %v1659 = vsub.f32 %v1337, %v1595
        %v1660 = vsub.f32 %v1338, %v1596
        %v1661 = vsub.f32 %v1339, %v1597
        %v1662 = vsub.f32 %v1340, %v1598
        %v1663 = vsub.f32 %v1341, %v1599
        %v1664 = vsub.f32 %v1342, %v1600
        %v1665 = vsub.f32 %v1343, %v1601
        %v1666 = vsub.f32 %v1344, %v1602
        %v1667 = vsub.f32 %v1345, %v1603
        %v1668 = vsub.f32 %v1346, %v1604
        %v1669 = vsub.f32 %v1347, %v1605
        %v1670 = vsub.f32 %v1348, %v1606
        %v1671 = vsub.f32 %v1349, %v1607
        %v1672 = vmul.f32 %v1608, %v1608
        %v1673 = vmul.f32 %v1609, %v1609
        %v1674 = vmul.f32 %v1610, %v1610
        %v1675 = vmul.f32 %v1611, %v1611
        %v1676 = vmul.f32 %v1612, %v1612
        %v1677 = vmul.f32 %v1613, %v1613
        %v1678 = vmul.f32 %v1614, %v1614
        %v1679 = vmul.f32 %v1615, %v1615
        %v1680 = vmul.f32 %v1616, %v1616
        %v1681 = vmul.f32 %v1617, %v1617
        %v1682 = vmul.f32 %v1618, %v1618
        %v1683 = vmul.f32 %v1619, %v1619
        %v1684 = vmul.f32 %v1620, %v1620
        %v1685 = vmul.f32 %v1621, %v1621
        %v1686 = vmul.f32 %v1622, %v1622
        %v1687 = vmul.f32 %v1623, %v1623
        %v1688 = vmul.f32 %v1624, %v1624
        %v1689 = vmul.f32 %v1625, %v1625
        %v1690 = vmul.f32 %v1626, %v1626
        %v1691 = vmul.f32 %v1627, %v1627
        %v1692 = vmul.f32 %v1628, %v1628
        %v1693 = vmul.f32 %v1629, %v1629
        %v1694 = vmul.f32 %v1630, %v1630
        %v1695 = vmul.f32 %v1631, %v1631
        %v1696 = vmul.f32 %v1632, %v1632
        %v1697 = vmul.f32 %v1633, %v1633
        %v1698 = vmul.f32 %v1634, %v1634
        %v1699 = vmul.f32 %v1635, %v1635
        %v1700 = vmul.f32 %v1636, %v1636
        %v1701 = vmul.f32 %v1637, %v1637
        %v1702 = vmul.f32 %v1638, %v1638
        %v1703 = vmul.f32 %v1639, %v1639
        %v1704 = vmul.f32 %v1640, %v1640
        %v1705 = vmul.f32 %v1641, %v1641
        %v1706 = vmul.f32 %v1642, %v1642
        %v1707 = vmul.f32 %v1643, %v1643
        %v1708 = vmul.f32 %v1644, %v1644
        %v1709 = vmul.f32 %v1645, %v1645
        %v1710 = vmul.f32 %v1646, %v1646
        %v1711 = vmul.f32 %v1647, %v1647
        %v1712 = vmul.f32 %v1648, %v1648
        %v1713 = vmul.f32 %v1649, %v1649
        %v1714 = vmul.f32 %v1650, %v1650
        %v1715 = vmul.f32 %v1651, %v1651
        %v1716 = vmul.f32 %v1652, %v1652
        %v1717 = vmul.f32 %v1653, %v1653
        %v1718 = vmul.f32 %v1654, %v1654
        %v1719 = vmul.f32 %v1655, %v1655
        %v1720 = vmul.f32 %v1656, %v1656
        %v1721 = vmul.f32 %v1657, %v1657
        %v1722 = vmul.f32 %v1658, %v1658
        %v1723 = vmul.f32 %v1659, %v1659
        %v1724 = vmul.f32 %v1660, %v1660
        %v1725 = vmul.f32 %v1661, %v1661
        %v1726 = vmul.f32 %v1662, %v1662
        %v1727 = vmul.f32 %v1663, %v1663
        %v1728 = vmul.f32 %v1664, %v1664
        %v1729 = vmul.f32 %v1665, %v1665
        %v1730 = vmul.f32 %v1666, %v1666
        %v1731 = vmul.f32 %v1667, %v1667
        %v1732 = vmul.f32 %v1668, %v1668
        %v1733 = vmul.f32 %v1669, %v1669
        %v1734 = vmul.f32 %v1670, %v1670
        %v1735 = vmul.f32 %v1671, %v1671
        %v1736 = vsel %vm1350, %v1672, 0.0
        %1737 = vadd.xlane.f32.xlu0 %v1736
        %v1738 = vpop.xlane.xlu0 %1737
        %v1739 = vsel %vm1350, %v1673, 0.0
        %1740 = vadd.xlane.f32.xlu0 %v1739
        %v1741 = vpop.xlane.xlu0 %1740
        %v1742 = vsel %vm1350, %v1674, 0.0
        %1743 = vadd.xlane.f32.xlu0 %v1742
        %v1744 = vpop.xlane.xlu0 %1743
        %v1745 = vsel %vm1350, %v1675, 0.0
        %1746 = vadd.xlane.f32.xlu0 %v1745
        %v1747 = vpop.xlane.xlu0 %1746
        %v1748 = vsel %vm1350, %v1676, 0.0
        %1749 = vadd.xlane.f32.xlu0 %v1748
        %v1750 = vpop.xlane.xlu0 %1749
        %v1751 = vsel %vm1350, %v1677, 0.0
        %1752 = vadd.xlane.f32.xlu0 %v1751
        %v1753 = vpop.xlane.xlu0 %1752
        %v1754 = vsel %vm1350, %v1678, 0.0
        %1755 = vadd.xlane.f32.xlu0 %v1754
        %v1756 = vpop.xlane.xlu0 %1755
        %v1757 = vsel %vm1350, %v1679, 0.0
        %1758 = vadd.xlane.f32.xlu0 %v1757
        %v1759 = vpop.xlane.xlu0 %1758
        %v1760 = vsel %vm1350, %v1680, 0.0
        %1761 = vadd.xlane.f32.xlu0 %v1760
        %v1762 = vpop.xlane.xlu0 %1761
        %v1763 = vsel %vm1350, %v1681, 0.0
        %1764 = vadd.xlane.f32.xlu0 %v1763
        %v1765 = vpop.xlane.xlu0 %1764
        %v1766 = vsel %vm1350, %v1682, 0.0
        %1767 = vadd.xlane.f32.xlu0 %v1766
        %v1768 = vpop.xlane.xlu0 %1767
        %v1769 = vsel %vm1350, %v1683, 0.0
        %1770 = vadd.xlane.f32.xlu0 %v1769
        %v1771 = vpop.xlane.xlu0 %1770
        %v1772 = vsel %vm1350, %v1684, 0.0
        %1773 = vadd.xlane.f32.xlu0 %v1772
        %v1774 = vpop.xlane.xlu0 %1773
        %v1775 = vsel %vm1350, %v1685, 0.0
        %1776 = vadd.xlane.f32.xlu0 %v1775
        %v1777 = vpop.xlane.xlu0 %1776
        %v1778 = vsel %vm1350, %v1686, 0.0
        %1779 = vadd.xlane.f32.xlu0 %v1778
        %v1780 = vpop.xlane.xlu0 %1779
        %v1781 = vsel %vm1350, %v1687, 0.0
        %1782 = vadd.xlane.f32.xlu0 %v1781
        %v1783 = vpop.xlane.xlu0 %1782
        %v1784 = vsel %vm1350, %v1688, 0.0
        %1785 = vadd.xlane.f32.xlu0 %v1784
        %v1786 = vpop.xlane.xlu0 %1785
        %v1787 = vsel %vm1350, %v1689, 0.0
        %1788 = vadd.xlane.f32.xlu0 %v1787
        %v1789 = vpop.xlane.xlu0 %1788
        %v1790 = vsel %vm1350, %v1690, 0.0
        %1791 = vadd.xlane.f32.xlu0 %v1790
        %v1792 = vpop.xlane.xlu0 %1791
        %v1793 = vsel %vm1350, %v1691, 0.0
        %1794 = vadd.xlane.f32.xlu0 %v1793
        %v1795 = vpop.xlane.xlu0 %1794
        %v1796 = vsel %vm1350, %v1692, 0.0
        %1797 = vadd.xlane.f32.xlu0 %v1796
        %v1798 = vpop.xlane.xlu0 %1797
        %v1799 = vsel %vm1350, %v1693, 0.0
        %1800 = vadd.xlane.f32.xlu0 %v1799
        %v1801 = vpop.xlane.xlu0 %1800
        %v1802 = vsel %vm1350, %v1694, 0.0
        %1803 = vadd.xlane.f32.xlu0 %v1802
        %v1804 = vpop.xlane.xlu0 %1803
        %v1805 = vsel %vm1350, %v1695, 0.0
        %1806 = vadd.xlane.f32.xlu0 %v1805
        %v1807 = vpop.xlane.xlu0 %1806
        %v1808 = vsel %vm1350, %v1696, 0.0
        %1809 = vadd.xlane.f32.xlu0 %v1808
        %v1810 = vpop.xlane.xlu0 %1809
        %v1811 = vsel %vm1350, %v1697, 0.0
        %1812 = vadd.xlane.f32.xlu0 %v1811
        %v1813 = vpop.xlane.xlu0 %1812
        %v1814 = vsel %vm1350, %v1698, 0.0
        %1815 = vadd.xlane.f32.xlu0 %v1814
        %v1816 = vpop.xlane.xlu0 %1815
        %v1817 = vsel %vm1350, %v1699, 0.0
        %1818 = vadd.xlane.f32.xlu0 %v1817
        %v1819 = vpop.xlane.xlu0 %1818
        %v1820 = vsel %vm1350, %v1700, 0.0
        %1821 = vadd.xlane.f32.xlu0 %v1820
        %v1822 = vpop.xlane.xlu0 %1821
        %v1823 = vsel %vm1350, %v1701, 0.0
        %1824 = vadd.xlane.f32.xlu0 %v1823
        %v1825 = vpop.xlane.xlu0 %1824
        %v1826 = vsel %vm1350, %v1702, 0.0
        %1827 = vadd.xlane.f32.xlu0 %v1826
        %v1828 = vpop.xlane.xlu0 %1827
        %v1829 = vsel %vm1350, %v1703, 0.0
        %1830 = vadd.xlane.f32.xlu0 %v1829
        %v1831 = vpop.xlane.xlu0 %1830
        %v1832 = vsel %vm1350, %v1704, 0.0
        %1833 = vadd.xlane.f32.xlu0 %v1832
        %v1834 = vpop.xlane.xlu0 %1833
        %v1835 = vsel %vm1350, %v1705, 0.0
        %1836 = vadd.xlane.f32.xlu0 %v1835
        %v1837 = vpop.xlane.xlu0 %1836
        %v1838 = vsel %vm1350, %v1706, 0.0
        %1839 = vadd.xlane.f32.xlu0 %v1838
        %v1840 = vpop.xlane.xlu0 %1839
        %v1841 = vsel %vm1350, %v1707, 0.0
        %1842 = vadd.xlane.f32.xlu0 %v1841
        %v1843 = vpop.xlane.xlu0 %1842
        %v1844 = vsel %vm1350, %v1708, 0.0
        %1845 = vadd.xlane.f32.xlu0 %v1844
        %v1846 = vpop.xlane.xlu0 %1845
        %v1847 = vsel %vm1350, %v1709, 0.0
        %1848 = vadd.xlane.f32.xlu0 %v1847
        %v1849 = vpop.xlane.xlu0 %1848
        %v1850 = vsel %vm1350, %v1710, 0.0
        %1851 = vadd.xlane.f32.xlu0 %v1850
        %v1852 = vpop.xlane.xlu0 %1851
        %v1853 = vsel %vm1350, %v1711, 0.0
        %1854 = vadd.xlane.f32.xlu0 %v1853
        %v1855 = vpop.xlane.xlu0 %1854
        %v1856 = vsel %vm1350, %v1712, 0.0
        %1857 = vadd.xlane.f32.xlu0 %v1856
        %v1858 = vpop.xlane.xlu0 %1857
        %v1859 = vsel %vm1350, %v1713, 0.0
        %1860 = vadd.xlane.f32.xlu0 %v1859
        %v1861 = vpop.xlane.xlu0 %1860
        %v1862 = vsel %vm1350, %v1714, 0.0
        %1863 = vadd.xlane.f32.xlu0 %v1862
        %v1864 = vpop.xlane.xlu0 %1863
        %v1865 = vsel %vm1350, %v1715, 0.0
        %1866 = vadd.xlane.f32.xlu0 %v1865
        %v1867 = vpop.xlane.xlu0 %1866
        %v1868 = vsel %vm1350, %v1716, 0.0
        %1869 = vadd.xlane.f32.xlu0 %v1868
        %v1870 = vpop.xlane.xlu0 %1869
        %v1871 = vsel %vm1350, %v1717, 0.0
        %1872 = vadd.xlane.f32.xlu0 %v1871
        %v1873 = vpop.xlane.xlu0 %1872
        %v1874 = vsel %vm1350, %v1718, 0.0
        %1875 = vadd.xlane.f32.xlu0 %v1874
        %v1876 = vpop.xlane.xlu0 %1875
        %v1877 = vsel %vm1350, %v1719, 0.0
        %1878 = vadd.xlane.f32.xlu0 %v1877
        %v1879 = vpop.xlane.xlu0 %1878
        %v1880 = vsel %vm1350, %v1720, 0.0
        %1881 = vadd.xlane.f32.xlu0 %v1880
        %v1882 = vpop.xlane.xlu0 %1881
        %v1883 = vsel %vm1350, %v1721, 0.0
        %1884 = vadd.xlane.f32.xlu0 %v1883
        %v1885 = vpop.xlane.xlu0 %1884
        %v1886 = vsel %vm1350, %v1722, 0.0
        %1887 = vadd.xlane.f32.xlu0 %v1886
        %v1888 = vpop.xlane.xlu0 %1887
        %v1889 = vsel %vm1350, %v1723, 0.0
        %1890 = vadd.xlane.f32.xlu0 %v1889
        %v1891 = vpop.xlane.xlu0 %1890
        %v1892 = vsel %vm1350, %v1724, 0.0
        %1893 = vadd.xlane.f32.xlu0 %v1892
        %v1894 = vpop.xlane.xlu0 %1893
        %v1895 = vsel %vm1350, %v1725, 0.0
        %1896 = vadd.xlane.f32.xlu0 %v1895
        %v1897 = vpop.xlane.xlu0 %1896
        %v1898 = vsel %vm1350, %v1726, 0.0
        %1899 = vadd.xlane.f32.xlu0 %v1898
        %v1900 = vpop.xlane.xlu0 %1899
        %v1901 = vsel %vm1350, %v1727, 0.0
        %1902 = vadd.xlane.f32.xlu0 %v1901
        %v1903 = vpop.xlane.xlu0 %1902
        %v1904 = vsel %vm1350, %v1728, 0.0
        %1905 = vadd.xlane.f32.xlu0 %v1904
        %v1906 = vpop.xlane.xlu0 %1905
        %v1907 = vsel %vm1350, %v1729, 0.0
        %1908 = vadd.xlane.f32.xlu0 %v1907
        %v1909 = vpop.xlane.xlu0 %1908
        %v1910 = vsel %vm1350, %v1730, 0.0
        %1911 = vadd.xlane.f32.xlu0 %v1910
        %v1912 = vpop.xlane.xlu0 %1911
        %v1913 = vsel %vm1350, %v1731, 0.0
        %1914 = vadd.xlane.f32.xlu0 %v1913
        %v1915 = vpop.xlane.xlu0 %1914
        %v1916 = vsel %vm1350, %v1732, 0.0
        %1917 = vadd.xlane.f32.xlu0 %v1916
        %v1918 = vpop.xlane.xlu0 %1917
        %v1919 = vsel %vm1350, %v1733, 0.0
        %1920 = vadd.xlane.f32.xlu0 %v1919
        %v1921 = vpop.xlane.xlu0 %1920
        %v1922 = vsel %vm1350, %v1734, 0.0
        %1923 = vadd.xlane.f32.xlu0 %v1922
        %v1924 = vpop.xlane.xlu0 %1923
        %v1925 = vsel %vm1350, %v1735, 0.0
        %1926 = vadd.xlane.f32.xlu0 %v1925
        %v1927 = vpop.xlane.xlu0 %1926
        %v1928 = vmul.f32 %v1738, %v1543
        %v1929 = vmul.f32 %v1741, %v1543
        %v1930 = vmul.f32 %v1744, %v1543
        %v1931 = vmul.f32 %v1747, %v1543
        %v1932 = vmul.f32 %v1750, %v1543
        %v1933 = vmul.f32 %v1753, %v1543
        %v1934 = vmul.f32 %v1756, %v1543
        %v1935 = vmul.f32 %v1759, %v1543
        %v1936 = vmul.f32 %v1762, %v1543
        %v1937 = vmul.f32 %v1765, %v1543
        %v1938 = vmul.f32 %v1768, %v1543
        %v1939 = vmul.f32 %v1771, %v1543
        %v1940 = vmul.f32 %v1774, %v1543
        %v1941 = vmul.f32 %v1777, %v1543
        %v1942 = vmul.f32 %v1780, %v1543
        %v1943 = vmul.f32 %v1783, %v1543
        %v1944 = vmul.f32 %v1786, %v1543
        %v1945 = vmul.f32 %v1789, %v1543
        %v1946 = vmul.f32 %v1792, %v1543
        %v1947 = vmul.f32 %v1795, %v1543
        %v1948 = vmul.f32 %v1798, %v1543
        %v1949 = vmul.f32 %v1801, %v1543
        %v1950 = vmul.f32 %v1804, %v1543
        %v1951 = vmul.f32 %v1807, %v1543
        %v1952 = vmul.f32 %v1810, %v1543
        %v1953 = vmul.f32 %v1813, %v1543
        %v1954 = vmul.f32 %v1816, %v1543
        %v1955 = vmul.f32 %v1819, %v1543
        %v1956 = vmul.f32 %v1822, %v1543
        %v1957 = vmul.f32 %v1825, %v1543
        %v1958 = vmul.f32 %v1828, %v1543
        %v1959 = vmul.f32 %v1831, %v1543
        %v1960 = vmul.f32 %v1834, %v1543
        %v1961 = vmul.f32 %v1837, %v1543
        %v1962 = vmul.f32 %v1840, %v1543
        %v1963 = vmul.f32 %v1843, %v1543
        %v1964 = vmul.f32 %v1846, %v1543
        %v1965 = vmul.f32 %v1849, %v1543
        %v1966 = vmul.f32 %v1852, %v1543
        %v1967 = vmul.f32 %v1855, %v1543
        %v1968 = vmul.f32 %v1858, %v1543
        %v1969 = vmul.f32 %v1861, %v1543
        %v1970 = vmul.f32 %v1864, %v1543
        %v1971 = vmul.f32 %v1867, %v1543
        %v1972 = vmul.f32 %v1870, %v1543
        %v1973 = vmul.f32 %v1873, %v1543
        %v1974 = vmul.f32 %v1876, %v1543
        %v1975 = vmul.f32 %v1879, %v1543
        %v1976 = vmul.f32 %v1882, %v1543
        %v1977 = vmul.f32 %v1885, %v1543
        %v1978 = vmul.f32 %v1888, %v1543
        %v1979 = vmul.f32 %v1891, %v1543
        %v1980 = vmul.f32 %v1894, %v1543
        %v1981 = vmul.f32 %v1897, %v1543
        %v1982 = vmul.f32 %v1900, %v1543
        %v1983 = vmul.f32 %v1903, %v1543
        %v1984 = vmul.f32 %v1906, %v1543
        %v1985 = vmul.f32 %v1909, %v1543
        %v1986 = vmul.f32 %v1912, %v1543
        %v1987 = vmul.f32 %v1915, %v1543
        %v1988 = vmul.f32 %v1918, %v1543
        %v1989 = vmul.f32 %v1921, %v1543
        %v1990 = vmul.f32 %v1924, %v1543
        %v1991 = vmul.f32 %v1927, %v1543
        %v1992 = vadd.f32 %v1928, 1e-05
        %v1993 = vadd.f32 %v1929, 1e-05
        %v1994 = vadd.f32 %v1930, 1e-05
        %v1995 = vadd.f32 %v1931, 1e-05
        %v1996 = vadd.f32 %v1932, 1e-05
        %v1997 = vadd.f32 %v1933, 1e-05
        %v1998 = vadd.f32 %v1934, 1e-05
        %v1999 = vadd.f32 %v1935, 1e-05
        %v2000 = vadd.f32 %v1936, 1e-05
        %v2001 = vadd.f32 %v1937, 1e-05
        %v2002 = vadd.f32 %v1938, 1e-05
        %v2003 = vadd.f32 %v1939, 1e-05
        %v2004 = vadd.f32 %v1940, 1e-05
        %v2005 = vadd.f32 %v1941, 1e-05
        %v2006 = vadd.f32 %v1942, 1e-05
        %v2007 = vadd.f32 %v1943, 1e-05
        %v2008 = vadd.f32 %v1944, 1e-05
        %v2009 = vadd.f32 %v1945, 1e-05
        %v2010 = vadd.f32 %v1946, 1e-05
        %v2011 = vadd.f32 %v1947, 1e-05
        %v2012 = vadd.f32 %v1948, 1e-05
        %v2013 = vadd.f32 %v1949, 1e-05
        %v2014 = vadd.f32 %v1950, 1e-05
        %v2015 = vadd.f32 %v1951, 1e-05
        %v2016 = vadd.f32 %v1952, 1e-05
        %v2017 = vadd.f32 %v1953, 1e-05
        %v2018 = vadd.f32 %v1954, 1e-05
        %v2019 = vadd.f32 %v1955, 1e-05
        %v2020 = vadd.f32 %v1956, 1e-05
        %v2021 = vadd.f32 %v1957, 1e-05
        %v2022 = vadd.f32 %v1958, 1e-05
        %v2023 = vadd.f32 %v1959, 1e-05
        %v2024 = vadd.f32 %v1960, 1e-05
        %v2025 = vadd.f32 %v1961, 1e-05
        %v2026 = vadd.f32 %v1962, 1e-05
        %v2027 = vadd.f32 %v1963, 1e-05
        %v2028 = vadd.f32 %v1964, 1e-05
        %v2029 = vadd.f32 %v1965, 1e-05
        %v2030 = vadd.f32 %v1966, 1e-05
        %v2031 = vadd.f32 %v1967, 1e-05
        %v2032 = vadd.f32 %v1968, 1e-05
        %v2033 = vadd.f32 %v1969, 1e-05
        %v2034 = vadd.f32 %v1970, 1e-05
        %v2035 = vadd.f32 %v1971, 1e-05
        %v2036 = vadd.f32 %v1972, 1e-05
        %v2037 = vadd.f32 %v1973, 1e-05
        %v2038 = vadd.f32 %v1974, 1e-05
        %v2039 = vadd.f32 %v1975, 1e-05
        %v2040 = vadd.f32 %v1976, 1e-05
        %v2041 = vadd.f32 %v1977, 1e-05
        %v2042 = vadd.f32 %v1978, 1e-05
        %v2043 = vadd.f32 %v1979, 1e-05
        %v2044 = vadd.f32 %v1980, 1e-05
        %v2045 = vadd.f32 %v1981, 1e-05
        %v2046 = vadd.f32 %v1982, 1e-05
        %v2047 = vadd.f32 %v1983, 1e-05
        %v2048 = vadd.f32 %v1984, 1e-05
        %v2049 = vadd.f32 %v1985, 1e-05
        %v2050 = vadd.f32 %v1986, 1e-05
        %v2051 = vadd.f32 %v1987, 1e-05
        %v2052 = vadd.f32 %v1988, 1e-05
        %v2053 = vadd.f32 %v1989, 1e-05
        %v2054 = vadd.f32 %v1990, 1e-05
        %v2055 = vadd.f32 %v1991, 1e-05
        %v2056 = vrsqrt.pop %v1992
        %v2057 = vrsqrt.pop %v1993
        %v2058 = vrsqrt.pop %v1994
        %v2059 = vrsqrt.pop %v1995
        %v2060 = vrsqrt.pop %v1996
        %v2061 = vrsqrt.pop %v1997
        %v2062 = vrsqrt.pop %v1998
        %v2063 = vrsqrt.pop %v1999
        %v2064 = vrsqrt.pop %v2000
        %v2065 = vrsqrt.pop %v2001
        %v2066 = vrsqrt.pop %v2002
        %v2067 = vrsqrt.pop %v2003
        %v2068 = vrsqrt.pop %v2004
        %v2069 = vrsqrt.pop %v2005
        %v2070 = vrsqrt.pop %v2006
        %v2071 = vrsqrt.pop %v2007
        %v2072 = vrsqrt.pop %v2008
        %v2073 = vrsqrt.pop %v2009
        %v2074 = vrsqrt.pop %v2010
        %v2075 = vrsqrt.pop %v2011
        %v2076 = vrsqrt.pop %v2012
        %v2077 = vrsqrt.pop %v2013
        %v2078 = vrsqrt.pop %v2014
        %v2079 = vrsqrt.pop %v2015
        %v2080 = vrsqrt.pop %v2016
        %v2081 = vrsqrt.pop %v2017
        %v2082 = vrsqrt.pop %v2018
        %v2083 = vrsqrt.pop %v2019
        %v2084 = vrsqrt.pop %v2020
        %v2085 = vrsqrt.pop %v2021
        %v2086 = vrsqrt.pop %v2022
        %v2087 = vrsqrt.pop %v2023
        %v2088 = vrsqrt.pop %v2024
        %v2089 = vrsqrt.pop %v2025
        %v2090 = vrsqrt.pop %v2026
        %v2091 = vrsqrt.pop %v2027
        %v2092 = vrsqrt.pop %v2028
        %v2093 = vrsqrt.pop %v2029
        %v2094 = vrsqrt.pop %v2030
        %v2095 = vrsqrt.pop %v2031
        %v2096 = vrsqrt.pop %v2032
        %v2097 = vrsqrt.pop %v2033
        %v2098 = vrsqrt.pop %v2034
        %v2099 = vrsqrt.pop %v2035
        %v2100 = vrsqrt.pop %v2036
        %v2101 = vrsqrt.pop %v2037
        %v2102 = vrsqrt.pop %v2038
        %v2103 = vrsqrt.pop %v2039
        %v2104 = vrsqrt.pop %v2040
        %v2105 = vrsqrt.pop %v2041
        %v2106 = vrsqrt.pop %v2042
        %v2107 = vrsqrt.pop %v2043
        %v2108 = vrsqrt.pop %v2044
        %v2109 = vrsqrt.pop %v2045
        %v2110 = vrsqrt.pop %v2046
        %v2111 = vrsqrt.pop %v2047
        %v2112 = vrsqrt.pop %v2048
        %v2113 = vrsqrt.pop %v2049
        %v2114 = vrsqrt.pop %v2050
        %v2115 = vrsqrt.pop %v2051
        %v2116 = vrsqrt.pop %v2052
        %v2117 = vrsqrt.pop %v2053
        %v2118 = vrsqrt.pop %v2054
        %v2119 = vrsqrt.pop %v2055
        %v2120 = vmul.f32 %v1608, %v2056
        %v2121 = vmul.f32 %v1609, %v2057
        %v2122 = vmul.f32 %v1610, %v2058
        %v2123 = vmul.f32 %v1611, %v2059
        %v2124 = vmul.f32 %v1612, %v2060
        %v2125 = vmul.f32 %v1613, %v2061
        %v2126 = vmul.f32 %v1614, %v2062
        %v2127 = vmul.f32 %v1615, %v2063
        %v2128 = vmul.f32 %v1616, %v2064
        %v2129 = vmul.f32 %v1617, %v2065
        %v2130 = vmul.f32 %v1618, %v2066
        %v2131 = vmul.f32 %v1619, %v2067
        %v2132 = vmul.f32 %v1620, %v2068
        %v2133 = vmul.f32 %v1621, %v2069
        %v2134 = vmul.f32 %v1622, %v2070
        %v2135 = vmul.f32 %v1623, %v2071
        %v2136 = vmul.f32 %v1624, %v2072
        %v2137 = vmul.f32 %v1625, %v2073
        %v2138 = vmul.f32 %v1626, %v2074
        %v2139 = vmul.f32 %v1627, %v2075
        %v2140 = vmul.f32 %v1628, %v2076
        %v2141 = vmul.f32 %v1629, %v2077
        %v2142 = vmul.f32 %v1630, %v2078
        %v2143 = vmul.f32 %v1631, %v2079
        %v2144 = vmul.f32 %v1632, %v2080
        %v2145 = vmul.f32 %v1633, %v2081
        %v2146 = vmul.f32 %v1634, %v2082
        %v2147 = vmul.f32 %v1635, %v2083
        %v2148 = vmul.f32 %v1636, %v2084
        %v2149 = vmul.f32 %v1637, %v2085
        %v2150 = vmul.f32 %v1638, %v2086
        %v2151 = vmul.f32 %v1639, %v2087
        %v2152 = vmul.f32 %v1640, %v2088
        %v2153 = vmul.f32 %v1641, %v2089
        %v2154 = vmul.f32 %v1642, %v2090
        %v2155 = vmul.f32 %v1643, %v2091
        %v2156 = vmul.f32 %v1644, %v2092
        %v2157 = vmul.f32 %v1645, %v2093
        %v2158 = vmul.f32 %v1646, %v2094
        %v2159 = vmul.f32 %v1647, %v2095
        %v2160 = vmul.f32 %v1648, %v2096
        %v2161 = vmul.f32 %v1649, %v2097
        %v2162 = vmul.f32 %v1650, %v2098
        %v2163 = vmul.f32 %v1651, %v2099
        %v2164 = vmul.f32 %v1652, %v2100
        %v2165 = vmul.f32 %v1653, %v2101
        %v2166 = vmul.f32 %v1654, %v2102
        %v2167 = vmul.f32 %v1655, %v2103
        %v2168 = vmul.f32 %v1656, %v2104
        %v2169 = vmul.f32 %v1657, %v2105
        %v2170 = vmul.f32 %v1658, %v2106
        %v2171 = vmul.f32 %v1659, %v2107
        %v2172 = vmul.f32 %v1660, %v2108
        %v2173 = vmul.f32 %v1661, %v2109
        %v2174 = vmul.f32 %v1662, %v2110
        %v2175 = vmul.f32 %v1663, %v2111
        %v2176 = vmul.f32 %v1664, %v2112
        %v2177 = vmul.f32 %v1665, %v2113
        %v2178 = vmul.f32 %v1666, %v2114
        %v2179 = vmul.f32 %v1667, %v2115
        %v2180 = vmul.f32 %v1668, %v2116
        %v2181 = vmul.f32 %v1669, %v2117
        %v2182 = vmul.f32 %v1670, %v2118
        %v2183 = vmul.f32 %v1671, %v2119
        %v2184 = vld [vmem:[%s529] sm:$0xf]
        %v2185 = vlaneseq
        %v2186 = vshrl.u32 %v2185, 7
        %v2187 = vsub.s32 0, %v2186
        %v2188 = vrot.slane %v2184, %v2187
        %v2189 = vmul.f32 %v2120, %v2188
        %v2190 = vmul.f32 %v2121, %v2188
        %v2191 = vmul.f32 %v2122, %v2188
        %v2192 = vmul.f32 %v2123, %v2188
        %v2193 = vmul.f32 %v2124, %v2188
        %v2194 = vmul.f32 %v2125, %v2188
        %v2195 = vmul.f32 %v2126, %v2188
        %v2196 = vmul.f32 %v2127, %v2188
        %v2197 = vmul.f32 %v2128, %v2188
        %v2198 = vmul.f32 %v2129, %v2188
        %v2199 = vmul.f32 %v2130, %v2188
        %v2200 = vmul.f32 %v2131, %v2188
        %v2201 = vmul.f32 %v2132, %v2188
        %v2202 = vmul.f32 %v2133, %v2188
        %v2203 = vmul.f32 %v2134, %v2188
        %v2204 = vmul.f32 %v2135, %v2188
        %v2205 = vmul.f32 %v2136, %v2188
        %v2206 = vmul.f32 %v2137, %v2188
        %v2207 = vmul.f32 %v2138, %v2188
        %v2208 = vmul.f32 %v2139, %v2188
        %v2209 = vmul.f32 %v2140, %v2188
        %v2210 = vmul.f32 %v2141, %v2188
        %v2211 = vmul.f32 %v2142, %v2188
        %v2212 = vmul.f32 %v2143, %v2188
        %v2213 = vmul.f32 %v2144, %v2188
        %v2214 = vmul.f32 %v2145, %v2188
        %v2215 = vmul.f32 %v2146, %v2188
        %v2216 = vmul.f32 %v2147, %v2188
        %v2217 = vmul.f32 %v2148, %v2188
        %v2218 = vmul.f32 %v2149, %v2188
        %v2219 = vmul.f32 %v2150, %v2188
        %v2220 = vmul.f32 %v2151, %v2188
        %v2221 = vmul.f32 %v2152, %v2188
        %v2222 = vmul.f32 %v2153, %v2188
        %v2223 = vmul.f32 %v2154, %v2188
        %v2224 = vmul.f32 %v2155, %v2188
        %v2225 = vmul.f32 %v2156, %v2188
        %v2226 = vmul.f32 %v2157, %v2188
        %v2227 = vmul.f32 %v2158, %v2188
        %v2228 = vmul.f32 %v2159, %v2188
        %v2229 = vmul.f32 %v2160, %v2188
        %v2230 = vmul.f32 %v2161, %v2188
        %v2231 = vmul.f32 %v2162, %v2188
        %v2232 = vmul.f32 %v2163, %v2188
        %v2233 = vmul.f32 %v2164, %v2188
        %v2234 = vmul.f32 %v2165, %v2188
        %v2235 = vmul.f32 %v2166, %v2188
        %v2236 = vmul.f32 %v2167, %v2188
        %v2237 = vmul.f32 %v2168, %v2188
        %v2238 = vmul.f32 %v2169, %v2188
        %v2239 = vmul.f32 %v2170, %v2188
        %v2240 = vmul.f32 %v2171, %v2188
        %v2241 = vmul.f32 %v2172, %v2188
        %v2242 = vmul.f32 %v2173, %v2188
        %v2243 = vmul.f32 %v2174, %v2188
        %v2244 = vmul.f32 %v2175, %v2188
        %v2245 = vmul.f32 %v2176, %v2188
        %v2246 = vmul.f32 %v2177, %v2188
        %v2247 = vmul.f32 %v2178, %v2188
        %v2248 = vmul.f32 %v2179, %v2188
        %v2249 = vmul.f32 %v2180, %v2188
        %v2250 = vmul.f32 %v2181, %v2188
        %v2251 = vmul.f32 %v2182, %v2188
        %v2252 = vmul.f32 %v2183, %v2188
        %v2253 = vsel %vm1350, %v2189, 0.0
        %2254 = vadd.xlane.f32.xlu0 %v2253
        %v2255 = vpop.xlane.xlu0 %2254
        %v2256 = vsel %vm1350, %v2190, 0.0
        %2257 = vadd.xlane.f32.xlu0 %v2256
        %v2258 = vpop.xlane.xlu0 %2257
        %v2259 = vsel %vm1350, %v2191, 0.0
        %2260 = vadd.xlane.f32.xlu0 %v2259
        %v2261 = vpop.xlane.xlu0 %2260
        %v2262 = vsel %vm1350, %v2192, 0.0
        %2263 = vadd.xlane.f32.xlu0 %v2262
        %v2264 = vpop.xlane.xlu0 %2263
        %v2265 = vsel %vm1350, %v2193, 0.0
        %2266 = vadd.xlane.f32.xlu0 %v2265
        %v2267 = vpop.xlane.xlu0 %2266
        %v2268 = vsel %vm1350, %v2194, 0.0
        %2269 = vadd.xlane.f32.xlu0 %v2268
        %v2270 = vpop.xlane.xlu0 %2269
        %v2271 = vsel %vm1350, %v2195, 0.0
        %2272 = vadd.xlane.f32.xlu0 %v2271
        %v2273 = vpop.xlane.xlu0 %2272
        %v2274 = vsel %vm1350, %v2196, 0.0
        %2275 = vadd.xlane.f32.xlu0 %v2274
        %v2276 = vpop.xlane.xlu0 %2275
        %v2277 = vsel %vm1350, %v2197, 0.0
        %2278 = vadd.xlane.f32.xlu0 %v2277
        %v2279 = vpop.xlane.xlu0 %2278
        %v2280 = vsel %vm1350, %v2198, 0.0
        %2281 = vadd.xlane.f32.xlu0 %v2280
        %v2282 = vpop.xlane.xlu0 %2281
        %v2283 = vsel %vm1350, %v2199, 0.0
        %2284 = vadd.xlane.f32.xlu0 %v2283
        %v2285 = vpop.xlane.xlu0 %2284
        %v2286 = vsel %vm1350, %v2200, 0.0
        %2287 = vadd.xlane.f32.xlu0 %v2286
        %v2288 = vpop.xlane.xlu0 %2287
        %v2289 = vsel %vm1350, %v2201, 0.0
        %2290 = vadd.xlane.f32.xlu0 %v2289
        %v2291 = vpop.xlane.xlu0 %2290
        %v2292 = vsel %vm1350, %v2202, 0.0
        %2293 = vadd.xlane.f32.xlu0 %v2292
        %v2294 = vpop.xlane.xlu0 %2293
        %v2295 = vsel %vm1350, %v2203, 0.0
        %2296 = vadd.xlane.f32.xlu0 %v2295
        %v2297 = vpop.xlane.xlu0 %2296
        %v2298 = vsel %vm1350, %v2204, 0.0
        %2299 = vadd.xlane.f32.xlu0 %v2298
        %v2300 = vpop.xlane.xlu0 %2299
        %v2301 = vsel %vm1350, %v2205, 0.0
        %2302 = vadd.xlane.f32.xlu0 %v2301
        %v2303 = vpop.xlane.xlu0 %2302
        %v2304 = vsel %vm1350, %v2206, 0.0
        %2305 = vadd.xlane.f32.xlu0 %v2304
        %v2306 = vpop.xlane.xlu0 %2305
        %v2307 = vsel %vm1350, %v2207, 0.0
        %2308 = vadd.xlane.f32.xlu0 %v2307
        %v2309 = vpop.xlane.xlu0 %2308
        %v2310 = vsel %vm1350, %v2208, 0.0
        %2311 = vadd.xlane.f32.xlu0 %v2310
        %v2312 = vpop.xlane.xlu0 %2311
        %v2313 = vsel %vm1350, %v2209, 0.0
        %2314 = vadd.xlane.f32.xlu0 %v2313
        %v2315 = vpop.xlane.xlu0 %2314
        %v2316 = vsel %vm1350, %v2210, 0.0
        %2317 = vadd.xlane.f32.xlu0 %v2316
        %v2318 = vpop.xlane.xlu0 %2317
        %v2319 = vsel %vm1350, %v2211, 0.0
        %2320 = vadd.xlane.f32.xlu0 %v2319
        %v2321 = vpop.xlane.xlu0 %2320
        %v2322 = vsel %vm1350, %v2212, 0.0
        %2323 = vadd.xlane.f32.xlu0 %v2322
        %v2324 = vpop.xlane.xlu0 %2323
        %v2325 = vsel %vm1350, %v2213, 0.0
        %2326 = vadd.xlane.f32.xlu0 %v2325
        %v2327 = vpop.xlane.xlu0 %2326
        %v2328 = vsel %vm1350, %v2214, 0.0
        %2329 = vadd.xlane.f32.xlu0 %v2328
        %v2330 = vpop.xlane.xlu0 %2329
        %v2331 = vsel %vm1350, %v2215, 0.0
        %2332 = vadd.xlane.f32.xlu0 %v2331
        %v2333 = vpop.xlane.xlu0 %2332
        %v2334 = vsel %vm1350, %v2216, 0.0
        %2335 = vadd.xlane.f32.xlu0 %v2334
        %v2336 = vpop.xlane.xlu0 %2335
        %v2337 = vsel %vm1350, %v2217, 0.0
        %2338 = vadd.xlane.f32.xlu0 %v2337
        %v2339 = vpop.xlane.xlu0 %2338
        %v2340 = vsel %vm1350, %v2218, 0.0
        %2341 = vadd.xlane.f32.xlu0 %v2340
        %v2342 = vpop.xlane.xlu0 %2341
        %v2343 = vsel %vm1350, %v2219, 0.0
        %2344 = vadd.xlane.f32.xlu0 %v2343
        %v2345 = vpop.xlane.xlu0 %2344
        %v2346 = vsel %vm1350, %v2220, 0.0
        %2347 = vadd.xlane.f32.xlu0 %v2346
        %v2348 = vpop.xlane.xlu0 %2347
        %v2349 = vsel %vm1350, %v2221, 0.0
        %2350 = vadd.xlane.f32.xlu0 %v2349
        %v2351 = vpop.xlane.xlu0 %2350
        %v2352 = vsel %vm1350, %v2222, 0.0
        %2353 = vadd.xlane.f32.xlu0 %v2352
        %v2354 = vpop.xlane.xlu0 %2353
        %v2355 = vsel %vm1350, %v2223, 0.0
        %2356 = vadd.xlane.f32.xlu0 %v2355
        %v2357 = vpop.xlane.xlu0 %2356
        %v2358 = vsel %vm1350, %v2224, 0.0
        %2359 = vadd.xlane.f32.xlu0 %v2358
        %v2360 = vpop.xlane.xlu0 %2359
        %v2361 = vsel %vm1350, %v2225, 0.0
        %2362 = vadd.xlane.f32.xlu0 %v2361
        %v2363 = vpop.xlane.xlu0 %2362
        %v2364 = vsel %vm1350, %v2226, 0.0
        %2365 = vadd.xlane.f32.xlu0 %v2364
        %v2366 = vpop.xlane.xlu0 %2365
        %v2367 = vsel %vm1350, %v2227, 0.0
        %2368 = vadd.xlane.f32.xlu0 %v2367
        %v2369 = vpop.xlane.xlu0 %2368
        %v2370 = vsel %vm1350, %v2228, 0.0
        %2371 = vadd.xlane.f32.xlu0 %v2370
        %v2372 = vpop.xlane.xlu0 %2371
        %v2373 = vsel %vm1350, %v2229, 0.0
        %2374 = vadd.xlane.f32.xlu0 %v2373
        %v2375 = vpop.xlane.xlu0 %2374
        %v2376 = vsel %vm1350, %v2230, 0.0
        %2377 = vadd.xlane.f32.xlu0 %v2376
        %v2378 = vpop.xlane.xlu0 %2377
        %v2379 = vsel %vm1350, %v2231, 0.0
        %2380 = vadd.xlane.f32.xlu0 %v2379
        %v2381 = vpop.xlane.xlu0 %2380
        %v2382 = vsel %vm1350, %v2232, 0.0
        %2383 = vadd.xlane.f32.xlu0 %v2382
        %v2384 = vpop.xlane.xlu0 %2383
        %v2385 = vsel %vm1350, %v2233, 0.0
        %2386 = vadd.xlane.f32.xlu0 %v2385
        %v2387 = vpop.xlane.xlu0 %2386
        %v2388 = vsel %vm1350, %v2234, 0.0
        %2389 = vadd.xlane.f32.xlu0 %v2388
        %v2390 = vpop.xlane.xlu0 %2389
        %v2391 = vsel %vm1350, %v2235, 0.0
        %2392 = vadd.xlane.f32.xlu0 %v2391
        %v2393 = vpop.xlane.xlu0 %2392
        %v2394 = vsel %vm1350, %v2236, 0.0
        %2395 = vadd.xlane.f32.xlu0 %v2394
        %v2396 = vpop.xlane.xlu0 %2395
        %v2397 = vsel %vm1350, %v2237, 0.0
        %2398 = vadd.xlane.f32.xlu0 %v2397
        %v2399 = vpop.xlane.xlu0 %2398
        %v2400 = vsel %vm1350, %v2238, 0.0
        %2401 = vadd.xlane.f32.xlu0 %v2400
        %v2402 = vpop.xlane.xlu0 %2401
        %v2403 = vsel %vm1350, %v2239, 0.0
        %2404 = vadd.xlane.f32.xlu0 %v2403
        %v2405 = vpop.xlane.xlu0 %2404
        %v2406 = vsel %vm1350, %v2240, 0.0
        %2407 = vadd.xlane.f32.xlu0 %v2406
        %v2408 = vpop.xlane.xlu0 %2407
        %v2409 = vsel %vm1350, %v2241, 0.0
        %2410 = vadd.xlane.f32.xlu0 %v2409
        %v2411 = vpop.xlane.xlu0 %2410
        %v2412 = vsel %vm1350, %v2242, 0.0
        %2413 = vadd.xlane.f32.xlu0 %v2412
        %v2414 = vpop.xlane.xlu0 %2413
        %v2415 = vsel %vm1350, %v2243, 0.0
        %2416 = vadd.xlane.f32.xlu0 %v2415
        %v2417 = vpop.xlane.xlu0 %2416
        %v2418 = vsel %vm1350, %v2244, 0.0
        %2419 = vadd.xlane.f32.xlu0 %v2418
        %v2420 = vpop.xlane.xlu0 %2419
        %v2421 = vsel %vm1350, %v2245, 0.0
        %2422 = vadd.xlane.f32.xlu0 %v2421
        %v2423 = vpop.xlane.xlu0 %2422
        %v2424 = vsel %vm1350, %v2246, 0.0
        %2425 = vadd.xlane.f32.xlu0 %v2424
        %v2426 = vpop.xlane.xlu0 %2425
        %v2427 = vsel %vm1350, %v2247, 0.0
        %2428 = vadd.xlane.f32.xlu0 %v2427
        %v2429 = vpop.xlane.xlu0 %2428
        %v2430 = vsel %vm1350, %v2248, 0.0
        %2431 = vadd.xlane.f32.xlu0 %v2430
        %v2432 = vpop.xlane.xlu0 %2431
        %v2433 = vsel %vm1350, %v2249, 0.0
        %2434 = vadd.xlane.f32.xlu0 %v2433
        %v2435 = vpop.xlane.xlu0 %2434
        %v2436 = vsel %vm1350, %v2250, 0.0
        %2437 = vadd.xlane.f32.xlu0 %v2436
        %v2438 = vpop.xlane.xlu0 %2437
        %v2439 = vsel %vm1350, %v2251, 0.0
        %2440 = vadd.xlane.f32.xlu0 %v2439
        %v2441 = vpop.xlane.xlu0 %2440
        %v2442 = vsel %vm1350, %v2252, 0.0
        %2443 = vadd.xlane.f32.xlu0 %v2442
        %v2444 = vpop.xlane.xlu0 %2443
        %2447 = vrot.lane.b32.xlu0 %v1216, 64
        %v2448 = vpop.permute.xlu0 %2447
        %2449 = vrot.lane.b32.xlu0 %v1222, 64
        %v2450 = vpop.permute.xlu0 %2449
        %v2483 = vlaneseq
        %v2484 = vand.u32 %v2483, 127
        %v2485 = vlaneseq
        %v2486 = vshrl.u32 %v2485, 7
        %v2487 = vsub.s32 %v2484, %v2486
        %v2488 = vrot.slane %v2255, %v2487
        %v2489 = vadd.s32 %v2484, 4294967288
        %v2490 = vlaneseq
        %v2491 = vshrl.u32 %v2490, 7
        %v2492 = vsub.s32 %v2489, %v2491
        %v2493 = vrot.slane %v2258, %v2492
        %vm2494 = vcmask 130112
        %v2495 = vsel %vm2494, %v2493, %v2488
        %v2496 = vlaneseq
        %v2497 = vshrl.u32 %v2496, 7
        %v2498 = vsub.s32 %v2484, %v2497
        %v2499 = vrot.slane %v2261, %v2498
        %v2500 = vlaneseq
        %v2501 = vshrl.u32 %v2500, 7
        %v2502 = vsub.s32 %v2489, %v2501
        %v2503 = vrot.slane %v2264, %v2502
        %v2504 = vsel %vm2494, %v2503, %v2499
        %v2505 = vlaneseq
        %v2506 = vshrl.u32 %v2505, 7
        %v2507 = vsub.s32 %v2484, %v2506
        %v2508 = vrot.slane %v2267, %v2507
        %v2509 = vlaneseq
        %v2510 = vshrl.u32 %v2509, 7
        %v2511 = vsub.s32 %v2489, %v2510
        %v2512 = vrot.slane %v2270, %v2511
        %v2513 = vsel %vm2494, %v2512, %v2508
        %v2514 = vlaneseq
        %v2515 = vshrl.u32 %v2514, 7
        %v2516 = vsub.s32 %v2484, %v2515
        %v2517 = vrot.slane %v2273, %v2516
        %v2518 = vlaneseq
        %v2519 = vshrl.u32 %v2518, 7
        %v2520 = vsub.s32 %v2489, %v2519
        %v2521 = vrot.slane %v2276, %v2520
        %v2522 = vsel %vm2494, %v2521, %v2517
        %v2523 = vlaneseq
        %v2524 = vshrl.u32 %v2523, 7
        %v2525 = vsub.s32 %v2484, %v2524
        %v2526 = vrot.slane %v2279, %v2525
        %v2527 = vlaneseq
        %v2528 = vshrl.u32 %v2527, 7
        %v2529 = vsub.s32 %v2489, %v2528
        %v2530 = vrot.slane %v2282, %v2529
        %v2531 = vsel %vm2494, %v2530, %v2526
        %v2532 = vlaneseq
        %v2533 = vshrl.u32 %v2532, 7
        %v2534 = vsub.s32 %v2484, %v2533
        %v2535 = vrot.slane %v2285, %v2534
        %v2536 = vlaneseq
        %v2537 = vshrl.u32 %v2536, 7
        %v2538 = vsub.s32 %v2489, %v2537
        %v2539 = vrot.slane %v2288, %v2538
        %v2540 = vsel %vm2494, %v2539, %v2535
        %v2541 = vlaneseq
        %v2542 = vshrl.u32 %v2541, 7
        %v2543 = vsub.s32 %v2484, %v2542
        %v2544 = vrot.slane %v2291, %v2543
        %v2545 = vlaneseq
        %v2546 = vshrl.u32 %v2545, 7
        %v2547 = vsub.s32 %v2489, %v2546
        %v2548 = vrot.slane %v2294, %v2547
        %v2549 = vsel %vm2494, %v2548, %v2544
        %v2550 = vlaneseq
        %v2551 = vshrl.u32 %v2550, 7
        %v2552 = vsub.s32 %v2484, %v2551
        %v2553 = vrot.slane %v2297, %v2552
        %v2554 = vlaneseq
        %v2555 = vshrl.u32 %v2554, 7
        %v2556 = vsub.s32 %v2489, %v2555
        %v2557 = vrot.slane %v2300, %v2556
        %v2558 = vsel %vm2494, %v2557, %v2553
        %v2559 = vlaneseq
        %v2560 = vshrl.u32 %v2559, 7
        %v2561 = vsub.s32 %v2484, %v2560
        %v2562 = vrot.slane %v2303, %v2561
        %v2563 = vlaneseq
        %v2564 = vshrl.u32 %v2563, 7
        %v2565 = vsub.s32 %v2489, %v2564
        %v2566 = vrot.slane %v2306, %v2565
        %v2567 = vsel %vm2494, %v2566, %v2562
        %v2568 = vlaneseq
        %v2569 = vshrl.u32 %v2568, 7
        %v2570 = vsub.s32 %v2484, %v2569
        %v2571 = vrot.slane %v2309, %v2570
        %v2572 = vlaneseq
        %v2573 = vshrl.u32 %v2572, 7
        %v2574 = vsub.s32 %v2489, %v2573
        %v2575 = vrot.slane %v2312, %v2574
        %v2576 = vsel %vm2494, %v2575, %v2571
        %v2577 = vlaneseq
        %v2578 = vshrl.u32 %v2577, 7
        %v2579 = vsub.s32 %v2484, %v2578
        %v2580 = vrot.slane %v2315, %v2579
        %v2581 = vlaneseq
        %v2582 = vshrl.u32 %v2581, 7
        %v2583 = vsub.s32 %v2489, %v2582
        %v2584 = vrot.slane %v2318, %v2583
        %v2585 = vsel %vm2494, %v2584, %v2580
        %v2586 = vlaneseq
        %v2587 = vshrl.u32 %v2586, 7
        %v2588 = vsub.s32 %v2484, %v2587
        %v2589 = vrot.slane %v2321, %v2588
        %v2590 = vlaneseq
        %v2591 = vshrl.u32 %v2590, 7
        %v2592 = vsub.s32 %v2489, %v2591
        %v2593 = vrot.slane %v2324, %v2592
        %v2594 = vsel %vm2494, %v2593, %v2589
        %v2595 = vlaneseq
        %v2596 = vshrl.u32 %v2595, 7
        %v2597 = vsub.s32 %v2484, %v2596
        %v2598 = vrot.slane %v2327, %v2597
        %v2599 = vlaneseq
        %v2600 = vshrl.u32 %v2599, 7
        %v2601 = vsub.s32 %v2489, %v2600
        %v2602 = vrot.slane %v2330, %v2601
        %v2603 = vsel %vm2494, %v2602, %v2598
        %v2604 = vlaneseq
        %v2605 = vshrl.u32 %v2604, 7
        %v2606 = vsub.s32 %v2484, %v2605
        %v2607 = vrot.slane %v2333, %v2606
        %v2608 = vlaneseq
        %v2609 = vshrl.u32 %v2608, 7
        %v2610 = vsub.s32 %v2489, %v2609
        %v2611 = vrot.slane %v2336, %v2610
        %v2612 = vsel %vm2494, %v2611, %v2607
        %v2613 = vlaneseq
        %v2614 = vshrl.u32 %v2613, 7
        %v2615 = vsub.s32 %v2484, %v2614
        %v2616 = vrot.slane %v2339, %v2615
        %v2617 = vlaneseq
        %v2618 = vshrl.u32 %v2617, 7
        %v2619 = vsub.s32 %v2489, %v2618
        %v2620 = vrot.slane %v2342, %v2619
        %v2621 = vsel %vm2494, %v2620, %v2616
        %v2622 = vlaneseq
        %v2623 = vshrl.u32 %v2622, 7
        %v2624 = vsub.s32 %v2484, %v2623
        %v2625 = vrot.slane %v2345, %v2624
        %v2626 = vlaneseq
        %v2627 = vshrl.u32 %v2626, 7
        %v2628 = vsub.s32 %v2489, %v2627
        %v2629 = vrot.slane %v2348, %v2628
        %v2630 = vsel %vm2494, %v2629, %v2625
        %vm2631 = vcmask 1041409
        %v2632 = vsel %vm2631, %v2504, %v2495
        %vm2633 = vcmask 1042434
        %v2634 = vsel %vm2633, %v2513, %v2632
        %vm2635 = vcmask 1043459
        %v2636 = vsel %vm2635, %v2522, %v2634
        %vm2637 = vcmask 1044484
        %v2638 = vsel %vm2637, %v2531, %v2636
        %vm2639 = vcmask 1045509
        %v2640 = vsel %vm2639, %v2540, %v2638
        %vm2641 = vcmask 1046534
        %v2642 = vsel %vm2641, %v2549, %v2640
        %vm2643 = vcmask 1047559
        %v2644 = vsel %vm2643, %v2558, %v2642
        %v2645 = vsel %vm2631, %v2576, %v2567
        %v2646 = vsel %vm2633, %v2585, %v2645
        %v2647 = vsel %vm2635, %v2594, %v2646
        %v2648 = vsel %vm2637, %v2603, %v2647
        %v2649 = vsel %vm2639, %v2612, %v2648
        %v2650 = vsel %vm2641, %v2621, %v2649
        %v2651 = vsel %vm2643, %v2630, %v2650
        %v2655 = vsel %vm1350, %v1246, 0
        %v2658 = vsel %vm1350, %v1247, 0
        %v2660 = vsel %vm1350, %v2448, 0
        %v2662 = vsel %vm1350, %v2450, 0
        %2664 = vmatprep.subr.mxu0 0.0
        %2665 = vmatpush1.xpose.msra.mxu0 %v2660
        %2666 = vmatprep.subr.mxu0 0.0
        %2667 = vmatpush1.xpose.msra.mxu0 %v2662
        %2668 = vmatprep.subr.mxu0 0.0
        %2669 = vmatpush1.xpose.msra.mxu0 0.0
        %2670 = vmatprep.subr.mxu0 0.0
        %2671 = vmatpush1.xpose.msra.mxu0 0.0
        %2672 = vmatprep.subr.mxu0 0.0
        %2673 = vmatpush1.xpose.msra.mxu0 0.0
        %2674 = vmatprep.subr.mxu0 0.0
        %2675 = vmatpush1.xpose.msra.mxu0 0.0
        %2676 = vmatprep.subr.mxu0 0.0
        %2677 = vmatpush1.xpose.msra.mxu0 0.0
        %2678 = vmatprep.subr.mxu0 0.0
        %2679 = vmatpush1.xpose.msra.mxu0 0.0
        %2680 = vmatprep.subr.mxu0 0.0
        %2681 = vmatpush1.xpose.msra.mxu0 0.0
        %2682 = vmatprep.subr.mxu0 0.0
        %2683 = vmatpush1.xpose.msra.mxu0 0.0
        %2684 = vmatprep.subr.mxu0 0.0
        %2685 = vmatpush1.xpose.msra.mxu0 0.0
        %2686 = vmatprep.subr.mxu0 0.0
        %2687 = vmatpush1.xpose.msra.mxu0 0.0
        %2688 = vmatprep.subr.mxu0 0.0
        %2689 = vmatpush1.xpose.msra.mxu0 0.0
        %2690 = vmatprep.subr.mxu0 0.0
        %2691 = vmatpush1.xpose.msra.mxu0 0.0
        %2692 = vmatprep.subr.mxu0 0.0
        %2693 = vmatpush1.xpose.msra.mxu0 0.0
        %2694 = vmatprep.subr.mxu0 0.0
        %2695 = vmatpush1.xpose.msra.mxu0 0.0
        %2696 = vmatprep.subr.mxu0 0.0
        %2697 = vmatpush1.xpose.msra.mxu0 0.0
        %2698 = vmatprep.subr.mxu0 0.0
        %2699 = vmatpush1.xpose.msra.mxu0 0.0
        %2700 = vmatprep.subr.mxu0 0.0
        %2701 = vmatpush1.xpose.msra.mxu0 0.0
        %2702 = vmatprep.subr.mxu0 0.0
        %2703 = vmatpush1.xpose.msra.mxu0 0.0
        %2704 = vmatprep.subr.mxu0 0.0
        %2705 = vmatpush1.xpose.msra.mxu0 0.0
        %2706 = vmatprep.subr.mxu0 0.0
        %2707 = vmatpush1.xpose.msra.mxu0 0.0
        %2708 = vmatprep.subr.mxu0 0.0
        %2709 = vmatpush1.xpose.msra.mxu0 0.0
        %2710 = vmatprep.subr.mxu0 0.0
        %2711 = vmatpush1.xpose.msra.mxu0 0.0
        %2712 = vmatprep.subr.mxu0 0.0
        %2713 = vmatpush1.xpose.msra.mxu0 0.0
        %2714 = vmatprep.subr.mxu0 0.0
        %2715 = vmatpush1.xpose.msra.mxu0 0.0
        %2716 = vmatprep.subr.mxu0 0.0
        %2717 = vmatpush1.xpose.msra.mxu0 0.0
        %2718 = vmatprep.subr.mxu0 0.0
        %2719 = vmatpush1.xpose.msra.mxu0 0.0
        %2720 = vmatprep.subr.mxu0 0.0
        %2721 = vmatpush1.xpose.msra.mxu0 0.0
        %2722 = vmatprep.subr.mxu0 0.0
        %2723 = vmatpush1.xpose.msra.mxu0 0.0
        %2724 = vmatprep.subr.mxu0 0.0
        %2725 = vmatpush1.xpose.msra.mxu0 0.0
        %2726 = vmatprep.subr.mxu0 0.0
        %2727 = vmatpush1.xpose.msra.mxu0 0.0
        %2728 = vmatprep.mubr.f32.mxu0 0.0
        %2729 = vmatmul.mubr.f32.gmra.mrb[0].mxu0 %v2655
        %v2730 = vpop.f32.mrb[0].mxu0
        %v2731 = vadd.f32 %v2644, %v2730
        %v2732 = vpop.f32.mrb[0].mxu0
        %2733 = vmatprep.mubr.f32.mxu0 0.0
        %2734 = vmatmul.mubr.f32.gmra.mrb[0].mxu0 %v2658
        %v2735 = vpop.f32.mrb[0].mxu0
        %v2736 = vadd.f32 %v2651, %v2735
        %v2737 = vpop.f32.mrb[0].mxu0
        %2738 = vdwg.mxu0
        %2741 = vrot.lane.b32.xlu0 %v1228, 64
        %v2742 = vpop.permute.xlu0 %2741
        %2743 = vrot.lane.b32.xlu0 %v1234, 64
        %v2744 = vpop.permute.xlu0 %2743
        %v2777 = vlaneseq
        %v2778 = vshrl.u32 %v2777, 7
        %v2779 = vsub.s32 %v2484, %v2778
        %v2780 = vrot.slane %v2351, %v2779
        %v2781 = vlaneseq
        %v2782 = vshrl.u32 %v2781, 7
        %v2783 = vsub.s32 %v2489, %v2782
        %v2784 = vrot.slane %v2354, %v2783
        %v2785 = vsel %vm2494, %v2784, %v2780
        %v2786 = vlaneseq
        %v2787 = vshrl.u32 %v2786, 7
        %v2788 = vsub.s32 %v2484, %v2787
        %v2789 = vrot.slane %v2357, %v2788
        %v2790 = vlaneseq
        %v2791 = vshrl.u32 %v2790, 7
        %v2792 = vsub.s32 %v2489, %v2791
        %v2793 = vrot.slane %v2360, %v2792
        %v2794 = vsel %vm2494, %v2793, %v2789
        %v2795 = vlaneseq
        %v2796 = vshrl.u32 %v2795, 7
        %v2797 = vsub.s32 %v2484, %v2796
        %v2798 = vrot.slane %v2363, %v2797
        %v2799 = vlaneseq
        %v2800 = vshrl.u32 %v2799, 7
        %v2801 = vsub.s32 %v2489, %v2800
        %v2802 = vrot.slane %v2366, %v2801
        %v2803 = vsel %vm2494, %v2802, %v2798
        %v2804 = vlaneseq
        %v2805 = vshrl.u32 %v2804, 7
        %v2806 = vsub.s32 %v2484, %v2805
        %v2807 = vrot.slane %v2369, %v2806
        %v2808 = vlaneseq
        %v2809 = vshrl.u32 %v2808, 7
        %v2810 = vsub.s32 %v2489, %v2809
        %v2811 = vrot.slane %v2372, %v2810
        %v2812 = vsel %vm2494, %v2811, %v2807
        %v2813 = vlaneseq
        %v2814 = vshrl.u32 %v2813, 7
        %v2815 = vsub.s32 %v2484, %v2814
        %v2816 = vrot.slane %v2375, %v2815
        %v2817 = vlaneseq
        %v2818 = vshrl.u32 %v2817, 7
        %v2819 = vsub.s32 %v2489, %v2818
        %v2820 = vrot.slane %v2378, %v2819
        %v2821 = vsel %vm2494, %v2820, %v2816
        %v2822 = vlaneseq
        %v2823 = vshrl.u32 %v2822, 7
        %v2824 = vsub.s32 %v2484, %v2823
        %v2825 = vrot.slane %v2381, %v2824
        %v2826 = vlaneseq
        %v2827 = vshrl.u32 %v2826, 7
        %v2828 = vsub.s32 %v2489, %v2827
        %v2829 = vrot.slane %v2384, %v2828
        %v2830 = vsel %vm2494, %v2829, %v2825
        %v2831 = vlaneseq
        %v2832 = vshrl.u32 %v2831, 7
        %v2833 = vsub.s32 %v2484, %v2832
        %v2834 = vrot.slane %v2387, %v2833
        %v2835 = vlaneseq
        %v2836 = vshrl.u32 %v2835, 7
        %v2837 = vsub.s32 %v2489, %v2836
        %v2838 = vrot.slane %v2390, %v2837
        %v2839 = vsel %vm2494, %v2838, %v2834
        %v2840 = vlaneseq
        %v2841 = vshrl.u32 %v2840, 7
        %v2842 = vsub.s32 %v2484, %v2841
        %v2843 = vrot.slane %v2393, %v2842
        %v2844 = vlaneseq
        %v2845 = vshrl.u32 %v2844, 7
        %v2846 = vsub.s32 %v2489, %v2845
        %v2847 = vrot.slane %v2396, %v2846
        %v2848 = vsel %vm2494, %v2847, %v2843
        %v2849 = vlaneseq
        %v2850 = vshrl.u32 %v2849, 7
        %v2851 = vsub.s32 %v2484, %v2850
        %v2852 = vrot.slane %v2399, %v2851
        %v2853 = vlaneseq
        %v2854 = vshrl.u32 %v2853, 7
        %v2855 = vsub.s32 %v2489, %v2854
        %v2856 = vrot.slane %v2402, %v2855
        %v2857 = vsel %vm2494, %v2856, %v2852
        %v2858 = vlaneseq
        %v2859 = vshrl.u32 %v2858, 7
        %v2860 = vsub.s32 %v2484, %v2859
        %v2861 = vrot.slane %v2405, %v2860
        %v2862 = vlaneseq
        %v2863 = vshrl.u32 %v2862, 7
        %v2864 = vsub.s32 %v2489, %v2863
        %v2865 = vrot.slane %v2408, %v2864
        %v2866 = vsel %vm2494, %v2865, %v2861
        %v2867 = vlaneseq
        %v2868 = vshrl.u32 %v2867, 7
        %v2869 = vsub.s32 %v2484, %v2868
        %v2870 = vrot.slane %v2411, %v2869
        %v2871 = vlaneseq
        %v2872 = vshrl.u32 %v2871, 7
        %v2873 = vsub.s32 %v2489, %v2872
        %v2874 = vrot.slane %v2414, %v2873
        %v2875 = vsel %vm2494, %v2874, %v2870
        %v2876 = vlaneseq
        %v2877 = vshrl.u32 %v2876, 7
        %v2878 = vsub.s32 %v2484, %v2877
        %v2879 = vrot.slane %v2417, %v2878
        %v2880 = vlaneseq
        %v2881 = vshrl.u32 %v2880, 7
        %v2882 = vsub.s32 %v2489, %v2881
        %v2883 = vrot.slane %v2420, %v2882
        %v2884 = vsel %vm2494, %v2883, %v2879
        %v2885 = vlaneseq
        %v2886 = vshrl.u32 %v2885, 7
        %v2887 = vsub.s32 %v2484, %v2886
        %v2888 = vrot.slane %v2423, %v2887
        %v2889 = vlaneseq
        %v2890 = vshrl.u32 %v2889, 7
        %v2891 = vsub.s32 %v2489, %v2890
        %v2892 = vrot.slane %v2426, %v2891
        %v2893 = vsel %vm2494, %v2892, %v2888
        %v2894 = vlaneseq
        %v2895 = vshrl.u32 %v2894, 7
        %v2896 = vsub.s32 %v2484, %v2895
        %v2897 = vrot.slane %v2429, %v2896
        %v2898 = vlaneseq
        %v2899 = vshrl.u32 %v2898, 7
        %v2900 = vsub.s32 %v2489, %v2899
        %v2901 = vrot.slane %v2432, %v2900
        %v2902 = vsel %vm2494, %v2901, %v2897
        %v2903 = vlaneseq
        %v2904 = vshrl.u32 %v2903, 7
        %v2905 = vsub.s32 %v2484, %v2904
        %v2906 = vrot.slane %v2435, %v2905
        %v2907 = vlaneseq
        %v2908 = vshrl.u32 %v2907, 7
        %v2909 = vsub.s32 %v2489, %v2908
        %v2910 = vrot.slane %v2438, %v2909
        %v2911 = vsel %vm2494, %v2910, %v2906
        %v2912 = vlaneseq
        %v2913 = vshrl.u32 %v2912, 7
        %v2914 = vsub.s32 %v2484, %v2913
        %v2915 = vrot.slane %v2441, %v2914
        %v2916 = vlaneseq
        %v2917 = vshrl.u32 %v2916, 7
        %v2918 = vsub.s32 %v2489, %v2917
        %v2919 = vrot.slane %v2444, %v2918
        %v2920 = vsel %vm2494, %v2919, %v2915
        %v2921 = vsel %vm2631, %v2794, %v2785
        %v2922 = vsel %vm2633, %v2803, %v2921
        %v2923 = vsel %vm2635, %v2812, %v2922
        %v2924 = vsel %vm2637, %v2821, %v2923
        %v2925 = vsel %vm2639, %v2830, %v2924
        %v2926 = vsel %vm2641, %v2839, %v2925
        %v2927 = vsel %vm2643, %v2848, %v2926
        %v2928 = vsel %vm2631, %v2866, %v2857
        %v2929 = vsel %vm2633, %v2875, %v2928
        %v2930 = vsel %vm2635, %v2884, %v2929
        %v2931 = vsel %vm2637, %v2893, %v2930
        %v2932 = vsel %vm2639, %v2902, %v2931
        %v2933 = vsel %vm2641, %v2911, %v2932
        %v2934 = vsel %vm2643, %v2920, %v2933
        %v2938 = vsel %vm1350, %v1248, 0
        %v2941 = vsel %vm1350, %v1249, 0
        %v2943 = vsel %vm1350, %v2742, 0
        %v2945 = vsel %vm1350, %v2744, 0
        %2947 = vmatprep.subr.mxu0 0.0
        %2948 = vmatpush1.xpose.msra.mxu0 %v2943
        %2949 = vmatprep.subr.mxu0 0.0
        %2950 = vmatpush1.xpose.msra.mxu0 %v2945
        %2951 = vmatprep.subr.mxu0 0.0
        %2952 = vmatpush1.xpose.msra.mxu0 0.0
        %2953 = vmatprep.subr.mxu0 0.0
        %2954 = vmatpush1.xpose.msra.mxu0 0.0
        %2955 = vmatprep.subr.mxu0 0.0
        %2956 = vmatpush1.xpose.msra.mxu0 0.0
        %2957 = vmatprep.subr.mxu0 0.0
        %2958 = vmatpush1.xpose.msra.mxu0 0.0
        %2959 = vmatprep.subr.mxu0 0.0
        %2960 = vmatpush1.xpose.msra.mxu0 0.0
        %2961 = vmatprep.subr.mxu0 0.0
        %2962 = vmatpush1.xpose.msra.mxu0 0.0
        %2963 = vmatprep.subr.mxu0 0.0
        %2964 = vmatpush1.xpose.msra.mxu0 0.0
        %2965 = vmatprep.subr.mxu0 0.0
        %2966 = vmatpush1.xpose.msra.mxu0 0.0
        %2967 = vmatprep.subr.mxu0 0.0
        %2968 = vmatpush1.xpose.msra.mxu0 0.0
        %2969 = vmatprep.subr.mxu0 0.0
        %2970 = vmatpush1.xpose.msra.mxu0 0.0
        %2971 = vmatprep.subr.mxu0 0.0
        %2972 = vmatpush1.xpose.msra.mxu0 0.0
        %2973 = vmatprep.subr.mxu0 0.0
        %2974 = vmatpush1.xpose.msra.mxu0 0.0
        %2975 = vmatprep.subr.mxu0 0.0
        %2976 = vmatpush1.xpose.msra.mxu0 0.0
        %2977 = vmatprep.subr.mxu0 0.0
        %2978 = vmatpush1.xpose.msra.mxu0 0.0
        %2979 = vmatprep.subr.mxu0 0.0
        %2980 = vmatpush1.xpose.msra.mxu0 0.0
        %2981 = vmatprep.subr.mxu0 0.0
        %2982 = vmatpush1.xpose.msra.mxu0 0.0
        %2983 = vmatprep.subr.mxu0 0.0
        %2984 = vmatpush1.xpose.msra.mxu0 0.0
        %2985 = vmatprep.subr.mxu0 0.0
        %2986 = vmatpush1.xpose.msra.mxu0 0.0
        %2987 = vmatprep.subr.mxu0 0.0
        %2988 = vmatpush1.xpose.msra.mxu0 0.0
        %2989 = vmatprep.subr.mxu0 0.0
        %2990 = vmatpush1.xpose.msra.mxu0 0.0
        %2991 = vmatprep.subr.mxu0 0.0
        %2992 = vmatpush1.xpose.msra.mxu0 0.0
        %2993 = vmatprep.subr.mxu0 0.0
        %2994 = vmatpush1.xpose.msra.mxu0 0.0
        %2995 = vmatprep.subr.mxu0 0.0
        %2996 = vmatpush1.xpose.msra.mxu0 0.0
        %2997 = vmatprep.subr.mxu0 0.0
        %2998 = vmatpush1.xpose.msra.mxu0 0.0
        %2999 = vmatprep.subr.mxu0 0.0
        %3000 = vmatpush1.xpose.msra.mxu0 0.0
        %3001 = vmatprep.subr.mxu0 0.0
        %3002 = vmatpush1.xpose.msra.mxu0 0.0
        %3003 = vmatprep.subr.mxu0 0.0
        %3004 = vmatpush1.xpose.msra.mxu0 0.0
        %3005 = vmatprep.subr.mxu0 0.0
        %3006 = vmatpush1.xpose.msra.mxu0 0.0
        %3007 = vmatprep.subr.mxu0 0.0
        %3008 = vmatpush1.xpose.msra.mxu0 0.0
        %3009 = vmatprep.subr.mxu0 0.0
        %3010 = vmatpush1.xpose.msra.mxu0 0.0
        %3011 = vmatprep.mubr.f32.mxu0 0.0
        %3012 = vmatmul.mubr.f32.gmra.mrb[0].mxu0 %v2938
        %v3013 = vpop.f32.mrb[0].mxu0
        %v3014 = vadd.f32 %v2927, %v3013
        %v3015 = vpop.f32.mrb[0].mxu0
        %3016 = vmatprep.mubr.f32.mxu0 0.0
        %3017 = vmatmul.mubr.f32.gmra.mrb[0].mxu0 %v2941
        %v3018 = vpop.f32.mrb[0].mxu0
        %v3019 = vadd.f32 %v2934, %v3018
        %v3020 = vpop.f32.mrb[0].mxu0
        %3021 = vdwg.mxu0
        %v3022 = vsel %vm1350, %v2731, -inf
        %3023 = vmax.xlane.f32.xlu0 %v3022
        %v3024 = vpop.xlane.xlu0 %3023
        %v3025 = vsel %vm1350, %v2736, -inf
        %3026 = vmax.xlane.f32.xlu0 %v3025
        %v3027 = vpop.xlane.xlu0 %3026
        %v3028 = vsel %vm1350, %v3014, -inf
        %3029 = vmax.xlane.f32.xlu0 %v3028
        %v3030 = vpop.xlane.xlu0 %3029
        %v3031 = vsel %vm1350, %v3019, -inf
        %3032 = vmax.xlane.f32.xlu0 %v3031
        %v3033 = vpop.xlane.xlu0 %3032
        %v3034 = vsub.f32 %v2731, %v3024
        %v3035 = vsub.f32 %v2736, %v3027
        %v3036 = vsub.f32 %v3014, %v3030
        %v3037 = vsub.f32 %v3019, %v3033
        %v3038 = vmul.f32 %v3034, 1.442695
        %v3039 = vpow.pop %v3038
        %v3040 = vmul.f32 %v3035, 1.442695
        %v3041 = vpow.pop %v3040
        %v3042 = vmul.f32 %v3036, 1.442695
        %v3043 = vpow.pop %v3042
        %v3044 = vmul.f32 %v3037, 1.442695
        %v3045 = vpow.pop %v3044
        %v3046 = vsel %vm1350, %v3039, 0.0
        %3047 = vadd.xlane.f32.xlu0 %v3046
        %v3048 = vpop.xlane.xlu0 %3047
        %v3049 = vsel %vm1350, %v3041, 0.0
        %3050 = vadd.xlane.f32.xlu0 %v3049
        %v3051 = vpop.xlane.xlu0 %3050
        %v3052 = vsel %vm1350, %v3043, 0.0
        %3053 = vadd.xlane.f32.xlu0 %v3052
        %v3054 = vpop.xlane.xlu0 %3053
        %v3055 = vsel %vm1350, %v3045, 0.0
        %3056 = vadd.xlane.f32.xlu0 %v3055
        %v3057 = vpop.xlane.xlu0 %3056
        %v3058 = vrcp.pop %v3048
        %v3059 = vrcp.pop %v3051
        %v3060 = vrcp.pop %v3054
        %v3061 = vrcp.pop %v3057
        %v3062 = vmul.f32 %v3039, %v3058
        %v3063 = vmul.f32 %v3041, %v3059
        %v3064 = vmul.f32 %v3043, %v3060
        %v3065 = vmul.f32 %v3045, %v3061
        %v3067 = vsel %vm1350, %v3062, 0
        %v3070 = vsel %vm1350, %v3063, 0
        %3072 = vmatprep.subr.mxu0 0.0
        %3073 = vmatpush1.msra.mxu0 %v1218
        %3074 = vmatprep.subr.mxu0 0.0
        %3075 = vmatpush1.msra.mxu0 %v1224
        %3076 = vmatprep.subr.mxu0 0.0
        %3077 = vmatpush1.msra.mxu0 0.0
        %3078 = vmatprep.subr.mxu0 0.0
        %3079 = vmatpush1.msra.mxu0 0.0
        %3080 = vmatprep.subr.mxu0 0.0
        %3081 = vmatpush1.msra.mxu0 0.0
        %3082 = vmatprep.subr.mxu0 0.0
        %3083 = vmatpush1.msra.mxu0 0.0
        %3084 = vmatprep.subr.mxu0 0.0
        %3085 = vmatpush1.msra.mxu0 0.0
        %3086 = vmatprep.subr.mxu0 0.0
        %3087 = vmatpush1.msra.mxu0 0.0
        %3088 = vmatprep.subr.mxu0 0.0
        %3089 = vmatpush1.msra.mxu0 0.0
        %3090 = vmatprep.subr.mxu0 0.0
        %3091 = vmatpush1.msra.mxu0 0.0
        %3092 = vmatprep.subr.mxu0 0.0
        %3093 = vmatpush1.msra.mxu0 0.0
        %3094 = vmatprep.subr.mxu0 0.0
        %3095 = vmatpush1.msra.mxu0 0.0
        %3096 = vmatprep.subr.mxu0 0.0
        %3097 = vmatpush1.msra.mxu0 0.0
        %3098 = vmatprep.subr.mxu0 0.0
        %3099 = vmatpush1.msra.mxu0 0.0
        %3100 = vmatprep.subr.mxu0 0.0
        %3101 = vmatpush1.msra.mxu0 0.0
        %3102 = vmatprep.subr.mxu0 0.0
        %3103 = vmatpush1.msra.mxu0 0.0
        %3104 = vmatprep.subr.mxu0 0.0
        %3105 = vmatpush1.msra.mxu0 0.0
        %3106 = vmatprep.subr.mxu0 0.0
        %3107 = vmatpush1.msra.mxu0 0.0
        %3108 = vmatprep.subr.mxu0 0.0
        %3109 = vmatpush1.msra.mxu0 0.0
        %3110 = vmatprep.subr.mxu0 0.0
        %3111 = vmatpush1.msra.mxu0 0.0
        %3112 = vmatprep.subr.mxu0 0.0
        %3113 = vmatpush1.msra.mxu0 0.0
        %3114 = vmatprep.subr.mxu0 0.0
        %3115 = vmatpush1.msra.mxu0 0.0
        %3116 = vmatprep.subr.mxu0 0.0
        %3117 = vmatpush1.msra.mxu0 0.0
        %3118 = vmatprep.subr.mxu0 0.0
        %3119 = vmatpush1.msra.mxu0 0.0
        %3120 = vmatprep.subr.mxu0 0.0
        %3121 = vmatpush1.msra.mxu0 0.0
        %3122 = vmatprep.subr.mxu0 0.0
        %3123 = vmatpush1.msra.mxu0 0.0
        %3124 = vmatprep.subr.mxu0 0.0
        %3125 = vmatpush1.msra.mxu0 0.0
        %3126 = vmatprep.subr.mxu0 0.0
        %3127 = vmatpush1.msra.mxu0 0.0
        %3128 = vmatprep.subr.mxu0 0.0
        %3129 = vmatpush1.msra.mxu0 0.0
        %3130 = vmatprep.subr.mxu0 0.0
        %3131 = vmatpush1.msra.mxu0 0.0
        %3132 = vmatprep.subr.mxu0 0.0
        %3133 = vmatpush1.msra.mxu0 0.0
        %3134 = vmatprep.subr.mxu0 0.0
        %3135 = vmatpush1.msra.mxu0 0.0
        %3136 = vmatprep.mubr.f32.mxu0 0.0
        %3137 = vmatmul.mubr.f32.gmra.mrb[0].mxu0 %v3067
        %v3138 = vpop.f32.mrb[0].mxu0
        %v3139 = vadd.f32 0.0, %v3138
        %v3140 = vpop.f32.mrb[0].mxu0
        %3141 = vmatprep.mubr.f32.mxu0 0.0
        %3142 = vmatmul.mubr.f32.gmra.mrb[0].mxu0 %v3070
        %v3143 = vpop.f32.mrb[0].mxu0
        %v3144 = vadd.f32 0.0, %v3143
        %v3145 = vpop.f32.mrb[0].mxu0
        %3146 = vdwg.mxu0
        %v3148 = vsel %vm1350, %v3064, 0
        %v3151 = vsel %vm1350, %v3065, 0
        %3153 = vmatprep.subr.mxu0 0.0
        %3154 = vmatpush1.msra.mxu0 %v1230
        %3155 = vmatprep.subr.mxu0 0.0
        %3156 = vmatpush1.msra.mxu0 %v1236
        %3157 = vmatprep.subr.mxu0 0.0
        %3158 = vmatpush1.msra.mxu0 0.0
        %3159 = vmatprep.subr.mxu0 0.0
        %3160 = vmatpush1.msra.mxu0 0.0
        %3161 = vmatprep.subr.mxu0 0.0
        %3162 = vmatpush1.msra.mxu0 0.0
        %3163 = vmatprep.subr.mxu0 0.0
        %3164 = vmatpush1.msra.mxu0 0.0
        %3165 = vmatprep.subr.mxu0 0.0
        %3166 = vmatpush1.msra.mxu0 0.0
        %3167 = vmatprep.subr.mxu0 0.0
        %3168 = vmatpush1.msra.mxu0 0.0
        %3169 = vmatprep.subr.mxu0 0.0
        %3170 = vmatpush1.msra.mxu0 0.0
        %3171 = vmatprep.subr.mxu0 0.0
        %3172 = vmatpush1.msra.mxu0 0.0
        %3173 = vmatprep.subr.mxu0 0.0
        %3174 = vmatpush1.msra.mxu0 0.0
        %3175 = vmatprep.subr.mxu0 0.0
        %3176 = vmatpush1.msra.mxu0 0.0
        %3177 = vmatprep.subr.mxu0 0.0
        %3178 = vmatpush1.msra.mxu0 0.0
        %3179 = vmatprep.subr.mxu0 0.0
        %3180 = vmatpush1.msra.mxu0 0.0
        %3181 = vmatprep.subr.mxu0 0.0
        %3182 = vmatpush1.msra.mxu0 0.0
        %3183 = vmatprep.subr.mxu0 0.0
        %3184 = vmatpush1.msra.mxu0 0.0
        %3185 = vmatprep.subr.mxu0 0.0
        %3186 = vmatpush1.msra.mxu0 0.0
        %3187 = vmatprep.subr.mxu0 0.0
        %3188 = vmatpush1.msra.mxu0 0.0
        %3189 = vmatprep.subr.mxu0 0.0
        %3190 = vmatpush1.msra.mxu0 0.0
        %3191 = vmatprep.subr.mxu0 0.0
        %3192 = vmatpush1.msra.mxu0 0.0
        %3193 = vmatprep.subr.mxu0 0.0
        %3194 = vmatpush1.msra.mxu0 0.0
        %3195 = vmatprep.subr.mxu0 0.0
        %3196 = vmatpush1.msra.mxu0 0.0
        %3197 = vmatprep.subr.mxu0 0.0
        %3198 = vmatpush1.msra.mxu0 0.0
        %3199 = vmatprep.subr.mxu0 0.0
        %3200 = vmatpush1.msra.mxu0 0.0
        %3201 = vmatprep.subr.mxu0 0.0
        %3202 = vmatpush1.msra.mxu0 0.0
        %3203 = vmatprep.subr.mxu0 0.0
        %3204 = vmatpush1.msra.mxu0 0.0
        %3205 = vmatprep.subr.mxu0 0.0
        %3206 = vmatpush1.msra.mxu0 0.0
        %3207 = vmatprep.subr.mxu0 0.0
        %3208 = vmatpush1.msra.mxu0 0.0
        %3209 = vmatprep.subr.mxu0 0.0
        %3210 = vmatpush1.msra.mxu0 0.0
        %3211 = vmatprep.subr.mxu0 0.0
        %3212 = vmatpush1.msra.mxu0 0.0
        %3213 = vmatprep.subr.mxu0 0.0
        %3214 = vmatpush1.msra.mxu0 0.0
        %3215 = vmatprep.subr.mxu0 0.0
        %3216 = vmatpush1.msra.mxu0 0.0
        %3217 = vmatprep.mubr.f32.mxu0 0.0
        %3218 = vmatmul.mubr.f32.gmra.mrb[0].mxu0 %v3148
        %v3219 = vpop.f32.mrb[0].mxu0
        %v3220 = vadd.f32 0.0, %v3219
        %v3221 = vpop.f32.mrb[0].mxu0
        %3222 = vmatprep.mubr.f32.mxu0 0.0
        %3223 = vmatmul.mubr.f32.gmra.mrb[0].mxu0 %v3151
        %v3224 = vpop.f32.mrb[0].mxu0
        %v3225 = vadd.f32 0.0, %v3224
        %v3226 = vpop.f32.mrb[0].mxu0
        %3227 = vdwg.mxu0
        %3228 = vst.msk [vmem:[#allocation2] sm:$0xff] %vm1350, %v3139
        %3229 = vst.msk [vmem:[#allocation2 + $0x8] sm:$0xff] %vm1350, %v3144
        %3230 = vst.msk [vmem:[#allocation2 + $0x10] sm:$0xff] %vm1350, %v3220
        %3231 = vst.msk [vmem:[#allocation2 + $0x18] sm:$0xff] %vm1350, %v3225
        %v3232 = vlaneseq
        %v3233 = vshrl.u32 %v3232, 7
        %v3234 = vsub.s32 1, %v3233
        %v3235 = vrot.slane %v2184, %v3234
        %v3236 = vmul.f32 %v2120, %v3235
        %v3237 = vmul.f32 %v2121, %v3235
        %v3238 = vmul.f32 %v2122, %v3235
        %v3239 = vmul.f32 %v2123, %v3235
        %v3240 = vmul.f32 %v2124, %v3235
        %v3241 = vmul.f32 %v2125, %v3235
        %v3242 = vmul.f32 %v2126, %v3235
        %v3243 = vmul.f32 %v2127, %v3235
        %v3244 = vmul.f32 %v2128, %v3235
        %v3245 = vmul.f32 %v2129, %v3235
        %v3246 = vmul.f32 %v2130, %v3235
        %v3247 = vmul.f32 %v2131, %v3235
        %v3248 = vmul.f32 %v2132, %v3235
        %v3249 = vmul.f32 %v2133, %v3235
        %v3250 = vmul.f32 %v2134, %v3235
        %v3251 = vmul.f32 %v2135, %v3235
        %v3252 = vmul.f32 %v2136, %v3235
        %v3253 = vmul.f32 %v2137, %v3235
        %v3254 = vmul.f32 %v2138, %v3235
        %v3255 = vmul.f32 %v2139, %v3235
        %v3256 = vmul.f32 %v2140, %v3235
        %v3257 = vmul.f32 %v2141, %v3235
        %v3258 = vmul.f32 %v2142, %v3235
        %v3259 = vmul.f32 %v2143, %v3235
        %v3260 = vmul.f32 %v2144, %v3235
        %v3261 = vmul.f32 %v2145, %v3235
        %v3262 = vmul.f32 %v2146, %v3235
        %v3263 = vmul.f32 %v2147, %v3235
        %v3264 = vmul.f32 %v2148, %v3235
        %v3265 = vmul.f32 %v2149, %v3235
        %v3266 = vmul.f32 %v2150, %v3235
        %v3267 = vmul.f32 %v2151, %v3235
        %v3268 = vmul.f32 %v2152, %v3235
        %v3269 = vmul.f32 %v2153, %v3235
        %v3270 = vmul.f32 %v2154, %v3235
        %v3271 = vmul.f32 %v2155, %v3235
        %v3272 = vmul.f32 %v2156, %v3235
        %v3273 = vmul.f32 %v2157, %v3235
        %v3274 = vmul.f32 %v2158, %v3235
        %v3275 = vmul.f32 %v2159, %v3235
        %v3276 = vmul.f32 %v2160, %v3235
        %v3277 = vmul.f32 %v2161, %v3235
        %v3278 = vmul.f32 %v2162, %v3235
        %v3279 = vmul.f32 %v2163, %v3235
        %v3280 = vmul.f32 %v2164, %v3235
        %v3281 = vmul.f32 %v2165, %v3235
        %v3282 = vmul.f32 %v2166, %v3235
        %v3283 = vmul.f32 %v2167, %v3235
        %v3284 = vmul.f32 %v2168, %v3235
        %v3285 = vmul.f32 %v2169, %v3235
        %v3286 = vmul.f32 %v2170, %v3235
        %v3287 = vmul.f32 %v2171, %v3235
        %v3288 = vmul.f32 %v2172, %v3235
        %v3289 = vmul.f32 %v2173, %v3235
        %v3290 = vmul.f32 %v2174, %v3235
        %v3291 = vmul.f32 %v2175, %v3235
        %v3292 = vmul.f32 %v2176, %v3235
        %v3293 = vmul.f32 %v2177, %v3235
        %v3294 = vmul.f32 %v2178, %v3235
        %v3295 = vmul.f32 %v2179, %v3235
        %v3296 = vmul.f32 %v2180, %v3235
        %v3297 = vmul.f32 %v2181, %v3235
        %v3298 = vmul.f32 %v2182, %v3235
        %v3299 = vmul.f32 %v2183, %v3235
        %v3300 = vsel %vm1350, %v3236, 0.0
        %3301 = vadd.xlane.f32.xlu0 %v3300
        %v3302 = vpop.xlane.xlu0 %3301
        %v3303 = vsel %vm1350, %v3237, 0.0
        %3304 = vadd.xlane.f32.xlu0 %v3303
        %v3305 = vpop.xlane.xlu0 %3304
        %v3306 = vsel %vm1350, %v3238, 0.0
        %3307 = vadd.xlane.f32.xlu0 %v3306
        %v3308 = vpop.xlane.xlu0 %3307
        %v3309 = vsel %vm1350, %v3239, 0.0
        %3310 = vadd.xlane.f32.xlu0 %v3309
        %v3311 = vpop.xlane.xlu0 %3310
        %v3312 = vsel %vm1350, %v3240, 0.0
        %3313 = vadd.xlane.f32.xlu0 %v3312
        %v3314 = vpop.xlane.xlu0 %3313
        %v3315 = vsel %vm1350, %v3241, 0.0
        %3316 = vadd.xlane.f32.xlu0 %v3315
        %v3317 = vpop.xlane.xlu0 %3316
        %v3318 = vsel %vm1350, %v3242, 0.0
        %3319 = vadd.xlane.f32.xlu0 %v3318
        %v3320 = vpop.xlane.xlu0 %3319
        %v3321 = vsel %vm1350, %v3243, 0.0
        %3322 = vadd.xlane.f32.xlu0 %v3321
        %v3323 = vpop.xlane.xlu0 %3322
        %v3324 = vsel %vm1350, %v3244, 0.0
        %3325 = vadd.xlane.f32.xlu0 %v3324
        %v3326 = vpop.xlane.xlu0 %3325
        %v3327 = vsel %vm1350, %v3245, 0.0
        %3328 = vadd.xlane.f32.xlu0 %v3327
        %v3329 = vpop.xlane.xlu0 %3328
        %v3330 = vsel %vm1350, %v3246, 0.0
        %3331 = vadd.xlane.f32.xlu0 %v3330
        %v3332 = vpop.xlane.xlu0 %3331
        %v3333 = vsel %vm1350, %v3247, 0.0
        %3334 = vadd.xlane.f32.xlu0 %v3333
        %v3335 = vpop.xlane.xlu0 %3334
        %v3336 = vsel %vm1350, %v3248, 0.0
        %3337 = vadd.xlane.f32.xlu0 %v3336
        %v3338 = vpop.xlane.xlu0 %3337
        %v3339 = vsel %vm1350, %v3249, 0.0
        %3340 = vadd.xlane.f32.xlu0 %v3339
        %v3341 = vpop.xlane.xlu0 %3340
        %v3342 = vsel %vm1350, %v3250, 0.0
        %3343 = vadd.xlane.f32.xlu0 %v3342
        %v3344 = vpop.xlane.xlu0 %3343
        %v3345 = vsel %vm1350, %v3251, 0.0
        %3346 = vadd.xlane.f32.xlu0 %v3345
        %v3347 = vpop.xlane.xlu0 %3346
        %v3348 = vsel %vm1350, %v3252, 0.0
        %3349 = vadd.xlane.f32.xlu0 %v3348
        %v3350 = vpop.xlane.xlu0 %3349
        %v3351 = vsel %vm1350, %v3253, 0.0
        %3352 = vadd.xlane.f32.xlu0 %v3351
        %v3353 = vpop.xlane.xlu0 %3352
        %v3354 = vsel %vm1350, %v3254, 0.0
        %3355 = vadd.xlane.f32.xlu0 %v3354
        %v3356 = vpop.xlane.xlu0 %3355
        %v3357 = vsel %vm1350, %v3255, 0.0
        %3358 = vadd.xlane.f32.xlu0 %v3357
        %v3359 = vpop.xlane.xlu0 %3358
        %v3360 = vsel %vm1350, %v3256, 0.0
        %3361 = vadd.xlane.f32.xlu0 %v3360
        %v3362 = vpop.xlane.xlu0 %3361
        %v3363 = vsel %vm1350, %v3257, 0.0
        %3364 = vadd.xlane.f32.xlu0 %v3363
        %v3365 = vpop.xlane.xlu0 %3364
        %v3366 = vsel %vm1350, %v3258, 0.0
        %3367 = vadd.xlane.f32.xlu0 %v3366
        %v3368 = vpop.xlane.xlu0 %3367
        %v3369 = vsel %vm1350, %v3259, 0.0
        %3370 = vadd.xlane.f32.xlu0 %v3369
        %v3371 = vpop.xlane.xlu0 %3370
        %v3372 = vsel %vm1350, %v3260, 0.0
        %3373 = vadd.xlane.f32.xlu0 %v3372
        %v3374 = vpop.xlane.xlu0 %3373
        %v3375 = vsel %vm1350, %v3261, 0.0
        %3376 = vadd.xlane.f32.xlu0 %v3375
        %v3377 = vpop.xlane.xlu0 %3376
        %v3378 = vsel %vm1350, %v3262, 0.0
        %3379 = vadd.xlane.f32.xlu0 %v3378
        %v3380 = vpop.xlane.xlu0 %3379
        %v3381 = vsel %vm1350, %v3263, 0.0
        %3382 = vadd.xlane.f32.xlu0 %v3381
        %v3383 = vpop.xlane.xlu0 %3382
        %v3384 = vsel %vm1350, %v3264, 0.0
        %3385 = vadd.xlane.f32.xlu0 %v3384
        %v3386 = vpop.xlane.xlu0 %3385
        %v3387 = vsel %vm1350, %v3265, 0.0
        %3388 = vadd.xlane.f32.xlu0 %v3387
        %v3389 = vpop.xlane.xlu0 %3388
        %v3390 = vsel %vm1350, %v3266, 0.0
        %3391 = vadd.xlane.f32.xlu0 %v3390
        %v3392 = vpop.xlane.xlu0 %3391
        %v3393 = vsel %vm1350, %v3267, 0.0
        %3394 = vadd.xlane.f32.xlu0 %v3393
        %v3395 = vpop.xlane.xlu0 %3394
        %v3396 = vsel %vm1350, %v3268, 0.0
        %3397 = vadd.xlane.f32.xlu0 %v3396
        %v3398 = vpop.xlane.xlu0 %3397
        %v3399 = vsel %vm1350, %v3269, 0.0
        %3400 = vadd.xlane.f32.xlu0 %v3399
        %v3401 = vpop.xlane.xlu0 %3400
        %v3402 = vsel %vm1350, %v3270, 0.0
        %3403 = vadd.xlane.f32.xlu0 %v3402
        %v3404 = vpop.xlane.xlu0 %3403
        %v3405 = vsel %vm1350, %v3271, 0.0
        %3406 = vadd.xlane.f32.xlu0 %v3405
        %v3407 = vpop.xlane.xlu0 %3406
        %v3408 = vsel %vm1350, %v3272, 0.0
        %3409 = vadd.xlane.f32.xlu0 %v3408
        %v3410 = vpop.xlane.xlu0 %3409
        %v3411 = vsel %vm1350, %v3273, 0.0
        %3412 = vadd.xlane.f32.xlu0 %v3411
        %v3413 = vpop.xlane.xlu0 %3412
        %v3414 = vsel %vm1350, %v3274, 0.0
        %3415 = vadd.xlane.f32.xlu0 %v3414
        %v3416 = vpop.xlane.xlu0 %3415
        %v3417 = vsel %vm1350, %v3275, 0.0
        %3418 = vadd.xlane.f32.xlu0 %v3417
        %v3419 = vpop.xlane.xlu0 %3418
        %v3420 = vsel %vm1350, %v3276, 0.0
        %3421 = vadd.xlane.f32.xlu0 %v3420
        %v3422 = vpop.xlane.xlu0 %3421
        %v3423 = vsel %vm1350, %v3277, 0.0
        %3424 = vadd.xlane.f32.xlu0 %v3423
        %v3425 = vpop.xlane.xlu0 %3424
        %v3426 = vsel %vm1350, %v3278, 0.0
        %3427 = vadd.xlane.f32.xlu0 %v3426
        %v3428 = vpop.xlane.xlu0 %3427
        %v3429 = vsel %vm1350, %v3279, 0.0
        %3430 = vadd.xlane.f32.xlu0 %v3429
        %v3431 = vpop.xlane.xlu0 %3430
        %v3432 = vsel %vm1350, %v3280, 0.0
        %3433 = vadd.xlane.f32.xlu0 %v3432
        %v3434 = vpop.xlane.xlu0 %3433
        %v3435 = vsel %vm1350, %v3281, 0.0
        %3436 = vadd.xlane.f32.xlu0 %v3435
        %v3437 = vpop.xlane.xlu0 %3436
        %v3438 = vsel %vm1350, %v3282, 0.0
        %3439 = vadd.xlane.f32.xlu0 %v3438
        %v3440 = vpop.xlane.xlu0 %3439
        %v3441 = vsel %vm1350, %v3283, 0.0
        %3442 = vadd.xlane.f32.xlu0 %v3441
        %v3443 = vpop.xlane.xlu0 %3442
        %v3444 = vsel %vm1350, %v3284, 0.0
        %3445 = vadd.xlane.f32.xlu0 %v3444
        %v3446 = vpop.xlane.xlu0 %3445
        %v3447 = vsel %vm1350, %v3285, 0.0
        %3448 = vadd.xlane.f32.xlu0 %v3447
        %v3449 = vpop.xlane.xlu0 %3448
        %v3450 = vsel %vm1350, %v3286, 0.0
        %3451 = vadd.xlane.f32.xlu0 %v3450
        %v3452 = vpop.xlane.xlu0 %3451
        %v3453 = vsel %vm1350, %v3287, 0.0
        %3454 = vadd.xlane.f32.xlu0 %v3453
        %v3455 = vpop.xlane.xlu0 %3454
        %v3456 = vsel %vm1350, %v3288, 0.0
        %3457 = vadd.xlane.f32.xlu0 %v3456
        %v3458 = vpop.xlane.xlu0 %3457
        %v3459 = vsel %vm1350, %v3289, 0.0
        %3460 = vadd.xlane.f32.xlu0 %v3459
        %v3461 = vpop.xlane.xlu0 %3460
        %v3462 = vsel %vm1350, %v3290, 0.0
        %3463 = vadd.xlane.f32.xlu0 %v3462
        %v3464 = vpop.xlane.xlu0 %3463
        %v3465 = vsel %vm1350, %v3291, 0.0
        %3466 = vadd.xlane.f32.xlu0 %v3465
        %v3467 = vpop.xlane.xlu0 %3466
        %v3468 = vsel %vm1350, %v3292, 0.0
        %3469 = vadd.xlane.f32.xlu0 %v3468
        %v3470 = vpop.xlane.xlu0 %3469
        %v3471 = vsel %vm1350, %v3293, 0.0
        %3472 = vadd.xlane.f32.xlu0 %v3471
        %v3473 = vpop.xlane.xlu0 %3472
        %v3474 = vsel %vm1350, %v3294, 0.0
        %3475 = vadd.xlane.f32.xlu0 %v3474
        %v3476 = vpop.xlane.xlu0 %3475
        %v3477 = vsel %vm1350, %v3295, 0.0
        %3478 = vadd.xlane.f32.xlu0 %v3477
        %v3479 = vpop.xlane.xlu0 %3478
        %v3480 = vsel %vm1350, %v3296, 0.0
        %3481 = vadd.xlane.f32.xlu0 %v3480
        %v3482 = vpop.xlane.xlu0 %3481
        %v3483 = vsel %vm1350, %v3297, 0.0
        %3484 = vadd.xlane.f32.xlu0 %v3483
        %v3485 = vpop.xlane.xlu0 %3484
        %v3486 = vsel %vm1350, %v3298, 0.0
        %3487 = vadd.xlane.f32.xlu0 %v3486
        %v3488 = vpop.xlane.xlu0 %3487
        %v3489 = vsel %vm1350, %v3299, 0.0
        %3490 = vadd.xlane.f32.xlu0 %v3489
        %v3491 = vpop.xlane.xlu0 %3490
        %3492 = vrot.lane.b32.xlu0 %v1246, 112
        %v3493 = vpop.permute.xlu0 %3492
        %3494 = vrot.lane.b32.xlu0 %v1247, 112
        %v3495 = vpop.permute.xlu0 %3494
        %3496 = vrot.lane.b32.xlu0 %v1216, 48
        %v3497 = vpop.permute.xlu0 %3496
        %3498 = vrot.lane.b32.xlu0 %v1222, 48
        %v3499 = vpop.permute.xlu0 %3498
        %v3532 = vlaneseq
        %v3533 = vshrl.u32 %v3532, 7
        %v3534 = vsub.s32 %v2484, %v3533
        %v3535 = vrot.slane %v3302, %v3534
        %v3536 = vlaneseq
        %v3537 = vshrl.u32 %v3536, 7
        %v3538 = vsub.s32 %v2489, %v3537
        %v3539 = vrot.slane %v3305, %v3538
        %v3540 = vsel %vm2494, %v3539, %v3535
        %v3541 = vlaneseq
        %v3542 = vshrl.u32 %v3541, 7
        %v3543 = vsub.s32 %v2484, %v3542
        %v3544 = vrot.slane %v3308, %v3543
        %v3545 = vlaneseq
        %v3546 = vshrl.u32 %v3545, 7
        %v3547 = vsub.s32 %v2489, %v3546
        %v3548 = vrot.slane %v3311, %v3547
        %v3549 = vsel %vm2494, %v3548, %v3544
        %v3550 = vlaneseq
        %v3551 = vshrl.u32 %v3550, 7
        %v3552 = vsub.s32 %v2484, %v3551
        %v3553 = vrot.slane %v3314, %v3552
        %v3554 = vlaneseq
        %v3555 = vshrl.u32 %v3554, 7
        %v3556 = vsub.s32 %v2489, %v3555
        %v3557 = vrot.slane %v3317, %v3556
        %v3558 = vsel %vm2494, %v3557, %v3553
        %v3559 = vlaneseq
        %v3560 = vshrl.u32 %v3559, 7
        %v3561 = vsub.s32 %v2484, %v3560
        %v3562 = vrot.slane %v3320, %v3561
        %v3563 = vlaneseq
        %v3564 = vshrl.u32 %v3563, 7
        %v3565 = vsub.s32 %v2489, %v3564
        %v3566 = vrot.slane %v3323, %v3565
        %v3567 = vsel %vm2494, %v3566, %v3562
        %v3568 = vlaneseq
        %v3569 = vshrl.u32 %v3568, 7
        %v3570 = vsub.s32 %v2484, %v3569
        %v3571 = vrot.slane %v3326, %v3570
        %v3572 = vlaneseq
        %v3573 = vshrl.u32 %v3572, 7
        %v3574 = vsub.s32 %v2489, %v3573
        %v3575 = vrot.slane %v3329, %v3574
        %v3576 = vsel %vm2494, %v3575, %v3571
        %v3577 = vlaneseq
        %v3578 = vshrl.u32 %v3577, 7
        %v3579 = vsub.s32 %v2484, %v3578
        %v3580 = vrot.slane %v3332, %v3579
        %v3581 = vlaneseq
        %v3582 = vshrl.u32 %v3581, 7
        %v3583 = vsub.s32 %v2489, %v3582
        %v3584 = vrot.slane %v3335, %v3583
        %v3585 = vsel %vm2494, %v3584, %v3580
        %v3586 = vlaneseq
        %v3587 = vshrl.u32 %v3586, 7
        %v3588 = vsub.s32 %v2484, %v3587
        %v3589 = vrot.slane %v3338, %v3588
        %v3590 = vlaneseq
        %v3591 = vshrl.u32 %v3590, 7
        %v3592 = vsub.s32 %v2489, %v3591
        %v3593 = vrot.slane %v3341, %v3592
        %v3594 = vsel %vm2494, %v3593, %v3589
        %v3595 = vlaneseq
        %v3596 = vshrl.u32 %v3595, 7
        %v3597 = vsub.s32 %v2484, %v3596
        %v3598 = vrot.slane %v3344, %v3597
        %v3599 = vlaneseq
        %v3600 = vshrl.u32 %v3599, 7
        %v3601 = vsub.s32 %v2489, %v3600
        %v3602 = vrot.slane %v3347, %v3601
        %v3603 = vsel %vm2494, %v3602, %v3598
        %v3604 = vlaneseq
        %v3605 = vshrl.u32 %v3604, 7
        %v3606 = vsub.s32 %v2484, %v3605
        %v3607 = vrot.slane %v3350, %v3606
        %v3608 = vlaneseq
        %v3609 = vshrl.u32 %v3608, 7
        %v3610 = vsub.s32 %v2489, %v3609
        %v3611 = vrot.slane %v3353, %v3610
        %v3612 = vsel %vm2494, %v3611, %v3607
        %v3613 = vlaneseq
        %v3614 = vshrl.u32 %v3613, 7
        %v3615 = vsub.s32 %v2484, %v3614
        %v3616 = vrot.slane %v3356, %v3615
        %v3617 = vlaneseq
        %v3618 = vshrl.u32 %v3617, 7
        %v3619 = vsub.s32 %v2489, %v3618
        %v3620 = vrot.slane %v3359, %v3619
        %v3621 = vsel %vm2494, %v3620, %v3616
        %v3622 = vlaneseq
        %v3623 = vshrl.u32 %v3622, 7
        %v3624 = vsub.s32 %v2484, %v3623
        %v3625 = vrot.slane %v3362, %v3624
        %v3626 = vlaneseq
        %v3627 = vshrl.u32 %v3626, 7
        %v3628 = vsub.s32 %v2489, %v3627
        %v3629 = vrot.slane %v3365, %v3628
        %v3630 = vsel %vm2494, %v3629, %v3625
        %v3631 = vlaneseq
        %v3632 = vshrl.u32 %v3631, 7
        %v3633 = vsub.s32 %v2484, %v3632
        %v3634 = vrot.slane %v3368, %v3633
        %v3635 = vlaneseq
        %v3636 = vshrl.u32 %v3635, 7
        %v3637 = vsub.s32 %v2489, %v3636
        %v3638 = vrot.slane %v3371, %v3637
        %v3639 = vsel %vm2494, %v3638, %v3634
        %v3640 = vlaneseq
        %v3641 = vshrl.u32 %v3640, 7
        %v3642 = vsub.s32 %v2484, %v3641
        %v3643 = vrot.slane %v3374, %v3642
        %v3644 = vlaneseq
        %v3645 = vshrl.u32 %v3644, 7
        %v3646 = vsub.s32 %v2489, %v3645
        %v3647 = vrot.slane %v3377, %v3646
        %v3648 = vsel %vm2494, %v3647, %v3643
        %v3649 = vlaneseq
        %v3650 = vshrl.u32 %v3649, 7
        %v3651 = vsub.s32 %v2484, %v3650
        %v3652 = vrot.slane %v3380, %v3651
        %v3653 = vlaneseq
        %v3654 = vshrl.u32 %v3653, 7
        %v3655 = vsub.s32 %v2489, %v3654
        %v3656 = vrot.slane %v3383, %v3655
        %v3657 = vsel %vm2494, %v3656, %v3652
        %v3658 = vlaneseq
        %v3659 = vshrl.u32 %v3658, 7
        %v3660 = vsub.s32 %v2484, %v3659
        %v3661 = vrot.slane %v3386, %v3660
        %v3662 = vlaneseq
        %v3663 = vshrl.u32 %v3662, 7
        %v3664 = vsub.s32 %v2489, %v3663
        %v3665 = vrot.slane %v3389, %v3664
        %v3666 = vsel %vm2494, %v3665, %v3661
        %v3667 = vlaneseq
        %v3668 = vshrl.u32 %v3667, 7
        %v3669 = vsub.s32 %v2484, %v3668
        %v3670 = vrot.slane %v3392, %v3669
        %v3671 = vlaneseq
        %v3672 = vshrl.u32 %v3671, 7
        %v3673 = vsub.s32 %v2489, %v3672
        %v3674 = vrot.slane %v3395, %v3673
        %v3675 = vsel %vm2494, %v3674, %v3670
        %v3676 = vsel %vm2631, %v3549, %v3540
        %v3677 = vsel %vm2633, %v3558, %v3676
        %v3678 = vsel %vm2635, %v3567, %v3677
        %v3679 = vsel %vm2637, %v3576, %v3678
        %v3680 = vsel %vm2639, %v3585, %v3679
        %v3681 = vsel %vm2641, %v3594, %v3680
        %v3682 = vsel %vm2643, %v3603, %v3681
        %v3683 = vsel %vm2631, %v3621, %v3612
        %v3684 = vsel %vm2633, %v3630, %v3683
        %v3685 = vsel %vm2635, %v3639, %v3684
        %v3686 = vsel %vm2637, %v3648, %v3685
        %v3687 = vsel %vm2639, %v3657, %v3686
        %v3688 = vsel %vm2641, %v3666, %v3687
        %v3689 = vsel %vm2643, %v3675, %v3688
        %v3692 = vsel %vm1350, %v3493, 0
        %v3694 = vsel %vm1350, %v3495, 0
        %v3696 = vsel %vm1350, %v3497, 0
        %v3698 = vsel %vm1350, %v3499, 0
        %3700 = vmatprep.subr.mxu0 0.0
        %3701 = vmatpush1.xpose.msra.mxu0 %v3696
        %3702 = vmatprep.subr.mxu0 0.0
        %3703 = vmatpush1.xpose.msra.mxu0 %v3698
        %3704 = vmatprep.subr.mxu0 0.0
        %3705 = vmatpush1.xpose.msra.mxu0 0.0
        %3706 = vmatprep.subr.mxu0 0.0
        %3707 = vmatpush1.xpose.msra.mxu0 0.0
        %3708 = vmatprep.subr.mxu0 0.0
        %3709 = vmatpush1.xpose.msra.mxu0 0.0
        %3710 = vmatprep.subr.mxu0 0.0
        %3711 = vmatpush1.xpose.msra.mxu0 0.0
        %3712 = vmatprep.subr.mxu0 0.0
        %3713 = vmatpush1.xpose.msra.mxu0 0.0
        %3714 = vmatprep.subr.mxu0 0.0
        %3715 = vmatpush1.xpose.msra.mxu0 0.0
        %3716 = vmatprep.subr.mxu0 0.0
        %3717 = vmatpush1.xpose.msra.mxu0 0.0
        %3718 = vmatprep.subr.mxu0 0.0
        %3719 = vmatpush1.xpose.msra.mxu0 0.0
        %3720 = vmatprep.subr.mxu0 0.0
        %3721 = vmatpush1.xpose.msra.mxu0 0.0
        %3722 = vmatprep.subr.mxu0 0.0
        %3723 = vmatpush1.xpose.msra.mxu0 0.0
        %3724 = vmatprep.subr.mxu0 0.0
        %3725 = vmatpush1.xpose.msra.mxu0 0.0
        %3726 = vmatprep.subr.mxu0 0.0
        %3727 = vmatpush1.xpose.msra.mxu0 0.0
        %3728 = vmatprep.subr.mxu0 0.0
        %3729 = vmatpush1.xpose.msra.mxu0 0.0
        %3730 = vmatprep.subr.mxu0 0.0
        %3731 = vmatpush1.xpose.msra.mxu0 0.0
        %3732 = vmatprep.subr.mxu0 0.0
        %3733 = vmatpush1.xpose.msra.mxu0 0.0
        %3734 = vmatprep.subr.mxu0 0.0
        %3735 = vmatpush1.xpose.msra.mxu0 0.0
        %3736 = vmatprep.subr.mxu0 0.0
        %3737 = vmatpush1.xpose.msra.mxu0 0.0
        %3738 = vmatprep.subr.mxu0 0.0
        %3739 = vmatpush1.xpose.msra.mxu0 0.0
        %3740 = vmatprep.subr.mxu0 0.0
        %3741 = vmatpush1.xpose.msra.mxu0 0.0
        %3742 = vmatprep.subr.mxu0 0.0
        %3743 = vmatpush1.xpose.msra.mxu0 0.0
        %3744 = vmatprep.subr.mxu0 0.0
        %3745 = vmatpush1.xpose.msra.mxu0 0.0
        %3746 = vmatprep.subr.mxu0 0.0
        %3747 = vmatpush1.xpose.msra.mxu0 0.0
        %3748 = vmatprep.subr.mxu0 0.0
        %3749 = vmatpush1.xpose.msra.mxu0 0.0
        %3750 = vmatprep.subr.mxu0 0.0
        %3751 = vmatpush1.xpose.msra.mxu0 0.0
        %3752 = vmatprep.subr.mxu0 0.0
        %3753 = vmatpush1.xpose.msra.mxu0 0.0
        %3754 = vmatprep.subr.mxu0 0.0
        %3755 = vmatpush1.xpose.msra.mxu0 0.0
        %3756 = vmatprep.subr.mxu0 0.0
        %3757 = vmatpush1.xpose.msra.mxu0 0.0
        %3758 = vmatprep.subr.mxu0 0.0
        %3759 = vmatpush1.xpose.msra.mxu0 0.0
        %3760 = vmatprep.subr.mxu0 0.0
        %3761 = vmatpush1.xpose.msra.mxu0 0.0
        %3762 = vmatprep.subr.mxu0 0.0
        %3763 = vmatpush1.xpose.msra.mxu0 0.0
        %3764 = vmatprep.mubr.f32.mxu0 0.0
        %3765 = vmatmul.mubr.f32.gmra.mrb[0].mxu0 %v3692
        %v3766 = vpop.f32.mrb[0].mxu0
        %v3767 = vadd.f32 %v3682, %v3766
        %v3768 = vpop.f32.mrb[0].mxu0
        %3769 = vmatprep.mubr.f32.mxu0 0.0
        %3770 = vmatmul.mubr.f32.gmra.mrb[0].mxu0 %v3694
        %v3771 = vpop.f32.mrb[0].mxu0
        %v3772 = vadd.f32 %v3689, %v3771
        %v3773 = vpop.f32.mrb[0].mxu0
        %3774 = vdwg.mxu0
        %3775 = vrot.lane.b32.xlu0 %v1248, 112
        %v3776 = vpop.permute.xlu0 %3775
        %3777 = vrot.lane.b32.xlu0 %v1249, 112
        %v3778 = vpop.permute.xlu0 %3777
        %3779 = vrot.lane.b32.xlu0 %v1228, 48
        %v3780 = vpop.permute.xlu0 %3779
        %3781 = vrot.lane.b32.xlu0 %v1234, 48
        %v3782 = vpop.permute.xlu0 %3781
        %v3815 = vlaneseq
        %v3816 = vshrl.u32 %v3815, 7
        %v3817 = vsub.s32 %v2484, %v3816
        %v3818 = vrot.slane %v3398, %v3817
        %v3819 = vlaneseq
        %v3820 = vshrl.u32 %v3819, 7
        %v3821 = vsub.s32 %v2489, %v3820
        %v3822 = vrot.slane %v3401, %v3821
        %v3823 = vsel %vm2494, %v3822, %v3818
        %v3824 = vlaneseq
        %v3825 = vshrl.u32 %v3824, 7
        %v3826 = vsub.s32 %v2484, %v3825
        %v3827 = vrot.slane %v3404, %v3826
        %v3828 = vlaneseq
        %v3829 = vshrl.u32 %v3828, 7
        %v3830 = vsub.s32 %v2489, %v3829
        %v3831 = vrot.slane %v3407, %v3830
        %v3832 = vsel %vm2494, %v3831, %v3827
        %v3833 = vlaneseq
        %v3834 = vshrl.u32 %v3833, 7
        %v3835 = vsub.s32 %v2484, %v3834
        %v3836 = vrot.slane %v3410, %v3835
        %v3837 = vlaneseq
        %v3838 = vshrl.u32 %v3837, 7
        %v3839 = vsub.s32 %v2489, %v3838
        %v3840 = vrot.slane %v3413, %v3839
        %v3841 = vsel %vm2494, %v3840, %v3836
        %v3842 = vlaneseq
        %v3843 = vshrl.u32 %v3842, 7
        %v3844 = vsub.s32 %v2484, %v3843
        %v3845 = vrot.slane %v3416, %v3844
        %v3846 = vlaneseq
        %v3847 = vshrl.u32 %v3846, 7
        %v3848 = vsub.s32 %v2489, %v3847
        %v3849 = vrot.slane %v3419, %v3848
        %v3850 = vsel %vm2494, %v3849, %v3845
        %v3851 = vlaneseq
        %v3852 = vshrl.u32 %v3851, 7
        %v3853 = vsub.s32 %v2484, %v3852
        %v3854 = vrot.slane %v3422, %v3853
        %v3855 = vlaneseq
        %v3856 = vshrl.u32 %v3855, 7
        %v3857 = vsub.s32 %v2489, %v3856
        %v3858 = vrot.slane %v3425, %v3857
        %v3859 = vsel %vm2494, %v3858, %v3854
        %v3860 = vlaneseq
        %v3861 = vshrl.u32 %v3860, 7
        %v3862 = vsub.s32 %v2484, %v3861
        %v3863 = vrot.slane %v3428, %v3862
        %v3864 = vlaneseq
        %v3865 = vshrl.u32 %v3864, 7
        %v3866 = vsub.s32 %v2489, %v3865
        %v3867 = vrot.slane %v3431, %v3866
        %v3868 = vsel %vm2494, %v3867, %v3863
        %v3869 = vlaneseq
        %v3870 = vshrl.u32 %v3869, 7
        %v3871 = vsub.s32 %v2484, %v3870
        %v3872 = vrot.slane %v3434, %v3871
        %v3873 = vlaneseq
        %v3874 = vshrl.u32 %v3873, 7
        %v3875 = vsub.s32 %v2489, %v3874
        %v3876 = vrot.slane %v3437, %v3875
        %v3877 = vsel %vm2494, %v3876, %v3872
        %v3878 = vlaneseq
        %v3879 = vshrl.u32 %v3878, 7
        %v3880 = vsub.s32 %v2484, %v3879
        %v3881 = vrot.slane %v3440, %v3880
        %v3882 = vlaneseq
        %v3883 = vshrl.u32 %v3882, 7
        %v3884 = vsub.s32 %v2489, %v3883
        %v3885 = vrot.slane %v3443, %v3884
        %v3886 = vsel %vm2494, %v3885, %v3881
        %v3887 = vlaneseq
        %v3888 = vshrl.u32 %v3887, 7
        %v3889 = vsub.s32 %v2484, %v3888
        %v3890 = vrot.slane %v3446, %v3889
        %v3891 = vlaneseq
        %v3892 = vshrl.u32 %v3891, 7
        %v3893 = vsub.s32 %v2489, %v3892
        %v3894 = vrot.slane %v3449, %v3893
        %v3895 = vsel %vm2494, %v3894, %v3890
        %v3896 = vlaneseq
        %v3897 = vshrl.u32 %v3896, 7
        %v3898 = vsub.s32 %v2484, %v3897
        %v3899 = vrot.slane %v3452, %v3898
        %v3900 = vlaneseq
        %v3901 = vshrl.u32 %v3900, 7
        %v3902 = vsub.s32 %v2489, %v3901
        %v3903 = vrot.slane %v3455, %v3902
        %v3904 = vsel %vm2494, %v3903, %v3899
        %v3905 = vlaneseq
        %v3906 = vshrl.u32 %v3905, 7
        %v3907 = vsub.s32 %v2484, %v3906
        %v3908 = vrot.slane %v3458, %v3907
        %v3909 = vlaneseq
        %v3910 = vshrl.u32 %v3909, 7
        %v3911 = vsub.s32 %v2489, %v3910
        %v3912 = vrot.slane %v3461, %v3911
        %v3913 = vsel %vm2494, %v3912, %v3908
        %v3914 = vlaneseq
        %v3915 = vshrl.u32 %v3914, 7
        %v3916 = vsub.s32 %v2484, %v3915
        %v3917 = vrot.slane %v3464, %v3916
        %v3918 = vlaneseq
        %v3919 = vshrl.u32 %v3918, 7
        %v3920 = vsub.s32 %v2489, %v3919
        %v3921 = vrot.slane %v3467, %v3920
        %v3922 = vsel %vm2494, %v3921, %v3917
        %v3923 = vlaneseq
        %v3924 = vshrl.u32 %v3923, 7
        %v3925 = vsub.s32 %v2484, %v3924
        %v3926 = vrot.slane %v3470, %v3925
        %v3927 = vlaneseq
        %v3928 = vshrl.u32 %v3927, 7
        %v3929 = vsub.s32 %v2489, %v3928
        %v3930 = vrot.slane %v3473, %v3929
        %v3931 = vsel %vm2494, %v3930, %v3926
        %v3932 = vlaneseq
        %v3933 = vshrl.u32 %v3932, 7
        %v3934 = vsub.s32 %v2484, %v3933
        %v3935 = vrot.slane %v3476, %v3934
        %v3936 = vlaneseq
        %v3937 = vshrl.u32 %v3936, 7
        %v3938 = vsub.s32 %v2489, %v3937
        %v3939 = vrot.slane %v3479, %v3938
        %v3940 = vsel %vm2494, %v3939, %v3935
        %v3941 = vlaneseq
        %v3942 = vshrl.u32 %v3941, 7
        %v3943 = vsub.s32 %v2484, %v3942
        %v3944 = vrot.slane %v3482, %v3943
        %v3945 = vlaneseq
        %v3946 = vshrl.u32 %v3945, 7
        %v3947 = vsub.s32 %v2489, %v3946
        %v3948 = vrot.slane %v3485, %v3947
        %v3949 = vsel %vm2494, %v3948, %v3944
        %v3950 = vlaneseq
        %v3951 = vshrl.u32 %v3950, 7
        %v3952 = vsub.s32 %v2484, %v3951
        %v3953 = vrot.slane %v3488, %v3952
        %v3954 = vlaneseq
        %v3955 = vshrl.u32 %v3954, 7
        %v3956 = vsub.s32 %v2489, %v3955
        %v3957 = vrot.slane %v3491, %v3956
        %v3958 = vsel %vm2494, %v3957, %v3953
        %v3959 = vsel %vm2631, %v3832, %v3823
        %v3960 = vsel %vm2633, %v3841, %v3959
        %v3961 = vsel %vm2635, %v3850, %v3960
        %v3962 = vsel %vm2637, %v3859, %v3961
        %v3963 = vsel %vm2639, %v3868, %v3962
        %v3964 = vsel %vm2641, %v3877, %v3963
        %v3965 = vsel %vm2643, %v3886, %v3964
        %v3966 = vsel %vm2631, %v3904, %v3895
        %v3967 = vsel %vm2633, %v3913, %v3966
        %v3968 = vsel %vm2635, %v3922, %v3967
        %v3969 = vsel %vm2637, %v3931, %v3968
        %v3970 = vsel %vm2639, %v3940, %v3969
        %v3971 = vsel %vm2641, %v3949, %v3970
        %v3972 = vsel %vm2643, %v3958, %v3971
        %v3975 = vsel %vm1350, %v3776, 0
        %v3977 = vsel %vm1350, %v3778, 0
        %v3979 = vsel %vm1350, %v3780, 0
        %v3981 = vsel %vm1350, %v3782, 0
        %3983 = vmatprep.subr.mxu0 0.0
        %3984 = vmatpush1.xpose.msra.mxu0 %v3979
        %3985 = vmatprep.subr.mxu0 0.0
        %3986 = vmatpush1.xpose.msra.mxu0 %v3981
        %3987 = vmatprep.subr.mxu0 0.0
        %3988 = vmatpush1.xpose.msra.mxu0 0.0
        %3989 = vmatprep.subr.mxu0 0.0
        %3990 = vmatpush1.xpose.msra.mxu0 0.0
        %3991 = vmatprep.subr.mxu0 0.0
        %3992 = vmatpush1.xpose.msra.mxu0 0.0
        %3993 = vmatprep.subr.mxu0 0.0
        %3994 = vmatpush1.xpose.msra.mxu0 0.0
        %3995 = vmatprep.subr.mxu0 0.0
        %3996 = vmatpush1.xpose.msra.mxu0 0.0
        %3997 = vmatprep.subr.mxu0 0.0
        %3998 = vmatpush1.xpose.msra.mxu0 0.0
        %3999 = vmatprep.subr.mxu0 0.0
        %4000 = vmatpush1.xpose.msra.mxu0 0.0
        %4001 = vmatprep.subr.mxu0 0.0
        %4002 = vmatpush1.xpose.msra.mxu0 0.0
        %4003 = vmatprep.subr.mxu0 0.0
        %4004 = vmatpush1.xpose.msra.mxu0 0.0
        %4005 = vmatprep.subr.mxu0 0.0
        %4006 = vmatpush1.xpose.msra.mxu0 0.0
        %4007 = vmatprep.subr.mxu0 0.0
        %4008 = vmatpush1.xpose.msra.mxu0 0.0
        %4009 = vmatprep.subr.mxu0 0.0
        %4010 = vmatpush1.xpose.msra.mxu0 0.0
        %4011 = vmatprep.subr.mxu0 0.0
        %4012 = vmatpush1.xpose.msra.mxu0 0.0
        %4013 = vmatprep.subr.mxu0 0.0
        %4014 = vmatpush1.xpose.msra.mxu0 0.0
        %4015 = vmatprep.subr.mxu0 0.0
        %4016 = vmatpush1.xpose.msra.mxu0 0.0
        %4017 = vmatprep.subr.mxu0 0.0
        %4018 = vmatpush1.xpose.msra.mxu0 0.0
        %4019 = vmatprep.subr.mxu0 0.0
        %4020 = vmatpush1.xpose.msra.mxu0 0.0
        %4021 = vmatprep.subr.mxu0 0.0
        %4022 = vmatpush1.xpose.msra.mxu0 0.0
        %4023 = vmatprep.subr.mxu0 0.0
        %4024 = vmatpush1.xpose.msra.mxu0 0.0
        %4025 = vmatprep.subr.mxu0 0.0
        %4026 = vmatpush1.xpose.msra.mxu0 0.0
        %4027 = vmatprep.subr.mxu0 0.0
        %4028 = vmatpush1.xpose.msra.mxu0 0.0
        %4029 = vmatprep.subr.mxu0 0.0
        %4030 = vmatpush1.xpose.msra.mxu0 0.0
        %4031 = vmatprep.subr.mxu0 0.0
        %4032 = vmatpush1.xpose.msra.mxu0 0.0
        %4033 = vmatprep.subr.mxu0 0.0
        %4034 = vmatpush1.xpose.msra.mxu0 0.0
        %4035 = vmatprep.subr.mxu0 0.0
        %4036 = vmatpush1.xpose.msra.mxu0 0.0
        %4037 = vmatprep.subr.mxu0 0.0
        %4038 = vmatpush1.xpose.msra.mxu0 0.0
        %4039 = vmatprep.subr.mxu0 0.0
        %4040 = vmatpush1.xpose.msra.mxu0 0.0
        %4041 = vmatprep.subr.mxu0 0.0
        %4042 = vmatpush1.xpose.msra.mxu0 0.0
        %4043 = vmatprep.subr.mxu0 0.0
        %4044 = vmatpush1.xpose.msra.mxu0 0.0
        %4045 = vmatprep.subr.mxu0 0.0
        %4046 = vmatpush1.xpose.msra.mxu0 0.0
        %4047 = vmatprep.mubr.f32.mxu0 0.0
        %4048 = vmatmul.mubr.f32.gmra.mrb[0].mxu0 %v3975
        %v4049 = vpop.f32.mrb[0].mxu0
        %v4050 = vadd.f32 %v3965, %v4049
        %v4051 = vpop.f32.mrb[0].mxu0
        %4052 = vmatprep.mubr.f32.mxu0 0.0
        %4053 = vmatmul.mubr.f32.gmra.mrb[0].mxu0 %v3977
        %v4054 = vpop.f32.mrb[0].mxu0
        %v4055 = vadd.f32 %v3972, %v4054
        %v4056 = vpop.f32.mrb[0].mxu0
        %4057 = vdwg.mxu0
        %v4058 = vsel %vm1350, %v3767, -inf
        %4059 = vmax.xlane.f32.xlu0 %v4058
        %v4060 = vpop.xlane.xlu0 %4059
        %v4061 = vsel %vm1350, %v3772, -inf
        %4062 = vmax.xlane.f32.xlu0 %v4061
        %v4063 = vpop.xlane.xlu0 %4062
        %v4064 = vsel %vm1350, %v4050, -inf
        %4065 = vmax.xlane.f32.xlu0 %v4064
        %v4066 = vpop.xlane.xlu0 %4065
        %v4067 = vsel %vm1350, %v4055, -inf
        %4068 = vmax.xlane.f32.xlu0 %v4067
        %v4069 = vpop.xlane.xlu0 %4068
        %v4070 = vsub.f32 %v3767, %v4060
        %v4071 = vsub.f32 %v3772, %v4063
        %v4072 = vsub.f32 %v4050, %v4066
        %v4073 = vsub.f32 %v4055, %v4069
        %v4074 = vmul.f32 %v4070, 1.442695
        %v4075 = vpow.pop %v4074
        %v4076 = vmul.f32 %v4071, 1.442695
        %v4077 = vpow.pop %v4076
        %v4078 = vmul.f32 %v4072, 1.442695
        %v4079 = vpow.pop %v4078
        %v4080 = vmul.f32 %v4073, 1.442695
        %v4081 = vpow.pop %v4080
        %v4082 = vsel %vm1350, %v4075, 0.0
        %4083 = vadd.xlane.f32.xlu0 %v4082
        %v4084 = vpop.xlane.xlu0 %4083
        %v4085 = vsel %vm1350, %v4077, 0.0
        %4086 = vadd.xlane.f32.xlu0 %v4085
        %v4087 = vpop.xlane.xlu0 %4086
        %v4088 = vsel %vm1350, %v4079, 0.0
        %4089 = vadd.xlane.f32.xlu0 %v4088
        %v4090 = vpop.xlane.xlu0 %4089
        %v4091 = vsel %vm1350, %v4081, 0.0
        %4092 = vadd.xlane.f32.xlu0 %v4091
        %v4093 = vpop.xlane.xlu0 %4092
        %v4094 = vrcp.pop %v4084
        %v4095 = vrcp.pop %v4087
        %v4096 = vrcp.pop %v4090
        %v4097 = vrcp.pop %v4093
        %v4098 = vmul.f32 %v4075, %v4094
        %v4099 = vmul.f32 %v4077, %v4095
        %v4100 = vmul.f32 %v4079, %v4096
        %v4101 = vmul.f32 %v4081, %v4097
        %4104 = vrot.lane.b32.xlu0 %v1218, 112
        %v4105 = vpop.permute.xlu0 %4104
        %4106 = vrot.lane.b32.xlu0 %v1224, 112
        %v4107 = vpop.permute.xlu0 %4106
        %v4111 = vsel %vm1350, %v4098, 0
        %v4114 = vsel %vm1350, %v4099, 0
        %4116 = vmatprep.subr.mxu0 0.0
        %4117 = vmatpush1.msra.mxu0 %v4105
        %4118 = vmatprep.subr.mxu0 0.0
        %4119 = vmatpush1.msra.mxu0 %v4107
        %4120 = vmatprep.subr.mxu0 0.0
        %4121 = vmatpush1.msra.mxu0 0.0
        %4122 = vmatprep.subr.mxu0 0.0
        %4123 = vmatpush1.msra.mxu0 0.0
        %4124 = vmatprep.subr.mxu0 0.0
        %4125 = vmatpush1.msra.mxu0 0.0
        %4126 = vmatprep.subr.mxu0 0.0
        %4127 = vmatpush1.msra.mxu0 0.0
        %4128 = vmatprep.subr.mxu0 0.0
        %4129 = vmatpush1.msra.mxu0 0.0
        %4130 = vmatprep.subr.mxu0 0.0
        %4131 = vmatpush1.msra.mxu0 0.0
        %4132 = vmatprep.subr.mxu0 0.0
        %4133 = vmatpush1.msra.mxu0 0.0
        %4134 = vmatprep.subr.mxu0 0.0
        %4135 = vmatpush1.msra.mxu0 0.0
        %4136 = vmatprep.subr.mxu0 0.0
        %4137 = vmatpush1.msra.mxu0 0.0
        %4138 = vmatprep.subr.mxu0 0.0
        %4139 = vmatpush1.msra.mxu0 0.0
        %4140 = vmatprep.subr.mxu0 0.0
        %4141 = vmatpush1.msra.mxu0 0.0
        %4142 = vmatprep.subr.mxu0 0.0
        %4143 = vmatpush1.msra.mxu0 0.0
        %4144 = vmatprep.subr.mxu0 0.0
        %4145 = vmatpush1.msra.mxu0 0.0
        %4146 = vmatprep.subr.mxu0 0.0
        %4147 = vmatpush1.msra.mxu0 0.0
        %4148 = vmatprep.subr.mxu0 0.0
        %4149 = vmatpush1.msra.mxu0 0.0
        %4150 = vmatprep.subr.mxu0 0.0
        %4151 = vmatpush1.msra.mxu0 0.0
        %4152 = vmatprep.subr.mxu0 0.0
        %4153 = vmatpush1.msra.mxu0 0.0
        %4154 = vmatprep.subr.mxu0 0.0
        %4155 = vmatpush1.msra.mxu0 0.0
        %4156 = vmatprep.subr.mxu0 0.0
        %4157 = vmatpush1.msra.mxu0 0.0
        %4158 = vmatprep.subr.mxu0 0.0
        %4159 = vmatpush1.msra.mxu0 0.0
        %4160 = vmatprep.subr.mxu0 0.0
        %4161 = vmatpush1.msra.mxu0 0.0
        %4162 = vmatprep.subr.mxu0 0.0
        %4163 = vmatpush1.msra.mxu0 0.0
        %4164 = vmatprep.subr.mxu0 0.0
        %4165 = vmatpush1.msra.mxu0 0.0
        %4166 = vmatprep.subr.mxu0 0.0
        %4167 = vmatpush1.msra.mxu0 0.0
        %4168 = vmatprep.subr.mxu0 0.0
        %4169 = vmatpush1.msra.mxu0 0.0
        %4170 = vmatprep.subr.mxu0 0.0
        %4171 = vmatpush1.msra.mxu0 0.0
        %4172 = vmatprep.subr.mxu0 0.0
        %4173 = vmatpush1.msra.mxu0 0.0
        %4174 = vmatprep.subr.mxu0 0.0
        %4175 = vmatpush1.msra.mxu0 0.0
        %4176 = vmatprep.subr.mxu0 0.0
        %4177 = vmatpush1.msra.mxu0 0.0
        %4178 = vmatprep.subr.mxu0 0.0
        %4179 = vmatpush1.msra.mxu0 0.0
        %4180 = vmatprep.mubr.f32.mxu0 0.0
        %4181 = vmatmul.mubr.f32.gmra.mrb[0].mxu0 %v4111
        %v4182 = vpop.f32.mrb[0].mxu0
        %v4183 = vadd.f32 0.0, %v4182
        %v4184 = vpop.f32.mrb[0].mxu0
        %4185 = vmatprep.mubr.f32.mxu0 0.0
        %4186 = vmatmul.mubr.f32.gmra.mrb[0].mxu0 %v4114
        %v4187 = vpop.f32.mrb[0].mxu0
        %v4188 = vadd.f32 0.0, %v4187
        %v4189 = vpop.f32.mrb[0].mxu0
        %4190 = vdwg.mxu0
        %4193 = vrot.lane.b32.xlu0 %v1230, 112
        %v4194 = vpop.permute.xlu0 %4193
        %4195 = vrot.lane.b32.xlu0 %v1236, 112
        %v4196 = vpop.permute.xlu0 %4195
        %v4200 = vsel %vm1350, %v4100, 0
        %v4203 = vsel %vm1350, %v4101, 0
        %4205 = vmatprep.subr.mxu0 0.0
        %4206 = vmatpush1.msra.mxu0 %v4194
        %4207 = vmatprep.subr.mxu0 0.0
        %4208 = vmatpush1.msra.mxu0 %v4196
        %4209 = vmatprep.subr.mxu0 0.0
        %4210 = vmatpush1.msra.mxu0 0.0
        %4211 = vmatprep.subr.mxu0 0.0
        %4212 = vmatpush1.msra.mxu0 0.0
        %4213 = vmatprep.subr.mxu0 0.0
        %4214 = vmatpush1.msra.mxu0 0.0
        %4215 = vmatprep.subr.mxu0 0.0
        %4216 = vmatpush1.msra.mxu0 0.0
        %4217 = vmatprep.subr.mxu0 0.0
        %4218 = vmatpush1.msra.mxu0 0.0
        %4219 = vmatprep.subr.mxu0 0.0
        %4220 = vmatpush1.msra.mxu0 0.0
        %4221 = vmatprep.subr.mxu0 0.0
        %4222 = vmatpush1.msra.mxu0 0.0
        %4223 = vmatprep.subr.mxu0 0.0
        %4224 = vmatpush1.msra.mxu0 0.0
        %4225 = vmatprep.subr.mxu0 0.0
        %4226 = vmatpush1.msra.mxu0 0.0
        %4227 = vmatprep.subr.mxu0 0.0
        %4228 = vmatpush1.msra.mxu0 0.0
        %4229 = vmatprep.subr.mxu0 0.0
        %4230 = vmatpush1.msra.mxu0 0.0
        %4231 = vmatprep.subr.mxu0 0.0
        %4232 = vmatpush1.msra.mxu0 0.0
        %4233 = vmatprep.subr.mxu0 0.0
        %4234 = vmatpush1.msra.mxu0 0.0
        %4235 = vmatprep.subr.mxu0 0.0
        %4236 = vmatpush1.msra.mxu0 0.0
        %4237 = vmatprep.subr.mxu0 0.0
        %4238 = vmatpush1.msra.mxu0 0.0
        %4239 = vmatprep.subr.mxu0 0.0
        %4240 = vmatpush1.msra.mxu0 0.0
        %4241 = vmatprep.subr.mxu0 0.0
        %4242 = vmatpush1.msra.mxu0 0.0
        %4243 = vmatprep.subr.mxu0 0.0
        %4244 = vmatpush1.msra.mxu0 0.0
        %4245 = vmatprep.subr.mxu0 0.0
        %4246 = vmatpush1.msra.mxu0 0.0
        %4247 = vmatprep.subr.mxu0 0.0
        %4248 = vmatpush1.msra.mxu0 0.0
        %4249 = vmatprep.subr.mxu0 0.0
        %4250 = vmatpush1.msra.mxu0 0.0
        %4251 = vmatprep.subr.mxu0 0.0
        %4252 = vmatpush1.msra.mxu0 0.0
        %4253 = vmatprep.subr.mxu0 0.0
        %4254 = vmatpush1.msra.mxu0 0.0
        %4255 = vmatprep.subr.mxu0 0.0
        %4256 = vmatpush1.msra.mxu0 0.0
        %4257 = vmatprep.subr.mxu0 0.0
        %4258 = vmatpush1.msra.mxu0 0.0
        %4259 = vmatprep.subr.mxu0 0.0
        %4260 = vmatpush1.msra.mxu0 0.0
        %4261 = vmatprep.subr.mxu0 0.0
        %4262 = vmatpush1.msra.mxu0 0.0
        %4263 = vmatprep.subr.mxu0 0.0
        %4264 = vmatpush1.msra.mxu0 0.0
        %4265 = vmatprep.subr.mxu0 0.0
        %4266 = vmatpush1.msra.mxu0 0.0
        %4267 = vmatprep.subr.mxu0 0.0
        %4268 = vmatpush1.msra.mxu0 0.0
        %4269 = vmatprep.mubr.f32.mxu0 0.0
        %4270 = vmatmul.mubr.f32.gmra.mrb[0].mxu0 %v4200
        %v4271 = vpop.f32.mrb[0].mxu0
        %v4272 = vadd.f32 0.0, %v4271
        %v4273 = vpop.f32.mrb[0].mxu0
        %4274 = vmatprep.mubr.f32.mxu0 0.0
        %4275 = vmatmul.mubr.f32.gmra.mrb[0].mxu0 %v4203
        %v4276 = vpop.f32.mrb[0].mxu0
        %v4277 = vadd.f32 0.0, %v4276
        %v4278 = vpop.f32.mrb[0].mxu0
        %4279 = vdwg.mxu0
        %4284 = vrot.lane.b32.xlu0 %v4183, 16
        %v4285 = vpop.permute.xlu0 %4284
        %4286 = vrot.lane.b32.xlu0 %v4188, 16
        %v4287 = vpop.permute.xlu0 %4286
        %4288 = vrot.lane.b32.xlu0 %v4272, 16
        %v4289 = vpop.permute.xlu0 %4288
        %4290 = vrot.lane.b32.xlu0 %v4277, 16
        %v4291 = vpop.permute.xlu0 %4290
        %vm4296 = vcmask 261248
        %4297 = vst.msk [vmem:[#allocation2] sm:$0xff] %vm4296, %v4285
        %4298 = vst.msk [vmem:[#allocation2 + $0x8] sm:$0xff] %vm4296, %v4287
        %4299 = vst.msk [vmem:[#allocation2 + $0x10] sm:$0xff] %vm4296, %v4289
        %4300 = vst.msk [vmem:[#allocation2 + $0x18] sm:$0xff] %vm4296, %v4291
        %v4301 = vlaneseq
        %v4302 = vshrl.u32 %v4301, 7
        %v4303 = vsub.s32 2, %v4302
        %v4304 = vrot.slane %v2184, %v4303
        %v4305 = vmul.f32 %v2120, %v4304
        %v4306 = vmul.f32 %v2121, %v4304
        %v4307 = vmul.f32 %v2122, %v4304
        %v4308 = vmul.f32 %v2123, %v4304
        %v4309 = vmul.f32 %v2124, %v4304
        %v4310 = vmul.f32 %v2125, %v4304
        %v4311 = vmul.f32 %v2126, %v4304
        %v4312 = vmul.f32 %v2127, %v4304
        %v4313 = vmul.f32 %v2128, %v4304
        %v4314 = vmul.f32 %v2129, %v4304
        %v4315 = vmul.f32 %v2130, %v4304
        %v4316 = vmul.f32 %v2131, %v4304
        %v4317 = vmul.f32 %v2132, %v4304
        %v4318 = vmul.f32 %v2133, %v4304
        %v4319 = vmul.f32 %v2134, %v4304
        %v4320 = vmul.f32 %v2135, %v4304
        %v4321 = vmul.f32 %v2136, %v4304
        %v4322 = vmul.f32 %v2137, %v4304
        %v4323 = vmul.f32 %v2138, %v4304
        %v4324 = vmul.f32 %v2139, %v4304
        %v4325 = vmul.f32 %v2140, %v4304
        %v4326 = vmul.f32 %v2141, %v4304
        %v4327 = vmul.f32 %v2142, %v4304
        %v4328 = vmul.f32 %v2143, %v4304
        %v4329 = vmul.f32 %v2144, %v4304
        %v4330 = vmul.f32 %v2145, %v4304
        %v4331 = vmul.f32 %v2146, %v4304
        %v4332 = vmul.f32 %v2147, %v4304
        %v4333 = vmul.f32 %v2148, %v4304
        %v4334 = vmul.f32 %v2149, %v4304
        %v4335 = vmul.f32 %v2150, %v4304
        %v4336 = vmul.f32 %v2151, %v4304
        %v4337 = vmul.f32 %v2152, %v4304
        %v4338 = vmul.f32 %v2153, %v4304
        %v4339 = vmul.f32 %v2154, %v4304
        %v4340 = vmul.f32 %v2155, %v4304
        %v4341 = vmul.f32 %v2156, %v4304
        %v4342 = vmul.f32 %v2157, %v4304
        %v4343 = vmul.f32 %v2158, %v4304
        %v4344 = vmul.f32 %v2159, %v4304
        %v4345 = vmul.f32 %v2160, %v4304
        %v4346 = vmul.f32 %v2161, %v4304
        %v4347 = vmul.f32 %v2162, %v4304
        %v4348 = vmul.f32 %v2163, %v4304
        %v4349 = vmul.f32 %v2164, %v4304
        %v4350 = vmul.f32 %v2165, %v4304
        %v4351 = vmul.f32 %v2166, %v4304
        %v4352 = vmul.f32 %v2167, %v4304
        %v4353 = vmul.f32 %v2168, %v4304
        %v4354 = vmul.f32 %v2169, %v4304
        %v4355 = vmul.f32 %v2170, %v4304
        %v4356 = vmul.f32 %v2171, %v4304
        %v4357 = vmul.f32 %v2172, %v4304
        %v4358 = vmul.f32 %v2173, %v4304
        %v4359 = vmul.f32 %v2174, %v4304
        %v4360 = vmul.f32 %v2175, %v4304
        %v4361 = vmul.f32 %v2176, %v4304
        %v4362 = vmul.f32 %v2177, %v4304
        %v4363 = vmul.f32 %v2178, %v4304
        %v4364 = vmul.f32 %v2179, %v4304
        %v4365 = vmul.f32 %v2180, %v4304
        %v4366 = vmul.f32 %v2181, %v4304
        %v4367 = vmul.f32 %v2182, %v4304
        %v4368 = vmul.f32 %v2183, %v4304
        %v4369 = vsel %vm1350, %v4305, 0.0
        %4370 = vadd.xlane.f32.xlu0 %v4369
        %v4371 = vpop.xlane.xlu0 %4370
        %v4372 = vsel %vm1350, %v4306, 0.0
        %4373 = vadd.xlane.f32.xlu0 %v4372
        %v4374 = vpop.xlane.xlu0 %4373
        %v4375 = vsel %vm1350, %v4307, 0.0
        %4376 = vadd.xlane.f32.xlu0 %v4375
        %v4377 = vpop.xlane.xlu0 %4376
        %v4378 = vsel %vm1350, %v4308, 0.0
        %4379 = vadd.xlane.f32.xlu0 %v4378
        %v4380 = vpop.xlane.xlu0 %4379
        %v4381 = vsel %vm1350, %v4309, 0.0
        %4382 = vadd.xlane.f32.xlu0 %v4381
        %v4383 = vpop.xlane.xlu0 %4382
        %v4384 = vsel %vm1350, %v4310, 0.0
        %4385 = vadd.xlane.f32.xlu0 %v4384
        %v4386 = vpop.xlane.xlu0 %4385
        %v4387 = vsel %vm1350, %v4311, 0.0
        %4388 = vadd.xlane.f32.xlu0 %v4387
        %v4389 = vpop.xlane.xlu0 %4388
        %v4390 = vsel %vm1350, %v4312, 0.0
        %4391 = vadd.xlane.f32.xlu0 %v4390
        %v4392 = vpop.xlane.xlu0 %4391
        %v4393 = vsel %vm1350, %v4313, 0.0
        %4394 = vadd.xlane.f32.xlu0 %v4393
        %v4395 = vpop.xlane.xlu0 %4394
        %v4396 = vsel %vm1350, %v4314, 0.0
        %4397 = vadd.xlane.f32.xlu0 %v4396
        %v4398 = vpop.xlane.xlu0 %4397
        %v4399 = vsel %vm1350, %v4315, 0.0
        %4400 = vadd.xlane.f32.xlu0 %v4399
        %v4401 = vpop.xlane.xlu0 %4400
        %v4402 = vsel %vm1350, %v4316, 0.0
        %4403 = vadd.xlane.f32.xlu0 %v4402
        %v4404 = vpop.xlane.xlu0 %4403
        %v4405 = vsel %vm1350, %v4317, 0.0
        %4406 = vadd.xlane.f32.xlu0 %v4405
        %v4407 = vpop.xlane.xlu0 %4406
        %v4408 = vsel %vm1350, %v4318, 0.0
        %4409 = vadd.xlane.f32.xlu0 %v4408
        %v4410 = vpop.xlane.xlu0 %4409
        %v4411 = vsel %vm1350, %v4319, 0.0
        %4412 = vadd.xlane.f32.xlu0 %v4411
        %v4413 = vpop.xlane.xlu0 %4412
        %v4414 = vsel %vm1350, %v4320, 0.0
        %4415 = vadd.xlane.f32.xlu0 %v4414
        %v4416 = vpop.xlane.xlu0 %4415
        %v4417 = vsel %vm1350, %v4321, 0.0
        %4418 = vadd.xlane.f32.xlu0 %v4417
        %v4419 = vpop.xlane.xlu0 %4418
        %v4420 = vsel %vm1350, %v4322, 0.0
        %4421 = vadd.xlane.f32.xlu0 %v4420
        %v4422 = vpop.xlane.xlu0 %4421
        %v4423 = vsel %vm1350, %v4323, 0.0
        %4424 = vadd.xlane.f32.xlu0 %v4423
        %v4425 = vpop.xlane.xlu0 %4424
        %v4426 = vsel %vm1350, %v4324, 0.0
        %4427 = vadd.xlane.f32.xlu0 %v4426
        %v4428 = vpop.xlane.xlu0 %4427
        %v4429 = vsel %vm1350, %v4325, 0.0
        %4430 = vadd.xlane.f32.xlu0 %v4429
        %v4431 = vpop.xlane.xlu0 %4430
        %v4432 = vsel %vm1350, %v4326, 0.0
        %4433 = vadd.xlane.f32.xlu0 %v4432
        %v4434 = vpop.xlane.xlu0 %4433
        %v4435 = vsel %vm1350, %v4327, 0.0
        %4436 = vadd.xlane.f32.xlu0 %v4435
        %v4437 = vpop.xlane.xlu0 %4436
        %v4438 = vsel %vm1350, %v4328, 0.0
        %4439 = vadd.xlane.f32.xlu0 %v4438
        %v4440 = vpop.xlane.xlu0 %4439
        %v4441 = vsel %vm1350, %v4329, 0.0
        %4442 = vadd.xlane.f32.xlu0 %v4441
        %v4443 = vpop.xlane.xlu0 %4442
        %v4444 = vsel %vm1350, %v4330, 0.0
        %4445 = vadd.xlane.f32.xlu0 %v4444
        %v4446 = vpop.xlane.xlu0 %4445
        %v4447 = vsel %vm1350, %v4331, 0.0
        %4448 = vadd.xlane.f32.xlu0 %v4447
        %v4449 = vpop.xlane.xlu0 %4448
        %v4450 = vsel %vm1350, %v4332, 0.0
        %4451 = vadd.xlane.f32.xlu0 %v4450
        %v4452 = vpop.xlane.xlu0 %4451
        %v4453 = vsel %vm1350, %v4333, 0.0
        %4454 = vadd.xlane.f32.xlu0 %v4453
        %v4455 = vpop.xlane.xlu0 %4454
        %v4456 = vsel %vm1350, %v4334, 0.0
        %4457 = vadd.xlane.f32.xlu0 %v4456
        %v4458 = vpop.xlane.xlu0 %4457
        %v4459 = vsel %vm1350, %v4335, 0.0
        %4460 = vadd.xlane.f32.xlu0 %v4459
        %v4461 = vpop.xlane.xlu0 %4460
        %v4462 = vsel %vm1350, %v4336, 0.0
        %4463 = vadd.xlane.f32.xlu0 %v4462
        %v4464 = vpop.xlane.xlu0 %4463
        %v4465 = vsel %vm1350, %v4337, 0.0
        %4466 = vadd.xlane.f32.xlu0 %v4465
        %v4467 = vpop.xlane.xlu0 %4466
        %v4468 = vsel %vm1350, %v4338, 0.0
        %4469 = vadd.xlane.f32.xlu0 %v4468
        %v4470 = vpop.xlane.xlu0 %4469
        %v4471 = vsel %vm1350, %v4339, 0.0
        %4472 = vadd.xlane.f32.xlu0 %v4471
        %v4473 = vpop.xlane.xlu0 %4472
        %v4474 = vsel %vm1350, %v4340, 0.0
        %4475 = vadd.xlane.f32.xlu0 %v4474
        %v4476 = vpop.xlane.xlu0 %4475
        %v4477 = vsel %vm1350, %v4341, 0.0
        %4478 = vadd.xlane.f32.xlu0 %v4477
        %v4479 = vpop.xlane.xlu0 %4478
        %v4480 = vsel %vm1350, %v4342, 0.0
        %4481 = vadd.xlane.f32.xlu0 %v4480
        %v4482 = vpop.xlane.xlu0 %4481
        %v4483 = vsel %vm1350, %v4343, 0.0
        %4484 = vadd.xlane.f32.xlu0 %v4483
        %v4485 = vpop.xlane.xlu0 %4484
        %v4486 = vsel %vm1350, %v4344, 0.0
        %4487 = vadd.xlane.f32.xlu0 %v4486
        %v4488 = vpop.xlane.xlu0 %4487
        %v4489 = vsel %vm1350, %v4345, 0.0
        %4490 = vadd.xlane.f32.xlu0 %v4489
        %v4491 = vpop.xlane.xlu0 %4490
        %v4492 = vsel %vm1350, %v4346, 0.0
        %4493 = vadd.xlane.f32.xlu0 %v4492
        %v4494 = vpop.xlane.xlu0 %4493
        %v4495 = vsel %vm1350, %v4347, 0.0
        %4496 = vadd.xlane.f32.xlu0 %v4495
        %v4497 = vpop.xlane.xlu0 %4496
        %v4498 = vsel %vm1350, %v4348, 0.0
        %4499 = vadd.xlane.f32.xlu0 %v4498
        %v4500 = vpop.xlane.xlu0 %4499
        %v4501 = vsel %vm1350, %v4349, 0.0
        %4502 = vadd.xlane.f32.xlu0 %v4501
        %v4503 = vpop.xlane.xlu0 %4502
        %v4504 = vsel %vm1350, %v4350, 0.0
        %4505 = vadd.xlane.f32.xlu0 %v4504
        %v4506 = vpop.xlane.xlu0 %4505
        %v4507 = vsel %vm1350, %v4351, 0.0
        %4508 = vadd.xlane.f32.xlu0 %v4507
        %v4509 = vpop.xlane.xlu0 %4508
        %v4510 = vsel %vm1350, %v4352, 0.0
        %4511 = vadd.xlane.f32.xlu0 %v4510
        %v4512 = vpop.xlane.xlu0 %4511
        %v4513 = vsel %vm1350, %v4353, 0.0
        %4514 = vadd.xlane.f32.xlu0 %v4513
        %v4515 = vpop.xlane.xlu0 %4514
        %v4516 = vsel %vm1350, %v4354, 0.0
        %4517 = vadd.xlane.f32.xlu0 %v4516
        %v4518 = vpop.xlane.xlu0 %4517
        %v4519 = vsel %vm1350, %v4355, 0.0
        %4520 = vadd.xlane.f32.xlu0 %v4519
        %v4521 = vpop.xlane.xlu0 %4520
        %v4522 = vsel %vm1350, %v4356, 0.0
        %4523 = vadd.xlane.f32.xlu0 %v4522
        %v4524 = vpop.xlane.xlu0 %4523
        %v4525 = vsel %vm1350, %v4357, 0.0
        %4526 = vadd.xlane.f32.xlu0 %v4525
        %v4527 = vpop.xlane.xlu0 %4526
        %v4528 = vsel %vm1350, %v4358, 0.0
        %4529 = vadd.xlane.f32.xlu0 %v4528
        %v4530 = vpop.xlane.xlu0 %4529
        %v4531 = vsel %vm1350, %v4359, 0.0
        %4532 = vadd.xlane.f32.xlu0 %v4531
        %v4533 = vpop.xlane.xlu0 %4532
        %v4534 = vsel %vm1350, %v4360, 0.0
        %4535 = vadd.xlane.f32.xlu0 %v4534
        %v4536 = vpop.xlane.xlu0 %4535
        %v4537 = vsel %vm1350, %v4361, 0.0
        %4538 = vadd.xlane.f32.xlu0 %v4537
        %v4539 = vpop.xlane.xlu0 %4538
        %v4540 = vsel %vm1350, %v4362, 0.0
        %4541 = vadd.xlane.f32.xlu0 %v4540
        %v4542 = vpop.xlane.xlu0 %4541
        %v4543 = vsel %vm1350, %v4363, 0.0
        %4544 = vadd.xlane.f32.xlu0 %v4543
        %v4545 = vpop.xlane.xlu0 %4544
        %v4546 = vsel %vm1350, %v4364, 0.0
        %4547 = vadd.xlane.f32.xlu0 %v4546
        %v4548 = vpop.xlane.xlu0 %4547
        %v4549 = vsel %vm1350, %v4365, 0.0
        %4550 = vadd.xlane.f32.xlu0 %v4549
        %v4551 = vpop.xlane.xlu0 %4550
        %v4552 = vsel %vm1350, %v4366, 0.0
        %4553 = vadd.xlane.f32.xlu0 %v4552
        %v4554 = vpop.xlane.xlu0 %4553
        %v4555 = vsel %vm1350, %v4367, 0.0
        %4556 = vadd.xlane.f32.xlu0 %v4555
        %v4557 = vpop.xlane.xlu0 %4556
        %v4558 = vsel %vm1350, %v4368, 0.0
        %4559 = vadd.xlane.f32.xlu0 %v4558
        %v4560 = vpop.xlane.xlu0 %4559
        %4561 = vrot.lane.b32.xlu0 %v1246, 96
        %v4562 = vpop.permute.xlu0 %4561
        %4563 = vrot.lane.b32.xlu0 %v1247, 96
        %v4564 = vpop.permute.xlu0 %4563
        %4565 = vrot.lane.b32.xlu0 %v1216, 32
        %v4566 = vpop.permute.xlu0 %4565
        %4567 = vrot.lane.b32.xlu0 %v1222, 32
        %v4568 = vpop.permute.xlu0 %4567
        %v4601 = vlaneseq
        %v4602 = vshrl.u32 %v4601, 7
        %v4603 = vsub.s32 %v2484, %v4602
        %v4604 = vrot.slane %v4371, %v4603
        %v4605 = vlaneseq
        %v4606 = vshrl.u32 %v4605, 7
        %v4607 = vsub.s32 %v2489, %v4606
        %v4608 = vrot.slane %v4374, %v4607
        %v4609 = vsel %vm2494, %v4608, %v4604
        %v4610 = vlaneseq
        %v4611 = vshrl.u32 %v4610, 7
        %v4612 = vsub.s32 %v2484, %v4611
        %v4613 = vrot.slane %v4377, %v4612
        %v4614 = vlaneseq
        %v4615 = vshrl.u32 %v4614, 7
        %v4616 = vsub.s32 %v2489, %v4615
        %v4617 = vrot.slane %v4380, %v4616
        %v4618 = vsel %vm2494, %v4617, %v4613
        %v4619 = vlaneseq
        %v4620 = vshrl.u32 %v4619, 7
        %v4621 = vsub.s32 %v2484, %v4620
        %v4622 = vrot.slane %v4383, %v4621
        %v4623 = vlaneseq
        %v4624 = vshrl.u32 %v4623, 7
        %v4625 = vsub.s32 %v2489, %v4624
        %v4626 = vrot.slane %v4386, %v4625
        %v4627 = vsel %vm2494, %v4626, %v4622
        %v4628 = vlaneseq
        %v4629 = vshrl.u32 %v4628, 7
        %v4630 = vsub.s32 %v2484, %v4629
        %v4631 = vrot.slane %v4389, %v4630
        %v4632 = vlaneseq
        %v4633 = vshrl.u32 %v4632, 7
        %v4634 = vsub.s32 %v2489, %v4633
        %v4635 = vrot.slane %v4392, %v4634
        %v4636 = vsel %vm2494, %v4635, %v4631
        %v4637 = vlaneseq
        %v4638 = vshrl.u32 %v4637, 7
        %v4639 = vsub.s32 %v2484, %v4638
        %v4640 = vrot.slane %v4395, %v4639
        %v4641 = vlaneseq
        %v4642 = vshrl.u32 %v4641, 7
        %v4643 = vsub.s32 %v2489, %v4642
        %v4644 = vrot.slane %v4398, %v4643
        %v4645 = vsel %vm2494, %v4644, %v4640
        %v4646 = vlaneseq
        %v4647 = vshrl.u32 %v4646, 7
        %v4648 = vsub.s32 %v2484, %v4647
        %v4649 = vrot.slane %v4401, %v4648
        %v4650 = vlaneseq
        %v4651 = vshrl.u32 %v4650, 7
        %v4652 = vsub.s32 %v2489, %v4651
        %v4653 = vrot.slane %v4404, %v4652
        %v4654 = vsel %vm2494, %v4653, %v4649
        %v4655 = vlaneseq
        %v4656 = vshrl.u32 %v4655, 7
        %v4657 = vsub.s32 %v2484, %v4656
        %v4658 = vrot.slane %v4407, %v4657
        %v4659 = vlaneseq
        %v4660 = vshrl.u32 %v4659, 7
        %v4661 = vsub.s32 %v2489, %v4660
        %v4662 = vrot.slane %v4410, %v4661
        %v4663 = vsel %vm2494, %v4662, %v4658
        %v4664 = vlaneseq
        %v4665 = vshrl.u32 %v4664, 7
        %v4666 = vsub.s32 %v2484, %v4665
        %v4667 = vrot.slane %v4413, %v4666
        %v4668 = vlaneseq
        %v4669 = vshrl.u32 %v4668, 7
        %v4670 = vsub.s32 %v2489, %v4669
        %v4671 = vrot.slane %v4416, %v4670
        %v4672 = vsel %vm2494, %v4671, %v4667
        %v4673 = vlaneseq
        %v4674 = vshrl.u32 %v4673, 7
        %v4675 = vsub.s32 %v2484, %v4674
        %v4676 = vrot.slane %v4419, %v4675
        %v4677 = vlaneseq
        %v4678 = vshrl.u32 %v4677, 7
        %v4679 = vsub.s32 %v2489, %v4678
        %v4680 = vrot.slane %v4422, %v4679
        %v4681 = vsel %vm2494, %v4680, %v4676
        %v4682 = vlaneseq
        %v4683 = vshrl.u32 %v4682, 7
        %v4684 = vsub.s32 %v2484, %v4683
        %v4685 = vrot.slane %v4425, %v4684
        %v4686 = vlaneseq
        %v4687 = vshrl.u32 %v4686, 7
        %v4688 = vsub.s32 %v2489, %v4687
        %v4689 = vrot.slane %v4428, %v4688
        %v4690 = vsel %vm2494, %v4689, %v4685
        %v4691 = vlaneseq
        %v4692 = vshrl.u32 %v4691, 7
        %v4693 = vsub.s32 %v2484, %v4692
        %v4694 = vrot.slane %v4431, %v4693
        %v4695 = vlaneseq
        %v4696 = vshrl.u32 %v4695, 7
        %v4697 = vsub.s32 %v2489, %v4696
        %v4698 = vrot.slane %v4434, %v4697
        %v4699 = vsel %vm2494, %v4698, %v4694
        %v4700 = vlaneseq
        %v4701 = vshrl.u32 %v4700, 7
        %v4702 = vsub.s32 %v2484, %v4701
        %v4703 = vrot.slane %v4437, %v4702
        %v4704 = vlaneseq
        %v4705 = vshrl.u32 %v4704, 7
        %v4706 = vsub.s32 %v2489, %v4705
        %v4707 = vrot.slane %v4440, %v4706
        %v4708 = vsel %vm2494, %v4707, %v4703
        %v4709 = vlaneseq
        %v4710 = vshrl.u32 %v4709, 7
        %v4711 = vsub.s32 %v2484, %v4710
        %v4712 = vrot.slane %v4443, %v4711
        %v4713 = vlaneseq
        %v4714 = vshrl.u32 %v4713, 7
        %v4715 = vsub.s32 %v2489, %v4714
        %v4716 = vrot.slane %v4446, %v4715
        %v4717 = vsel %vm2494, %v4716, %v4712
        %v4718 = vlaneseq
        %v4719 = vshrl.u32 %v4718, 7
        %v4720 = vsub.s32 %v2484, %v4719
        %v4721 = vrot.slane %v4449, %v4720
        %v4722 = vlaneseq
        %v4723 = vshrl.u32 %v4722, 7
        %v4724 = vsub.s32 %v2489, %v4723
        %v4725 = vrot.slane %v4452, %v4724
        %v4726 = vsel %vm2494, %v4725, %v4721
        %v4727 = vlaneseq
        %v4728 = vshrl.u32 %v4727, 7
        %v4729 = vsub.s32 %v2484, %v4728
        %v4730 = vrot.slane %v4455, %v4729
        %v4731 = vlaneseq
        %v4732 = vshrl.u32 %v4731, 7
        %v4733 = vsub.s32 %v2489, %v4732
        %v4734 = vrot.slane %v4458, %v4733
        %v4735 = vsel %vm2494, %v4734, %v4730
        %v4736 = vlaneseq
        %v4737 = vshrl.u32 %v4736, 7
        %v4738 = vsub.s32 %v2484, %v4737
        %v4739 = vrot.slane %v4461, %v4738
        %v4740 = vlaneseq
        %v4741 = vshrl.u32 %v4740, 7
        %v4742 = vsub.s32 %v2489, %v4741
        %v4743 = vrot.slane %v4464, %v4742
        %v4744 = vsel %vm2494, %v4743, %v4739
        %v4745 = vsel %vm2631, %v4618, %v4609
        %v4746 = vsel %vm2633, %v4627, %v4745
        %v4747 = vsel %vm2635, %v4636, %v4746
        %v4748 = vsel %vm2637, %v4645, %v4747
        %v4749 = vsel %vm2639, %v4654, %v4748
        %v4750 = vsel %vm2641, %v4663, %v4749
        %v4751 = vsel %vm2643, %v4672, %v4750
        %v4752 = vsel %vm2631, %v4690, %v4681
        %v4753 = vsel %vm2633, %v4699, %v4752
        %v4754 = vsel %vm2635, %v4708, %v4753
        %v4755 = vsel %vm2637, %v4717, %v4754
        %v4756 = vsel %vm2639, %v4726, %v4755
        %v4757 = vsel %vm2641, %v4735, %v4756
        %v4758 = vsel %vm2643, %v4744, %v4757
        %v4761 = vsel %vm1350, %v4562, 0
        %v4763 = vsel %vm1350, %v4564, 0
        %v4765 = vsel %vm1350, %v4566, 0
        %v4767 = vsel %vm1350, %v4568, 0
        %4769 = vmatprep.subr.mxu0 0.0
        %4770 = vmatpush1.xpose.msra.mxu0 %v4765
        %4771 = vmatprep.subr.mxu0 0.0
        %4772 = vmatpush1.xpose.msra.mxu0 %v4767
        %4773 = vmatprep.subr.mxu0 0.0
        %4774 = vmatpush1.xpose.msra.mxu0 0.0
        %4775 = vmatprep.subr.mxu0 0.0
        %4776 = vmatpush1.xpose.msra.mxu0 0.0
        %4777 = vmatprep.subr.mxu0 0.0
        %4778 = vmatpush1.xpose.msra.mxu0 0.0
        %4779 = vmatprep.subr.mxu0 0.0
        %4780 = vmatpush1.xpose.msra.mxu0 0.0
        %4781 = vmatprep.subr.mxu0 0.0
        %4782 = vmatpush1.xpose.msra.mxu0 0.0
        %4783 = vmatprep.subr.mxu0 0.0
        %4784 = vmatpush1.xpose.msra.mxu0 0.0
        %4785 = vmatprep.subr.mxu0 0.0
        %4786 = vmatpush1.xpose.msra.mxu0 0.0
        %4787 = vmatprep.subr.mxu0 0.0
        %4788 = vmatpush1.xpose.msra.mxu0 0.0
        %4789 = vmatprep.subr.mxu0 0.0
        %4790 = vmatpush1.xpose.msra.mxu0 0.0
        %4791 = vmatprep.subr.mxu0 0.0
        %4792 = vmatpush1.xpose.msra.mxu0 0.0
        %4793 = vmatprep.subr.mxu0 0.0
        %4794 = vmatpush1.xpose.msra.mxu0 0.0
        %4795 = vmatprep.subr.mxu0 0.0
        %4796 = vmatpush1.xpose.msra.mxu0 0.0
        %4797 = vmatprep.subr.mxu0 0.0
        %4798 = vmatpush1.xpose.msra.mxu0 0.0
        %4799 = vmatprep.subr.mxu0 0.0
        %4800 = vmatpush1.xpose.msra.mxu0 0.0
        %4801 = vmatprep.subr.mxu0 0.0
        %4802 = vmatpush1.xpose.msra.mxu0 0.0
        %4803 = vmatprep.subr.mxu0 0.0
        %4804 = vmatpush1.xpose.msra.mxu0 0.0
        %4805 = vmatprep.subr.mxu0 0.0
        %4806 = vmatpush1.xpose.msra.mxu0 0.0
        %4807 = vmatprep.subr.mxu0 0.0
        %4808 = vmatpush1.xpose.msra.mxu0 0.0
        %4809 = vmatprep.subr.mxu0 0.0
        %4810 = vmatpush1.xpose.msra.mxu0 0.0
        %4811 = vmatprep.subr.mxu0 0.0
        %4812 = vmatpush1.xpose.msra.mxu0 0.0
        %4813 = vmatprep.subr.mxu0 0.0
        %4814 = vmatpush1.xpose.msra.mxu0 0.0
        %4815 = vmatprep.subr.mxu0 0.0
        %4816 = vmatpush1.xpose.msra.mxu0 0.0
        %4817 = vmatprep.subr.mxu0 0.0
        %4818 = vmatpush1.xpose.msra.mxu0 0.0
        %4819 = vmatprep.subr.mxu0 0.0
        %4820 = vmatpush1.xpose.msra.mxu0 0.0
        %4821 = vmatprep.subr.mxu0 0.0
        %4822 = vmatpush1.xpose.msra.mxu0 0.0
        %4823 = vmatprep.subr.mxu0 0.0
        %4824 = vmatpush1.xpose.msra.mxu0 0.0
        %4825 = vmatprep.subr.mxu0 0.0
        %4826 = vmatpush1.xpose.msra.mxu0 0.0
        %4827 = vmatprep.subr.mxu0 0.0
        %4828 = vmatpush1.xpose.msra.mxu0 0.0
        %4829 = vmatprep.subr.mxu0 0.0
        %4830 = vmatpush1.xpose.msra.mxu0 0.0
        %4831 = vmatprep.subr.mxu0 0.0
        %4832 = vmatpush1.xpose.msra.mxu0 0.0
        %4833 = vmatprep.mubr.f32.mxu0 0.0
        %4834 = vmatmul.mubr.f32.gmra.mrb[0].mxu0 %v4761
        %v4835 = vpop.f32.mrb[0].mxu0
        %v4836 = vadd.f32 %v4751, %v4835
        %v4837 = vpop.f32.mrb[0].mxu0
        %4838 = vmatprep.mubr.f32.mxu0 0.0
        %4839 = vmatmul.mubr.f32.gmra.mrb[0].mxu0 %v4763
        %v4840 = vpop.f32.mrb[0].mxu0
        %v4841 = vadd.f32 %v4758, %v4840
        %v4842 = vpop.f32.mrb[0].mxu0
        %4843 = vdwg.mxu0
        %4844 = vrot.lane.b32.xlu0 %v1248, 96
        %v4845 = vpop.permute.xlu0 %4844
        %4846 = vrot.lane.b32.xlu0 %v1249, 96
        %v4847 = vpop.permute.xlu0 %4846
        %4848 = vrot.lane.b32.xlu0 %v1228, 32
        %v4849 = vpop.permute.xlu0 %4848
        %4850 = vrot.lane.b32.xlu0 %v1234, 32
        %v4851 = vpop.permute.xlu0 %4850
        %v4884 = vlaneseq
        %v4885 = vshrl.u32 %v4884, 7
        %v4886 = vsub.s32 %v2484, %v4885
        %v4887 = vrot.slane %v4467, %v4886
        %v4888 = vlaneseq
        %v4889 = vshrl.u32 %v4888, 7
        %v4890 = vsub.s32 %v2489, %v4889
        %v4891 = vrot.slane %v4470, %v4890
        %v4892 = vsel %vm2494, %v4891, %v4887
        %v4893 = vlaneseq
        %v4894 = vshrl.u32 %v4893, 7
        %v4895 = vsub.s32 %v2484, %v4894
        %v4896 = vrot.slane %v4473, %v4895
        %v4897 = vlaneseq
        %v4898 = vshrl.u32 %v4897, 7
        %v4899 = vsub.s32 %v2489, %v4898
        %v4900 = vrot.slane %v4476, %v4899
        %v4901 = vsel %vm2494, %v4900, %v4896
        %v4902 = vlaneseq
        %v4903 = vshrl.u32 %v4902, 7
        %v4904 = vsub.s32 %v2484, %v4903
        %v4905 = vrot.slane %v4479, %v4904
        %v4906 = vlaneseq
        %v4907 = vshrl.u32 %v4906, 7
        %v4908 = vsub.s32 %v2489, %v4907
        %v4909 = vrot.slane %v4482, %v4908
        %v4910 = vsel %vm2494, %v4909, %v4905
        %v4911 = vlaneseq
        %v4912 = vshrl.u32 %v4911, 7
        %v4913 = vsub.s32 %v2484, %v4912
        %v4914 = vrot.slane %v4485, %v4913
        %v4915 = vlaneseq
        %v4916 = vshrl.u32 %v4915, 7
        %v4917 = vsub.s32 %v2489, %v4916
        %v4918 = vrot.slane %v4488, %v4917
        %v4919 = vsel %vm2494, %v4918, %v4914
        %v4920 = vlaneseq
        %v4921 = vshrl.u32 %v4920, 7
        %v4922 = vsub.s32 %v2484, %v4921
        %v4923 = vrot.slane %v4491, %v4922
        %v4924 = vlaneseq
        %v4925 = vshrl.u32 %v4924, 7
        %v4926 = vsub.s32 %v2489, %v4925
        %v4927 = vrot.slane %v4494, %v4926
        %v4928 = vsel %vm2494, %v4927, %v4923
        %v4929 = vlaneseq
        %v4930 = vshrl.u32 %v4929, 7
        %v4931 = vsub.s32 %v2484, %v4930
        %v4932 = vrot.slane %v4497, %v4931
        %v4933 = vlaneseq
        %v4934 = vshrl.u32 %v4933, 7
        %v4935 = vsub.s32 %v2489, %v4934
        %v4936 = vrot.slane %v4500, %v4935
        %v4937 = vsel %vm2494, %v4936, %v4932
        %v4938 = vlaneseq
        %v4939 = vshrl.u32 %v4938, 7
        %v4940 = vsub.s32 %v2484, %v4939
        %v4941 = vrot.slane %v4503, %v4940
        %v4942 = vlaneseq
        %v4943 = vshrl.u32 %v4942, 7
        %v4944 = vsub.s32 %v2489, %v4943
        %v4945 = vrot.slane %v4506, %v4944
        %v4946 = vsel %vm2494, %v4945, %v4941
        %v4947 = vlaneseq
        %v4948 = vshrl.u32 %v4947, 7
        %v4949 = vsub.s32 %v2484, %v4948
        %v4950 = vrot.slane %v4509, %v4949
        %v4951 = vlaneseq
        %v4952 = vshrl.u32 %v4951, 7
        %v4953 = vsub.s32 %v2489, %v4952
        %v4954 = vrot.slane %v4512, %v4953
        %v4955 = vsel %vm2494, %v4954, %v4950
        %v4956 = vlaneseq
        %v4957 = vshrl.u32 %v4956, 7
        %v4958 = vsub.s32 %v2484, %v4957
        %v4959 = vrot.slane %v4515, %v4958
        %v4960 = vlaneseq
        %v4961 = vshrl.u32 %v4960, 7
        %v4962 = vsub.s32 %v2489, %v4961
        %v4963 = vrot.slane %v4518, %v4962
        %v4964 = vsel %vm2494, %v4963, %v4959
        %v4965 = vlaneseq
        %v4966 = vshrl.u32 %v4965, 7
        %v4967 = vsub.s32 %v2484, %v4966
        %v4968 = vrot.slane %v4521, %v4967
        %v4969 = vlaneseq
        %v4970 = vshrl.u32 %v4969, 7
        %v4971 = vsub.s32 %v2489, %v4970
        %v4972 = vrot.slane %v4524, %v4971
        %v4973 = vsel %vm2494, %v4972, %v4968
        %v4974 = vlaneseq
        %v4975 = vshrl.u32 %v4974, 7
        %v4976 = vsub.s32 %v2484, %v4975
        %v4977 = vrot.slane %v4527, %v4976
        %v4978 = vlaneseq
        %v4979 = vshrl.u32 %v4978, 7
        %v4980 = vsub.s32 %v2489, %v4979
        %v4981 = vrot.slane %v4530, %v4980
        %v4982 = vsel %vm2494, %v4981, %v4977
        %v4983 = vlaneseq
        %v4984 = vshrl.u32 %v4983, 7
        %v4985 = vsub.s32 %v2484, %v4984
        %v4986 = vrot.slane %v4533, %v4985
        %v4987 = vlaneseq
        %v4988 = vshrl.u32 %v4987, 7
        %v4989 = vsub.s32 %v2489, %v4988
        %v4990 = vrot.slane %v4536, %v4989
        %v4991 = vsel %vm2494, %v4990, %v4986
        %v4992 = vlaneseq
        %v4993 = vshrl.u32 %v4992, 7
        %v4994 = vsub.s32 %v2484, %v4993
        %v4995 = vrot.slane %v4539, %v4994
        %v4996 = vlaneseq
        %v4997 = vshrl.u32 %v4996, 7
        %v4998 = vsub.s32 %v2489, %v4997
        %v4999 = vrot.slane %v4542, %v4998
        %v5000 = vsel %vm2494, %v4999, %v4995
        %v5001 = vlaneseq
        %v5002 = vshrl.u32 %v5001, 7
        %v5003 = vsub.s32 %v2484, %v5002
        %v5004 = vrot.slane %v4545, %v5003
        %v5005 = vlaneseq
        %v5006 = vshrl.u32 %v5005, 7
        %v5007 = vsub.s32 %v2489, %v5006
        %v5008 = vrot.slane %v4548, %v5007
        %v5009 = vsel %vm2494, %v5008, %v5004
        %v5010 = vlaneseq
        %v5011 = vshrl.u32 %v5010, 7
        %v5012 = vsub.s32 %v2484, %v5011
        %v5013 = vrot.slane %v4551, %v5012
        %v5014 = vlaneseq
        %v5015 = vshrl.u32 %v5014, 7
        %v5016 = vsub.s32 %v2489, %v5015
        %v5017 = vrot.slane %v4554, %v5016
        %v5018 = vsel %vm2494, %v5017, %v5013
        %v5019 = vlaneseq
        %v5020 = vshrl.u32 %v5019, 7
        %v5021 = vsub.s32 %v2484, %v5020
        %v5022 = vrot.slane %v4557, %v5021
        %v5023 = vlaneseq
        %v5024 = vshrl.u32 %v5023, 7
        %v5025 = vsub.s32 %v2489, %v5024
        %v5026 = vrot.slane %v4560, %v5025
        %v5027 = vsel %vm2494, %v5026, %v5022
        %v5028 = vsel %vm2631, %v4901, %v4892
        %v5029 = vsel %vm2633, %v4910, %v5028
        %v5030 = vsel %vm2635, %v4919, %v5029
        %v5031 = vsel %vm2637, %v4928, %v5030
        %v5032 = vsel %vm2639, %v4937, %v5031
        %v5033 = vsel %vm2641, %v4946, %v5032
        %v5034 = vsel %vm2643, %v4955, %v5033
        %v5035 = vsel %vm2631, %v4973, %v4964
        %v5036 = vsel %vm2633, %v4982, %v5035
        %v5037 = vsel %vm2635, %v4991, %v5036
        %v5038 = vsel %vm2637, %v5000, %v5037
        %v5039 = vsel %vm2639, %v5009, %v5038
        %v5040 = vsel %vm2641, %v5018, %v5039
        %v5041 = vsel %vm2643, %v5027, %v5040
        %v5044 = vsel %vm1350, %v4845, 0
        %v5046 = vsel %vm1350, %v4847, 0
        %v5048 = vsel %vm1350, %v4849, 0
        %v5050 = vsel %vm1350, %v4851, 0
        %5052 = vmatprep.subr.mxu0 0.0
        %5053 = vmatpush1.xpose.msra.mxu0 %v5048
        %5054 = vmatprep.subr.mxu0 0.0
        %5055 = vmatpush1.xpose.msra.mxu0 %v5050
        %5056 = vmatprep.subr.mxu0 0.0
        %5057 = vmatpush1.xpose.msra.mxu0 0.0
        %5058 = vmatprep.subr.mxu0 0.0
        %5059 = vmatpush1.xpose.msra.mxu0 0.0
        %5060 = vmatprep.subr.mxu0 0.0
        %5061 = vmatpush1.xpose.msra.mxu0 0.0
        %5062 = vmatprep.subr.mxu0 0.0
        %5063 = vmatpush1.xpose.msra.mxu0 0.0
        %5064 = vmatprep.subr.mxu0 0.0
        %5065 = vmatpush1.xpose.msra.mxu0 0.0
        %5066 = vmatprep.subr.mxu0 0.0
        %5067 = vmatpush1.xpose.msra.mxu0 0.0
        %5068 = vmatprep.subr.mxu0 0.0
        %5069 = vmatpush1.xpose.msra.mxu0 0.0
        %5070 = vmatprep.subr.mxu0 0.0
        %5071 = vmatpush1.xpose.msra.mxu0 0.0
        %5072 = vmatprep.subr.mxu0 0.0
        %5073 = vmatpush1.xpose.msra.mxu0 0.0
        %5074 = vmatprep.subr.mxu0 0.0
        %5075 = vmatpush1.xpose.msra.mxu0 0.0
        %5076 = vmatprep.subr.mxu0 0.0
        %5077 = vmatpush1.xpose.msra.mxu0 0.0
        %5078 = vmatprep.subr.mxu0 0.0
        %5079 = vmatpush1.xpose.msra.mxu0 0.0
        %5080 = vmatprep.subr.mxu0 0.0
        %5081 = vmatpush1.xpose.msra.mxu0 0.0
        %5082 = vmatprep.subr.mxu0 0.0
        %5083 = vmatpush1.xpose.msra.mxu0 0.0
        %5084 = vmatprep.subr.mxu0 0.0
        %5085 = vmatpush1.xpose.msra.mxu0 0.0
        %5086 = vmatprep.subr.mxu0 0.0
        %5087 = vmatpush1.xpose.msra.mxu0 0.0
        %5088 = vmatprep.subr.mxu0 0.0
        %5089 = vmatpush1.xpose.msra.mxu0 0.0
        %5090 = vmatprep.subr.mxu0 0.0
        %5091 = vmatpush1.xpose.msra.mxu0 0.0
        %5092 = vmatprep.subr.mxu0 0.0
        %5093 = vmatpush1.xpose.msra.mxu0 0.0
        %5094 = vmatprep.subr.mxu0 0.0
        %5095 = vmatpush1.xpose.msra.mxu0 0.0
        %5096 = vmatprep.subr.mxu0 0.0
        %5097 = vmatpush1.xpose.msra.mxu0 0.0
        %5098 = vmatprep.subr.mxu0 0.0
        %5099 = vmatpush1.xpose.msra.mxu0 0.0
        %5100 = vmatprep.subr.mxu0 0.0
        %5101 = vmatpush1.xpose.msra.mxu0 0.0
        %5102 = vmatprep.subr.mxu0 0.0
        %5103 = vmatpush1.xpose.msra.mxu0 0.0
        %5104 = vmatprep.subr.mxu0 0.0
        %5105 = vmatpush1.xpose.msra.mxu0 0.0
        %5106 = vmatprep.subr.mxu0 0.0
        %5107 = vmatpush1.xpose.msra.mxu0 0.0
        %5108 = vmatprep.subr.mxu0 0.0
        %5109 = vmatpush1.xpose.msra.mxu0 0.0
        %5110 = vmatprep.subr.mxu0 0.0
        %5111 = vmatpush1.xpose.msra.mxu0 0.0
        %5112 = vmatprep.subr.mxu0 0.0
        %5113 = vmatpush1.xpose.msra.mxu0 0.0
        %5114 = vmatprep.subr.mxu0 0.0
        %5115 = vmatpush1.xpose.msra.mxu0 0.0
        %5116 = vmatprep.mubr.f32.mxu0 0.0
        %5117 = vmatmul.mubr.f32.gmra.mrb[0].mxu0 %v5044
        %v5118 = vpop.f32.mrb[0].mxu0
        %v5119 = vadd.f32 %v5034, %v5118
        %v5120 = vpop.f32.mrb[0].mxu0
        %5121 = vmatprep.mubr.f32.mxu0 0.0
        %5122 = vmatmul.mubr.f32.gmra.mrb[0].mxu0 %v5046
        %v5123 = vpop.f32.mrb[0].mxu0
        %v5124 = vadd.f32 %v5041, %v5123
        %v5125 = vpop.f32.mrb[0].mxu0
        %5126 = vdwg.mxu0
        %v5127 = vsel %vm1350, %v4836, -inf
        %5128 = vmax.xlane.f32.xlu0 %v5127
        %v5129 = vpop.xlane.xlu0 %5128
        %v5130 = vsel %vm1350, %v4841, -inf
        %5131 = vmax.xlane.f32.xlu0 %v5130
        %v5132 = vpop.xlane.xlu0 %5131
        %v5133 = vsel %vm1350, %v5119, -inf
        %5134 = vmax.xlane.f32.xlu0 %v5133
        %v5135 = vpop.xlane.xlu0 %5134
        %v5136 = vsel %vm1350, %v5124, -inf
        %5137 = vmax.xlane.f32.xlu0 %v5136
        %v5138 = vpop.xlane.xlu0 %5137
        %v5139 = vsub.f32 %v4836, %v5129
        %v5140 = vsub.f32 %v4841, %v5132
        %v5141 = vsub.f32 %v5119, %v5135
        %v5142 = vsub.f32 %v5124, %v5138
        %v5143 = vmul.f32 %v5139, 1.442695
        %v5144 = vpow.pop %v5143
        %v5145 = vmul.f32 %v5140, 1.442695
        %v5146 = vpow.pop %v5145
        %v5147 = vmul.f32 %v5141, 1.442695
        %v5148 = vpow.pop %v5147
        %v5149 = vmul.f32 %v5142, 1.442695
        %v5150 = vpow.pop %v5149
        %v5151 = vsel %vm1350, %v5144, 0.0
        %5152 = vadd.xlane.f32.xlu0 %v5151
        %v5153 = vpop.xlane.xlu0 %5152
        %v5154 = vsel %vm1350, %v5146, 0.0
        %5155 = vadd.xlane.f32.xlu0 %v5154
        %v5156 = vpop.xlane.xlu0 %5155
        %v5157 = vsel %vm1350, %v5148, 0.0
        %5158 = vadd.xlane.f32.xlu0 %v5157
        %v5159 = vpop.xlane.xlu0 %5158
        %v5160 = vsel %vm1350, %v5150, 0.0
        %5161 = vadd.xlane.f32.xlu0 %v5160
        %v5162 = vpop.xlane.xlu0 %5161
        %v5163 = vrcp.pop %v5153
        %v5164 = vrcp.pop %v5156
        %v5165 = vrcp.pop %v5159
        %v5166 = vrcp.pop %v5162
        %v5167 = vmul.f32 %v5144, %v5163
        %v5168 = vmul.f32 %v5146, %v5164
        %v5169 = vmul.f32 %v5148, %v5165
        %v5170 = vmul.f32 %v5150, %v5166
        %5171 = vrot.lane.b32.xlu0 %v1218, 96
        %v5172 = vpop.permute.xlu0 %5171
        %5173 = vrot.lane.b32.xlu0 %v1224, 96
        %v5174 = vpop.permute.xlu0 %5173
        %v5178 = vsel %vm1350, %v5167, 0
        %v5181 = vsel %vm1350, %v5168, 0
        %5183 = vmatprep.subr.mxu0 0.0
        %5184 = vmatpush1.msra.mxu0 %v5172
        %5185 = vmatprep.subr.mxu0 0.0
        %5186 = vmatpush1.msra.mxu0 %v5174
        %5187 = vmatprep.subr.mxu0 0.0
        %5188 = vmatpush1.msra.mxu0 0.0
        %5189 = vmatprep.subr.mxu0 0.0
        %5190 = vmatpush1.msra.mxu0 0.0
        %5191 = vmatprep.subr.mxu0 0.0
        %5192 = vmatpush1.msra.mxu0 0.0
        %5193 = vmatprep.subr.mxu0 0.0
        %5194 = vmatpush1.msra.mxu0 0.0
        %5195 = vmatprep.subr.mxu0 0.0
        %5196 = vmatpush1.msra.mxu0 0.0
        %5197 = vmatprep.subr.mxu0 0.0
        %5198 = vmatpush1.msra.mxu0 0.0
        %5199 = vmatprep.subr.mxu0 0.0
        %5200 = vmatpush1.msra.mxu0 0.0
        %5201 = vmatprep.subr.mxu0 0.0
        %5202 = vmatpush1.msra.mxu0 0.0
        %5203 = vmatprep.subr.mxu0 0.0
        %5204 = vmatpush1.msra.mxu0 0.0
        %5205 = vmatprep.subr.mxu0 0.0
        %5206 = vmatpush1.msra.mxu0 0.0
        %5207 = vmatprep.subr.mxu0 0.0
        %5208 = vmatpush1.msra.mxu0 0.0
        %5209 = vmatprep.subr.mxu0 0.0
        %5210 = vmatpush1.msra.mxu0 0.0
        %5211 = vmatprep.subr.mxu0 0.0
        %5212 = vmatpush1.msra.mxu0 0.0
        %5213 = vmatprep.subr.mxu0 0.0
        %5214 = vmatpush1.msra.mxu0 0.0
        %5215 = vmatprep.subr.mxu0 0.0
        %5216 = vmatpush1.msra.mxu0 0.0
        %5217 = vmatprep.subr.mxu0 0.0
        %5218 = vmatpush1.msra.mxu0 0.0
        %5219 = vmatprep.subr.mxu0 0.0
        %5220 = vmatpush1.msra.mxu0 0.0
        %5221 = vmatprep.subr.mxu0 0.0
        %5222 = vmatpush1.msra.mxu0 0.0
        %5223 = vmatprep.subr.mxu0 0.0
        %5224 = vmatpush1.msra.mxu0 0.0
        %5225 = vmatprep.subr.mxu0 0.0
        %5226 = vmatpush1.msra.mxu0 0.0
        %5227 = vmatprep.subr.mxu0 0.0
        %5228 = vmatpush1.msra.mxu0 0.0
        %5229 = vmatprep.subr.mxu0 0.0
        %5230 = vmatpush1.msra.mxu0 0.0
        %5231 = vmatprep.subr.mxu0 0.0
        %5232 = vmatpush1.msra.mxu0 0.0
        %5233 = vmatprep.subr.mxu0 0.0
        %5234 = vmatpush1.msra.mxu0 0.0
        %5235 = vmatprep.subr.mxu0 0.0
        %5236 = vmatpush1.msra.mxu0 0.0
        %5237 = vmatprep.subr.mxu0 0.0
        %5238 = vmatpush1.msra.mxu0 0.0
        %5239 = vmatprep.subr.mxu0 0.0
        %5240 = vmatpush1.msra.mxu0 0.0
        %5241 = vmatprep.subr.mxu0 0.0
        %5242 = vmatpush1.msra.mxu0 0.0
        %5243 = vmatprep.subr.mxu0 0.0
        %5244 = vmatpush1.msra.mxu0 0.0
        %5245 = vmatprep.subr.mxu0 0.0
        %5246 = vmatpush1.msra.mxu0 0.0
        %5247 = vmatprep.mubr.f32.mxu0 0.0
        %5248 = vmatmul.mubr.f32.gmra.mrb[0].mxu0 %v5178
        %v5249 = vpop.f32.mrb[0].mxu0
        %v5250 = vadd.f32 0.0, %v5249
        %v5251 = vpop.f32.mrb[0].mxu0
        %5252 = vmatprep.mubr.f32.mxu0 0.0
        %5253 = vmatmul.mubr.f32.gmra.mrb[0].mxu0 %v5181
        %v5254 = vpop.f32.mrb[0].mxu0
        %v5255 = vadd.f32 0.0, %v5254
        %v5256 = vpop.f32.mrb[0].mxu0
        %5257 = vdwg.mxu0
        %5258 = vrot.lane.b32.xlu0 %v1230, 96
        %v5259 = vpop.permute.xlu0 %5258
        %5260 = vrot.lane.b32.xlu0 %v1236, 96
        %v5261 = vpop.permute.xlu0 %5260
        %v5265 = vsel %vm1350, %v5169, 0
        %v5268 = vsel %vm1350, %v5170, 0
        %5270 = vmatprep.subr.mxu0 0.0
        %5271 = vmatpush1.msra.mxu0 %v5259
        %5272 = vmatprep.subr.mxu0 0.0
        %5273 = vmatpush1.msra.mxu0 %v5261
        %5274 = vmatprep.subr.mxu0 0.0
        %5275 = vmatpush1.msra.mxu0 0.0
        %5276 = vmatprep.subr.mxu0 0.0
        %5277 = vmatpush1.msra.mxu0 0.0
        %5278 = vmatprep.subr.mxu0 0.0
        %5279 = vmatpush1.msra.mxu0 0.0
        %5280 = vmatprep.subr.mxu0 0.0
        %5281 = vmatpush1.msra.mxu0 0.0
        %5282 = vmatprep.subr.mxu0 0.0
        %5283 = vmatpush1.msra.mxu0 0.0
        %5284 = vmatprep.subr.mxu0 0.0
        %5285 = vmatpush1.msra.mxu0 0.0
        %5286 = vmatprep.subr.mxu0 0.0
        %5287 = vmatpush1.msra.mxu0 0.0
        %5288 = vmatprep.subr.mxu0 0.0
        %5289 = vmatpush1.msra.mxu0 0.0
        %5290 = vmatprep.subr.mxu0 0.0
        %5291 = vmatpush1.msra.mxu0 0.0
        %5292 = vmatprep.subr.mxu0 0.0
        %5293 = vmatpush1.msra.mxu0 0.0
        %5294 = vmatprep.subr.mxu0 0.0
        %5295 = vmatpush1.msra.mxu0 0.0
        %5296 = vmatprep.subr.mxu0 0.0
        %5297 = vmatpush1.msra.mxu0 0.0
        %5298 = vmatprep.subr.mxu0 0.0
        %5299 = vmatpush1.msra.mxu0 0.0
        %5300 = vmatprep.subr.mxu0 0.0
        %5301 = vmatpush1.msra.mxu0 0.0
        %5302 = vmatprep.subr.mxu0 0.0
        %5303 = vmatpush1.msra.mxu0 0.0
        %5304 = vmatprep.subr.mxu0 0.0
        %5305 = vmatpush1.msra.mxu0 0.0
        %5306 = vmatprep.subr.mxu0 0.0
        %5307 = vmatpush1.msra.mxu0 0.0
        %5308 = vmatprep.subr.mxu0 0.0
        %5309 = vmatpush1.msra.mxu0 0.0
        %5310 = vmatprep.subr.mxu0 0.0
        %5311 = vmatpush1.msra.mxu0 0.0
        %5312 = vmatprep.subr.mxu0 0.0
        %5313 = vmatpush1.msra.mxu0 0.0
        %5314 = vmatprep.subr.mxu0 0.0
        %5315 = vmatpush1.msra.mxu0 0.0
        %5316 = vmatprep.subr.mxu0 0.0
        %5317 = vmatpush1.msra.mxu0 0.0
        %5318 = vmatprep.subr.mxu0 0.0
        %5319 = vmatpush1.msra.mxu0 0.0
        %5320 = vmatprep.subr.mxu0 0.0
        %5321 = vmatpush1.msra.mxu0 0.0
        %5322 = vmatprep.subr.mxu0 0.0
        %5323 = vmatpush1.msra.mxu0 0.0
        %5324 = vmatprep.subr.mxu0 0.0
        %5325 = vmatpush1.msra.mxu0 0.0
        %5326 = vmatprep.subr.mxu0 0.0
        %5327 = vmatpush1.msra.mxu0 0.0
        %5328 = vmatprep.subr.mxu0 0.0
        %5329 = vmatpush1.msra.mxu0 0.0
        %5330 = vmatprep.subr.mxu0 0.0
        %5331 = vmatpush1.msra.mxu0 0.0
        %5332 = vmatprep.subr.mxu0 0.0
        %5333 = vmatpush1.msra.mxu0 0.0
        %5334 = vmatprep.mubr.f32.mxu0 0.0
        %5335 = vmatmul.mubr.f32.gmra.mrb[0].mxu0 %v5265
        %v5336 = vpop.f32.mrb[0].mxu0
        %v5337 = vadd.f32 0.0, %v5336
        %v5338 = vpop.f32.mrb[0].mxu0
        %5339 = vmatprep.mubr.f32.mxu0 0.0
        %5340 = vmatmul.mubr.f32.gmra.mrb[0].mxu0 %v5268
        %v5341 = vpop.f32.mrb[0].mxu0
        %v5342 = vadd.f32 0.0, %v5341
        %v5343 = vpop.f32.mrb[0].mxu0
        %5344 = vdwg.mxu0
        %5349 = vrot.lane.b32.xlu0 %v5250, 32
        %v5350 = vpop.permute.xlu0 %5349
        %5351 = vrot.lane.b32.xlu0 %v5255, 32
        %v5352 = vpop.permute.xlu0 %5351
        %5353 = vrot.lane.b32.xlu0 %v5337, 32
        %v5354 = vpop.permute.xlu0 %5353
        %5355 = vrot.lane.b32.xlu0 %v5342, 32
        %v5356 = vpop.permute.xlu0 %5355
        %vm5361 = vcmask 392448
        %5362 = vst.msk [vmem:[#allocation2] sm:$0xff] %vm5361, %v5350
        %5363 = vst.msk [vmem:[#allocation2 + $0x8] sm:$0xff] %vm5361, %v5352
        %5364 = vst.msk [vmem:[#allocation2 + $0x10] sm:$0xff] %vm5361, %v5354
        %5365 = vst.msk [vmem:[#allocation2 + $0x18] sm:$0xff] %vm5361, %v5356
        %v5366 = vlaneseq
        %v5367 = vshrl.u32 %v5366, 7
        %v5368 = vsub.s32 3, %v5367
        %v5369 = vrot.slane %v2184, %v5368
        %v5370 = vmul.f32 %v2120, %v5369
        %v5371 = vmul.f32 %v2121, %v5369
        %v5372 = vmul.f32 %v2122, %v5369
        %v5373 = vmul.f32 %v2123, %v5369
        %v5374 = vmul.f32 %v2124, %v5369
        %v5375 = vmul.f32 %v2125, %v5369
        %v5376 = vmul.f32 %v2126, %v5369
        %v5377 = vmul.f32 %v2127, %v5369
        %v5378 = vmul.f32 %v2128, %v5369
        %v5379 = vmul.f32 %v2129, %v5369
        %v5380 = vmul.f32 %v2130, %v5369
        %v5381 = vmul.f32 %v2131, %v5369
        %v5382 = vmul.f32 %v2132, %v5369
        %v5383 = vmul.f32 %v2133, %v5369
        %v5384 = vmul.f32 %v2134, %v5369
        %v5385 = vmul.f32 %v2135, %v5369
        %v5386 = vmul.f32 %v2136, %v5369
        %v5387 = vmul.f32 %v2137, %v5369
        %v5388 = vmul.f32 %v2138, %v5369
        %v5389 = vmul.f32 %v2139, %v5369
        %v5390 = vmul.f32 %v2140, %v5369
        %v5391 = vmul.f32 %v2141, %v5369
        %v5392 = vmul.f32 %v2142, %v5369
        %v5393 = vmul.f32 %v2143, %v5369
        %v5394 = vmul.f32 %v2144, %v5369
        %v5395 = vmul.f32 %v2145, %v5369
        %v5396 = vmul.f32 %v2146, %v5369
        %v5397 = vmul.f32 %v2147, %v5369
        %v5398 = vmul.f32 %v2148, %v5369
        %v5399 = vmul.f32 %v2149, %v5369
        %v5400 = vmul.f32 %v2150, %v5369
        %v5401 = vmul.f32 %v2151, %v5369
        %v5402 = vmul.f32 %v2152, %v5369
        %v5403 = vmul.f32 %v2153, %v5369
        %v5404 = vmul.f32 %v2154, %v5369
        %v5405 = vmul.f32 %v2155, %v5369
        %v5406 = vmul.f32 %v2156, %v5369
        %v5407 = vmul.f32 %v2157, %v5369
        %v5408 = vmul.f32 %v2158, %v5369
        %v5409 = vmul.f32 %v2159, %v5369
        %v5410 = vmul.f32 %v2160, %v5369
        %v5411 = vmul.f32 %v2161, %v5369
        %v5412 = vmul.f32 %v2162, %v5369
        %v5413 = vmul.f32 %v2163, %v5369
        %v5414 = vmul.f32 %v2164, %v5369
        %v5415 = vmul.f32 %v2165, %v5369
        %v5416 = vmul.f32 %v2166, %v5369
        %v5417 = vmul.f32 %v2167, %v5369
        %v5418 = vmul.f32 %v2168, %v5369
        %v5419 = vmul.f32 %v2169, %v5369
        %v5420 = vmul.f32 %v2170, %v5369
        %v5421 = vmul.f32 %v2171, %v5369
        %v5422 = vmul.f32 %v2172, %v5369
        %v5423 = vmul.f32 %v2173, %v5369
        %v5424 = vmul.f32 %v2174, %v5369
        %v5425 = vmul.f32 %v2175, %v5369
        %v5426 = vmul.f32 %v2176, %v5369
        %v5427 = vmul.f32 %v2177, %v5369
        %v5428 = vmul.f32 %v2178, %v5369
        %v5429 = vmul.f32 %v2179, %v5369
        %v5430 = vmul.f32 %v2180, %v5369
        %v5431 = vmul.f32 %v2181, %v5369
        %v5432 = vmul.f32 %v2182, %v5369
        %v5433 = vmul.f32 %v2183, %v5369
        %v5434 = vsel %vm1350, %v5370, 0.0
        %5435 = vadd.xlane.f32.xlu0 %v5434
        %v5436 = vpop.xlane.xlu0 %5435
        %v5437 = vsel %vm1350, %v5371, 0.0
        %5438 = vadd.xlane.f32.xlu0 %v5437
        %v5439 = vpop.xlane.xlu0 %5438
        %v5440 = vsel %vm1350, %v5372, 0.0
        %5441 = vadd.xlane.f32.xlu0 %v5440
        %v5442 = vpop.xlane.xlu0 %5441
        %v5443 = vsel %vm1350, %v5373, 0.0
        %5444 = vadd.xlane.f32.xlu0 %v5443
        %v5445 = vpop.xlane.xlu0 %5444
        %v5446 = vsel %vm1350, %v5374, 0.0
        %5447 = vadd.xlane.f32.xlu0 %v5446
        %v5448 = vpop.xlane.xlu0 %5447
        %v5449 = vsel %vm1350, %v5375, 0.0
        %5450 = vadd.xlane.f32.xlu0 %v5449
        %v5451 = vpop.xlane.xlu0 %5450
        %v5452 = vsel %vm1350, %v5376, 0.0
        %5453 = vadd.xlane.f32.xlu0 %v5452
        %v5454 = vpop.xlane.xlu0 %5453
        %v5455 = vsel %vm1350, %v5377, 0.0
        %5456 = vadd.xlane.f32.xlu0 %v5455
        %v5457 = vpop.xlane.xlu0 %5456
        %v5458 = vsel %vm1350, %v5378, 0.0
        %5459 = vadd.xlane.f32.xlu0 %v5458
        %v5460 = vpop.xlane.xlu0 %5459
        %v5461 = vsel %vm1350, %v5379, 0.0
        %5462 = vadd.xlane.f32.xlu0 %v5461
        %v5463 = vpop.xlane.xlu0 %5462
        %v5464 = vsel %vm1350, %v5380, 0.0
        %5465 = vadd.xlane.f32.xlu0 %v5464
        %v5466 = vpop.xlane.xlu0 %5465
        %v5467 = vsel %vm1350, %v5381, 0.0
        %5468 = vadd.xlane.f32.xlu0 %v5467
        %v5469 = vpop.xlane.xlu0 %5468
        %v5470 = vsel %vm1350, %v5382, 0.0
        %5471 = vadd.xlane.f32.xlu0 %v5470
        %v5472 = vpop.xlane.xlu0 %5471
        %v5473 = vsel %vm1350, %v5383, 0.0
        %5474 = vadd.xlane.f32.xlu0 %v5473
        %v5475 = vpop.xlane.xlu0 %5474
        %v5476 = vsel %vm1350, %v5384, 0.0
        %5477 = vadd.xlane.f32.xlu0 %v5476
        %v5478 = vpop.xlane.xlu0 %5477
        %v5479 = vsel %vm1350, %v5385, 0.0
        %5480 = vadd.xlane.f32.xlu0 %v5479
        %v5481 = vpop.xlane.xlu0 %5480
        %v5482 = vsel %vm1350, %v5386, 0.0
        %5483 = vadd.xlane.f32.xlu0 %v5482
        %v5484 = vpop.xlane.xlu0 %5483
        %v5485 = vsel %vm1350, %v5387, 0.0
        %5486 = vadd.xlane.f32.xlu0 %v5485
        %v5487 = vpop.xlane.xlu0 %5486
        %v5488 = vsel %vm1350, %v5388, 0.0
        %5489 = vadd.xlane.f32.xlu0 %v5488
        %v5490 = vpop.xlane.xlu0 %5489
        %v5491 = vsel %vm1350, %v5389, 0.0
        %5492 = vadd.xlane.f32.xlu0 %v5491
        %v5493 = vpop.xlane.xlu0 %5492
        %v5494 = vsel %vm1350, %v5390, 0.0
        %5495 = vadd.xlane.f32.xlu0 %v5494
        %v5496 = vpop.xlane.xlu0 %5495
        %v5497 = vsel %vm1350, %v5391, 0.0
        %5498 = vadd.xlane.f32.xlu0 %v5497
        %v5499 = vpop.xlane.xlu0 %5498
        %v5500 = vsel %vm1350, %v5392, 0.0
        %5501 = vadd.xlane.f32.xlu0 %v5500
        %v5502 = vpop.xlane.xlu0 %5501
        %v5503 = vsel %vm1350, %v5393, 0.0
        %5504 = vadd.xlane.f32.xlu0 %v5503
        %v5505 = vpop.xlane.xlu0 %5504
        %v5506 = vsel %vm1350, %v5394, 0.0
        %5507 = vadd.xlane.f32.xlu0 %v5506
        %v5508 = vpop.xlane.xlu0 %5507
        %v5509 = vsel %vm1350, %v5395, 0.0
        %5510 = vadd.xlane.f32.xlu0 %v5509
        %v5511 = vpop.xlane.xlu0 %5510
        %v5512 = vsel %vm1350, %v5396, 0.0
        %5513 = vadd.xlane.f32.xlu0 %v5512
        %v5514 = vpop.xlane.xlu0 %5513
        %v5515 = vsel %vm1350, %v5397, 0.0
        %5516 = vadd.xlane.f32.xlu0 %v5515
        %v5517 = vpop.xlane.xlu0 %5516
        %v5518 = vsel %vm1350, %v5398, 0.0
        %5519 = vadd.xlane.f32.xlu0 %v5518
        %v5520 = vpop.xlane.xlu0 %5519
        %v5521 = vsel %vm1350, %v5399, 0.0
        %5522 = vadd.xlane.f32.xlu0 %v5521
        %v5523 = vpop.xlane.xlu0 %5522
        %v5524 = vsel %vm1350, %v5400, 0.0
        %5525 = vadd.xlane.f32.xlu0 %v5524
        %v5526 = vpop.xlane.xlu0 %5525
        %v5527 = vsel %vm1350, %v5401, 0.0
        %5528 = vadd.xlane.f32.xlu0 %v5527
        %v5529 = vpop.xlane.xlu0 %5528
        %v5530 = vsel %vm1350, %v5402, 0.0
        %5531 = vadd.xlane.f32.xlu0 %v5530
        %v5532 = vpop.xlane.xlu0 %5531
        %v5533 = vsel %vm1350, %v5403, 0.0
        %5534 = vadd.xlane.f32.xlu0 %v5533
        %v5535 = vpop.xlane.xlu0 %5534
        %v5536 = vsel %vm1350, %v5404, 0.0
        %5537 = vadd.xlane.f32.xlu0 %v5536
        %v5538 = vpop.xlane.xlu0 %5537
        %v5539 = vsel %vm1350, %v5405, 0.0
        %5540 = vadd.xlane.f32.xlu0 %v5539
        %v5541 = vpop.xlane.xlu0 %5540
        %v5542 = vsel %vm1350, %v5406, 0.0
        %5543 = vadd.xlane.f32.xlu0 %v5542
        %v5544 = vpop.xlane.xlu0 %5543
        %v5545 = vsel %vm1350, %v5407, 0.0
        %5546 = vadd.xlane.f32.xlu0 %v5545
        %v5547 = vpop.xlane.xlu0 %5546
        %v5548 = vsel %vm1350, %v5408, 0.0
        %5549 = vadd.xlane.f32.xlu0 %v5548
        %v5550 = vpop.xlane.xlu0 %5549
        %v5551 = vsel %vm1350, %v5409, 0.0
        %5552 = vadd.xlane.f32.xlu0 %v5551
        %v5553 = vpop.xlane.xlu0 %5552
        %v5554 = vsel %vm1350, %v5410, 0.0
        %5555 = vadd.xlane.f32.xlu0 %v5554
        %v5556 = vpop.xlane.xlu0 %5555
        %v5557 = vsel %vm1350, %v5411, 0.0
        %5558 = vadd.xlane.f32.xlu0 %v5557
        %v5559 = vpop.xlane.xlu0 %5558
        %v5560 = vsel %vm1350, %v5412, 0.0
        %5561 = vadd.xlane.f32.xlu0 %v5560
        %v5562 = vpop.xlane.xlu0 %5561
        %v5563 = vsel %vm1350, %v5413, 0.0
        %5564 = vadd.xlane.f32.xlu0 %v5563
        %v5565 = vpop.xlane.xlu0 %5564
        %v5566 = vsel %vm1350, %v5414, 0.0
        %5567 = vadd.xlane.f32.xlu0 %v5566
        %v5568 = vpop.xlane.xlu0 %5567
        %v5569 = vsel %vm1350, %v5415, 0.0
        %5570 = vadd.xlane.f32.xlu0 %v5569
        %v5571 = vpop.xlane.xlu0 %5570
        %v5572 = vsel %vm1350, %v5416, 0.0
        %5573 = vadd.xlane.f32.xlu0 %v5572
        %v5574 = vpop.xlane.xlu0 %5573
        %v5575 = vsel %vm1350, %v5417, 0.0
        %5576 = vadd.xlane.f32.xlu0 %v5575
        %v5577 = vpop.xlane.xlu0 %5576
        %v5578 = vsel %vm1350, %v5418, 0.0
        %5579 = vadd.xlane.f32.xlu0 %v5578
        %v5580 = vpop.xlane.xlu0 %5579
        %v5581 = vsel %vm1350, %v5419, 0.0
        %5582 = vadd.xlane.f32.xlu0 %v5581
        %v5583 = vpop.xlane.xlu0 %5582
        %v5584 = vsel %vm1350, %v5420, 0.0
        %5585 = vadd.xlane.f32.xlu0 %v5584
        %v5586 = vpop.xlane.xlu0 %5585
        %v5587 = vsel %vm1350, %v5421, 0.0
        %5588 = vadd.xlane.f32.xlu0 %v5587
        %v5589 = vpop.xlane.xlu0 %5588
        %v5590 = vsel %vm1350, %v5422, 0.0
        %5591 = vadd.xlane.f32.xlu0 %v5590
        %v5592 = vpop.xlane.xlu0 %5591
        %v5593 = vsel %vm1350, %v5423, 0.0
        %5594 = vadd.xlane.f32.xlu0 %v5593
        %v5595 = vpop.xlane.xlu0 %5594
        %v5596 = vsel %vm1350, %v5424, 0.0
        %5597 = vadd.xlane.f32.xlu0 %v5596
        %v5598 = vpop.xlane.xlu0 %5597
        %v5599 = vsel %vm1350, %v5425, 0.0
        %5600 = vadd.xlane.f32.xlu0 %v5599
        %v5601 = vpop.xlane.xlu0 %5600
        %v5602 = vsel %vm1350, %v5426, 0.0
        %5603 = vadd.xlane.f32.xlu0 %v5602
        %v5604 = vpop.xlane.xlu0 %5603
        %v5605 = vsel %vm1350, %v5427, 0.0
        %5606 = vadd.xlane.f32.xlu0 %v5605
        %v5607 = vpop.xlane.xlu0 %5606
        %v5608 = vsel %vm1350, %v5428, 0.0
        %5609 = vadd.xlane.f32.xlu0 %v5608
        %v5610 = vpop.xlane.xlu0 %5609
        %v5611 = vsel %vm1350, %v5429, 0.0
        %5612 = vadd.xlane.f32.xlu0 %v5611
        %v5613 = vpop.xlane.xlu0 %5612
        %v5614 = vsel %vm1350, %v5430, 0.0
        %5615 = vadd.xlane.f32.xlu0 %v5614
        %v5616 = vpop.xlane.xlu0 %5615
        %v5617 = vsel %vm1350, %v5431, 0.0
        %5618 = vadd.xlane.f32.xlu0 %v5617
        %v5619 = vpop.xlane.xlu0 %5618
        %v5620 = vsel %vm1350, %v5432, 0.0
        %5621 = vadd.xlane.f32.xlu0 %v5620
        %v5622 = vpop.xlane.xlu0 %5621
        %v5623 = vsel %vm1350, %v5433, 0.0
        %5624 = vadd.xlane.f32.xlu0 %v5623
        %v5625 = vpop.xlane.xlu0 %5624
        %5626 = vrot.lane.b32.xlu0 %v1246, 80
        %v5627 = vpop.permute.xlu0 %5626
        %5628 = vrot.lane.b32.xlu0 %v1247, 80
        %v5629 = vpop.permute.xlu0 %5628
        %5630 = vrot.lane.b32.xlu0 %v1216, 16
        %v5631 = vpop.permute.xlu0 %5630
        %5632 = vrot.lane.b32.xlu0 %v1222, 16
        %v5633 = vpop.permute.xlu0 %5632
        %v5666 = vlaneseq
        %v5667 = vshrl.u32 %v5666, 7
        %v5668 = vsub.s32 %v2484, %v5667
        %v5669 = vrot.slane %v5436, %v5668
        %v5670 = vlaneseq
        %v5671 = vshrl.u32 %v5670, 7
        %v5672 = vsub.s32 %v2489, %v5671
        %v5673 = vrot.slane %v5439, %v5672
        %v5674 = vsel %vm2494, %v5673, %v5669
        %v5675 = vlaneseq
        %v5676 = vshrl.u32 %v5675, 7
        %v5677 = vsub.s32 %v2484, %v5676
        %v5678 = vrot.slane %v5442, %v5677
        %v5679 = vlaneseq
        %v5680 = vshrl.u32 %v5679, 7
        %v5681 = vsub.s32 %v2489, %v5680
        %v5682 = vrot.slane %v5445, %v5681
        %v5683 = vsel %vm2494, %v5682, %v5678
        %v5684 = vlaneseq
        %v5685 = vshrl.u32 %v5684, 7
        %v5686 = vsub.s32 %v2484, %v5685
        %v5687 = vrot.slane %v5448, %v5686
        %v5688 = vlaneseq
        %v5689 = vshrl.u32 %v5688, 7
        %v5690 = vsub.s32 %v2489, %v5689
        %v5691 = vrot.slane %v5451, %v5690
        %v5692 = vsel %vm2494, %v5691, %v5687
        %v5693 = vlaneseq
        %v5694 = vshrl.u32 %v5693, 7
        %v5695 = vsub.s32 %v2484, %v5694
        %v5696 = vrot.slane %v5454, %v5695
        %v5697 = vlaneseq
        %v5698 = vshrl.u32 %v5697, 7
        %v5699 = vsub.s32 %v2489, %v5698
        %v5700 = vrot.slane %v5457, %v5699
        %v5701 = vsel %vm2494, %v5700, %v5696
        %v5702 = vlaneseq
        %v5703 = vshrl.u32 %v5702, 7
        %v5704 = vsub.s32 %v2484, %v5703
        %v5705 = vrot.slane %v5460, %v5704
        %v5706 = vlaneseq
        %v5707 = vshrl.u32 %v5706, 7
        %v5708 = vsub.s32 %v2489, %v5707
        %v5709 = vrot.slane %v5463, %v5708
        %v5710 = vsel %vm2494, %v5709, %v5705
        %v5711 = vlaneseq
        %v5712 = vshrl.u32 %v5711, 7
        %v5713 = vsub.s32 %v2484, %v5712
        %v5714 = vrot.slane %v5466, %v5713
        %v5715 = vlaneseq
        %v5716 = vshrl.u32 %v5715, 7
        %v5717 = vsub.s32 %v2489, %v5716
        %v5718 = vrot.slane %v5469, %v5717
        %v5719 = vsel %vm2494, %v5718, %v5714
        %v5720 = vlaneseq
        %v5721 = vshrl.u32 %v5720, 7
        %v5722 = vsub.s32 %v2484, %v5721
        %v5723 = vrot.slane %v5472, %v5722
        %v5724 = vlaneseq
        %v5725 = vshrl.u32 %v5724, 7
        %v5726 = vsub.s32 %v2489, %v5725
        %v5727 = vrot.slane %v5475, %v5726
        %v5728 = vsel %vm2494, %v5727, %v5723
        %v5729 = vlaneseq
        %v5730 = vshrl.u32 %v5729, 7
        %v5731 = vsub.s32 %v2484, %v5730
        %v5732 = vrot.slane %v5478, %v5731
        %v5733 = vlaneseq
        %v5734 = vshrl.u32 %v5733, 7
        %v5735 = vsub.s32 %v2489, %v5734
        %v5736 = vrot.slane %v5481, %v5735
        %v5737 = vsel %vm2494, %v5736, %v5732
        %v5738 = vlaneseq
        %v5739 = vshrl.u32 %v5738, 7
        %v5740 = vsub.s32 %v2484, %v5739
        %v5741 = vrot.slane %v5484, %v5740
        %v5742 = vlaneseq
        %v5743 = vshrl.u32 %v5742, 7
        %v5744 = vsub.s32 %v2489, %v5743
        %v5745 = vrot.slane %v5487, %v5744
        %v5746 = vsel %vm2494, %v5745, %v5741
        %v5747 = vlaneseq
        %v5748 = vshrl.u32 %v5747, 7
        %v5749 = vsub.s32 %v2484, %v5748
        %v5750 = vrot.slane %v5490, %v5749
        %v5751 = vlaneseq
        %v5752 = vshrl.u32 %v5751, 7
        %v5753 = vsub.s32 %v2489, %v5752
        %v5754 = vrot.slane %v5493, %v5753
        %v5755 = vsel %vm2494, %v5754, %v5750
        %v5756 = vlaneseq
        %v5757 = vshrl.u32 %v5756, 7
        %v5758 = vsub.s32 %v2484, %v5757
        %v5759 = vrot.slane %v5496, %v5758
        %v5760 = vlaneseq
        %v5761 = vshrl.u32 %v5760, 7
        %v5762 = vsub.s32 %v2489, %v5761
        %v5763 = vrot.slane %v5499, %v5762
        %v5764 = vsel %vm2494, %v5763, %v5759
        %v5765 = vlaneseq
        %v5766 = vshrl.u32 %v5765, 7
        %v5767 = vsub.s32 %v2484, %v5766
        %v5768 = vrot.slane %v5502, %v5767
        %v5769 = vlaneseq
        %v5770 = vshrl.u32 %v5769, 7
        %v5771 = vsub.s32 %v2489, %v5770
        %v5772 = vrot.slane %v5505, %v5771
        %v5773 = vsel %vm2494, %v5772, %v5768
        %v5774 = vlaneseq
        %v5775 = vshrl.u32 %v5774, 7
        %v5776 = vsub.s32 %v2484, %v5775
        %v5777 = vrot.slane %v5508, %v5776
        %v5778 = vlaneseq
        %v5779 = vshrl.u32 %v5778, 7
        %v5780 = vsub.s32 %v2489, %v5779
        %v5781 = vrot.slane %v5511, %v5780
        %v5782 = vsel %vm2494, %v5781, %v5777
        %v5783 = vlaneseq
        %v5784 = vshrl.u32 %v5783, 7
        %v5785 = vsub.s32 %v2484, %v5784
        %v5786 = vrot.slane %v5514, %v5785
        %v5787 = vlaneseq
        %v5788 = vshrl.u32 %v5787, 7
        %v5789 = vsub.s32 %v2489, %v5788
        %v5790 = vrot.slane %v5517, %v5789
        %v5791 = vsel %vm2494, %v5790, %v5786
        %v5792 = vlaneseq
        %v5793 = vshrl.u32 %v5792, 7
        %v5794 = vsub.s32 %v2484, %v5793
        %v5795 = vrot.slane %v5520, %v5794
        %v5796 = vlaneseq
        %v5797 = vshrl.u32 %v5796, 7
        %v5798 = vsub.s32 %v2489, %v5797
        %v5799 = vrot.slane %v5523, %v5798
        %v5800 = vsel %vm2494, %v5799, %v5795
        %v5801 = vlaneseq
        %v5802 = vshrl.u32 %v5801, 7
        %v5803 = vsub.s32 %v2484, %v5802
        %v5804 = vrot.slane %v5526, %v5803
        %v5805 = vlaneseq
        %v5806 = vshrl.u32 %v5805, 7
        %v5807 = vsub.s32 %v2489, %v5806
        %v5808 = vrot.slane %v5529, %v5807
        %v5809 = vsel %vm2494, %v5808, %v5804
        %v5810 = vsel %vm2631, %v5683, %v5674
        %v5811 = vsel %vm2633, %v5692, %v5810
        %v5812 = vsel %vm2635, %v5701, %v5811
        %v5813 = vsel %vm2637, %v5710, %v5812
        %v5814 = vsel %vm2639, %v5719, %v5813
        %v5815 = vsel %vm2641, %v5728, %v5814
        %v5816 = vsel %vm2643, %v5737, %v5815
        %v5817 = vsel %vm2631, %v5755, %v5746
        %v5818 = vsel %vm2633, %v5764, %v5817
        %v5819 = vsel %vm2635, %v5773, %v5818
        %v5820 = vsel %vm2637, %v5782, %v5819
        %v5821 = vsel %vm2639, %v5791, %v5820
        %v5822 = vsel %vm2641, %v5800, %v5821
        %v5823 = vsel %vm2643, %v5809, %v5822
        %v5826 = vsel %vm1350, %v5627, 0
        %v5828 = vsel %vm1350, %v5629, 0
        %v5830 = vsel %vm1350, %v5631, 0
        %v5832 = vsel %vm1350, %v5633, 0
        %5834 = vmatprep.subr.mxu0 0.0
        %5835 = vmatpush1.xpose.msra.mxu0 %v5830
        %5836 = vmatprep.subr.mxu0 0.0
        %5837 = vmatpush1.xpose.msra.mxu0 %v5832
        %5838 = vmatprep.subr.mxu0 0.0
        %5839 = vmatpush1.xpose.msra.mxu0 0.0
        %5840 = vmatprep.subr.mxu0 0.0
        %5841 = vmatpush1.xpose.msra.mxu0 0.0
        %5842 = vmatprep.subr.mxu0 0.0
        %5843 = vmatpush1.xpose.msra.mxu0 0.0
        %5844 = vmatprep.subr.mxu0 0.0
        %5845 = vmatpush1.xpose.msra.mxu0 0.0
        %5846 = vmatprep.subr.mxu0 0.0
        %5847 = vmatpush1.xpose.msra.mxu0 0.0
        %5848 = vmatprep.subr.mxu0 0.0
        %5849 = vmatpush1.xpose.msra.mxu0 0.0
        %5850 = vmatprep.subr.mxu0 0.0
        %5851 = vmatpush1.xpose.msra.mxu0 0.0
        %5852 = vmatprep.subr.mxu0 0.0
        %5853 = vmatpush1.xpose.msra.mxu0 0.0
        %5854 = vmatprep.subr.mxu0 0.0
        %5855 = vmatpush1.xpose.msra.mxu0 0.0
        %5856 = vmatprep.subr.mxu0 0.0
        %5857 = vmatpush1.xpose.msra.mxu0 0.0
        %5858 = vmatprep.subr.mxu0 0.0
        %5859 = vmatpush1.xpose.msra.mxu0 0.0
        %5860 = vmatprep.subr.mxu0 0.0
        %5861 = vmatpush1.xpose.msra.mxu0 0.0
        %5862 = vmatprep.subr.mxu0 0.0
        %5863 = vmatpush1.xpose.msra.mxu0 0.0
        %5864 = vmatprep.subr.mxu0 0.0
        %5865 = vmatpush1.xpose.msra.mxu0 0.0
        %5866 = vmatprep.subr.mxu0 0.0
        %5867 = vmatpush1.xpose.msra.mxu0 0.0
        %5868 = vmatprep.subr.mxu0 0.0
        %5869 = vmatpush1.xpose.msra.mxu0 0.0
        %5870 = vmatprep.subr.mxu0 0.0
        %5871 = vmatpush1.xpose.msra.mxu0 0.0
        %5872 = vmatprep.subr.mxu0 0.0
        %5873 = vmatpush1.xpose.msra.mxu0 0.0
        %5874 = vmatprep.subr.mxu0 0.0
        %5875 = vmatpush1.xpose.msra.mxu0 0.0
        %5876 = vmatprep.subr.mxu0 0.0
        %5877 = vmatpush1.xpose.msra.mxu0 0.0
        %5878 = vmatprep.subr.mxu0 0.0
        %5879 = vmatpush1.xpose.msra.mxu0 0.0
        %5880 = vmatprep.subr.mxu0 0.0
        %5881 = vmatpush1.xpose.msra.mxu0 0.0
        %5882 = vmatprep.subr.mxu0 0.0
        %5883 = vmatpush1.xpose.msra.mxu0 0.0
        %5884 = vmatprep.subr.mxu0 0.0
        %5885 = vmatpush1.xpose.msra.mxu0 0.0
        %5886 = vmatprep.subr.mxu0 0.0
        %5887 = vmatpush1.xpose.msra.mxu0 0.0
        %5888 = vmatprep.subr.mxu0 0.0
        %5889 = vmatpush1.xpose.msra.mxu0 0.0
        %5890 = vmatprep.subr.mxu0 0.0
        %5891 = vmatpush1.xpose.msra.mxu0 0.0
        %5892 = vmatprep.subr.mxu0 0.0
        %5893 = vmatpush1.xpose.msra.mxu0 0.0
        %5894 = vmatprep.subr.mxu0 0.0
        %5895 = vmatpush1.xpose.msra.mxu0 0.0
        %5896 = vmatprep.subr.mxu0 0.0
        %5897 = vmatpush1.xpose.msra.mxu0 0.0
        %5898 = vmatprep.mubr.f32.mxu0 0.0
        %5899 = vmatmul.mubr.f32.gmra.mrb[0].mxu0 %v5826
        %v5900 = vpop.f32.mrb[0].mxu0
        %v5901 = vadd.f32 %v5816, %v5900
        %v5902 = vpop.f32.mrb[0].mxu0
        %5903 = vmatprep.mubr.f32.mxu0 0.0
        %5904 = vmatmul.mubr.f32.gmra.mrb[0].mxu0 %v5828
        %v5905 = vpop.f32.mrb[0].mxu0
        %v5906 = vadd.f32 %v5823, %v5905
        %v5907 = vpop.f32.mrb[0].mxu0
        %5908 = vdwg.mxu0
        %5909 = vrot.lane.b32.xlu0 %v1248, 80
        %v5910 = vpop.permute.xlu0 %5909
        %5911 = vrot.lane.b32.xlu0 %v1249, 80
        %v5912 = vpop.permute.xlu0 %5911
        %5913 = vrot.lane.b32.xlu0 %v1228, 16
        %v5914 = vpop.permute.xlu0 %5913
        %5915 = vrot.lane.b32.xlu0 %v1234, 16
        %v5916 = vpop.permute.xlu0 %5915
        %v5949 = vlaneseq
        %v5950 = vshrl.u32 %v5949, 7
        %v5951 = vsub.s32 %v2484, %v5950
        %v5952 = vrot.slane %v5532, %v5951
        %v5953 = vlaneseq
        %v5954 = vshrl.u32 %v5953, 7
        %v5955 = vsub.s32 %v2489, %v5954
        %v5956 = vrot.slane %v5535, %v5955
        %v5957 = vsel %vm2494, %v5956, %v5952
        %v5958 = vlaneseq
        %v5959 = vshrl.u32 %v5958, 7
        %v5960 = vsub.s32 %v2484, %v5959
        %v5961 = vrot.slane %v5538, %v5960
        %v5962 = vlaneseq
        %v5963 = vshrl.u32 %v5962, 7
        %v5964 = vsub.s32 %v2489, %v5963
        %v5965 = vrot.slane %v5541, %v5964
        %v5966 = vsel %vm2494, %v5965, %v5961
        %v5967 = vlaneseq
        %v5968 = vshrl.u32 %v5967, 7
        %v5969 = vsub.s32 %v2484, %v5968
        %v5970 = vrot.slane %v5544, %v5969
        %v5971 = vlaneseq
        %v5972 = vshrl.u32 %v5971, 7
        %v5973 = vsub.s32 %v2489, %v5972
        %v5974 = vrot.slane %v5547, %v5973
        %v5975 = vsel %vm2494, %v5974, %v5970
        %v5976 = vlaneseq
        %v5977 = vshrl.u32 %v5976, 7
        %v5978 = vsub.s32 %v2484, %v5977
        %v5979 = vrot.slane %v5550, %v5978
        %v5980 = vlaneseq
        %v5981 = vshrl.u32 %v5980, 7
        %v5982 = vsub.s32 %v2489, %v5981
        %v5983 = vrot.slane %v5553, %v5982
        %v5984 = vsel %vm2494, %v5983, %v5979
        %v5985 = vlaneseq
        %v5986 = vshrl.u32 %v5985, 7
        %v5987 = vsub.s32 %v2484, %v5986
        %v5988 = vrot.slane %v5556, %v5987
        %v5989 = vlaneseq
        %v5990 = vshrl.u32 %v5989, 7
        %v5991 = vsub.s32 %v2489, %v5990
        %v5992 = vrot.slane %v5559, %v5991
        %v5993 = vsel %vm2494, %v5992, %v5988
        %v5994 = vlaneseq
        %v5995 = vshrl.u32 %v5994, 7
        %v5996 = vsub.s32 %v2484, %v5995
        %v5997 = vrot.slane %v5562, %v5996
        %v5998 = vlaneseq
        %v5999 = vshrl.u32 %v5998, 7
        %v6000 = vsub.s32 %v2489, %v5999
        %v6001 = vrot.slane %v5565, %v6000
        %v6002 = vsel %vm2494, %v6001, %v5997
        %v6003 = vlaneseq
        %v6004 = vshrl.u32 %v6003, 7
        %v6005 = vsub.s32 %v2484, %v6004
        %v6006 = vrot.slane %v5568, %v6005
        %v6007 = vlaneseq
        %v6008 = vshrl.u32 %v6007, 7
        %v6009 = vsub.s32 %v2489, %v6008
        %v6010 = vrot.slane %v5571, %v6009
        %v6011 = vsel %vm2494, %v6010, %v6006
        %v6012 = vlaneseq
        %v6013 = vshrl.u32 %v6012, 7
        %v6014 = vsub.s32 %v2484, %v6013
        %v6015 = vrot.slane %v5574, %v6014
        %v6016 = vlaneseq
        %v6017 = vshrl.u32 %v6016, 7
        %v6018 = vsub.s32 %v2489, %v6017
        %v6019 = vrot.slane %v5577, %v6018
        %v6020 = vsel %vm2494, %v6019, %v6015
        %v6021 = vlaneseq
        %v6022 = vshrl.u32 %v6021, 7
        %v6023 = vsub.s32 %v2484, %v6022
        %v6024 = vrot.slane %v5580, %v6023
        %v6025 = vlaneseq
        %v6026 = vshrl.u32 %v6025, 7
        %v6027 = vsub.s32 %v2489, %v6026
        %v6028 = vrot.slane %v5583, %v6027
        %v6029 = vsel %vm2494, %v6028, %v6024
        %v6030 = vlaneseq
        %v6031 = vshrl.u32 %v6030, 7
        %v6032 = vsub.s32 %v2484, %v6031
        %v6033 = vrot.slane %v5586, %v6032
        %v6034 = vlaneseq
        %v6035 = vshrl.u32 %v6034, 7
        %v6036 = vsub.s32 %v2489, %v6035
        %v6037 = vrot.slane %v5589, %v6036
        %v6038 = vsel %vm2494, %v6037, %v6033
        %v6039 = vlaneseq
        %v6040 = vshrl.u32 %v6039, 7
        %v6041 = vsub.s32 %v2484, %v6040
        %v6042 = vrot.slane %v5592, %v6041
        %v6043 = vlaneseq
        %v6044 = vshrl.u32 %v6043, 7
        %v6045 = vsub.s32 %v2489, %v6044
        %v6046 = vrot.slane %v5595, %v6045
        %v6047 = vsel %vm2494, %v6046, %v6042
        %v6048 = vlaneseq
        %v6049 = vshrl.u32 %v6048, 7
        %v6050 = vsub.s32 %v2484, %v6049
        %v6051 = vrot.slane %v5598, %v6050
        %v6052 = vlaneseq
        %v6053 = vshrl.u32 %v6052, 7
        %v6054 = vsub.s32 %v2489, %v6053
        %v6055 = vrot.slane %v5601, %v6054
        %v6056 = vsel %vm2494, %v6055, %v6051
        %v6057 = vlaneseq
        %v6058 = vshrl.u32 %v6057, 7
        %v6059 = vsub.s32 %v2484, %v6058
        %v6060 = vrot.slane %v5604, %v6059
        %v6061 = vlaneseq
        %v6062 = vshrl.u32 %v6061, 7
        %v6063 = vsub.s32 %v2489, %v6062
        %v6064 = vrot.slane %v5607, %v6063
        %v6065 = vsel %vm2494, %v6064, %v6060
        %v6066 = vlaneseq
        %v6067 = vshrl.u32 %v6066, 7
        %v6068 = vsub.s32 %v2484, %v6067
        %v6069 = vrot.slane %v5610, %v6068
        %v6070 = vlaneseq
        %v6071 = vshrl.u32 %v6070, 7
        %v6072 = vsub.s32 %v2489, %v6071
        %v6073 = vrot.slane %v5613, %v6072
        %v6074 = vsel %vm2494, %v6073, %v6069
        %v6075 = vlaneseq
        %v6076 = vshrl.u32 %v6075, 7
        %v6077 = vsub.s32 %v2484, %v6076
        %v6078 = vrot.slane %v5616, %v6077
        %v6079 = vlaneseq
        %v6080 = vshrl.u32 %v6079, 7
        %v6081 = vsub.s32 %v2489, %v6080
        %v6082 = vrot.slane %v5619, %v6081
        %v6083 = vsel %vm2494, %v6082, %v6078
        %v6084 = vlaneseq
        %v6085 = vshrl.u32 %v6084, 7
        %v6086 = vsub.s32 %v2484, %v6085
        %v6087 = vrot.slane %v5622, %v6086
        %v6088 = vlaneseq
        %v6089 = vshrl.u32 %v6088, 7
        %v6090 = vsub.s32 %v2489, %v6089
        %v6091 = vrot.slane %v5625, %v6090
        %v6092 = vsel %vm2494, %v6091, %v6087
        %v6093 = vsel %vm2631, %v5966, %v5957
        %v6094 = vsel %vm2633, %v5975, %v6093
        %v6095 = vsel %vm2635, %v5984, %v6094
        %v6096 = vsel %vm2637, %v5993, %v6095
        %v6097 = vsel %vm2639, %v6002, %v6096
        %v6098 = vsel %vm2641, %v6011, %v6097
        %v6099 = vsel %vm2643, %v6020, %v6098
        %v6100 = vsel %vm2631, %v6038, %v6029
        %v6101 = vsel %vm2633, %v6047, %v6100
        %v6102 = vsel %vm2635, %v6056, %v6101
        %v6103 = vsel %vm2637, %v6065, %v6102
        %v6104 = vsel %vm2639, %v6074, %v6103
        %v6105 = vsel %vm2641, %v6083, %v6104
        %v6106 = vsel %vm2643, %v6092, %v6105
        %v6109 = vsel %vm1350, %v5910, 0
        %v6111 = vsel %vm1350, %v5912, 0
        %v6113 = vsel %vm1350, %v5914, 0
        %v6115 = vsel %vm1350, %v5916, 0
        %6117 = vmatprep.subr.mxu0 0.0
        %6118 = vmatpush1.xpose.msra.mxu0 %v6113
        %6119 = vmatprep.subr.mxu0 0.0
        %6120 = vmatpush1.xpose.msra.mxu0 %v6115
        %6121 = vmatprep.subr.mxu0 0.0
        %6122 = vmatpush1.xpose.msra.mxu0 0.0
        %6123 = vmatprep.subr.mxu0 0.0
        %6124 = vmatpush1.xpose.msra.mxu0 0.0
        %6125 = vmatprep.subr.mxu0 0.0
        %6126 = vmatpush1.xpose.msra.mxu0 0.0
        %6127 = vmatprep.subr.mxu0 0.0
        %6128 = vmatpush1.xpose.msra.mxu0 0.0
        %6129 = vmatprep.subr.mxu0 0.0
        %6130 = vmatpush1.xpose.msra.mxu0 0.0
        %6131 = vmatprep.subr.mxu0 0.0
        %6132 = vmatpush1.xpose.msra.mxu0 0.0
        %6133 = vmatprep.subr.mxu0 0.0
        %6134 = vmatpush1.xpose.msra.mxu0 0.0
        %6135 = vmatprep.subr.mxu0 0.0
        %6136 = vmatpush1.xpose.msra.mxu0 0.0
        %6137 = vmatprep.subr.mxu0 0.0
        %6138 = vmatpush1.xpose.msra.mxu0 0.0
        %6139 = vmatprep.subr.mxu0 0.0
        %6140 = vmatpush1.xpose.msra.mxu0 0.0
        %6141 = vmatprep.subr.mxu0 0.0
        %6142 = vmatpush1.xpose.msra.mxu0 0.0
        %6143 = vmatprep.subr.mxu0 0.0
        %6144 = vmatpush1.xpose.msra.mxu0 0.0
        %6145 = vmatprep.subr.mxu0 0.0
        %6146 = vmatpush1.xpose.msra.mxu0 0.0
        %6147 = vmatprep.subr.mxu0 0.0
        %6148 = vmatpush1.xpose.msra.mxu0 0.0
        %6149 = vmatprep.subr.mxu0 0.0
        %6150 = vmatpush1.xpose.msra.mxu0 0.0
        %6151 = vmatprep.subr.mxu0 0.0
        %6152 = vmatpush1.xpose.msra.mxu0 0.0
        %6153 = vmatprep.subr.mxu0 0.0
        %6154 = vmatpush1.xpose.msra.mxu0 0.0
        %6155 = vmatprep.subr.mxu0 0.0
        %6156 = vmatpush1.xpose.msra.mxu0 0.0
        %6157 = vmatprep.subr.mxu0 0.0
        %6158 = vmatpush1.xpose.msra.mxu0 0.0
        %6159 = vmatprep.subr.mxu0 0.0
        %6160 = vmatpush1.xpose.msra.mxu0 0.0
        %6161 = vmatprep.subr.mxu0 0.0
        %6162 = vmatpush1.xpose.msra.mxu0 0.0
        %6163 = vmatprep.subr.mxu0 0.0
        %6164 = vmatpush1.xpose.msra.mxu0 0.0
        %6165 = vmatprep.subr.mxu0 0.0
        %6166 = vmatpush1.xpose.msra.mxu0 0.0
        %6167 = vmatprep.subr.mxu0 0.0
        %6168 = vmatpush1.xpose.msra.mxu0 0.0
        %6169 = vmatprep.subr.mxu0 0.0
        %6170 = vmatpush1.xpose.msra.mxu0 0.0
        %6171 = vmatprep.subr.mxu0 0.0
        %6172 = vmatpush1.xpose.msra.mxu0 0.0
        %6173 = vmatprep.subr.mxu0 0.0
        %6174 = vmatpush1.xpose.msra.mxu0 0.0
        %6175 = vmatprep.subr.mxu0 0.0
        %6176 = vmatpush1.xpose.msra.mxu0 0.0
        %6177 = vmatprep.subr.mxu0 0.0
        %6178 = vmatpush1.xpose.msra.mxu0 0.0
        %6179 = vmatprep.subr.mxu0 0.0
        %6180 = vmatpush1.xpose.msra.mxu0 0.0
        %6181 = vmatprep.mubr.f32.mxu0 0.0
        %6182 = vmatmul.mubr.f32.gmra.mrb[0].mxu0 %v6109
        %v6183 = vpop.f32.mrb[0].mxu0
        %v6184 = vadd.f32 %v6099, %v6183
        %v6185 = vpop.f32.mrb[0].mxu0
        %6186 = vmatprep.mubr.f32.mxu0 0.0
        %6187 = vmatmul.mubr.f32.gmra.mrb[0].mxu0 %v6111
        %v6188 = vpop.f32.mrb[0].mxu0
        %v6189 = vadd.f32 %v6106, %v6188
        %v6190 = vpop.f32.mrb[0].mxu0
        %6191 = vdwg.mxu0
        %v6192 = vsel %vm1350, %v5901, -inf
        %6193 = vmax.xlane.f32.xlu0 %v6192
        %v6194 = vpop.xlane.xlu0 %6193
        %v6195 = vsel %vm1350, %v5906, -inf
        %6196 = vmax.xlane.f32.xlu0 %v6195
        %v6197 = vpop.xlane.xlu0 %6196
        %v6198 = vsel %vm1350, %v6184, -inf
        %6199 = vmax.xlane.f32.xlu0 %v6198
        %v6200 = vpop.xlane.xlu0 %6199
        %v6201 = vsel %vm1350, %v6189, -inf
        %6202 = vmax.xlane.f32.xlu0 %v6201
        %v6203 = vpop.xlane.xlu0 %6202
        %v6204 = vsub.f32 %v5901, %v6194
        %v6205 = vsub.f32 %v5906, %v6197
        %v6206 = vsub.f32 %v6184, %v6200
        %v6207 = vsub.f32 %v6189, %v6203
        %v6208 = vmul.f32 %v6204, 1.442695
        %v6209 = vpow.pop %v6208
        %v6210 = vmul.f32 %v6205, 1.442695
        %v6211 = vpow.pop %v6210
        %v6212 = vmul.f32 %v6206, 1.442695
        %v6213 = vpow.pop %v6212
        %v6214 = vmul.f32 %v6207, 1.442695
        %v6215 = vpow.pop %v6214
        %v6216 = vsel %vm1350, %v6209, 0.0
        %6217 = vadd.xlane.f32.xlu0 %v6216
        %v6218 = vpop.xlane.xlu0 %6217
        %v6219 = vsel %vm1350, %v6211, 0.0
        %6220 = vadd.xlane.f32.xlu0 %v6219
        %v6221 = vpop.xlane.xlu0 %6220
        %v6222 = vsel %vm1350, %v6213, 0.0
        %6223 = vadd.xlane.f32.xlu0 %v6222
        %v6224 = vpop.xlane.xlu0 %6223
        %v6225 = vsel %vm1350, %v6215, 0.0
        %6226 = vadd.xlane.f32.xlu0 %v6225
        %v6227 = vpop.xlane.xlu0 %6226
        %v6228 = vrcp.pop %v6218
        %v6229 = vrcp.pop %v6221
        %v6230 = vrcp.pop %v6224
        %v6231 = vrcp.pop %v6227
        %v6232 = vmul.f32 %v6209, %v6228
        %v6233 = vmul.f32 %v6211, %v6229
        %v6234 = vmul.f32 %v6213, %v6230
        %v6235 = vmul.f32 %v6215, %v6231
        %6236 = vrot.lane.b32.xlu0 %v1218, 80
        %v6237 = vpop.permute.xlu0 %6236
        %6238 = vrot.lane.b32.xlu0 %v1224, 80
        %v6239 = vpop.permute.xlu0 %6238
        %v6243 = vsel %vm1350, %v6232, 0
        %v6246 = vsel %vm1350, %v6233, 0
        %6248 = vmatprep.subr.mxu0 0.0
        %6249 = vmatpush1.msra.mxu0 %v6237
        %6250 = vmatprep.subr.mxu0 0.0
        %6251 = vmatpush1.msra.mxu0 %v6239
        %6252 = vmatprep.subr.mxu0 0.0
        %6253 = vmatpush1.msra.mxu0 0.0
        %6254 = vmatprep.subr.mxu0 0.0
        %6255 = vmatpush1.msra.mxu0 0.0
        %6256 = vmatprep.subr.mxu0 0.0
        %6257 = vmatpush1.msra.mxu0 0.0
        %6258 = vmatprep.subr.mxu0 0.0
        %6259 = vmatpush1.msra.mxu0 0.0
        %6260 = vmatprep.subr.mxu0 0.0
        %6261 = vmatpush1.msra.mxu0 0.0
        %6262 = vmatprep.subr.mxu0 0.0
        %6263 = vmatpush1.msra.mxu0 0.0
        %6264 = vmatprep.subr.mxu0 0.0
        %6265 = vmatpush1.msra.mxu0 0.0
        %6266 = vmatprep.subr.mxu0 0.0
        %6267 = vmatpush1.msra.mxu0 0.0
        %6268 = vmatprep.subr.mxu0 0.0
        %6269 = vmatpush1.msra.mxu0 0.0
        %6270 = vmatprep.subr.mxu0 0.0
        %6271 = vmatpush1.msra.mxu0 0.0
        %6272 = vmatprep.subr.mxu0 0.0
        %6273 = vmatpush1.msra.mxu0 0.0
        %6274 = vmatprep.subr.mxu0 0.0
        %6275 = vmatpush1.msra.mxu0 0.0
        %6276 = vmatprep.subr.mxu0 0.0
        %6277 = vmatpush1.msra.mxu0 0.0
        %6278 = vmatprep.subr.mxu0 0.0
        %6279 = vmatpush1.msra.mxu0 0.0
        %6280 = vmatprep.subr.mxu0 0.0
        %6281 = vmatpush1.msra.mxu0 0.0
        %6282 = vmatprep.subr.mxu0 0.0
        %6283 = vmatpush1.msra.mxu0 0.0
        %6284 = vmatprep.subr.mxu0 0.0
        %6285 = vmatpush1.msra.mxu0 0.0
        %6286 = vmatprep.subr.mxu0 0.0
        %6287 = vmatpush1.msra.mxu0 0.0
        %6288 = vmatprep.subr.mxu0 0.0
        %6289 = vmatpush1.msra.mxu0 0.0
        %6290 = vmatprep.subr.mxu0 0.0
        %6291 = vmatpush1.msra.mxu0 0.0
        %6292 = vmatprep.subr.mxu0 0.0
        %6293 = vmatpush1.msra.mxu0 0.0
        %6294 = vmatprep.subr.mxu0 0.0
        %6295 = vmatpush1.msra.mxu0 0.0
        %6296 = vmatprep.subr.mxu0 0.0
        %6297 = vmatpush1.msra.mxu0 0.0
        %6298 = vmatprep.subr.mxu0 0.0
        %6299 = vmatpush1.msra.mxu0 0.0
        %6300 = vmatprep.subr.mxu0 0.0
        %6301 = vmatpush1.msra.mxu0 0.0
        %6302 = vmatprep.subr.mxu0 0.0
        %6303 = vmatpush1.msra.mxu0 0.0
        %6304 = vmatprep.subr.mxu0 0.0
        %6305 = vmatpush1.msra.mxu0 0.0
        %6306 = vmatprep.subr.mxu0 0.0
        %6307 = vmatpush1.msra.mxu0 0.0
        %6308 = vmatprep.subr.mxu0 0.0
        %6309 = vmatpush1.msra.mxu0 0.0
        %6310 = vmatprep.subr.mxu0 0.0
        %6311 = vmatpush1.msra.mxu0 0.0
        %6312 = vmatprep.mubr.f32.mxu0 0.0
        %6313 = vmatmul.mubr.f32.gmra.mrb[0].mxu0 %v6243
        %v6314 = vpop.f32.mrb[0].mxu0
        %v6315 = vadd.f32 0.0, %v6314
        %v6316 = vpop.f32.mrb[0].mxu0
        %6317 = vmatprep.mubr.f32.mxu0 0.0
        %6318 = vmatmul.mubr.f32.gmra.mrb[0].mxu0 %v6246
        %v6319 = vpop.f32.mrb[0].mxu0
        %v6320 = vadd.f32 0.0, %v6319
        %v6321 = vpop.f32.mrb[0].mxu0
        %6322 = vdwg.mxu0
        %6323 = vrot.lane.b32.xlu0 %v1230, 80
        %v6324 = vpop.permute.xlu0 %6323
        %6325 = vrot.lane.b32.xlu0 %v1236, 80
        %v6326 = vpop.permute.xlu0 %6325
        %v6330 = vsel %vm1350, %v6234, 0
        %v6333 = vsel %vm1350, %v6235, 0
        %6335 = vmatprep.subr.mxu0 0.0
        %6336 = vmatpush1.msra.mxu0 %v6324
        %6337 = vmatprep.subr.mxu0 0.0
        %6338 = vmatpush1.msra.mxu0 %v6326
        %6339 = vmatprep.subr.mxu0 0.0
        %6340 = vmatpush1.msra.mxu0 0.0
        %6341 = vmatprep.subr.mxu0 0.0
        %6342 = vmatpush1.msra.mxu0 0.0
        %6343 = vmatprep.subr.mxu0 0.0
        %6344 = vmatpush1.msra.mxu0 0.0
        %6345 = vmatprep.subr.mxu0 0.0
        %6346 = vmatpush1.msra.mxu0 0.0
        %6347 = vmatprep.subr.mxu0 0.0
        %6348 = vmatpush1.msra.mxu0 0.0
        %6349 = vmatprep.subr.mxu0 0.0
        %6350 = vmatpush1.msra.mxu0 0.0
        %6351 = vmatprep.subr.mxu0 0.0
        %6352 = vmatpush1.msra.mxu0 0.0
        %6353 = vmatprep.subr.mxu0 0.0
        %6354 = vmatpush1.msra.mxu0 0.0
        %6355 = vmatprep.subr.mxu0 0.0
        %6356 = vmatpush1.msra.mxu0 0.0
        %6357 = vmatprep.subr.mxu0 0.0
        %6358 = vmatpush1.msra.mxu0 0.0
        %6359 = vmatprep.subr.mxu0 0.0
        %6360 = vmatpush1.msra.mxu0 0.0
        %6361 = vmatprep.subr.mxu0 0.0
        %6362 = vmatpush1.msra.mxu0 0.0
        %6363 = vmatprep.subr.mxu0 0.0
        %6364 = vmatpush1.msra.mxu0 0.0
        %6365 = vmatprep.subr.mxu0 0.0
        %6366 = vmatpush1.msra.mxu0 0.0
        %6367 = vmatprep.subr.mxu0 0.0
        %6368 = vmatpush1.msra.mxu0 0.0
        %6369 = vmatprep.subr.mxu0 0.0
        %6370 = vmatpush1.msra.mxu0 0.0
        %6371 = vmatprep.subr.mxu0 0.0
        %6372 = vmatpush1.msra.mxu0 0.0
        %6373 = vmatprep.subr.mxu0 0.0
        %6374 = vmatpush1.msra.mxu0 0.0
        %6375 = vmatprep.subr.mxu0 0.0
        %6376 = vmatpush1.msra.mxu0 0.0
        %6377 = vmatprep.subr.mxu0 0.0
        %6378 = vmatpush1.msra.mxu0 0.0
        %6379 = vmatprep.subr.mxu0 0.0
        %6380 = vmatpush1.msra.mxu0 0.0
        %6381 = vmatprep.subr.mxu0 0.0
        %6382 = vmatpush1.msra.mxu0 0.0
        %6383 = vmatprep.subr.mxu0 0.0
        %6384 = vmatpush1.msra.mxu0 0.0
        %6385 = vmatprep.subr.mxu0 0.0
        %6386 = vmatpush1.msra.mxu0 0.0
        %6387 = vmatprep.subr.mxu0 0.0
        %6388 = vmatpush1.msra.mxu0 0.0
        %6389 = vmatprep.subr.mxu0 0.0
        %6390 = vmatpush1.msra.mxu0 0.0
        %6391 = vmatprep.subr.mxu0 0.0
        %6392 = vmatpush1.msra.mxu0 0.0
        %6393 = vmatprep.subr.mxu0 0.0
        %6394 = vmatpush1.msra.mxu0 0.0
        %6395 = vmatprep.subr.mxu0 0.0
        %6396 = vmatpush1.msra.mxu0 0.0
        %6397 = vmatprep.subr.mxu0 0.0
        %6398 = vmatpush1.msra.mxu0 0.0
        %6399 = vmatprep.mubr.f32.mxu0 0.0
        %6400 = vmatmul.mubr.f32.gmra.mrb[0].mxu0 %v6330
        %v6401 = vpop.f32.mrb[0].mxu0
        %v6402 = vadd.f32 0.0, %v6401
        %v6403 = vpop.f32.mrb[0].mxu0
        %6404 = vmatprep.mubr.f32.mxu0 0.0
        %6405 = vmatmul.mubr.f32.gmra.mrb[0].mxu0 %v6333
        %v6406 = vpop.f32.mrb[0].mxu0
        %v6407 = vadd.f32 0.0, %v6406
        %v6408 = vpop.f32.mrb[0].mxu0
        %6409 = vdwg.mxu0
        %6414 = vrot.lane.b32.xlu0 %v6315, 48
        %v6415 = vpop.permute.xlu0 %6414
        %6416 = vrot.lane.b32.xlu0 %v6320, 48
        %v6417 = vpop.permute.xlu0 %6416
        %6418 = vrot.lane.b32.xlu0 %v6402, 48
        %v6419 = vpop.permute.xlu0 %6418
        %6420 = vrot.lane.b32.xlu0 %v6407, 48
        %v6421 = vpop.permute.xlu0 %6420
        %vm6426 = vcmask 523648
        %6427 = vst.msk [vmem:[#allocation2] sm:$0xff] %vm6426, %v6415
        %6428 = vst.msk [vmem:[#allocation2 + $0x8] sm:$0xff] %vm6426, %v6417
        %6429 = vst.msk [vmem:[#allocation2 + $0x10] sm:$0xff] %vm6426, %v6419
        %6430 = vst.msk [vmem:[#allocation2 + $0x18] sm:$0xff] %vm6426, %v6421
        %v6431 = vld [vmem:[#allocation2] sm:$0xff]
        %v6432 = vld [vmem:[#allocation2 + $0x8] sm:$0xff]
        %v6433 = vld [vmem:[#allocation2 + $0x10] sm:$0xff]
        %v6434 = vld [vmem:[#allocation2 + $0x18] sm:$0xff]
        %6439 = vrot.lane.b32.xlu0 %v1279, 64
        %v6440 = vpop.permute.xlu0 %6439
        %6441 = vrot.lane.b32.xlu0 %v1281, 64
        %v6442 = vpop.permute.xlu0 %6441
        %6443 = vrot.lane.b32.xlu0 %v1283, 64
        %v6444 = vpop.permute.xlu0 %6443
        %6445 = vrot.lane.b32.xlu0 %v1285, 64
        %v6446 = vpop.permute.xlu0 %6445
        %v6451 = vmul.f32 %v6431, %v6440
        %v6452 = vmul.f32 %v6432, %v6442
        %v6453 = vmul.f32 %v6433, %v6444
        %v6454 = vmul.f32 %v6434, %v6446
        %v6455 = vld [vmem:[%s520] sm:$0xff]
        %v6456 = vld [vmem:[%s520 + $0x8] sm:$0xff]
        %v6457 = vld [vmem:[%s520 + $0x10] sm:$0xff]
        %v6458 = vld [vmem:[%s520 + $0x18] sm:$0xff]
        %v6459 = vld [vmem:[%s520 + $0x20] sm:$0xff]
        %v6460 = vld [vmem:[%s520 + $0x28] sm:$0xff]
        %v6461 = vld [vmem:[%s520 + $0x30] sm:$0xff]
        %v6462 = vld [vmem:[%s520 + $0x38] sm:$0xff]
        %v6463 = vlaneseq
        %v6464 = vshrl.u32 %v6463, 7
        %v6465 = vsub.s32 4, %v6464
        %v6466 = vrot.slane %v646, %v6465
        %v6468 = vsel %vm1043, %v6451, 0
        %v6471 = vsel %vm1043, %v6452, 0
        %v6474 = vsel %vm1043, %v6453, 0
        %v6477 = vsel %vm1043, %v6454, 0
        %6479 = vmatprep.subr.mxu0 0.0
        %6480 = vmatpush1.msra.mxu0 %v6455
        %6481 = vmatprep.subr.mxu0 0.0
        %6482 = vmatpush1.msra.mxu0 %v6456
        %6483 = vmatprep.subr.mxu0 0.0
        %6484 = vmatpush1.msra.mxu0 %v6457
        %6485 = vmatprep.subr.mxu0 0.0
        %6486 = vmatpush1.msra.mxu0 %v6458
        %6487 = vmatprep.subr.mxu0 0.0
        %6488 = vmatpush1.msra.mxu0 %v6459
        %6489 = vmatprep.subr.mxu0 0.0
        %6490 = vmatpush1.msra.mxu0 %v6460
        %6491 = vmatprep.subr.mxu0 0.0
        %6492 = vmatpush1.msra.mxu0 %v6461
        %6493 = vmatprep.subr.mxu0 0.0
        %6494 = vmatpush1.msra.mxu0 %v6462
        %6495 = vmatprep.subr.mxu0 0.0
        %6496 = vmatpush1.msra.mxu0 0.0
        %6497 = vmatprep.subr.mxu0 0.0
        %6498 = vmatpush1.msra.mxu0 0.0
        %6499 = vmatprep.subr.mxu0 0.0
        %6500 = vmatpush1.msra.mxu0 0.0
        %6501 = vmatprep.subr.mxu0 0.0
        %6502 = vmatpush1.msra.mxu0 0.0
        %6503 = vmatprep.subr.mxu0 0.0
        %6504 = vmatpush1.msra.mxu0 0.0
        %6505 = vmatprep.subr.mxu0 0.0
        %6506 = vmatpush1.msra.mxu0 0.0
        %6507 = vmatprep.subr.mxu0 0.0
        %6508 = vmatpush1.msra.mxu0 0.0
        %6509 = vmatprep.subr.mxu0 0.0
        %6510 = vmatpush1.msra.mxu0 0.0
        %6511 = vmatprep.subr.mxu0 0.0
        %6512 = vmatpush1.msra.mxu0 0.0
        %6513 = vmatprep.subr.mxu0 0.0
        %6514 = vmatpush1.msra.mxu0 0.0
        %6515 = vmatprep.subr.mxu0 0.0
        %6516 = vmatpush1.msra.mxu0 0.0
        %6517 = vmatprep.subr.mxu0 0.0
        %6518 = vmatpush1.msra.mxu0 0.0
        %6519 = vmatprep.subr.mxu0 0.0
        %6520 = vmatpush1.msra.mxu0 0.0
        %6521 = vmatprep.subr.mxu0 0.0
        %6522 = vmatpush1.msra.mxu0 0.0
        %6523 = vmatprep.subr.mxu0 0.0
        %6524 = vmatpush1.msra.mxu0 0.0
        %6525 = vmatprep.subr.mxu0 0.0
        %6526 = vmatpush1.msra.mxu0 0.0
        %6527 = vmatprep.subr.mxu0 0.0
        %6528 = vmatpush1.msra.mxu0 0.0
        %6529 = vmatprep.subr.mxu0 0.0
        %6530 = vmatpush1.msra.mxu0 0.0
        %6531 = vmatprep.subr.mxu0 0.0
        %6532 = vmatpush1.msra.mxu0 0.0
        %6533 = vmatprep.subr.mxu0 0.0
        %6534 = vmatpush1.msra.mxu0 0.0
        %6535 = vmatprep.subr.mxu0 0.0
        %6536 = vmatpush1.msra.mxu0 0.0
        %6537 = vmatprep.subr.mxu0 0.0
        %6538 = vmatpush1.msra.mxu0 0.0
        %6539 = vmatprep.subr.mxu0 0.0
        %6540 = vmatpush1.msra.mxu0 0.0
        %6541 = vmatprep.subr.mxu0 0.0
        %6542 = vmatpush1.msra.mxu0 0.0
        %6543 = vmatprep.mubr.f32.mxu0 0.0
        %6544 = vmatmul.mubr.f32.gmra.mrb[0].mxu0 %v6468
        %v6545 = vpop.f32.mrb[0].mxu0
        %v6546 = vadd.f32 %v6466, %v6545
        %v6547 = vpop.f32.mrb[0].mxu0
        %6548 = vmatprep.mubr.f32.mxu0 0.0
        %6549 = vmatmul.mubr.f32.gmra.mrb[0].mxu0 %v6471
        %v6550 = vpop.f32.mrb[0].mxu0
        %v6551 = vadd.f32 %v6466, %v6550
        %v6552 = vpop.f32.mrb[0].mxu0
        %6553 = vmatprep.mubr.f32.mxu0 0.0
        %6554 = vmatmul.mubr.f32.gmra.mrb[0].mxu0 %v6474
        %v6555 = vpop.f32.mrb[0].mxu0
        %v6556 = vadd.f32 %v6466, %v6555
        %v6557 = vpop.f32.mrb[0].mxu0
        %6558 = vmatprep.mubr.f32.mxu0 0.0
        %6559 = vmatmul.mubr.f32.gmra.mrb[0].mxu0 %v6477
        %v6560 = vpop.f32.mrb[0].mxu0
        %v6561 = vadd.f32 %v6466, %v6560
        %v6562 = vpop.f32.mrb[0].mxu0
        %6563 = vdwg.mxu0
        %v6564 = vmul.f32 %v1000, %v6546
        %v6565 = vmul.f32 %v1002, %v6551
        %v6566 = vmul.f32 %v1004, %v6556
        %v6567 = vmul.f32 %v1006, %v6561
        %v6568 = vadd.f32 %v6564, %v638
        %v6569 = vadd.f32 %v6565, %v639
        %v6570 = vadd.f32 %v6566, %v640
        %v6571 = vadd.f32 %v6567, %v641
        %v6572 = vsel %vm1043, %v6568, 0.0
        %6573 = vadd.xlane.f32.xlu0 %v6572
        %v6574 = vpop.xlane.xlu0 %6573
        %v6575 = vsel %vm1043, %v6569, 0.0
        %6576 = vadd.xlane.f32.xlu0 %v6575
        %v6577 = vpop.xlane.xlu0 %6576
        %v6578 = vsel %vm1043, %v6570, 0.0
        %6579 = vadd.xlane.f32.xlu0 %v6578
        %v6580 = vpop.xlane.xlu0 %6579
        %v6581 = vsel %vm1043, %v6571, 0.0
        %6582 = vadd.xlane.f32.xlu0 %v6581
        %v6583 = vpop.xlane.xlu0 %6582
        %v6584 = vmul.f32 %v6574, %v1056
        %v6585 = vmul.f32 %v6577, %v1056
        %v6586 = vmul.f32 %v6580, %v1056
        %v6587 = vmul.f32 %v6583, %v1056
        %v6588 = vsub.f32 %v6568, %v6584
        %v6589 = vsub.f32 %v6569, %v6585
        %v6590 = vsub.f32 %v6570, %v6586
        %v6591 = vsub.f32 %v6571, %v6587
        %v6592 = vmul.f32 %v6588, %v6588
        %v6593 = vmul.f32 %v6589, %v6589
        %v6594 = vmul.f32 %v6590, %v6590
        %v6595 = vmul.f32 %v6591, %v6591
        %v6596 = vsel %vm1043, %v6592, 0.0
        %6597 = vadd.xlane.f32.xlu0 %v6596
        %v6598 = vpop.xlane.xlu0 %6597
        %v6599 = vsel %vm1043, %v6593, 0.0
        %6600 = vadd.xlane.f32.xlu0 %v6599
        %v6601 = vpop.xlane.xlu0 %6600
        %v6602 = vsel %vm1043, %v6594, 0.0
        %6603 = vadd.xlane.f32.xlu0 %v6602
        %v6604 = vpop.xlane.xlu0 %6603
        %v6605 = vsel %vm1043, %v6595, 0.0
        %6606 = vadd.xlane.f32.xlu0 %v6605
        %v6607 = vpop.xlane.xlu0 %6606
        %v6608 = vmul.f32 %v6598, %v1056
        %v6609 = vmul.f32 %v6601, %v1056
        %v6610 = vmul.f32 %v6604, %v1056
        %v6611 = vmul.f32 %v6607, %v1056
        %v6612 = vadd.f32 %v6608, 1e-05
        %v6613 = vadd.f32 %v6609, 1e-05
        %v6614 = vadd.f32 %v6610, 1e-05
        %v6615 = vadd.f32 %v6611, 1e-05
        %v6616 = vrsqrt.pop %v6612
        %v6617 = vrsqrt.pop %v6613
        %v6618 = vrsqrt.pop %v6614
        %v6619 = vrsqrt.pop %v6615
        %v6620 = vmul.f32 %v6588, %v6616
        %v6621 = vmul.f32 %v6589, %v6617
        %v6622 = vmul.f32 %v6590, %v6618
        %v6623 = vmul.f32 %v6591, %v6619
        %v6624 = vmul.f32 %v867, %v6620
        %v6625 = vmul.f32 %v869, %v6621
        %v6626 = vmul.f32 %v871, %v6622
        %v6627 = vmul.f32 %v873, %v6623
        %6632 = vrot.lane.b32.xlu0 %v790, 64
        %v6633 = vpop.permute.xlu0 %6632
        %6634 = vrot.lane.b32.xlu0 %v796, 64
        %v6635 = vpop.permute.xlu0 %6634
        %6636 = vrot.lane.b32.xlu0 %v802, 64
        %v6637 = vpop.permute.xlu0 %6636
        %6638 = vrot.lane.b32.xlu0 %v808, 64
        %v6639 = vpop.permute.xlu0 %6638
        %v6644 = vadd.f32 %v6624, %v6633
        %v6645 = vadd.f32 %v6625, %v6635
        %v6646 = vadd.f32 %v6626, %v6637
        %v6647 = vadd.f32 %v6627, %v6639
        %v6648 = vld [vmem:[%s538] sm:$0xff]
        %v6649 = vld [vmem:[%s538 + $0x8] sm:$0xff]
        %v6650 = vld [vmem:[%s538 + $0x10] sm:$0xff]
        %v6651 = vld [vmem:[%s538 + $0x18] sm:$0xff]
        %v6652 = vld [vmem:[%s538 + $0x20] sm:$0xff]
        %v6653 = vld [vmem:[%s538 + $0x28] sm:$0xff]
        %v6654 = vld [vmem:[%s538 + $0x30] sm:$0xff]
        %v6655 = vld [vmem:[%s538 + $0x38] sm:$0xff]
        %v6656 = vld [vmem:[%s538 + $0x40] sm:$0xff]
        %v6657 = vld [vmem:[%s538 + $0x48] sm:$0xff]
        %v6658 = vld [vmem:[%s538 + $0x50] sm:$0xff]
        %v6659 = vld [vmem:[%s538 + $0x58] sm:$0xff]
        %v6660 = vld [vmem:[%s538 + $0x60] sm:$0xff]
        %v6661 = vld [vmem:[%s538 + $0x68] sm:$0xff]
        %v6662 = vld [vmem:[%s538 + $0x70] sm:$0xff]
        %v6663 = vld [vmem:[%s538 + $0x78] sm:$0xff]
        %v6665 = vsel %vm1043, %v6644, 0
        %v6668 = vsel %vm1043, %v6645, 0
        %v6671 = vsel %vm1043, %v6646, 0
        %v6674 = vsel %vm1043, %v6647, 0
        %6676 = vmatprep.subr.mxu0 %v6649
        %6677 = vmatpush1.msra.mxu0 %v6648
        %6678 = vmatprep.subr.mxu0 %v6651
        %6679 = vmatpush1.msra.mxu0 %v6650
        %6680 = vmatprep.subr.mxu0 %v6653
        %6681 = vmatpush1.msra.mxu0 %v6652
        %6682 = vmatprep.subr.mxu0 %v6655
        %6683 = vmatpush1.msra.mxu0 %v6654
        %6684 = vmatprep.subr.mxu0 %v6657
        %6685 = vmatpush1.msra.mxu0 %v6656
        %6686 = vmatprep.subr.mxu0 %v6659
        %6687 = vmatpush1.msra.mxu0 %v6658
        %6688 = vmatprep.subr.mxu0 %v6661
        %6689 = vmatpush1.msra.mxu0 %v6660
        %6690 = vmatprep.subr.mxu0 %v6663
        %6691 = vmatpush1.msra.mxu0 %v6662
        %6692 = vmatprep.subr.mxu0 0.0
        %6693 = vmatpush1.msra.mxu0 0.0
        %6694 = vmatprep.subr.mxu0 0.0
        %6695 = vmatpush1.msra.mxu0 0.0
        %6696 = vmatprep.subr.mxu0 0.0
        %6697 = vmatpush1.msra.mxu0 0.0
        %6698 = vmatprep.subr.mxu0 0.0
        %6699 = vmatpush1.msra.mxu0 0.0
        %6700 = vmatprep.subr.mxu0 0.0
        %6701 = vmatpush1.msra.mxu0 0.0
        %6702 = vmatprep.subr.mxu0 0.0
        %6703 = vmatpush1.msra.mxu0 0.0
        %6704 = vmatprep.subr.mxu0 0.0
        %6705 = vmatpush1.msra.mxu0 0.0
        %6706 = vmatprep.subr.mxu0 0.0
        %6707 = vmatpush1.msra.mxu0 0.0
        %6708 = vmatprep.subr.mxu0 0.0
        %6709 = vmatpush1.msra.mxu0 0.0
        %6710 = vmatprep.subr.mxu0 0.0
        %6711 = vmatpush1.msra.mxu0 0.0
        %6712 = vmatprep.subr.mxu0 0.0
        %6713 = vmatpush1.msra.mxu0 0.0
        %6714 = vmatprep.subr.mxu0 0.0
        %6715 = vmatpush1.msra.mxu0 0.0
        %6716 = vmatprep.subr.mxu0 0.0
        %6717 = vmatpush1.msra.mxu0 0.0
        %6718 = vmatprep.subr.mxu0 0.0
        %6719 = vmatpush1.msra.mxu0 0.0
        %6720 = vmatprep.subr.mxu0 0.0
        %6721 = vmatpush1.msra.mxu0 0.0
        %6722 = vmatprep.subr.mxu0 0.0
        %6723 = vmatpush1.msra.mxu0 0.0
        %6724 = vmatprep.subr.mxu0 0.0
        %6725 = vmatpush1.msra.mxu0 0.0
        %6726 = vmatprep.subr.mxu0 0.0
        %6727 = vmatpush1.msra.mxu0 0.0
        %6728 = vmatprep.subr.mxu0 0.0
        %6729 = vmatpush1.msra.mxu0 0.0
        %6730 = vmatprep.subr.mxu0 0.0
        %6731 = vmatpush1.msra.mxu0 0.0
        %6732 = vmatprep.subr.mxu0 0.0
        %6733 = vmatpush1.msra.mxu0 0.0
        %6734 = vmatprep.subr.mxu0 0.0
        %6735 = vmatpush1.msra.mxu0 0.0
        %6736 = vmatprep.subr.mxu0 0.0
        %6737 = vmatpush1.msra.mxu0 0.0
        %6738 = vmatprep.subr.mxu0 0.0
        %6739 = vmatpush1.msra.mxu0 0.0
        %6740 = vmatprep.mubr.f32.mxu0 0.0
        %6741 = vmatmul.mubr.f32.gmra.mrb[0].mxu0 %v6665
        %v6742 = vpop.f32.mrb[0].mxu0
        %v6743 = vadd.f32 0.0, %v6742
        %v6744 = vpop.f32.mrb[0].mxu0
        %v6745 = vadd.f32 0.0, %v6744
        %6746 = vmatprep.mubr.f32.mxu0 0.0
        %6747 = vmatmul.mubr.f32.gmra.mrb[0].mxu0 %v6668
        %v6748 = vpop.f32.mrb[0].mxu0
        %v6749 = vadd.f32 0.0, %v6748
        %v6750 = vpop.f32.mrb[0].mxu0
        %v6751 = vadd.f32 0.0, %v6750
        %6752 = vmatprep.mubr.f32.mxu0 0.0
        %6753 = vmatmul.mubr.f32.gmra.mrb[0].mxu0 %v6671
        %v6754 = vpop.f32.mrb[0].mxu0
        %v6755 = vadd.f32 0.0, %v6754
        %v6756 = vpop.f32.mrb[0].mxu0
        %v6757 = vadd.f32 0.0, %v6756
        %6758 = vmatprep.mubr.f32.mxu0 0.0
        %6759 = vmatmul.mubr.f32.gmra.mrb[0].mxu0 %v6674
        %v6760 = vpop.f32.mrb[0].mxu0
        %v6761 = vadd.f32 0.0, %v6760
        %v6762 = vpop.f32.mrb[0].mxu0
        %v6763 = vadd.f32 0.0, %v6762
        %6764 = vdwg.mxu0
        %v6765 = vxor.u32 %v6743, 2147483648
        %v6766 = vxor.u32 %v6749, 2147483648
        %v6767 = vxor.u32 %v6755, 2147483648
        %v6768 = vxor.u32 %v6761, 2147483648
        %v6769 = vmul.f32 %v6765, 1.442695
        %v6770 = vpow.pop %v6769
        %v6771 = vmul.f32 %v6766, 1.442695
        %v6772 = vpow.pop %v6771
        %v6773 = vmul.f32 %v6767, 1.442695
        %v6774 = vpow.pop %v6773
        %v6775 = vmul.f32 %v6768, 1.442695
        %v6776 = vpow.pop %v6775
        %v6777 = vadd.f32 %v6770, 1.0
        %v6778 = vadd.f32 %v6772, 1.0
        %v6779 = vadd.f32 %v6774, 1.0
        %v6780 = vadd.f32 %v6776, 1.0
        %v6781 = vrcp.pop %v6777
        %v6782 = vmul.f32 1.0, %v6781
        %v6783 = vrcp.pop %v6778
        %v6784 = vmul.f32 1.0, %v6783
        %v6785 = vrcp.pop %v6779
        %v6786 = vmul.f32 1.0, %v6785
        %v6787 = vrcp.pop %v6780
        %v6788 = vmul.f32 1.0, %v6787
        %v6789 = vmul.f32 %v6743, %v6782
        %v6790 = vmul.f32 %v6749, %v6784
        %v6791 = vmul.f32 %v6755, %v6786
        %v6792 = vmul.f32 %v6761, %v6788
        %v6793 = vmul.f32 %v6789, %v6745
        %v6794 = vmul.f32 %v6790, %v6751
        %v6795 = vmul.f32 %v6791, %v6757
        %v6796 = vmul.f32 %v6792, %v6763
        %v6797 = vld [vmem:[%s624] sm:$0xff]
        %v6798 = vld [vmem:[%s624 + $0x8] sm:$0xff]
        %v6799 = vld [vmem:[%s624 + $0x10] sm:$0xff]
        %v6800 = vld [vmem:[%s624 + $0x18] sm:$0xff]
        %v6801 = vld [vmem:[%s624 + $0x20] sm:$0xff]
        %v6802 = vld [vmem:[%s624 + $0x28] sm:$0xff]
        %v6803 = vld [vmem:[%s624 + $0x30] sm:$0xff]
        %v6804 = vld [vmem:[%s624 + $0x38] sm:$0xff]
        %v6805 = vld [vmem:[%s624 + $0x40] sm:$0xff]
        %v6806 = vld [vmem:[%s624 + $0x48] sm:$0xff]
        %v6807 = vld [vmem:[%s624 + $0x50] sm:$0xff]
        %v6808 = vld [vmem:[%s624 + $0x58] sm:$0xff]
        %v6809 = vld [vmem:[%s624 + $0x60] sm:$0xff]
        %v6810 = vld [vmem:[%s624 + $0x68] sm:$0xff]
        %v6811 = vld [vmem:[%s624 + $0x70] sm:$0xff]
        %v6812 = vld [vmem:[%s624 + $0x78] sm:$0xff]
        %6813 = vmatprep.subr.mxu0 0.0
        %6814 = vmatpush1.msra.mxu0 %v6797
        %6815 = vmatprep.subr.mxu0 0.0
        %6816 = vmatpush1.msra.mxu0 %v6798
        %6817 = vmatprep.subr.mxu0 0.0
        %6818 = vmatpush1.msra.mxu0 %v6799
        %6819 = vmatprep.subr.mxu0 0.0
        %6820 = vmatpush1.msra.mxu0 %v6800
        %6821 = vmatprep.subr.mxu0 0.0
        %6822 = vmatpush1.msra.mxu0 %v6801
        %6823 = vmatprep.subr.mxu0 0.0
        %6824 = vmatpush1.msra.mxu0 %v6802
        %6825 = vmatprep.subr.mxu0 0.0
        %6826 = vmatpush1.msra.mxu0 %v6803
        %6827 = vmatprep.subr.mxu0 0.0
        %6828 = vmatpush1.msra.mxu0 %v6804
        %6829 = vmatprep.subr.mxu0 0.0
        %6830 = vmatpush1.msra.mxu0 %v6805
        %6831 = vmatprep.subr.mxu0 0.0
        %6832 = vmatpush1.msra.mxu0 %v6806
        %6833 = vmatprep.subr.mxu0 0.0
        %6834 = vmatpush1.msra.mxu0 %v6807
        %6835 = vmatprep.subr.mxu0 0.0
        %6836 = vmatpush1.msra.mxu0 %v6808
        %6837 = vmatprep.subr.mxu0 0.0
        %6838 = vmatpush1.msra.mxu0 %v6809
        %6839 = vmatprep.subr.mxu0 0.0
        %6840 = vmatpush1.msra.mxu0 %v6810
        %6841 = vmatprep.subr.mxu0 0.0
        %6842 = vmatpush1.msra.mxu0 %v6811
        %6843 = vmatprep.subr.mxu0 0.0
        %6844 = vmatpush1.msra.mxu0 %v6812
        %6845 = vmatprep.subr.mxu0 0.0
        %6846 = vmatpush1.msra.mxu0 0.0
        %6847 = vmatprep.subr.mxu0 0.0
        %6848 = vmatpush1.msra.mxu0 0.0
        %6849 = vmatprep.subr.mxu0 0.0
        %6850 = vmatpush1.msra.mxu0 0.0
        %6851 = vmatprep.subr.mxu0 0.0
        %6852 = vmatpush1.msra.mxu0 0.0
        %6853 = vmatprep.subr.mxu0 0.0
        %6854 = vmatpush1.msra.mxu0 0.0
        %6855 = vmatprep.subr.mxu0 0.0
        %6856 = vmatpush1.msra.mxu0 0.0
        %6857 = vmatprep.subr.mxu0 0.0
        %6858 = vmatpush1.msra.mxu0 0.0
        %6859 = vmatprep.subr.mxu0 0.0
        %6860 = vmatpush1.msra.mxu0 0.0
        %6861 = vmatprep.subr.mxu0 0.0
        %6862 = vmatpush1.msra.mxu0 0.0
        %6863 = vmatprep.subr.mxu0 0.0
        %6864 = vmatpush1.msra.mxu0 0.0
        %6865 = vmatprep.subr.mxu0 0.0
        %6866 = vmatpush1.msra.mxu0 0.0
        %6867 = vmatprep.subr.mxu0 0.0
        %6868 = vmatpush1.msra.mxu0 0.0
        %6869 = vmatprep.subr.mxu0 0.0
        %6870 = vmatpush1.msra.mxu0 0.0
        %6871 = vmatprep.subr.mxu0 0.0
        %6872 = vmatpush1.msra.mxu0 0.0
        %6873 = vmatprep.subr.mxu0 0.0
        %6874 = vmatpush1.msra.mxu0 0.0
        %6875 = vmatprep.subr.mxu0 0.0
        %6876 = vmatpush1.msra.mxu0 0.0
        %6877 = vmatprep.mubr.f32.mxu0 0.0
        %6878 = vmatmul.mubr.f32.gmra.mrb[0].mxu0 %v6793
        %v6879 = vpop.f32.mrb[0].mxu0
        %v6880 = vadd.f32 0.0, %v6879
        %v6881 = vpop.f32.mrb[0].mxu0
        %6882 = vmatprep.mubr.f32.mxu0 0.0
        %6883 = vmatmul.mubr.f32.gmra.mrb[0].mxu0 %v6794
        %v6884 = vpop.f32.mrb[0].mxu0
        %v6885 = vadd.f32 0.0, %v6884
        %v6886 = vpop.f32.mrb[0].mxu0
        %6887 = vmatprep.mubr.f32.mxu0 0.0
        %6888 = vmatmul.mubr.f32.gmra.mrb[0].mxu0 %v6795
        %v6889 = vpop.f32.mrb[0].mxu0
        %v6890 = vadd.f32 0.0, %v6889
        %v6891 = vpop.f32.mrb[0].mxu0
        %6892 = vmatprep.mubr.f32.mxu0 0.0
        %6893 = vmatmul.mubr.f32.gmra.mrb[0].mxu0 %v6796
        %v6894 = vpop.f32.mrb[0].mxu0
        %v6895 = vadd.f32 0.0, %v6894
        %v6896 = vpop.f32.mrb[0].mxu0
        %6897 = vdwg.mxu0
        %6902 = vrot.lane.b32.xlu0 %v6880, 64
        %v6903 = vpop.permute.xlu0 %6902
        %6904 = vrot.lane.b32.xlu0 %v6885, 64
        %v6905 = vpop.permute.xlu0 %6904
        %6906 = vrot.lane.b32.xlu0 %v6890, 64
        %v6907 = vpop.permute.xlu0 %6906
        %6908 = vrot.lane.b32.xlu0 %v6895, 64
        %v6909 = vpop.permute.xlu0 %6908
        %v6914 = vmul.f32 %v1036, %v6903
        %v6915 = vmul.f32 %v1038, %v6905
        %v6916 = vmul.f32 %v1040, %v6907
        %v6917 = vmul.f32 %v1042, %v6909
        %6922 = vrot.lane.b32.xlu0 %v6568, 64
        %v6923 = vpop.permute.xlu0 %6922
        %6924 = vrot.lane.b32.xlu0 %v6569, 64
        %v6925 = vpop.permute.xlu0 %6924
        %6926 = vrot.lane.b32.xlu0 %v6570, 64
        %v6927 = vpop.permute.xlu0 %6926
        %6928 = vrot.lane.b32.xlu0 %v6571, 64
        %v6929 = vpop.permute.xlu0 %6928
        %v6934 = vadd.f32 %v6914, %v6923
        %v6935 = vadd.f32 %v6915, %v6925
        %v6936 = vadd.f32 %v6916, %v6927
        %v6937 = vadd.f32 %v6917, %v6929
        %6942 = vrot.lane.b32.xlu0 %v6934, 64
        %v6943 = vpop.permute.xlu0 %6942
        %6944 = vrot.lane.b32.xlu0 %v6935, 64
        %v6945 = vpop.permute.xlu0 %6944
        %6946 = vrot.lane.b32.xlu0 %v6936, 64
        %v6947 = vpop.permute.xlu0 %6946
        %6948 = vrot.lane.b32.xlu0 %v6937, 64
        %v6949 = vpop.permute.xlu0 %6948
        %6954 = vst.msk [vmem:[#allocation15] sm:$0xff] %vm1043, %v6943
        %6955 = vst.msk [vmem:[#allocation15 + $0x8] sm:$0xff] %vm1043, %v6945
        %6956 = vst.msk [vmem:[#allocation15 + $0x10] sm:$0xff] %vm1043, %v6947
        %6957 = vst.msk [vmem:[#allocation15 + $0x18] sm:$0xff] %vm1043, %v6949
        // Predicated region
        $region97: #{tpu_custom_call.1} parent=63 // pred_check
          %p6958 = pneg %p315
        $region98: #{tpu_custom_call.1} parent=63 // pred_check_branch
          %6960 = sbr.rel (%p6958) target = $region100
        $region99: #{tpu_custom_call.1} parent=63 // pred_region
          %s6962 = ssub.s32 512, 512
          %6963 = vsyncadd [#allocation5], %s6962
          %s6964 = sshll.u32 [#allocation15], 4
          %s6965 = int_to_ptr.vmem [resolvable:$true] %s6964
          %6970 = dma.vmem_to_hbm [thread:$0]  %s6965, 512, %s11, [#allocation5], 128, 128, 8
        $region100: #{tpu_custom_call.1} parent=63 // pred_fallthru
          _
        // Predicated region
        $region101: #{tpu_custom_call.1} parent=63 // pred_check
          %p6971 = pneg %p315
        $region102: #{tpu_custom_call.1} parent=63 // pred_check_branch
          %6973 = sbr.rel (%p6971) target = $region104
        $region103: #{tpu_custom_call.1} parent=63 // pred_region
          %6974 = dma.done [#allocation5], 512
        $region104: #{tpu_custom_call.1} parent=63 // pred_fallthru
          _
      $region64: #{tpu_custom_call.1} parent=5 // pred_fallthru
        _
      %p6975 = scmp.le.s32.totalorder 2, %s26
      // Predicated region
      $region105: #{tpu_custom_call.1} parent=5 // pred_check
        %p6976 = pneg %p6975
      $region106: #{tpu_custom_call.1} parent=5 // pred_check_branch
        %6978 = sbr.rel (%p6976) target = $region108
      $region107: #{tpu_custom_call.1} parent=5 // pred_region
        %s6979 = ssub.s32 %s26, 2
      $region108: #{tpu_custom_call.1} parent=5 // pred_fallthru
        _
    $region6: #{tpu_custom_call.1} parent=1 // loop_footer
      %s30 = sadd.s32 1, %s26
    $region7: #{tpu_custom_call.1} parent=1 // loop_footer_branch
      %25 = sbr.rel target = $region3
    $region8: #{tpu_custom_call.1} parent=1 // loop_exit
      _
    %6980 = vsyncpa [#allocation4], 1
    %s6981 = scalar_lea.sflag [#allocation4], 1
    %6982 = vsyncpa %s6981, 1
    %6983 = vsyncpa [#allocation7], 1
    %6984 = vsyncpa [#allocation10], 1
    %s6985 = scalar_lea.sflag [#allocation10], 1
    %6986 = vsyncpa %s6985, 1
    %6987 = vsyncpa [#allocation13], 1
    %s6988 = scalar_lea.sflag [#allocation13], 1
    %6989 = vsyncpa %s6988, 1
    %6990 = vsyncpa [#allocation5], 1
    %s6991 = scalar_lea.sflag [#allocation5], 1
    %6992 = vsyncpa %s6991, 1

</llo_original>
